<compile_context>
chip_gen: v7x
topology: tpu7x:2x2x1
jax: 0.10.0
libtpu: 0.0.40
codegen_flags: <defaults>
</compile_context>

<pallas_src>
import functools

import jax
import jax.numpy as jnp
from jax.experimental import pallas as pl
from jax.experimental.pallas import tpu as pltpu


def _round_up(n, m):
    return ((n + m - 1) // m) * m


# ----------------------------------------------------------------------------
# Fused kernel: whole MLP for one batch tile.
# ----------------------------------------------------------------------------
def _ember_fused_kernel(x_ref,
                        w1_ref, b1_ref,
                        w2_ref, b2_ref,
                        w3_ref, b3_ref,
                        w4_ref, b4_ref,
                        w5_ref, b5_ref,
                        o_ref):
    # Activations in bf16 for the MXU; accumulation + epilogues in f32.
    h = x_ref[...].astype(jnp.bfloat16)

    # Layer 1: Linear + folded-BN, ReLU.  (Dropout = identity in eval mode.)
    z = jnp.dot(h, w1_ref[...], preferred_element_type=jnp.float32) + b1_ref[...]
    h = jnp.maximum(z, 0.0).astype(jnp.bfloat16)

    # Layer 2
    z = jnp.dot(h, w2_ref[...], preferred_element_type=jnp.float32) + b2_ref[...]
    h = jnp.maximum(z, 0.0).astype(jnp.bfloat16)

    # Layer 3
    z = jnp.dot(h, w3_ref[...], preferred_element_type=jnp.float32) + b3_ref[...]
    h = jnp.maximum(z, 0.0).astype(jnp.bfloat16)

    # Layer 4 (keep f32 for the final reduction)
    z = jnp.dot(h, w4_ref[...], preferred_element_type=jnp.float32) + b4_ref[...]
    h4 = jnp.maximum(z, 0.0)                              # (tn, 128) f32

    # Layer 5: 128 -> 1.  Transpose to (128, tn) so the scalar output becomes
    # lane-dense, then VPU multiply + XLU sublane reduction (no degenerate
    # 1-lane MXU matmul), then Sigmoid.
    h4t = h4.T                                            # (128, tn), XLU
    logits = jnp.sum(h4t * w5_ref[...], axis=0, keepdims=True) + b5_ref[...]
    o_ref[...] = jax.nn.sigmoid(logits)                   # (1, tn), lane-dense


# ----------------------------------------------------------------------------
# Per-generation sizing + tile selection
# ----------------------------------------------------------------------------
def _device_config():
    kind = ""
    try:
        kind = jax.devices()[0].device_kind.lower()
    except Exception:
        pass
    if "v7" in kind:
        # v7x: 64 MiB VMEM / TC, 2 TCs. Modest tiles, and make sure the grid
        # has >= 2 steps so "parallel" actually feeds both TensorCores.
        return {"tile_target": 256, "vmem_limit": 48 << 20, "two_steps": True}
    if any(t in kind for t in ("v4", "v5", "v6")):
        # 128 MiB VMEM: bigger batch tiles, fewer grid steps.
        return {"tile_target": 512, "vmem_limit": 100 << 20, "two_steps": False}
    # Unknown TPU: conservative defaults.
    return {"tile_target": 256, "vmem_limit": 64 << 20, "two_steps": False}


def _choose_tile_n(n, cfg):
    """Batch tile: always a multiple of 128 (pad the batch up, never shrink
    the tile to a sublane sliver); on v7x prefer a >=2-step grid."""
    n128 = _round_up(max(n, 1), 128)
    tn = min(_round_up(cfg["tile_target"], 128), n128)
    if cfg["two_steps"] and n128 >= 256:
        tn = min(tn, _round_up(n128 // 2, 128))
    return max(tn, 128)


def _resident_spec(shape):
    """Whole-array block, same block every grid step, single-buffered
    (weights never change across the batch grid -> second buffer is waste)."""
    zeros = (0,) * len(shape)
    return pl.BlockSpec(shape, lambda i: zeros, pipeline_mode=pl.Buffered(1))


# ----------------------------------------------------------------------------
# Wrapper
# ----------------------------------------------------------------------------
@functools.partial(jax.jit, static_argnames=("tile_n",))
def ember_mlp_forward(x, params, *, tile_n=None):
    """Fused Ember_MLP_Net forward (eval mode).

    x: (N, F) f32 or bf16 (bf16 preferred if the producer can supply it; the
       kernel casts internally either way -- no wrapper-side cast op).
    Returns (N, 1) f32 probabilities.
    """
    w1, b1, w2, b2, w3, b3, w4, b4, w5_col, b5 = params
    n, f_in = x.shape
    f_pad = w1.shape[0]                  # feature dim padded to x128 in params

    cfg = _device_config()
    tn = tile_n if tile_n is not None else _choose_tile_n(n, cfg)
    n_pad = _round_up(n, tn)

    pad_rows, pad_cols = n_pad - n, f_pad - f_in
    if pad_rows or pad_cols:
        x = jnp.pad(x, ((0, pad_rows), (0, pad_cols)))

    grid = (n_pad // tn,)
    out = pl.pallas_call(
        _ember_fused_kernel,
        out_shape=jax.ShapeDtypeStruct((1, n_pad), jnp.float32),
        grid=grid,
        in_specs=[
            pl.BlockSpec((tn, f_pad), lambda i: (i, 0)),     # x: batch-tiled
            _resident_spec(w1.shape), _resident_spec(b1.shape),
            _resident_spec(w2.shape), _resident_spec(b2.shape),
            _resident_spec(w3.shape), _resident_spec(b3.shape),
            _resident_spec(w4.shape), _resident_spec(b4.shape),
            _resident_spec(w5_col.shape), _resident_spec(b5.shape),
        ],
        out_specs=pl.BlockSpec((1, tn), lambda i: (0, i)),   # lane-dense output
        compiler_params=pltpu.CompilerParams(
            dimension_semantics=("parallel",),               # shard steps on v7x TCs
            vmem_limit_bytes=cfg["vmem_limit"],
        ),
    )(x, w1, b1, w2, b2, w3, b3, w4, b4, w5_col, b5)

    # Back to the module's (N, 1) output shape.
    return out[0, :n, None]


# ----------------------------------------------------------------------------
# Parameter construction (deterministic, synthetic) with BN folding.
# ----------------------------------------------------------------------------
def init_params(input_features, key, *, eps=1e-5):
    """Returns (kernel_params, raw_layers).

    kernel_params: BN folded into Linear, bf16 weights, W1's K rows zero-padded
                   to a multiple of 128 -- what the fused kernel consumes.
    raw_layers:    unfolded f32 Linear + BatchNorm running stats -- used by the
                   f32 reference that mirrors the true PyTorch module math.
    """
    dims = [input_features, 1024, 512, 256, 128, 1]
    f_pad = _round_up(input_features, 128)
    kernel_flat, raw_layers = [], []
    for li in range(5):
        d_in, d_out = dims[li], dims[li + 1]
        key, kw, kb, kg, kbeta, km, kv = jax.random.split(key, 7)
        w = jax.random.normal(kw, (d_in, d_out), jnp.float32) / jnp.sqrt(d_in)
        b = jax.random.normal(kb, (1, d_out), jnp.float32) * 0.01
        if li < 4:
            # Inference-mode BatchNorm1d params (synthetic running stats).
            gamma = 1.0 + 0.1 * jax.random.normal(kg, (1, d_out), jnp.float32)
            beta = 0.1 * jax.random.normal(kbeta, (1, d_out), jnp.float32)
            mean = 0.1 * jax.random.normal(km, (1, d_out), jnp.float32)
            var = 1.0 + 0.1 * jax.random.uniform(kv, (1, d_out), jnp.float32)
            raw_layers.append((w, b, gamma, beta, mean, var))
            scale = gamma / jnp.sqrt(var + eps)
            shift = beta - mean * scale
            w_fold = w * scale
            b_fold = b * scale + shift
            if li == 0 and f_pad != d_in:
                # Zero-row pad: layer-1 K dim lane-aligned (multiple of 128).
                w_fold = jnp.pad(w_fold, ((0, f_pad - d_in), (0, 0)))
            kernel_flat += [w_fold.astype(jnp.bfloat16), b_fold]
        else:
            raw_layers.append((w, b))
            # Final 128 -> 1 layer kept f32 as a (128, 1) column for the
            # transpose + sublane-reduce path in-kernel.
            kernel_flat += [w, b]
    return tuple(kernel_flat), raw_layers


# ----------------------------------------------------------------------------
# References for correctness checks.
# ----------------------------------------------------------------------------
def _reference_forward_true(x, raw_layers, eps=1e-5):
    """Pure f32 math of the original PyTorch module (eval mode)."""
    h = x.astype(jnp.float32)
    for (w, b, gamma, beta, mean, var) in raw_layers[:4]:
        z = h @ w + b
        z = (z - mean) * gamma / jnp.sqrt(var + eps) + beta   # BatchNorm1d (eval)
        h = jnp.maximum(z, 0.0)                               # ReLU; Dropout = id
    w5, b5 = raw_layers[4]
    return jax.nn.sigmoid(h @ w5 + b5)


def _reference_forward_folded(x, params):
    """Mirrors the kernel's folded bf16 math (tight-tolerance check)."""
    w1, b1, w2, b2, w3, b3, w4, b4, w5, b5 = params
    f_pad = w1.shape[0]
    if x.shape[1] != f_pad:
        x = jnp.pad(x, ((0, 0), (0, f_pad - x.shape[1])))
    h = x
    for w, b in ((w1, b1), (w2, b2), (w3, b3), (w4, b4)):
        z = jnp.dot(h.astype(jnp.bfloat16), w,
                    preferred_element_type=jnp.float32) + b
        h = jnp.maximum(z, 0.0)
    logits = jnp.dot(h, w5) + b5
    return jax.nn.sigmoid(logits)


# ----------------------------------------------------------------------------
if __name__ == "__main__":
    key = jax.random.PRNGKey(0)
    key, kx, kp = jax.random.split(key, 3)

    # Small demo shapes; input_features deliberately NOT a multiple of 128 and
    # batch NOT a multiple of the tile, to exercise both padding paths.
    input_features = 200
    batch = 300

    x = jax.random.normal(kx, (batch, input_features), jnp.float32)
    params, raw_layers = init_params(input_features, kp)

    y = ember_mlp_forward(x, params)
    jax.block_until_ready(y)

    assert y.shape == (batch, 1)
    assert bool(jnp.all((y >= 0.0) & (y <= 1.0)))

    # Tight check against a reference mirroring the kernel's folded bf16 math.
    y_folded = _reference_forward_folded(x, params)
    assert bool(jnp.allclose(y, y_folded, rtol=2e-3, atol=2e-3)), \
        float(jnp.max(jnp.abs(y - y_folded)))

    # Looser check against the TRUE f32 module math (Linear->BN->ReLU->...->
    # Sigmoid); the gap is the documented bf16 weight-folding error.
    y_true = _reference_forward_true(x, raw_layers)
    assert bool(jnp.allclose(y, y_true, atol=5e-2)), \
        float(jnp.max(jnp.abs(y - y_true)))

    print("KERNEL_OK")
</pallas_src>

<mosaic_0001>
module attributes {stable_mosaic.version = 11 : i64} {
  func.func @_ember_fused_kernel(%arg0: i32, %arg1: memref<256x256xf32, #tpu.memory_space<vmem>>, %arg2: memref<256x1024xbf16, #tpu.memory_space<vmem>>, %arg3: memref<1x1024xf32, #tpu.memory_space<vmem>>, %arg4: memref<1024x512xbf16, #tpu.memory_space<vmem>>, %arg5: memref<1x512xf32, #tpu.memory_space<vmem>>, %arg6: memref<512x256xbf16, #tpu.memory_space<vmem>>, %arg7: memref<1x256xf32, #tpu.memory_space<vmem>>, %arg8: memref<256x128xbf16, #tpu.memory_space<vmem>>, %arg9: memref<1x128xf32, #tpu.memory_space<vmem>>, %arg10: memref<128x1xf32, #tpu.memory_space<vmem>>, %arg11: memref<1x1xf32, #tpu.memory_space<vmem>>, %arg12: memref<1x256xf32, #tpu.memory_space<vmem>>) attributes {dimension_semantics = [#tpu.dimension_semantics<parallel>], iteration_bounds = array<i64: 2>, scalar_prefetch = 0 : i64, scratch_operands = 0 : i64, tpu.core_type = #tpu.core_type<tc>, window_params = [{transform_indices = @transform_0, window_bounds = array<i64: 256, 256>}, {pipeline_mode = #tpu.pipeline_mode<synchronous>, transform_indices = @transform_1, window_bounds = array<i64: 256, 1024>}, {pipeline_mode = #tpu.pipeline_mode<synchronous>, transform_indices = @transform_2, window_bounds = array<i64: 1, 1024>}, {pipeline_mode = #tpu.pipeline_mode<synchronous>, transform_indices = @transform_3, window_bounds = array<i64: 1024, 512>}, {pipeline_mode = #tpu.pipeline_mode<synchronous>, transform_indices = @transform_4, window_bounds = array<i64: 1, 512>}, {pipeline_mode = #tpu.pipeline_mode<synchronous>, transform_indices = @transform_5, window_bounds = array<i64: 512, 256>}, {pipeline_mode = #tpu.pipeline_mode<synchronous>, transform_indices = @transform_6, window_bounds = array<i64: 1, 256>}, {pipeline_mode = #tpu.pipeline_mode<synchronous>, transform_indices = @transform_7, window_bounds = array<i64: 256, 128>}, {pipeline_mode = #tpu.pipeline_mode<synchronous>, transform_indices = @transform_8, window_bounds = array<i64: 1, 128>}, {pipeline_mode = #tpu.pipeline_mode<synchronous>, transform_indices = @transform_9, window_bounds = array<i64: 128, 1>}, {pipeline_mode = #tpu.pipeline_mode<synchronous>, transform_indices = @transform_10, window_bounds = array<i64: 1, 1>}, {transform_indices = @transform_11, window_bounds = array<i64: 1, 256>}]} {
    %c0 = arith.constant 0 : index
    %c0_0 = arith.constant 0 : index
    %0 = vector.load %arg1[%c0, %c0_0] : memref<256x256xf32, #tpu.memory_space<vmem>>, vector<256x256xf32>
    %1 = arith.truncf %0 : vector<256x256xf32> to vector<256x256xbf16>
    %c0_1 = arith.constant 0 : index
    %c0_2 = arith.constant 0 : index
    %2 = vector.load %arg2[%c0_1, %c0_2] : memref<256x1024xbf16, #tpu.memory_space<vmem>>, vector<256x1024xbf16>
    %cst = arith.constant dense<0.000000e+00> : vector<256x1024xf32>
    %3 = tpu.matmul %1, %2, %cst {dimension_numbers = #tpu.dot_dimension_numbers<[1], [0], [0], [1], [0, 0, 1, 1], [], []>} : vector<256x256xbf16>, vector<256x1024xbf16>, vector<256x1024xf32> -> vector<256x1024xf32>
    %c0_3 = arith.constant 0 : index
    %c0_4 = arith.constant 0 : index
    %4 = vector.load %arg3[%c0_3, %c0_4] : memref<1x1024xf32, #tpu.memory_space<vmem>>, vector<1x1024xf32>
    %5 = vector.broadcast %4 : vector<1x1024xf32> to vector<256x1024xf32>
    %6 = arith.addf %3, %5 : vector<256x1024xf32>
    %cst_5 = arith.constant 0.000000e+00 : f32
    %7 = vector.broadcast %cst_5 : f32 to vector<256x1024xf32>
    %8 = arith.maximumf %6, %7 : vector<256x1024xf32>
    %9 = arith.truncf %8 : vector<256x1024xf32> to vector<256x1024xbf16>
    %c0_6 = arith.constant 0 : index
    %c0_7 = arith.constant 0 : index
    %10 = vector.load %arg4[%c0_6, %c0_7] : memref<1024x512xbf16, #tpu.memory_space<vmem>>, vector<1024x512xbf16>
    %cst_8 = arith.constant dense<0.000000e+00> : vector<256x512xf32>
    %11 = tpu.matmul %9, %10, %cst_8 {dimension_numbers = #tpu.dot_dimension_numbers<[1], [0], [0], [1], [0, 0, 1, 1], [], []>} : vector<256x1024xbf16>, vector<1024x512xbf16>, vector<256x512xf32> -> vector<256x512xf32>
    %c0_9 = arith.constant 0 : index
    %c0_10 = arith.constant 0 : index
    %12 = vector.load %arg5[%c0_9, %c0_10] : memref<1x512xf32, #tpu.memory_space<vmem>>, vector<1x512xf32>
    %13 = vector.broadcast %12 : vector<1x512xf32> to vector<256x512xf32>
    %14 = arith.addf %11, %13 : vector<256x512xf32>
    %cst_11 = arith.constant 0.000000e+00 : f32
    %15 = vector.broadcast %cst_11 : f32 to vector<256x512xf32>
    %16 = arith.maximumf %14, %15 : vector<256x512xf32>
    %17 = arith.truncf %16 : vector<256x512xf32> to vector<256x512xbf16>
    %c0_12 = arith.constant 0 : index
    %c0_13 = arith.constant 0 : index
    %18 = vector.load %arg6[%c0_12, %c0_13] : memref<512x256xbf16, #tpu.memory_space<vmem>>, vector<512x256xbf16>
    %cst_14 = arith.constant dense<0.000000e+00> : vector<256x256xf32>
    %19 = tpu.matmul %17, %18, %cst_14 {dimension_numbers = #tpu.dot_dimension_numbers<[1], [0], [0], [1], [0, 0, 1, 1], [], []>} : vector<256x512xbf16>, vector<512x256xbf16>, vector<256x256xf32> -> vector<256x256xf32>
    %c0_15 = arith.constant 0 : index
    %c0_16 = arith.constant 0 : index
    %20 = vector.load %arg7[%c0_15, %c0_16] : memref<1x256xf32, #tpu.memory_space<vmem>>, vector<1x256xf32>
    %21 = vector.broadcast %20 : vector<1x256xf32> to vector<256x256xf32>
    %22 = arith.addf %19, %21 : vector<256x256xf32>
    %cst_17 = arith.constant 0.000000e+00 : f32
    %23 = vector.broadcast %cst_17 : f32 to vector<256x256xf32>
    %24 = arith.maximumf %22, %23 : vector<256x256xf32>
    %25 = arith.truncf %24 : vector<256x256xf32> to vector<256x256xbf16>
    %c0_18 = arith.constant 0 : index
    %c0_19 = arith.constant 0 : index
    %26 = vector.load %arg8[%c0_18, %c0_19] : memref<256x128xbf16, #tpu.memory_space<vmem>>, vector<256x128xbf16>
    %cst_20 = arith.constant dense<0.000000e+00> : vector<256x128xf32>
    %27 = tpu.matmul %25, %26, %cst_20 {dimension_numbers = #tpu.dot_dimension_numbers<[1], [0], [0], [1], [0, 0, 1, 1], [], []>} : vector<256x256xbf16>, vector<256x128xbf16>, vector<256x128xf32> -> vector<256x128xf32>
    %c0_21 = arith.constant 0 : index
    %c0_22 = arith.constant 0 : index
    %28 = vector.load %arg9[%c0_21, %c0_22] : memref<1x128xf32, #tpu.memory_space<vmem>>, vector<1x128xf32>
    %29 = vector.broadcast %28 : vector<1x128xf32> to vector<256x128xf32>
    %30 = arith.addf %27, %29 : vector<256x128xf32>
    %cst_23 = arith.constant 0.000000e+00 : f32
    %31 = vector.broadcast %cst_23 : f32 to vector<256x128xf32>
    %32 = arith.maximumf %30, %31 : vector<256x128xf32>
    %33 = tpu.transpose %32, [1, 0] : vector<256x128xf32> -> vector<128x256xf32>
    %c0_24 = arith.constant 0 : index
    %c0_25 = arith.constant 0 : index
    %34 = vector.load %arg10[%c0_24, %c0_25] : memref<128x1xf32, #tpu.memory_space<vmem>>, vector<128x1xf32>
    %35 = vector.broadcast %34 : vector<128x1xf32> to vector<128x256xf32>
    %36 = arith.mulf %33, %35 : vector<128x256xf32>
    %cst_26 = arith.constant dense<0.000000e+00> : vector<256xf32>
    %37 = vector.multi_reduction <add>, %36, %cst_26 [0] : vector<128x256xf32> to vector<256xf32>
    %38 = vector.shape_cast %37 : vector<256xf32> to vector<1x256xf32>
    %c0_27 = arith.constant 0 : index
    %c0_28 = arith.constant 0 : index
    %39 = vector.load %arg11[%c0_27, %c0_28] : memref<1x1xf32, #tpu.memory_space<vmem>>, vector<1x1xf32>
    %40 = vector.broadcast %39 : vector<1x1xf32> to vector<1x256xf32>
    %41 = arith.addf %38, %40 : vector<1x256xf32>
    %42 = arith.negf %41 : vector<1x256xf32>
    %43 = math.exp %42 : vector<1x256xf32>
    %cst_29 = arith.constant 1.000000e+00 : f32
    %44 = vector.broadcast %cst_29 : f32 to vector<1x256xf32>
    %45 = arith.addf %44, %43 : vector<1x256xf32>
    %46 = arith.divf %44, %45 : vector<1x256xf32>
    %c0_30 = arith.constant 0 : index
    %c0_31 = arith.constant 0 : index
    %47 = vector.load %arg12[%c0_30, %c0_31] : memref<1x256xf32, #tpu.memory_space<vmem>>, vector<1x256xf32>
    tpu.vector_store %arg12[%c0_30, %c0_31], %46 {strides = array<i32>} : memref<1x256xf32, #tpu.memory_space<vmem>>, vector<1x256xf32>,
    return
  }
  func.func @transform_0(%arg0: i32) -> (i32, i32) {
    %c0_i32 = arith.constant 0 : i32
    %c0_i32_0 = arith.constant 0 : i32
    return %arg0, %c0_i32 : i32, i32
  }
  func.func @transform_1(%arg0: i32) -> (i32, i32) {
    %c0_i32 = arith.constant 0 : i32
    %c0_i32_0 = arith.constant 0 : i32
    %c0_i32_1 = arith.constant 0 : i32
    return %c0_i32, %c0_i32_0 : i32, i32
  }
  func.func @transform_2(%arg0: i32) -> (i32, i32) {
    %c0_i32 = arith.constant 0 : i32
    %c0_i32_0 = arith.constant 0 : i32
    %c0_i32_1 = arith.constant 0 : i32
    return %c0_i32, %c0_i32_0 : i32, i32
  }
  func.func @transform_3(%arg0: i32) -> (i32, i32) {
    %c0_i32 = arith.constant 0 : i32
    %c0_i32_0 = arith.constant 0 : i32
    %c0_i32_1 = arith.constant 0 : i32
    return %c0_i32, %c0_i32_0 : i32, i32
  }
  func.func @transform_4(%arg0: i32) -> (i32, i32) {
    %c0_i32 = arith.constant 0 : i32
    %c0_i32_0 = arith.constant 0 : i32
    %c0_i32_1 = arith.constant 0 : i32
    return %c0_i32, %c0_i32_0 : i32, i32
  }
  func.func @transform_5(%arg0: i32) -> (i32, i32) {
    %c0_i32 = arith.constant 0 : i32
    %c0_i32_0 = arith.constant 0 : i32
    %c0_i32_1 = arith.constant 0 : i32
    return %c0_i32, %c0_i32_0 : i32, i32
  }
  func.func @transform_6(%arg0: i32) -> (i32, i32) {
    %c0_i32 = arith.constant 0 : i32
    %c0_i32_0 = arith.constant 0 : i32
    %c0_i32_1 = arith.constant 0 : i32
    return %c0_i32, %c0_i32_0 : i32, i32
  }
  func.func @transform_7(%arg0: i32) -> (i32, i32) {
    %c0_i32 = arith.constant 0 : i32
    %c0_i32_0 = arith.constant 0 : i32
    %c0_i32_1 = arith.constant 0 : i32
    return %c0_i32, %c0_i32_0 : i32, i32
  }
  func.func @transform_8(%arg0: i32) -> (i32, i32) {
    %c0_i32 = arith.constant 0 : i32
    %c0_i32_0 = arith.constant 0 : i32
    %c0_i32_1 = arith.constant 0 : i32
    return %c0_i32, %c0_i32_0 : i32, i32
  }
  func.func @transform_9(%arg0: i32) -> (i32, i32) {
    %c0_i32 = arith.constant 0 : i32
    %c0_i32_0 = arith.constant 0 : i32
    %c0_i32_1 = arith.constant 0 : i32
    return %c0_i32, %c0_i32_0 : i32, i32
  }
  func.func @transform_10(%arg0: i32) -> (i32, i32) {
    %c0_i32 = arith.constant 0 : i32
    %c0_i32_0 = arith.constant 0 : i32
    %c0_i32_1 = arith.constant 0 : i32
    return %c0_i32, %c0_i32_0 : i32, i32
  }
  func.func @transform_11(%arg0: i32) -> (i32, i32) {
    %c0_i32 = arith.constant 0 : i32
    %c0_i32_0 = arith.constant 0 : i32
    return %c0_i32, %arg0 : i32, i32
  }
}

</mosaic_0001>

<llo_original>
// kernel: ember_mlp_forward.1
$region0: #{ember_mlp_forward.1}
  #allocation0 [shape = 'u32[]', space=smem, size = 0x4, offset = 0x4, fixed_abs, tag = 'smem constant byte address 0x4 - core index']
  #allocation1 [shape = 'u32[144,128]{1,0:T(1,128)}', space=vmem, size = 0x12000, scoped, tag = 'internal scratch']
  #allocation2 [shape = 'f32[1,1]{1,0:T(1,128)S(1)}', space=vmem, size = 0x200, scoped, tag = 'scoped memory for ember_mlp_forward.1']
  %s0 = inlined_call_operand.hbm [shape: f32[512,256], index: 0, kind: input, shape index: {}]
  %s1 = inlined_call_operand.hbm [shape: bf16[256,1024], index: 1, kind: input, shape index: {}]
  %s2 = inlined_call_operand.hbm [shape: f32[1,1024], index: 2, kind: input, shape index: {}]
  %s3 = inlined_call_operand.hbm [shape: bf16[1024,512], index: 3, kind: input, shape index: {}]
  %s4 = inlined_call_operand.hbm [shape: f32[1,512], index: 4, kind: input, shape index: {}]
  %s5 = inlined_call_operand.hbm [shape: bf16[512,256], index: 5, kind: input, shape index: {}]
  %s6 = inlined_call_operand.hbm [shape: f32[1,256], index: 6, kind: input, shape index: {}]
  %s7 = inlined_call_operand.hbm [shape: bf16[256,128], index: 7, kind: input, shape index: {}]
  %s8 = inlined_call_operand.hbm [shape: f32[1,128], index: 8, kind: input, shape index: {}]
  %s9 = inlined_call_operand.hbm [shape: f32[128,1], index: 9, kind: input, shape index: {}]
  %s10 = inlined_call_operand.<no memory space> [shape: f32[1,1], index: 10, kind: input, shape index: {}]
  %s11 = inlined_call_operand.hbm [shape: f32[1,512], index: 11, kind: output, shape index: {}]
  %s12 = sld [smem:[#allocation0]]
  $region117: #{ember_mlp_forward.1} parent=0
    _
  %s14 = ssub.s32 1, %s12
  %s15 = scalar_select 0, %s14, %s12
  %v16 = vstv %s10
  %17 = vst [vmem:[#allocation2] sm:$0x1] %v16
  $region1: #{ember_mlp_forward.1} parent=0
    #allocation3 [shape = 'u8[524288]{0}', space=vmem, size = 0x80000, scoped, tag = 'input window, operand 0']
    #allocation4 [shape = 's32[2]{0}', space=sflag, size = 0x8, scoped, tag = 'scoped memory for ember_mlp_forward.1']
    #allocation5 [shape = 's32[2]{0}', space=sflag, size = 0x8, scoped, tag = 'scoped memory for ember_mlp_forward.1']
    #allocation6 [shape = 'u8[524288]{0}', space=vmem, size = 0x80000, scoped, tag = 'input window, operand 1, single buffered']
    #allocation7 [shape = 's32[1]{0}', space=sflag, size = 0x4, scoped, tag = 'scoped memory for ember_mlp_forward.1']
    #allocation8 [shape = 'u8[4096]{0}', space=vmem, size = 0x1000, scoped, tag = 'input window, operand 2, single buffered']
    #allocation9 [shape = 'u8[1048576]{0}', space=vmem, size = 0x100000, scoped, tag = 'input window, operand 3, single buffered']
    #allocation10 [shape = 's32[1]{0}', space=sflag, size = 0x4, scoped, tag = 'scoped memory for ember_mlp_forward.1']
    #allocation11 [shape = 'u8[2048]{0}', space=vmem, size = 0x800, scoped, tag = 'input window, operand 4, single buffered']
    #allocation12 [shape = 'u8[262144]{0}', space=vmem, size = 0x40000, scoped, tag = 'input window, operand 5, single buffered']
    #allocation13 [shape = 's32[1]{0}', space=sflag, size = 0x4, scoped, tag = 'scoped memory for ember_mlp_forward.1']
    #allocation14 [shape = 'u8[1024]{0}', space=vmem, size = 0x400, scoped, tag = 'input window, operand 6, single buffered']
    #allocation15 [shape = 'u8[65536]{0}', space=vmem, size = 0x10000, scoped, tag = 'input window, operand 7, single buffered']
    #allocation16 [shape = 's32[1]{0}', space=sflag, size = 0x4, scoped, tag = 'scoped memory for ember_mlp_forward.1']
    #allocation17 [shape = 'u8[512]{0}', space=vmem, size = 0x400, scoped, tag = 'input window, operand 8, single buffered']
    #allocation18 [shape = 'u8[65536]{0}', space=vmem, size = 0x10000, scoped, tag = 'input window, operand 9, single buffered']
    #allocation19 [shape = 's32[1]{0}', space=sflag, size = 0x4, scoped, tag = 'scoped memory for ember_mlp_forward.1']
    #allocation20 [shape = 'u8[2048]{0}', space=vmem, size = 0x800, scoped, tag = 'output window, operand 0']
    %18 = vsyncpa [#allocation4], 0
    %s19 = scalar_lea.sflag [#allocation4], 1
    %20 = vsyncpa %s19, 0
    %21 = vsyncpa [#allocation7], 0
    %22 = vsyncpa [#allocation10], 0
    %23 = vsyncpa [#allocation13], 0
    %24 = vsyncpa [#allocation16], 0
    %25 = vsyncpa [#allocation19], 0
    %26 = vsyncpa [#allocation5], 0
    %s27 = scalar_lea.sflag [#allocation5], 1
    %28 = vsyncpa %s27, 0
    loop: start=0, step=1, limit=4
    $region2: #{ember_mlp_forward.1} parent=1 // loop_pre_header
      _
    $region3: #{ember_mlp_forward.1} parent=1 // loop_header
      %s30 = sphi 0, %s34
      %p31 = scmp.ge.s32.totalorder %s30, 4
      %s40 = sphi 0, %s42
      %s43 = sphi 0, %s40
      %s44 = sphi 0, %s43
      %s60 = sphi 0, %s44
      %s64 = sphi 0, %s64
      %s66 = sphi 0, %s64
      %s67 = sphi 0, %s66
      %s81 = sphi 0, %s67
      %s85 = sphi 0, %s85
      %s87 = sphi 0, %s85
      %s88 = sphi 0, %s87
      %s102 = sphi 0, %s88
      %s106 = sphi 0, %s106
      %s108 = sphi 0, %s106
      %s109 = sphi 0, %s108
      %s123 = sphi 0, %s109
      %s127 = sphi 0, %s127
      %s129 = sphi 0, %s127
      %s130 = sphi 0, %s129
      %s144 = sphi 0, %s130
      %s148 = sphi 0, %s148
      %s150 = sphi 0, %s148
      %s151 = sphi 0, %s150
      %s165 = sphi 0, %s151
      %s169 = sphi 0, %s169
      %s171 = sphi 0, %s169
      %s172 = sphi 0, %s171
      %s186 = sphi 0, %s172
      %s190 = sphi 0, %s190
      %s192 = sphi 0, %s190
      %s193 = sphi 0, %s192
      %s207 = sphi 0, %s193
      %s211 = sphi 0, %s211
      %s213 = sphi 0, %s211
      %s214 = sphi 0, %s213
      %s228 = sphi 0, %s214
      %s232 = sphi 0, %s232
      %s234 = sphi 0, %s232
      %s235 = sphi 0, %s234
      %s249 = sphi 0, %s235
      %s253 = sphi 0, %s253
      %s255 = sphi 0, %s253
      %s256 = sphi 0, %s255
      %s270 = sphi 0, %s256
      %s276 = sphi 0, %s278
      %s279 = sphi 0, %s276
      %s280 = sphi 0, %s279
      %s296 = sphi 0, %s280
    $region4: #{ember_mlp_forward.1} parent=1 // loop_header_branch
      %33 = sbr.rel (%p31) target = $region8
    $region5: #{ember_mlp_forward.1} parent=1 // loop_body
      %s35 = ssub.s32 %s30, 1
      %s36 = ssub.s32 %s30, 2
      %s37 = sadd.s32 %s30, 1
      %s38 = ssub.s32 %s30, %s37
      %p39 = scmp.eq.s32.totalorder %s38, 0
      %s41 = sadd.s32 %s40, 1
      %s42 = scalar_select %p39, %s40, %s41
      %p45 = pneg %p39
      %p46 = scmp.eq.s32.totalorder %s30, 1
      %p47 = por %p45, %p46
      %p48 = scmp.ne.s32.totalorder %s40, %s43
      %p49 = scmp.eq.s32.totalorder %s30, 0
      %p50 = por %p48, %p49
      %p51 = scmp.ne.s32.totalorder %s40, %s43
      %p52 = scmp.eq.s32.totalorder %s35, 1
      %p53 = por %p51, %p52
      %p54 = scmp.ne.s32.totalorder %s43, %s44
      %p55 = scmp.eq.s32.totalorder %s35, 0
      %p56 = por %p54, %p55
      %p57 = scmp.ne.s32.totalorder %s43, %s44
      %p58 = scmp.eq.s32.totalorder %s36, 1
      %p59 = por %p57, %p58
      %p61 = scmp.ne.s32.totalorder %s44, %s60
      %p62 = scmp.eq.s32.totalorder %s36, 0
      %p63 = por %p61, %p62
      %s65 = sadd.s32 %s64, 1
      %p68 = scmp.eq.s32.totalorder %s30, 1
      %p69 = scmp.ne.s32.totalorder %s64, %s66
      %p70 = scmp.eq.s32.totalorder %s30, 0
      %p71 = por %p69, %p70
      %p72 = scmp.ne.s32.totalorder %s64, %s66
      %p73 = scmp.eq.s32.totalorder %s35, 1
      %p74 = por %p72, %p73
      %p75 = scmp.ne.s32.totalorder %s66, %s67
      %p76 = scmp.eq.s32.totalorder %s35, 0
      %p77 = por %p75, %p76
      %p78 = scmp.ne.s32.totalorder %s66, %s67
      %p79 = scmp.eq.s32.totalorder %s36, 1
      %p80 = por %p78, %p79
      %p82 = scmp.ne.s32.totalorder %s67, %s81
      %p83 = scmp.eq.s32.totalorder %s36, 0
      %p84 = por %p82, %p83
      %s86 = sadd.s32 %s85, 1
      %p89 = scmp.eq.s32.totalorder %s30, 1
      %p90 = scmp.ne.s32.totalorder %s85, %s87
      %p91 = scmp.eq.s32.totalorder %s30, 0
      %p92 = por %p90, %p91
      %p93 = scmp.ne.s32.totalorder %s85, %s87
      %p94 = scmp.eq.s32.totalorder %s35, 1
      %p95 = por %p93, %p94
      %p96 = scmp.ne.s32.totalorder %s87, %s88
      %p97 = scmp.eq.s32.totalorder %s35, 0
      %p98 = por %p96, %p97
      %p99 = scmp.ne.s32.totalorder %s87, %s88
      %p100 = scmp.eq.s32.totalorder %s36, 1
      %p101 = por %p99, %p100
      %p103 = scmp.ne.s32.totalorder %s88, %s102
      %p104 = scmp.eq.s32.totalorder %s36, 0
      %p105 = por %p103, %p104
      %s107 = sadd.s32 %s106, 1
      %p110 = scmp.eq.s32.totalorder %s30, 1
      %p111 = scmp.ne.s32.totalorder %s106, %s108
      %p112 = scmp.eq.s32.totalorder %s30, 0
      %p113 = por %p111, %p112
      %p114 = scmp.ne.s32.totalorder %s106, %s108
      %p115 = scmp.eq.s32.totalorder %s35, 1
      %p116 = por %p114, %p115
      %p117 = scmp.ne.s32.totalorder %s108, %s109
      %p118 = scmp.eq.s32.totalorder %s35, 0
      %p119 = por %p117, %p118
      %p120 = scmp.ne.s32.totalorder %s108, %s109
      %p121 = scmp.eq.s32.totalorder %s36, 1
      %p122 = por %p120, %p121
      %p124 = scmp.ne.s32.totalorder %s109, %s123
      %p125 = scmp.eq.s32.totalorder %s36, 0
      %p126 = por %p124, %p125
      %s128 = sadd.s32 %s127, 1
      %p131 = scmp.eq.s32.totalorder %s30, 1
      %p132 = scmp.ne.s32.totalorder %s127, %s129
      %p133 = scmp.eq.s32.totalorder %s30, 0
      %p134 = por %p132, %p133
      %p135 = scmp.ne.s32.totalorder %s127, %s129
      %p136 = scmp.eq.s32.totalorder %s35, 1
      %p137 = por %p135, %p136
      %p138 = scmp.ne.s32.totalorder %s129, %s130
      %p139 = scmp.eq.s32.totalorder %s35, 0
      %p140 = por %p138, %p139
      %p141 = scmp.ne.s32.totalorder %s129, %s130
      %p142 = scmp.eq.s32.totalorder %s36, 1
      %p143 = por %p141, %p142
      %p145 = scmp.ne.s32.totalorder %s130, %s144
      %p146 = scmp.eq.s32.totalorder %s36, 0
      %p147 = por %p145, %p146
      %s149 = sadd.s32 %s148, 1
      %p152 = scmp.eq.s32.totalorder %s30, 1
      %p153 = scmp.ne.s32.totalorder %s148, %s150
      %p154 = scmp.eq.s32.totalorder %s30, 0
      %p155 = por %p153, %p154
      %p156 = scmp.ne.s32.totalorder %s148, %s150
      %p157 = scmp.eq.s32.totalorder %s35, 1
      %p158 = por %p156, %p157
      %p159 = scmp.ne.s32.totalorder %s150, %s151
      %p160 = scmp.eq.s32.totalorder %s35, 0
      %p161 = por %p159, %p160
      %p162 = scmp.ne.s32.totalorder %s150, %s151
      %p163 = scmp.eq.s32.totalorder %s36, 1
      %p164 = por %p162, %p163
      %p166 = scmp.ne.s32.totalorder %s151, %s165
      %p167 = scmp.eq.s32.totalorder %s36, 0
      %p168 = por %p166, %p167
      %s170 = sadd.s32 %s169, 1
      %p173 = scmp.eq.s32.totalorder %s30, 1
      %p174 = scmp.ne.s32.totalorder %s169, %s171
      %p175 = scmp.eq.s32.totalorder %s30, 0
      %p176 = por %p174, %p175
      %p177 = scmp.ne.s32.totalorder %s169, %s171
      %p178 = scmp.eq.s32.totalorder %s35, 1
      %p179 = por %p177, %p178
      %p180 = scmp.ne.s32.totalorder %s171, %s172
      %p181 = scmp.eq.s32.totalorder %s35, 0
      %p182 = por %p180, %p181
      %p183 = scmp.ne.s32.totalorder %s171, %s172
      %p184 = scmp.eq.s32.totalorder %s36, 1
      %p185 = por %p183, %p184
      %p187 = scmp.ne.s32.totalorder %s172, %s186
      %p188 = scmp.eq.s32.totalorder %s36, 0
      %p189 = por %p187, %p188
      %s191 = sadd.s32 %s190, 1
      %p194 = scmp.eq.s32.totalorder %s30, 1
      %p195 = scmp.ne.s32.totalorder %s190, %s192
      %p196 = scmp.eq.s32.totalorder %s30, 0
      %p197 = por %p195, %p196
      %p198 = scmp.ne.s32.totalorder %s190, %s192
      %p199 = scmp.eq.s32.totalorder %s35, 1
      %p200 = por %p198, %p199
      %p201 = scmp.ne.s32.totalorder %s192, %s193
      %p202 = scmp.eq.s32.totalorder %s35, 0
      %p203 = por %p201, %p202
      %p204 = scmp.ne.s32.totalorder %s192, %s193
      %p205 = scmp.eq.s32.totalorder %s36, 1
      %p206 = por %p204, %p205
      %p208 = scmp.ne.s32.totalorder %s193, %s207
      %p209 = scmp.eq.s32.totalorder %s36, 0
      %p210 = por %p208, %p209
      %s212 = sadd.s32 %s211, 1
      %p215 = scmp.eq.s32.totalorder %s30, 1
      %p216 = scmp.ne.s32.totalorder %s211, %s213
      %p217 = scmp.eq.s32.totalorder %s30, 0
      %p218 = por %p216, %p217
      %p219 = scmp.ne.s32.totalorder %s211, %s213
      %p220 = scmp.eq.s32.totalorder %s35, 1
      %p221 = por %p219, %p220
      %p222 = scmp.ne.s32.totalorder %s213, %s214
      %p223 = scmp.eq.s32.totalorder %s35, 0
      %p224 = por %p222, %p223
      %p225 = scmp.ne.s32.totalorder %s213, %s214
      %p226 = scmp.eq.s32.totalorder %s36, 1
      %p227 = por %p225, %p226
      %p229 = scmp.ne.s32.totalorder %s214, %s228
      %p230 = scmp.eq.s32.totalorder %s36, 0
      %p231 = por %p229, %p230
      %s233 = sadd.s32 %s232, 1
      %p236 = scmp.eq.s32.totalorder %s30, 1
      %p237 = scmp.ne.s32.totalorder %s232, %s234
      %p238 = scmp.eq.s32.totalorder %s30, 0
      %p239 = por %p237, %p238
      %p240 = scmp.ne.s32.totalorder %s232, %s234
      %p241 = scmp.eq.s32.totalorder %s35, 1
      %p242 = por %p240, %p241
      %p243 = scmp.ne.s32.totalorder %s234, %s235
      %p244 = scmp.eq.s32.totalorder %s35, 0
      %p245 = por %p243, %p244
      %p246 = scmp.ne.s32.totalorder %s234, %s235
      %p247 = scmp.eq.s32.totalorder %s36, 1
      %p248 = por %p246, %p247
      %p250 = scmp.ne.s32.totalorder %s235, %s249
      %p251 = scmp.eq.s32.totalorder %s36, 0
      %p252 = por %p250, %p251
      %s254 = sadd.s32 %s253, 1
      %p257 = scmp.eq.s32.totalorder %s30, 1
      %p258 = scmp.ne.s32.totalorder %s253, %s255
      %p259 = scmp.eq.s32.totalorder %s30, 0
      %p260 = por %p258, %p259
      %p261 = scmp.ne.s32.totalorder %s253, %s255
      %p262 = scmp.eq.s32.totalorder %s35, 1
      %p263 = por %p261, %p262
      %p264 = scmp.ne.s32.totalorder %s255, %s256
      %p265 = scmp.eq.s32.totalorder %s35, 0
      %p266 = por %p264, %p265
      %p267 = scmp.ne.s32.totalorder %s255, %s256
      %p268 = scmp.eq.s32.totalorder %s36, 1
      %p269 = por %p267, %p268
      %p271 = scmp.ne.s32.totalorder %s256, %s270
      %p272 = scmp.eq.s32.totalorder %s36, 0
      %p273 = por %p271, %p272
      %s274 = ssub.s32 %s30, %s37
      %p275 = scmp.eq.s32.totalorder %s274, 0
      %s277 = sadd.s32 %s276, 1
      %s278 = scalar_select %p275, %s276, %s277
      %p281 = pneg %p275
      %p282 = scmp.eq.s32.totalorder %s30, 1
      %p283 = por %p281, %p282
      %p284 = scmp.ne.s32.totalorder %s276, %s279
      %p285 = scmp.eq.s32.totalorder %s30, 0
      %p286 = por %p284, %p285
      %p287 = scmp.ne.s32.totalorder %s276, %s279
      %p288 = scmp.eq.s32.totalorder %s35, 1
      %p289 = por %p287, %p288
      %p290 = scmp.ne.s32.totalorder %s279, %s280
      %p291 = scmp.eq.s32.totalorder %s35, 0
      %p292 = por %p290, %p291
      %p293 = scmp.ne.s32.totalorder %s279, %s280
      %p294 = scmp.eq.s32.totalorder %s36, 1
      %p295 = por %p293, %p294
      %p297 = scmp.ne.s32.totalorder %s280, %s296
      %p298 = scmp.eq.s32.totalorder %s36, 0
      %p299 = por %p297, %p298
      %p300 = scmp.le.s32.totalorder 1, %s30
      %p301 = scmp.lt.s32.totalorder %s30, 3
      %p302 = pnand %p300, %p301
      %p303 = pneg %p302
      // Predicated region
      $region9: #{ember_mlp_forward.1} parent=5 // pred_check
        _
      $region10: #{ember_mlp_forward.1} parent=5 // pred_check_branch
        %305 = sbr.rel (%p302) target = $region12
      $region11: #{ember_mlp_forward.1} parent=5 // pred_region
        %s306 = ssub.s32 %s30, 1
        // Predicated region
        $region13: #{ember_mlp_forward.1} parent=11 // pred_check
          %p307 = pneg %p77
        $region14: #{ember_mlp_forward.1} parent=11 // pred_check_branch
          %309 = sbr.rel (%p307) target = $region16
        $region15: #{ember_mlp_forward.1} parent=11 // pred_region
          %s311 = ssub.s32 16384, 16384
          %312 = vsyncadd [#allocation7], %s311
          %s313 = sshll.u32 [#allocation6], 4
          %s314 = int_to_ptr.vmem [resolvable:$true] %s313
          %319 = dma.hbm_to_vmem [thread:$0]  %s1, 16384, %s314, [#allocation7], 512, 512, 32
        $region16: #{ember_mlp_forward.1} parent=11 // pred_fallthru
          _
        // Predicated region
        $region17: #{ember_mlp_forward.1} parent=11 // pred_check
          %p320 = pneg %p98
        $region18: #{ember_mlp_forward.1} parent=11 // pred_check_branch
          %322 = sbr.rel (%p320) target = $region20
        $region19: #{ember_mlp_forward.1} parent=11 // pred_region
          %s324 = ssub.s32 128, 128
          %325 = vsyncadd [#allocation7], %s324
          %s327 = sshll.u32 [#allocation8], 4
          %s328 = int_to_ptr.vmem [resolvable:$true] %s327
          %330 = dma.hbm_to_vmem [thread:$0]  %s2, 128, %s328, [#allocation7]
        $region20: #{ember_mlp_forward.1} parent=11 // pred_fallthru
          _
        // Predicated region
        $region21: #{ember_mlp_forward.1} parent=11 // pred_check
          %p331 = pneg %p119
        $region22: #{ember_mlp_forward.1} parent=11 // pred_check_branch
          %333 = sbr.rel (%p331) target = $region24
        $region23: #{ember_mlp_forward.1} parent=11 // pred_region
          %s335 = ssub.s32 32768, 32768
          %336 = vsyncadd [#allocation10], %s335
          %s337 = sshll.u32 [#allocation9], 4
          %s338 = int_to_ptr.vmem [resolvable:$true] %s337
          %343 = dma.hbm_to_vmem [thread:$0]  %s3, 32768, %s338, [#allocation10], 256, 256, 16
        $region24: #{ember_mlp_forward.1} parent=11 // pred_fallthru
          _
        // Predicated region
        $region25: #{ember_mlp_forward.1} parent=11 // pred_check
          %p344 = pneg %p140
        $region26: #{ember_mlp_forward.1} parent=11 // pred_check_branch
          %346 = sbr.rel (%p344) target = $region28
        $region27: #{ember_mlp_forward.1} parent=11 // pred_region
          %s348 = ssub.s32 64, 64
          %349 = vsyncadd [#allocation10], %s348
          %s351 = sshll.u32 [#allocation11], 4
          %s352 = int_to_ptr.vmem [resolvable:$true] %s351
          %354 = dma.hbm_to_vmem [thread:$0]  %s4, 64, %s352, [#allocation10]
        $region28: #{ember_mlp_forward.1} parent=11 // pred_fallthru
          _
        // Predicated region
        $region29: #{ember_mlp_forward.1} parent=11 // pred_check
          %p355 = pneg %p161
        $region30: #{ember_mlp_forward.1} parent=11 // pred_check_branch
          %357 = sbr.rel (%p355) target = $region32
        $region31: #{ember_mlp_forward.1} parent=11 // pred_region
          %s359 = ssub.s32 8192, 8192
          %360 = vsyncadd [#allocation13], %s359
          %s361 = sshll.u32 [#allocation12], 4
          %s362 = int_to_ptr.vmem [resolvable:$true] %s361
          %367 = dma.hbm_to_vmem [thread:$0]  %s5, 8192, %s362, [#allocation13], 128, 128, 8
        $region32: #{ember_mlp_forward.1} parent=11 // pred_fallthru
          _
        // Predicated region
        $region33: #{ember_mlp_forward.1} parent=11 // pred_check
          %p368 = pneg %p182
        $region34: #{ember_mlp_forward.1} parent=11 // pred_check_branch
          %370 = sbr.rel (%p368) target = $region36
        $region35: #{ember_mlp_forward.1} parent=11 // pred_region
          %s372 = ssub.s32 32, 32
          %373 = vsyncadd [#allocation13], %s372
          %s375 = sshll.u32 [#allocation14], 4
          %s376 = int_to_ptr.vmem [resolvable:$true] %s375
          %378 = dma.hbm_to_vmem [thread:$0]  %s6, 32, %s376, [#allocation13]
        $region36: #{ember_mlp_forward.1} parent=11 // pred_fallthru
          _
        // Predicated region
        $region37: #{ember_mlp_forward.1} parent=11 // pred_check
          %p379 = pneg %p203
        $region38: #{ember_mlp_forward.1} parent=11 // pred_check_branch
          %381 = sbr.rel (%p379) target = $region40
        $region39: #{ember_mlp_forward.1} parent=11 // pred_region
          %s383 = ssub.s32 2048, 2048
          %384 = vsyncadd [#allocation16], %s383
          %s385 = sshll.u32 [#allocation15], 4
          %s386 = int_to_ptr.vmem [resolvable:$true] %s385
          %391 = dma.hbm_to_vmem [thread:$0]  %s7, 2048, %s386, [#allocation16], 64, 64, 4
        $region40: #{ember_mlp_forward.1} parent=11 // pred_fallthru
          _
        // Predicated region
        $region41: #{ember_mlp_forward.1} parent=11 // pred_check
          %p392 = pneg %p224
        $region42: #{ember_mlp_forward.1} parent=11 // pred_check_branch
          %394 = sbr.rel (%p392) target = $region44
        $region43: #{ember_mlp_forward.1} parent=11 // pred_region
          %s396 = ssub.s32 16, 16
          %397 = vsyncadd [#allocation16], %s396
          %s399 = sshll.u32 [#allocation17], 4
          %s400 = int_to_ptr.vmem [resolvable:$true] %s399
          %402 = dma.hbm_to_vmem [thread:$0]  %s8, 16, %s400, [#allocation16]
        $region44: #{ember_mlp_forward.1} parent=11 // pred_fallthru
          _
        // Predicated region
        $region45: #{ember_mlp_forward.1} parent=11 // pred_check
          %p403 = pneg %p245
        $region46: #{ember_mlp_forward.1} parent=11 // pred_check_branch
          %405 = sbr.rel (%p403) target = $region48
        $region47: #{ember_mlp_forward.1} parent=11 // pred_region
          %s407 = ssub.s32 2048, 2048
          %408 = vsyncadd [#allocation19], %s407
          %s409 = sshll.u32 [#allocation18], 4
          %s410 = int_to_ptr.vmem [resolvable:$true] %s409
          %415 = dma.hbm_to_vmem [thread:$0]  %s9, 2048, %s410, [#allocation19], 128, 128, 8
        $region48: #{ember_mlp_forward.1} parent=11 // pred_fallthru
          _
        // Predicated region
        $region49: #{ember_mlp_forward.1} parent=11 // pred_check
          %p416 = pneg %p266
        $region50: #{ember_mlp_forward.1} parent=11 // pred_check_branch
          %418 = sbr.rel (%p416) target = $region52
        $region51: #{ember_mlp_forward.1} parent=11 // pred_region
          _
        $region52: #{ember_mlp_forward.1} parent=11 // pred_fallthru
          _
      $region12: #{ember_mlp_forward.1} parent=5 // pred_fallthru
        _
      %p419 = scmp.lt.s32.totalorder %s30, 2
      // Predicated region
      $region53: #{ember_mlp_forward.1} parent=5 // pred_check
        %p420 = pneg %p419
      $region54: #{ember_mlp_forward.1} parent=5 // pred_check_branch
        %422 = sbr.rel (%p420) target = $region56
      $region55: #{ember_mlp_forward.1} parent=5 // pred_region
        // Predicated region
        $region57: #{ember_mlp_forward.1} parent=55 // pred_check
          %p423 = pneg %p50
        $region58: #{ember_mlp_forward.1} parent=55 // pred_check_branch
          %425 = sbr.rel (%p423) target = $region60
        $region59: #{ember_mlp_forward.1} parent=55 // pred_region
          %s426 = sand.u32 %s40, 1
          %s427 = scalar_lea.sflag [#allocation4], %s426
          %s428 = sand.u32 %s40, 1
          %s429 = smul.addr %s428, 512
          %s430 = scalar_lea.vmem [#allocation3], %s429
          %s431 = smul.u32 32, %s30
          %s433 = ssub.s32 8192, 8192
          %434 = vsyncadd %s427, %s433
          %s435 = smul.addr %s431, 2
          %s436 = smul.addr %s435, 128
          %s437 = scalar_lea.hbm %s0, %s436
          %s438 = sshll.u32 %s430, 4
          %s439 = int_to_ptr.vmem [resolvable:$true] %s438
          %444 = dma.hbm_to_vmem [thread:$0]  %s437, 8192, %s439, %s427, 256, 256, 16
        $region60: #{ember_mlp_forward.1} parent=55 // pred_fallthru
          _
      $region56: #{ember_mlp_forward.1} parent=5 // pred_fallthru
        _
      %p445 = scmp.le.s32.totalorder 1, %s30
      %p446 = scmp.lt.s32.totalorder %s30, 3
      %p447 = pnand %p445, %p446
      %p448 = pneg %p447
      // Predicated region
      $region61: #{ember_mlp_forward.1} parent=5 // pred_check
        _
      $region62: #{ember_mlp_forward.1} parent=5 // pred_check_branch
        %450 = sbr.rel (%p447) target = $region64
      $region63: #{ember_mlp_forward.1} parent=5 // pred_region
        %s451 = ssub.s32 %s30, 1
        %s452 = sand.u32 %s43, 1
        %s453 = scalar_lea.sflag [#allocation4], %s452
        %s454 = sand.u32 %s43, 1
        %s455 = smul.addr %s454, 512
        %s456 = scalar_lea.vmem [#allocation3], %s455
        // Predicated region
        $region65: #{ember_mlp_forward.1} parent=63 // pred_check
          %p457 = pneg %p56
        $region66: #{ember_mlp_forward.1} parent=63 // pred_check_branch
          %459 = sbr.rel (%p457) target = $region68
        $region67: #{ember_mlp_forward.1} parent=63 // pred_region
          %460 = dma.done %s453, 8192
        $region68: #{ember_mlp_forward.1} parent=63 // pred_fallthru
          _
        // Predicated region
        $region69: #{ember_mlp_forward.1} parent=63 // pred_check
          %p461 = pneg %p77
        $region70: #{ember_mlp_forward.1} parent=63 // pred_check_branch
          %463 = sbr.rel (%p461) target = $region72
        $region71: #{ember_mlp_forward.1} parent=63 // pred_region
          %464 = dma.done [#allocation7], 16384
        $region72: #{ember_mlp_forward.1} parent=63 // pred_fallthru
          _
        // Predicated region
        $region73: #{ember_mlp_forward.1} parent=63 // pred_check
          %p465 = pneg %p98
        $region74: #{ember_mlp_forward.1} parent=63 // pred_check_branch
          %467 = sbr.rel (%p465) target = $region76
        $region75: #{ember_mlp_forward.1} parent=63 // pred_region
          %468 = dma.done [#allocation7], 128
        $region76: #{ember_mlp_forward.1} parent=63 // pred_fallthru
          _
        // Predicated region
        $region77: #{ember_mlp_forward.1} parent=63 // pred_check
          %p469 = pneg %p119
        $region78: #{ember_mlp_forward.1} parent=63 // pred_check_branch
          %471 = sbr.rel (%p469) target = $region80
        $region79: #{ember_mlp_forward.1} parent=63 // pred_region
          %472 = dma.done [#allocation10], 32768
        $region80: #{ember_mlp_forward.1} parent=63 // pred_fallthru
          _
        // Predicated region
        $region81: #{ember_mlp_forward.1} parent=63 // pred_check
          %p473 = pneg %p140
        $region82: #{ember_mlp_forward.1} parent=63 // pred_check_branch
          %475 = sbr.rel (%p473) target = $region84
        $region83: #{ember_mlp_forward.1} parent=63 // pred_region
          %476 = dma.done [#allocation10], 64
        $region84: #{ember_mlp_forward.1} parent=63 // pred_fallthru
          _
        // Predicated region
        $region85: #{ember_mlp_forward.1} parent=63 // pred_check
          %p477 = pneg %p161
        $region86: #{ember_mlp_forward.1} parent=63 // pred_check_branch
          %479 = sbr.rel (%p477) target = $region88
        $region87: #{ember_mlp_forward.1} parent=63 // pred_region
          %480 = dma.done [#allocation13], 8192
        $region88: #{ember_mlp_forward.1} parent=63 // pred_fallthru
          _
        // Predicated region
        $region89: #{ember_mlp_forward.1} parent=63 // pred_check
          %p481 = pneg %p182
        $region90: #{ember_mlp_forward.1} parent=63 // pred_check_branch
          %483 = sbr.rel (%p481) target = $region92
        $region91: #{ember_mlp_forward.1} parent=63 // pred_region
          %484 = dma.done [#allocation13], 32
        $region92: #{ember_mlp_forward.1} parent=63 // pred_fallthru
          _
        // Predicated region
        $region93: #{ember_mlp_forward.1} parent=63 // pred_check
          %p485 = pneg %p203
        $region94: #{ember_mlp_forward.1} parent=63 // pred_check_branch
          %487 = sbr.rel (%p485) target = $region96
        $region95: #{ember_mlp_forward.1} parent=63 // pred_region
          %488 = dma.done [#allocation16], 2048
        $region96: #{ember_mlp_forward.1} parent=63 // pred_fallthru
          _
        // Predicated region
        $region97: #{ember_mlp_forward.1} parent=63 // pred_check
          %p489 = pneg %p224
        $region98: #{ember_mlp_forward.1} parent=63 // pred_check_branch
          %491 = sbr.rel (%p489) target = $region100
        $region99: #{ember_mlp_forward.1} parent=63 // pred_region
          %492 = dma.done [#allocation16], 16
        $region100: #{ember_mlp_forward.1} parent=63 // pred_fallthru
          _
        // Predicated region
        $region101: #{ember_mlp_forward.1} parent=63 // pred_check
          %p493 = pneg %p245
        $region102: #{ember_mlp_forward.1} parent=63 // pred_check_branch
          %495 = sbr.rel (%p493) target = $region104
        $region103: #{ember_mlp_forward.1} parent=63 // pred_region
          %496 = dma.done [#allocation19], 2048
        $region104: #{ember_mlp_forward.1} parent=63 // pred_fallthru
          _
        %s497 = sand.u32 %s43, 1
        %s498 = scalar_lea.sflag [#allocation4], %s497
        %s499 = sand.u32 %s43, 1
        %s500 = smul.addr %s499, 512
        %s501 = scalar_lea.vmem [#allocation3], %s500
        %p502 = pneg %p56
        %p503 = pneg %p53
        %p504 = pneg %p77
        %p505 = pneg %p74
        %p506 = pneg %p98
        %p507 = pneg %p95
        %p508 = pneg %p119
        %p509 = pneg %p116
        %p510 = pneg %p140
        %p511 = pneg %p137
        %p512 = pneg %p161
        %p513 = pneg %p158
        %p514 = pneg %p182
        %p515 = pneg %p179
        %p516 = pneg %p203
        %p517 = pneg %p200
        %p518 = pneg %p224
        %p519 = pneg %p221
        %p520 = pneg %p245
        %p521 = pneg %p242
        %p522 = pneg %p266
        %p523 = pneg %p263
        %p524 = pneg %p292
        %p525 = pneg %p289
        %s526 = sand.u32 %s279, 1
        %s527 = scalar_lea.sflag [#allocation5], %s526
        %s528 = sand.u32 %s279, 1
        %s529 = smul.addr %s528, 2
        %s530 = scalar_lea.vmem [#allocation20], %s529
        %s531 = smul.u32 32, %s35
        %s532 = smul.u32 2, %s35
        %v534 = vld [vmem:[%s456] sm:$0xff]
        %v535 = vld [vmem:[%s456 + $0x8] sm:$0xff]
        %v536 = vld [vmem:[%s456 + $0x10] sm:$0xff]
        %v537 = vld [vmem:[%s456 + $0x18] sm:$0xff]
        %v538 = vld [vmem:[%s456 + $0x20] sm:$0xff]
        %v539 = vld [vmem:[%s456 + $0x28] sm:$0xff]
        %v540 = vld [vmem:[%s456 + $0x30] sm:$0xff]
        %v541 = vld [vmem:[%s456 + $0x38] sm:$0xff]
        %v542 = vld [vmem:[%s456 + $0x40] sm:$0xff]
        %v543 = vld [vmem:[%s456 + $0x48] sm:$0xff]
        %v544 = vld [vmem:[%s456 + $0x50] sm:$0xff]
        %v545 = vld [vmem:[%s456 + $0x58] sm:$0xff]
        %v546 = vld [vmem:[%s456 + $0x60] sm:$0xff]
        %v547 = vld [vmem:[%s456 + $0x68] sm:$0xff]
        %v548 = vld [vmem:[%s456 + $0x70] sm:$0xff]
        %v549 = vld [vmem:[%s456 + $0x78] sm:$0xff]
        %v550 = vld [vmem:[%s456 + $0x80] sm:$0xff]
        %v551 = vld [vmem:[%s456 + $0x88] sm:$0xff]
        %v552 = vld [vmem:[%s456 + $0x90] sm:$0xff]
        %v553 = vld [vmem:[%s456 + $0x98] sm:$0xff]
        %v554 = vld [vmem:[%s456 + $0xa0] sm:$0xff]
        %v555 = vld [vmem:[%s456 + $0xa8] sm:$0xff]
        %v556 = vld [vmem:[%s456 + $0xb0] sm:$0xff]
        %v557 = vld [vmem:[%s456 + $0xb8] sm:$0xff]
        %v558 = vld [vmem:[%s456 + $0xc0] sm:$0xff]
        %v559 = vld [vmem:[%s456 + $0xc8] sm:$0xff]
        %v560 = vld [vmem:[%s456 + $0xd0] sm:$0xff]
        %v561 = vld [vmem:[%s456 + $0xd8] sm:$0xff]
        %v562 = vld [vmem:[%s456 + $0xe0] sm:$0xff]
        %v563 = vld [vmem:[%s456 + $0xe8] sm:$0xff]
        %v564 = vld [vmem:[%s456 + $0xf0] sm:$0xff]
        %v565 = vld [vmem:[%s456 + $0xf8] sm:$0xff]
        %v566 = vld [vmem:[%s456 + $0x100] sm:$0xff]
        %v567 = vld [vmem:[%s456 + $0x108] sm:$0xff]
        %v568 = vld [vmem:[%s456 + $0x110] sm:$0xff]
        %v569 = vld [vmem:[%s456 + $0x118] sm:$0xff]
        %v570 = vld [vmem:[%s456 + $0x120] sm:$0xff]
        %v571 = vld [vmem:[%s456 + $0x128] sm:$0xff]
        %v572 = vld [vmem:[%s456 + $0x130] sm:$0xff]
        %v573 = vld [vmem:[%s456 + $0x138] sm:$0xff]
        %v574 = vld [vmem:[%s456 + $0x140] sm:$0xff]
        %v575 = vld [vmem:[%s456 + $0x148] sm:$0xff]
        %v576 = vld [vmem:[%s456 + $0x150] sm:$0xff]
        %v577 = vld [vmem:[%s456 + $0x158] sm:$0xff]
        %v578 = vld [vmem:[%s456 + $0x160] sm:$0xff]
        %v579 = vld [vmem:[%s456 + $0x168] sm:$0xff]
        %v580 = vld [vmem:[%s456 + $0x170] sm:$0xff]
        %v581 = vld [vmem:[%s456 + $0x178] sm:$0xff]
        %v582 = vld [vmem:[%s456 + $0x180] sm:$0xff]
        %v583 = vld [vmem:[%s456 + $0x188] sm:$0xff]
        %v584 = vld [vmem:[%s456 + $0x190] sm:$0xff]
        %v585 = vld [vmem:[%s456 + $0x198] sm:$0xff]
        %v586 = vld [vmem:[%s456 + $0x1a0] sm:$0xff]
        %v587 = vld [vmem:[%s456 + $0x1a8] sm:$0xff]
        %v588 = vld [vmem:[%s456 + $0x1b0] sm:$0xff]
        %v589 = vld [vmem:[%s456 + $0x1b8] sm:$0xff]
        %v590 = vld [vmem:[%s456 + $0x1c0] sm:$0xff]
        %v591 = vld [vmem:[%s456 + $0x1c8] sm:$0xff]
        %v592 = vld [vmem:[%s456 + $0x1d0] sm:$0xff]
        %v593 = vld [vmem:[%s456 + $0x1d8] sm:$0xff]
        %v594 = vld [vmem:[%s456 + $0x1e0] sm:$0xff]
        %v595 = vld [vmem:[%s456 + $0x1e8] sm:$0xff]
        %v596 = vld [vmem:[%s456 + $0x1f0] sm:$0xff]
        %v597 = vld [vmem:[%s456 + $0x1f8] sm:$0xff]
        %v598 = vpack.c.bf16 %v536, %v534
        %v599 = vpack.c.bf16 %v537, %v535
        %v600 = vpack.c.bf16 %v540, %v538
        %v601 = vpack.c.bf16 %v541, %v539
        %v602 = vpack.c.bf16 %v544, %v542
        %v603 = vpack.c.bf16 %v545, %v543
        %v604 = vpack.c.bf16 %v548, %v546
        %v605 = vpack.c.bf16 %v549, %v547
        %v606 = vpack.c.bf16 %v552, %v550
        %v607 = vpack.c.bf16 %v553, %v551
        %v608 = vpack.c.bf16 %v556, %v554
        %v609 = vpack.c.bf16 %v557, %v555
        %v610 = vpack.c.bf16 %v560, %v558
        %v611 = vpack.c.bf16 %v561, %v559
        %v612 = vpack.c.bf16 %v564, %v562
        %v613 = vpack.c.bf16 %v565, %v563
        %v614 = vpack.c.bf16 %v568, %v566
        %v615 = vpack.c.bf16 %v569, %v567
        %v616 = vpack.c.bf16 %v572, %v570
        %v617 = vpack.c.bf16 %v573, %v571
        %v618 = vpack.c.bf16 %v576, %v574
        %v619 = vpack.c.bf16 %v577, %v575
        %v620 = vpack.c.bf16 %v580, %v578
        %v621 = vpack.c.bf16 %v581, %v579
        %v622 = vpack.c.bf16 %v584, %v582
        %v623 = vpack.c.bf16 %v585, %v583
        %v624 = vpack.c.bf16 %v588, %v586
        %v625 = vpack.c.bf16 %v589, %v587
        %v626 = vpack.c.bf16 %v592, %v590
        %v627 = vpack.c.bf16 %v593, %v591
        %v628 = vpack.c.bf16 %v596, %v594
        %v629 = vpack.c.bf16 %v597, %v595
        %v630 = vld [vmem:[#allocation6] sm:$0xff]
        %v631 = vld [vmem:[#allocation6 + $0x8] sm:$0xff]
        %v632 = vld [vmem:[#allocation6 + $0x10] sm:$0xff]
        %v633 = vld [vmem:[#allocation6 + $0x18] sm:$0xff]
        %v634 = vld [vmem:[#allocation6 + $0x20] sm:$0xff]
        %v635 = vld [vmem:[#allocation6 + $0x28] sm:$0xff]
        %v636 = vld [vmem:[#allocation6 + $0x30] sm:$0xff]
        %v637 = vld [vmem:[#allocation6 + $0x38] sm:$0xff]
        %v638 = vld [vmem:[#allocation6 + $0x40] sm:$0xff]
        %v639 = vld [vmem:[#allocation6 + $0x48] sm:$0xff]
        %v640 = vld [vmem:[#allocation6 + $0x50] sm:$0xff]
        %v641 = vld [vmem:[#allocation6 + $0x58] sm:$0xff]
        %v642 = vld [vmem:[#allocation6 + $0x60] sm:$0xff]
        %v643 = vld [vmem:[#allocation6 + $0x68] sm:$0xff]
        %v644 = vld [vmem:[#allocation6 + $0x70] sm:$0xff]
        %v645 = vld [vmem:[#allocation6 + $0x78] sm:$0xff]
        %v646 = vld [vmem:[#allocation6 + $0x80] sm:$0xff]
        %v647 = vld [vmem:[#allocation6 + $0x88] sm:$0xff]
        %v648 = vld [vmem:[#allocation6 + $0x90] sm:$0xff]
        %v649 = vld [vmem:[#allocation6 + $0x98] sm:$0xff]
        %v650 = vld [vmem:[#allocation6 + $0xa0] sm:$0xff]
        %v651 = vld [vmem:[#allocation6 + $0xa8] sm:$0xff]
        %v652 = vld [vmem:[#allocation6 + $0xb0] sm:$0xff]
        %v653 = vld [vmem:[#allocation6 + $0xb8] sm:$0xff]
        %v654 = vld [vmem:[#allocation6 + $0xc0] sm:$0xff]
        %v655 = vld [vmem:[#allocation6 + $0xc8] sm:$0xff]
        %v656 = vld [vmem:[#allocation6 + $0xd0] sm:$0xff]
        %v657 = vld [vmem:[#allocation6 + $0xd8] sm:$0xff]
        %v658 = vld [vmem:[#allocation6 + $0xe0] sm:$0xff]
        %v659 = vld [vmem:[#allocation6 + $0xe8] sm:$0xff]
        %v660 = vld [vmem:[#allocation6 + $0xf0] sm:$0xff]
        %v661 = vld [vmem:[#allocation6 + $0xf8] sm:$0xff]
        %v662 = vld [vmem:[#allocation6 + $0x100] sm:$0xff]
        %v663 = vld [vmem:[#allocation6 + $0x108] sm:$0xff]
        %v664 = vld [vmem:[#allocation6 + $0x110] sm:$0xff]
        %v665 = vld [vmem:[#allocation6 + $0x118] sm:$0xff]
        %v666 = vld [vmem:[#allocation6 + $0x120] sm:$0xff]
        %v667 = vld [vmem:[#allocation6 + $0x128] sm:$0xff]
        %v668 = vld [vmem:[#allocation6 + $0x130] sm:$0xff]
        %v669 = vld [vmem:[#allocation6 + $0x138] sm:$0xff]
        %v670 = vld [vmem:[#allocation6 + $0x140] sm:$0xff]
        %v671 = vld [vmem:[#allocation6 + $0x148] sm:$0xff]
        %v672 = vld [vmem:[#allocation6 + $0x150] sm:$0xff]
        %v673 = vld [vmem:[#allocation6 + $0x158] sm:$0xff]
        %v674 = vld [vmem:[#allocation6 + $0x160] sm:$0xff]
        %v675 = vld [vmem:[#allocation6 + $0x168] sm:$0xff]
        %v676 = vld [vmem:[#allocation6 + $0x170] sm:$0xff]
        %v677 = vld [vmem:[#allocation6 + $0x178] sm:$0xff]
        %v678 = vld [vmem:[#allocation6 + $0x180] sm:$0xff]
        %v679 = vld [vmem:[#allocation6 + $0x188] sm:$0xff]
        %v680 = vld [vmem:[#allocation6 + $0x190] sm:$0xff]
        %v681 = vld [vmem:[#allocation6 + $0x198] sm:$0xff]
        %v682 = vld [vmem:[#allocation6 + $0x1a0] sm:$0xff]
        %v683 = vld [vmem:[#allocation6 + $0x1a8] sm:$0xff]
        %v684 = vld [vmem:[#allocation6 + $0x1b0] sm:$0xff]
        %v685 = vld [vmem:[#allocation6 + $0x1b8] sm:$0xff]
        %v686 = vld [vmem:[#allocation6 + $0x1c0] sm:$0xff]
        %v687 = vld [vmem:[#allocation6 + $0x1c8] sm:$0xff]
        %v688 = vld [vmem:[#allocation6 + $0x1d0] sm:$0xff]
        %v689 = vld [vmem:[#allocation6 + $0x1d8] sm:$0xff]
        %v690 = vld [vmem:[#allocation6 + $0x1e0] sm:$0xff]
        %v691 = vld [vmem:[#allocation6 + $0x1e8] sm:$0xff]
        %v692 = vld [vmem:[#allocation6 + $0x1f0] sm:$0xff]
        %v693 = vld [vmem:[#allocation6 + $0x1f8] sm:$0xff]
        %v694 = vld [vmem:[#allocation6 + $0x200] sm:$0xff]
        %v695 = vld [vmem:[#allocation6 + $0x208] sm:$0xff]
        %v696 = vld [vmem:[#allocation6 + $0x210] sm:$0xff]
        %v697 = vld [vmem:[#allocation6 + $0x218] sm:$0xff]
        %v698 = vld [vmem:[#allocation6 + $0x220] sm:$0xff]
        %v699 = vld [vmem:[#allocation6 + $0x228] sm:$0xff]
        %v700 = vld [vmem:[#allocation6 + $0x230] sm:$0xff]
        %v701 = vld [vmem:[#allocation6 + $0x238] sm:$0xff]
        %v702 = vld [vmem:[#allocation6 + $0x240] sm:$0xff]
        %v703 = vld [vmem:[#allocation6 + $0x248] sm:$0xff]
        %v704 = vld [vmem:[#allocation6 + $0x250] sm:$0xff]
        %v705 = vld [vmem:[#allocation6 + $0x258] sm:$0xff]
        %v706 = vld [vmem:[#allocation6 + $0x260] sm:$0xff]
        %v707 = vld [vmem:[#allocation6 + $0x268] sm:$0xff]
        %v708 = vld [vmem:[#allocation6 + $0x270] sm:$0xff]
        %v709 = vld [vmem:[#allocation6 + $0x278] sm:$0xff]
        %v710 = vld [vmem:[#allocation6 + $0x280] sm:$0xff]
        %v711 = vld [vmem:[#allocation6 + $0x288] sm:$0xff]
        %v712 = vld [vmem:[#allocation6 + $0x290] sm:$0xff]
        %v713 = vld [vmem:[#allocation6 + $0x298] sm:$0xff]
        %v714 = vld [vmem:[#allocation6 + $0x2a0] sm:$0xff]
        %v715 = vld [vmem:[#allocation6 + $0x2a8] sm:$0xff]
        %v716 = vld [vmem:[#allocation6 + $0x2b0] sm:$0xff]
        %v717 = vld [vmem:[#allocation6 + $0x2b8] sm:$0xff]
        %v718 = vld [vmem:[#allocation6 + $0x2c0] sm:$0xff]
        %v719 = vld [vmem:[#allocation6 + $0x2c8] sm:$0xff]
        %v720 = vld [vmem:[#allocation6 + $0x2d0] sm:$0xff]
        %v721 = vld [vmem:[#allocation6 + $0x2d8] sm:$0xff]
        %v722 = vld [vmem:[#allocation6 + $0x2e0] sm:$0xff]
        %v723 = vld [vmem:[#allocation6 + $0x2e8] sm:$0xff]
        %v724 = vld [vmem:[#allocation6 + $0x2f0] sm:$0xff]
        %v725 = vld [vmem:[#allocation6 + $0x2f8] sm:$0xff]
        %v726 = vld [vmem:[#allocation6 + $0x300] sm:$0xff]
        %v727 = vld [vmem:[#allocation6 + $0x308] sm:$0xff]
        %v728 = vld [vmem:[#allocation6 + $0x310] sm:$0xff]
        %v729 = vld [vmem:[#allocation6 + $0x318] sm:$0xff]
        %v730 = vld [vmem:[#allocation6 + $0x320] sm:$0xff]
        %v731 = vld [vmem:[#allocation6 + $0x328] sm:$0xff]
        %v732 = vld [vmem:[#allocation6 + $0x330] sm:$0xff]
        %v733 = vld [vmem:[#allocation6 + $0x338] sm:$0xff]
        %v734 = vld [vmem:[#allocation6 + $0x340] sm:$0xff]
        %v735 = vld [vmem:[#allocation6 + $0x348] sm:$0xff]
        %v736 = vld [vmem:[#allocation6 + $0x350] sm:$0xff]
        %v737 = vld [vmem:[#allocation6 + $0x358] sm:$0xff]
        %v738 = vld [vmem:[#allocation6 + $0x360] sm:$0xff]
        %v739 = vld [vmem:[#allocation6 + $0x368] sm:$0xff]
        %v740 = vld [vmem:[#allocation6 + $0x370] sm:$0xff]
        %v741 = vld [vmem:[#allocation6 + $0x378] sm:$0xff]
        %v742 = vld [vmem:[#allocation6 + $0x380] sm:$0xff]
        %v743 = vld [vmem:[#allocation6 + $0x388] sm:$0xff]
        %v744 = vld [vmem:[#allocation6 + $0x390] sm:$0xff]
        %v745 = vld [vmem:[#allocation6 + $0x398] sm:$0xff]
        %v746 = vld [vmem:[#allocation6 + $0x3a0] sm:$0xff]
        %v747 = vld [vmem:[#allocation6 + $0x3a8] sm:$0xff]
        %v748 = vld [vmem:[#allocation6 + $0x3b0] sm:$0xff]
        %v749 = vld [vmem:[#allocation6 + $0x3b8] sm:$0xff]
        %v750 = vld [vmem:[#allocation6 + $0x3c0] sm:$0xff]
        %v751 = vld [vmem:[#allocation6 + $0x3c8] sm:$0xff]
        %v752 = vld [vmem:[#allocation6 + $0x3d0] sm:$0xff]
        %v753 = vld [vmem:[#allocation6 + $0x3d8] sm:$0xff]
        %v754 = vld [vmem:[#allocation6 + $0x3e0] sm:$0xff]
        %v755 = vld [vmem:[#allocation6 + $0x3e8] sm:$0xff]
        %v756 = vld [vmem:[#allocation6 + $0x3f0] sm:$0xff]
        %v757 = vld [vmem:[#allocation6 + $0x3f8] sm:$0xff]
        %v758 = vld [vmem:[#allocation8] sm:$0xff]
        %v760 = vlaneseq
        %v761 = vshrl.u32 %v760, 7
        %v762 = vsub.s32 0, %v761
        %v763 = vrot.slane %v758, %v762
        %v764 = vlaneseq
        %v765 = vshrl.u32 %v764, 7
        %v766 = vsub.s32 1, %v765
        %v767 = vrot.slane %v758, %v766
        %v768 = vlaneseq
        %v769 = vshrl.u32 %v768, 7
        %v770 = vsub.s32 2, %v769
        %v771 = vrot.slane %v758, %v770
        %v772 = vlaneseq
        %v773 = vshrl.u32 %v772, 7
        %v774 = vsub.s32 3, %v773
        %v775 = vrot.slane %v758, %v774
        %v776 = vlaneseq
        %v777 = vshrl.u32 %v776, 7
        %v778 = vsub.s32 4, %v777
        %v779 = vrot.slane %v758, %v778
        %v780 = vlaneseq
        %v781 = vshrl.u32 %v780, 7
        %v782 = vsub.s32 5, %v781
        %v783 = vrot.slane %v758, %v782
        %v784 = vlaneseq
        %v785 = vshrl.u32 %v784, 7
        %v786 = vsub.s32 6, %v785
        %v787 = vrot.slane %v758, %v786
        %v788 = vlaneseq
        %v789 = vshrl.u32 %v788, 7
        %v790 = vsub.s32 7, %v789
        %v791 = vrot.slane %v758, %v790
        %v928 = vunpack.c.l.b16 %v630
        %v929 = vunpack.c.h.b16 %v630
        %v930 = vunpack.c.l.b16 %v631
        %v931 = vunpack.c.h.b16 %v631
        %v932 = vunpack.c.l.b16 %v632
        %v933 = vunpack.c.h.b16 %v632
        %v934 = vunpack.c.l.b16 %v633
        %v935 = vunpack.c.h.b16 %v633
        %v936 = vunpack.c.l.b16 %v634
        %v937 = vunpack.c.h.b16 %v634
        %v938 = vunpack.c.l.b16 %v635
        %v939 = vunpack.c.h.b16 %v635
        %v940 = vunpack.c.l.b16 %v636
        %v941 = vunpack.c.h.b16 %v636
        %v942 = vunpack.c.l.b16 %v637
        %v943 = vunpack.c.h.b16 %v637
        %v944 = vunpack.c.l.b16 %v638
        %v945 = vunpack.c.h.b16 %v638
        %v946 = vunpack.c.l.b16 %v639
        %v947 = vunpack.c.h.b16 %v639
        %v948 = vunpack.c.l.b16 %v640
        %v949 = vunpack.c.h.b16 %v640
        %v950 = vunpack.c.l.b16 %v641
        %v951 = vunpack.c.h.b16 %v641
        %v952 = vunpack.c.l.b16 %v642
        %v953 = vunpack.c.h.b16 %v642
        %v954 = vunpack.c.l.b16 %v643
        %v955 = vunpack.c.h.b16 %v643
        %v956 = vunpack.c.l.b16 %v644
        %v957 = vunpack.c.h.b16 %v644
        %v958 = vunpack.c.l.b16 %v645
        %v959 = vunpack.c.h.b16 %v645
        %v960 = vunpack.c.l.b16 %v646
        %v961 = vunpack.c.h.b16 %v646
        %v962 = vunpack.c.l.b16 %v647
        %v963 = vunpack.c.h.b16 %v647
        %v964 = vunpack.c.l.b16 %v648
        %v965 = vunpack.c.h.b16 %v648
        %v966 = vunpack.c.l.b16 %v649
        %v967 = vunpack.c.h.b16 %v649
        %v968 = vunpack.c.l.b16 %v650
        %v969 = vunpack.c.h.b16 %v650
        %v970 = vunpack.c.l.b16 %v651
        %v971 = vunpack.c.h.b16 %v651
        %v972 = vunpack.c.l.b16 %v652
        %v973 = vunpack.c.h.b16 %v652
        %v974 = vunpack.c.l.b16 %v653
        %v975 = vunpack.c.h.b16 %v653
        %v976 = vunpack.c.l.b16 %v654
        %v977 = vunpack.c.h.b16 %v654
        %v978 = vunpack.c.l.b16 %v655
        %v979 = vunpack.c.h.b16 %v655
        %v980 = vunpack.c.l.b16 %v656
        %v981 = vunpack.c.h.b16 %v656
        %v982 = vunpack.c.l.b16 %v657
        %v983 = vunpack.c.h.b16 %v657
        %v984 = vunpack.c.l.b16 %v658
        %v985 = vunpack.c.h.b16 %v658
        %v986 = vunpack.c.l.b16 %v659
        %v987 = vunpack.c.h.b16 %v659
        %v988 = vunpack.c.l.b16 %v660
        %v989 = vunpack.c.h.b16 %v660
        %v990 = vunpack.c.l.b16 %v661
        %v991 = vunpack.c.h.b16 %v661
        %v992 = vunpack.c.l.b16 %v662
        %v993 = vunpack.c.h.b16 %v662
        %v994 = vunpack.c.l.b16 %v663
        %v995 = vunpack.c.h.b16 %v663
        %v996 = vunpack.c.l.b16 %v664
        %v997 = vunpack.c.h.b16 %v664
        %v998 = vunpack.c.l.b16 %v665
        %v999 = vunpack.c.h.b16 %v665
        %v1000 = vunpack.c.l.b16 %v666
        %v1001 = vunpack.c.h.b16 %v666
        %v1002 = vunpack.c.l.b16 %v667
        %v1003 = vunpack.c.h.b16 %v667
        %v1004 = vunpack.c.l.b16 %v668
        %v1005 = vunpack.c.h.b16 %v668
        %v1006 = vunpack.c.l.b16 %v669
        %v1007 = vunpack.c.h.b16 %v669
        %v1008 = vunpack.c.l.b16 %v670
        %v1009 = vunpack.c.h.b16 %v670
        %v1010 = vunpack.c.l.b16 %v671
        %v1011 = vunpack.c.h.b16 %v671
        %v1012 = vunpack.c.l.b16 %v672
        %v1013 = vunpack.c.h.b16 %v672
        %v1014 = vunpack.c.l.b16 %v673
        %v1015 = vunpack.c.h.b16 %v673
        %v1016 = vunpack.c.l.b16 %v674
        %v1017 = vunpack.c.h.b16 %v674
        %v1018 = vunpack.c.l.b16 %v675
        %v1019 = vunpack.c.h.b16 %v675
        %v1020 = vunpack.c.l.b16 %v676
        %v1021 = vunpack.c.h.b16 %v676
        %v1022 = vunpack.c.l.b16 %v677
        %v1023 = vunpack.c.h.b16 %v677
        %v1024 = vunpack.c.l.b16 %v678
        %v1025 = vunpack.c.h.b16 %v678
        %v1026 = vunpack.c.l.b16 %v679
        %v1027 = vunpack.c.h.b16 %v679
        %v1028 = vunpack.c.l.b16 %v680
        %v1029 = vunpack.c.h.b16 %v680
        %v1030 = vunpack.c.l.b16 %v681
        %v1031 = vunpack.c.h.b16 %v681
        %v1032 = vunpack.c.l.b16 %v682
        %v1033 = vunpack.c.h.b16 %v682
        %v1034 = vunpack.c.l.b16 %v683
        %v1035 = vunpack.c.h.b16 %v683
        %v1036 = vunpack.c.l.b16 %v684
        %v1037 = vunpack.c.h.b16 %v684
        %v1038 = vunpack.c.l.b16 %v685
        %v1039 = vunpack.c.h.b16 %v685
        %v1040 = vunpack.c.l.b16 %v686
        %v1041 = vunpack.c.h.b16 %v686
        %v1042 = vunpack.c.l.b16 %v687
        %v1043 = vunpack.c.h.b16 %v687
        %v1044 = vunpack.c.l.b16 %v688
        %v1045 = vunpack.c.h.b16 %v688
        %v1046 = vunpack.c.l.b16 %v689
        %v1047 = vunpack.c.h.b16 %v689
        %v1048 = vunpack.c.l.b16 %v690
        %v1049 = vunpack.c.h.b16 %v690
        %v1050 = vunpack.c.l.b16 %v691
        %v1051 = vunpack.c.h.b16 %v691
        %v1052 = vunpack.c.l.b16 %v692
        %v1053 = vunpack.c.h.b16 %v692
        %v1054 = vunpack.c.l.b16 %v693
        %v1055 = vunpack.c.h.b16 %v693
        %v1056 = vunpack.c.l.b16 %v694
        %v1057 = vunpack.c.h.b16 %v694
        %v1058 = vunpack.c.l.b16 %v695
        %v1059 = vunpack.c.h.b16 %v695
        %v1060 = vunpack.c.l.b16 %v696
        %v1061 = vunpack.c.h.b16 %v696
        %v1062 = vunpack.c.l.b16 %v697
        %v1063 = vunpack.c.h.b16 %v697
        %v1064 = vunpack.c.l.b16 %v698
        %v1065 = vunpack.c.h.b16 %v698
        %v1066 = vunpack.c.l.b16 %v699
        %v1067 = vunpack.c.h.b16 %v699
        %v1068 = vunpack.c.l.b16 %v700
        %v1069 = vunpack.c.h.b16 %v700
        %v1070 = vunpack.c.l.b16 %v701
        %v1071 = vunpack.c.h.b16 %v701
        %v1072 = vunpack.c.l.b16 %v702
        %v1073 = vunpack.c.h.b16 %v702
        %v1074 = vunpack.c.l.b16 %v703
        %v1075 = vunpack.c.h.b16 %v703
        %v1076 = vunpack.c.l.b16 %v704
        %v1077 = vunpack.c.h.b16 %v704
        %v1078 = vunpack.c.l.b16 %v705
        %v1079 = vunpack.c.h.b16 %v705
        %v1080 = vunpack.c.l.b16 %v706
        %v1081 = vunpack.c.h.b16 %v706
        %v1082 = vunpack.c.l.b16 %v707
        %v1083 = vunpack.c.h.b16 %v707
        %v1084 = vunpack.c.l.b16 %v708
        %v1085 = vunpack.c.h.b16 %v708
        %v1086 = vunpack.c.l.b16 %v709
        %v1087 = vunpack.c.h.b16 %v709
        %v1088 = vunpack.c.l.b16 %v710
        %v1089 = vunpack.c.h.b16 %v710
        %v1090 = vunpack.c.l.b16 %v711
        %v1091 = vunpack.c.h.b16 %v711
        %v1092 = vunpack.c.l.b16 %v712
        %v1093 = vunpack.c.h.b16 %v712
        %v1094 = vunpack.c.l.b16 %v713
        %v1095 = vunpack.c.h.b16 %v713
        %v1096 = vunpack.c.l.b16 %v714
        %v1097 = vunpack.c.h.b16 %v714
        %v1098 = vunpack.c.l.b16 %v715
        %v1099 = vunpack.c.h.b16 %v715
        %v1100 = vunpack.c.l.b16 %v716
        %v1101 = vunpack.c.h.b16 %v716
        %v1102 = vunpack.c.l.b16 %v717
        %v1103 = vunpack.c.h.b16 %v717
        %v1104 = vunpack.c.l.b16 %v718
        %v1105 = vunpack.c.h.b16 %v718
        %v1106 = vunpack.c.l.b16 %v719
        %v1107 = vunpack.c.h.b16 %v719
        %v1108 = vunpack.c.l.b16 %v720
        %v1109 = vunpack.c.h.b16 %v720
        %v1110 = vunpack.c.l.b16 %v721
        %v1111 = vunpack.c.h.b16 %v721
        %v1112 = vunpack.c.l.b16 %v722
        %v1113 = vunpack.c.h.b16 %v722
        %v1114 = vunpack.c.l.b16 %v723
        %v1115 = vunpack.c.h.b16 %v723
        %v1116 = vunpack.c.l.b16 %v724
        %v1117 = vunpack.c.h.b16 %v724
        %v1118 = vunpack.c.l.b16 %v725
        %v1119 = vunpack.c.h.b16 %v725
        %v1120 = vunpack.c.l.b16 %v726
        %v1121 = vunpack.c.h.b16 %v726
        %v1122 = vunpack.c.l.b16 %v727
        %v1123 = vunpack.c.h.b16 %v727
        %v1124 = vunpack.c.l.b16 %v728
        %v1125 = vunpack.c.h.b16 %v728
        %v1126 = vunpack.c.l.b16 %v729
        %v1127 = vunpack.c.h.b16 %v729
        %v1128 = vunpack.c.l.b16 %v730
        %v1129 = vunpack.c.h.b16 %v730
        %v1130 = vunpack.c.l.b16 %v731
        %v1131 = vunpack.c.h.b16 %v731
        %v1132 = vunpack.c.l.b16 %v732
        %v1133 = vunpack.c.h.b16 %v732
        %v1134 = vunpack.c.l.b16 %v733
        %v1135 = vunpack.c.h.b16 %v733
        %v1136 = vunpack.c.l.b16 %v734
        %v1137 = vunpack.c.h.b16 %v734
        %v1138 = vunpack.c.l.b16 %v735
        %v1139 = vunpack.c.h.b16 %v735
        %v1140 = vunpack.c.l.b16 %v736
        %v1141 = vunpack.c.h.b16 %v736
        %v1142 = vunpack.c.l.b16 %v737
        %v1143 = vunpack.c.h.b16 %v737
        %v1144 = vunpack.c.l.b16 %v738
        %v1145 = vunpack.c.h.b16 %v738
        %v1146 = vunpack.c.l.b16 %v739
        %v1147 = vunpack.c.h.b16 %v739
        %v1148 = vunpack.c.l.b16 %v740
        %v1149 = vunpack.c.h.b16 %v740
        %v1150 = vunpack.c.l.b16 %v741
        %v1151 = vunpack.c.h.b16 %v741
        %v1152 = vunpack.c.l.b16 %v742
        %v1153 = vunpack.c.h.b16 %v742
        %v1154 = vunpack.c.l.b16 %v743
        %v1155 = vunpack.c.h.b16 %v743
        %v1156 = vunpack.c.l.b16 %v744
        %v1157 = vunpack.c.h.b16 %v744
        %v1158 = vunpack.c.l.b16 %v745
        %v1159 = vunpack.c.h.b16 %v745
        %v1160 = vunpack.c.l.b16 %v746
        %v1161 = vunpack.c.h.b16 %v746
        %v1162 = vunpack.c.l.b16 %v747
        %v1163 = vunpack.c.h.b16 %v747
        %v1164 = vunpack.c.l.b16 %v748
        %v1165 = vunpack.c.h.b16 %v748
        %v1166 = vunpack.c.l.b16 %v749
        %v1167 = vunpack.c.h.b16 %v749
        %v1168 = vunpack.c.l.b16 %v750
        %v1169 = vunpack.c.h.b16 %v750
        %v1170 = vunpack.c.l.b16 %v751
        %v1171 = vunpack.c.h.b16 %v751
        %v1172 = vunpack.c.l.b16 %v752
        %v1173 = vunpack.c.h.b16 %v752
        %v1174 = vunpack.c.l.b16 %v753
        %v1175 = vunpack.c.h.b16 %v753
        %v1176 = vunpack.c.l.b16 %v754
        %v1177 = vunpack.c.h.b16 %v754
        %v1178 = vunpack.c.l.b16 %v755
        %v1179 = vunpack.c.h.b16 %v755
        %v1180 = vunpack.c.l.b16 %v756
        %v1181 = vunpack.c.h.b16 %v756
        %v1182 = vunpack.c.l.b16 %v757
        %v1183 = vunpack.c.h.b16 %v757
        %v1184 = vpack.c.b16 %v936, %v928
        %v1185 = vpack.c.b16 %v937, %v929
        %v1186 = vpack.c.b16 %v938, %v930
        %v1187 = vpack.c.b16 %v939, %v931
        %v1188 = vpack.c.b16 %v940, %v932
        %v1189 = vpack.c.b16 %v941, %v933
        %v1190 = vpack.c.b16 %v942, %v934
        %v1191 = vpack.c.b16 %v943, %v935
        %v1192 = vpack.c.b16 %v952, %v944
        %v1193 = vpack.c.b16 %v953, %v945
        %v1194 = vpack.c.b16 %v954, %v946
        %v1195 = vpack.c.b16 %v955, %v947
        %v1196 = vpack.c.b16 %v956, %v948
        %v1197 = vpack.c.b16 %v957, %v949
        %v1198 = vpack.c.b16 %v958, %v950
        %v1199 = vpack.c.b16 %v959, %v951
        %v1200 = vpack.c.b16 %v968, %v960
        %v1201 = vpack.c.b16 %v969, %v961
        %v1202 = vpack.c.b16 %v970, %v962
        %v1203 = vpack.c.b16 %v971, %v963
        %v1204 = vpack.c.b16 %v972, %v964
        %v1205 = vpack.c.b16 %v973, %v965
        %v1206 = vpack.c.b16 %v974, %v966
        %v1207 = vpack.c.b16 %v975, %v967
        %v1208 = vpack.c.b16 %v984, %v976
        %v1209 = vpack.c.b16 %v985, %v977
        %v1210 = vpack.c.b16 %v986, %v978
        %v1211 = vpack.c.b16 %v987, %v979
        %v1212 = vpack.c.b16 %v988, %v980
        %v1213 = vpack.c.b16 %v989, %v981
        %v1214 = vpack.c.b16 %v990, %v982
        %v1215 = vpack.c.b16 %v991, %v983
        %v1216 = vpack.c.b16 %v1000, %v992
        %v1217 = vpack.c.b16 %v1001, %v993
        %v1218 = vpack.c.b16 %v1002, %v994
        %v1219 = vpack.c.b16 %v1003, %v995
        %v1220 = vpack.c.b16 %v1004, %v996
        %v1221 = vpack.c.b16 %v1005, %v997
        %v1222 = vpack.c.b16 %v1006, %v998
        %v1223 = vpack.c.b16 %v1007, %v999
        %v1224 = vpack.c.b16 %v1016, %v1008
        %v1225 = vpack.c.b16 %v1017, %v1009
        %v1226 = vpack.c.b16 %v1018, %v1010
        %v1227 = vpack.c.b16 %v1019, %v1011
        %v1228 = vpack.c.b16 %v1020, %v1012
        %v1229 = vpack.c.b16 %v1021, %v1013
        %v1230 = vpack.c.b16 %v1022, %v1014
        %v1231 = vpack.c.b16 %v1023, %v1015
        %v1232 = vpack.c.b16 %v1032, %v1024
        %v1233 = vpack.c.b16 %v1033, %v1025
        %v1234 = vpack.c.b16 %v1034, %v1026
        %v1235 = vpack.c.b16 %v1035, %v1027
        %v1236 = vpack.c.b16 %v1036, %v1028
        %v1237 = vpack.c.b16 %v1037, %v1029
        %v1238 = vpack.c.b16 %v1038, %v1030
        %v1239 = vpack.c.b16 %v1039, %v1031
        %v1240 = vpack.c.b16 %v1048, %v1040
        %v1241 = vpack.c.b16 %v1049, %v1041
        %v1242 = vpack.c.b16 %v1050, %v1042
        %v1243 = vpack.c.b16 %v1051, %v1043
        %v1244 = vpack.c.b16 %v1052, %v1044
        %v1245 = vpack.c.b16 %v1053, %v1045
        %v1246 = vpack.c.b16 %v1054, %v1046
        %v1247 = vpack.c.b16 %v1055, %v1047
        %v1248 = vpack.c.b16 %v1064, %v1056
        %v1249 = vpack.c.b16 %v1065, %v1057
        %v1250 = vpack.c.b16 %v1066, %v1058
        %v1251 = vpack.c.b16 %v1067, %v1059
        %v1252 = vpack.c.b16 %v1068, %v1060
        %v1253 = vpack.c.b16 %v1069, %v1061
        %v1254 = vpack.c.b16 %v1070, %v1062
        %v1255 = vpack.c.b16 %v1071, %v1063
        %v1256 = vpack.c.b16 %v1080, %v1072
        %v1257 = vpack.c.b16 %v1081, %v1073
        %v1258 = vpack.c.b16 %v1082, %v1074
        %v1259 = vpack.c.b16 %v1083, %v1075
        %v1260 = vpack.c.b16 %v1084, %v1076
        %v1261 = vpack.c.b16 %v1085, %v1077
        %v1262 = vpack.c.b16 %v1086, %v1078
        %v1263 = vpack.c.b16 %v1087, %v1079
        %v1264 = vpack.c.b16 %v1096, %v1088
        %v1265 = vpack.c.b16 %v1097, %v1089
        %v1266 = vpack.c.b16 %v1098, %v1090
        %v1267 = vpack.c.b16 %v1099, %v1091
        %v1268 = vpack.c.b16 %v1100, %v1092
        %v1269 = vpack.c.b16 %v1101, %v1093
        %v1270 = vpack.c.b16 %v1102, %v1094
        %v1271 = vpack.c.b16 %v1103, %v1095
        %v1272 = vpack.c.b16 %v1112, %v1104
        %v1273 = vpack.c.b16 %v1113, %v1105
        %v1274 = vpack.c.b16 %v1114, %v1106
        %v1275 = vpack.c.b16 %v1115, %v1107
        %v1276 = vpack.c.b16 %v1116, %v1108
        %v1277 = vpack.c.b16 %v1117, %v1109
        %v1278 = vpack.c.b16 %v1118, %v1110
        %v1279 = vpack.c.b16 %v1119, %v1111
        %v1280 = vpack.c.b16 %v1128, %v1120
        %v1281 = vpack.c.b16 %v1129, %v1121
        %v1282 = vpack.c.b16 %v1130, %v1122
        %v1283 = vpack.c.b16 %v1131, %v1123
        %v1284 = vpack.c.b16 %v1132, %v1124
        %v1285 = vpack.c.b16 %v1133, %v1125
        %v1286 = vpack.c.b16 %v1134, %v1126
        %v1287 = vpack.c.b16 %v1135, %v1127
        %v1288 = vpack.c.b16 %v1144, %v1136
        %v1289 = vpack.c.b16 %v1145, %v1137
        %v1290 = vpack.c.b16 %v1146, %v1138
        %v1291 = vpack.c.b16 %v1147, %v1139
        %v1292 = vpack.c.b16 %v1148, %v1140
        %v1293 = vpack.c.b16 %v1149, %v1141
        %v1294 = vpack.c.b16 %v1150, %v1142
        %v1295 = vpack.c.b16 %v1151, %v1143
        %v1296 = vpack.c.b16 %v1160, %v1152
        %v1297 = vpack.c.b16 %v1161, %v1153
        %v1298 = vpack.c.b16 %v1162, %v1154
        %v1299 = vpack.c.b16 %v1163, %v1155
        %v1300 = vpack.c.b16 %v1164, %v1156
        %v1301 = vpack.c.b16 %v1165, %v1157
        %v1302 = vpack.c.b16 %v1166, %v1158
        %v1303 = vpack.c.b16 %v1167, %v1159
        %v1304 = vpack.c.b16 %v1176, %v1168
        %v1305 = vpack.c.b16 %v1177, %v1169
        %v1306 = vpack.c.b16 %v1178, %v1170
        %v1307 = vpack.c.b16 %v1179, %v1171
        %v1308 = vpack.c.b16 %v1180, %v1172
        %v1309 = vpack.c.b16 %v1181, %v1173
        %v1310 = vpack.c.b16 %v1182, %v1174
        %v1311 = vpack.c.b16 %v1183, %v1175
        %1440 = vmatprep.subr.bf16.mxu0 %v1185
        %1441 = vmatpush1.bf16.msra.mxu0 %v1184
        %1442 = vmatprep.subr.bf16.mxu0 %v1193
        %1443 = vmatpush1.bf16.msra.mxu0 %v1192
        %1444 = vmatprep.subr.bf16.mxu0 %v1201
        %1445 = vmatpush1.bf16.msra.mxu0 %v1200
        %1446 = vmatprep.subr.bf16.mxu0 %v1209
        %1447 = vmatpush1.bf16.msra.mxu0 %v1208
        %1448 = vmatprep.subr.bf16.mxu0 %v1217
        %1449 = vmatpush1.bf16.msra.mxu0 %v1216
        %1450 = vmatprep.subr.bf16.mxu0 %v1225
        %1451 = vmatpush1.bf16.msra.mxu0 %v1224
        %1452 = vmatprep.subr.bf16.mxu0 %v1233
        %1453 = vmatpush1.bf16.msra.mxu0 %v1232
        %1454 = vmatprep.subr.bf16.mxu0 %v1241
        %1455 = vmatpush1.bf16.msra.mxu0 %v1240
        %1456 = vmatprep.subr.bf16.mxu0 %v1249
        %1457 = vmatpush1.bf16.msra.mxu0 %v1248
        %1458 = vmatprep.subr.bf16.mxu0 %v1257
        %1459 = vmatpush1.bf16.msra.mxu0 %v1256
        %1460 = vmatprep.subr.bf16.mxu0 %v1265
        %1461 = vmatpush1.bf16.msra.mxu0 %v1264
        %1462 = vmatprep.subr.bf16.mxu0 %v1273
        %1463 = vmatpush1.bf16.msra.mxu0 %v1272
        %1464 = vmatprep.subr.bf16.mxu0 %v1281
        %1465 = vmatpush1.bf16.msra.mxu0 %v1280
        %1466 = vmatprep.subr.bf16.mxu0 %v1289
        %1467 = vmatpush1.bf16.msra.mxu0 %v1288
        %1468 = vmatprep.subr.bf16.mxu0 %v1297
        %1469 = vmatpush1.bf16.msra.mxu0 %v1296
        %1470 = vmatprep.subr.bf16.mxu0 %v1305
        %1471 = vmatpush1.bf16.msra.mxu0 %v1304
        %1472 = vmatprep.mubr.bf16.mxu0 %v599
        %1473 = vmatmul.mubr.bf16.gmra.mrb[0].mxu0 %v598
        %v1474 = vpop.f32.mrb[0].mxu0
        %v1475 = vadd.f32 %v763, %v1474
        %v1476 = vpop.f32.mrb[0].mxu0
        %v1477 = vadd.f32 %v767, %v1476
        %v1478 = vpop.f32.mrb[0].mxu0
        %v1479 = vadd.f32 %v763, %v1478
        %v1480 = vpop.f32.mrb[0].mxu0
        %v1481 = vadd.f32 %v767, %v1480
        %1482 = vmatprep.mubr.bf16.mxu0 %v601
        %1483 = vmatmul.mubr.bf16.gmra.mrb[0].mxu0 %v600
        %v1484 = vpop.f32.mrb[0].mxu0
        %v1485 = vadd.f32 %v763, %v1484
        %v1486 = vpop.f32.mrb[0].mxu0
        %v1487 = vadd.f32 %v767, %v1486
        %v1488 = vpop.f32.mrb[0].mxu0
        %v1489 = vadd.f32 %v763, %v1488
        %v1490 = vpop.f32.mrb[0].mxu0
        %v1491 = vadd.f32 %v767, %v1490
        %1492 = vmatprep.mubr.bf16.mxu0 %v603
        %1493 = vmatmul.mubr.bf16.gmra.mrb[0].mxu0 %v602
        %v1494 = vpop.f32.mrb[0].mxu0
        %v1495 = vadd.f32 %v763, %v1494
        %v1496 = vpop.f32.mrb[0].mxu0
        %v1497 = vadd.f32 %v767, %v1496
        %v1498 = vpop.f32.mrb[0].mxu0
        %v1499 = vadd.f32 %v763, %v1498
        %v1500 = vpop.f32.mrb[0].mxu0
        %v1501 = vadd.f32 %v767, %v1500
        %1502 = vmatprep.mubr.bf16.mxu0 %v605
        %1503 = vmatmul.mubr.bf16.gmra.mrb[0].mxu0 %v604
        %v1504 = vpop.f32.mrb[0].mxu0
        %v1505 = vadd.f32 %v763, %v1504
        %v1506 = vpop.f32.mrb[0].mxu0
        %v1507 = vadd.f32 %v767, %v1506
        %v1508 = vpop.f32.mrb[0].mxu0
        %v1509 = vadd.f32 %v763, %v1508
        %v1510 = vpop.f32.mrb[0].mxu0
        %v1511 = vadd.f32 %v767, %v1510
        %1512 = vmatprep.mubr.bf16.mxu0 %v607
        %1513 = vmatmul.mubr.bf16.gmra.mrb[0].mxu0 %v606
        %v1514 = vpop.f32.mrb[0].mxu0
        %v1515 = vadd.f32 %v763, %v1514
        %v1516 = vpop.f32.mrb[0].mxu0
        %v1517 = vadd.f32 %v767, %v1516
        %v1518 = vpop.f32.mrb[0].mxu0
        %v1519 = vadd.f32 %v763, %v1518
        %v1520 = vpop.f32.mrb[0].mxu0
        %v1521 = vadd.f32 %v767, %v1520
        %1522 = vmatprep.mubr.bf16.mxu0 %v609
        %1523 = vmatmul.mubr.bf16.gmra.mrb[0].mxu0 %v608
        %v1524 = vpop.f32.mrb[0].mxu0
        %v1525 = vadd.f32 %v763, %v1524
        %v1526 = vpop.f32.mrb[0].mxu0
        %v1527 = vadd.f32 %v767, %v1526
        %v1528 = vpop.f32.mrb[0].mxu0
        %v1529 = vadd.f32 %v763, %v1528
        %v1530 = vpop.f32.mrb[0].mxu0
        %v1531 = vadd.f32 %v767, %v1530
        %1532 = vmatprep.mubr.bf16.mxu0 %v611
        %1533 = vmatmul.mubr.bf16.gmra.mrb[0].mxu0 %v610
        %v1534 = vpop.f32.mrb[0].mxu0
        %v1535 = vadd.f32 %v763, %v1534
        %v1536 = vpop.f32.mrb[0].mxu0
        %v1537 = vadd.f32 %v767, %v1536
        %v1538 = vpop.f32.mrb[0].mxu0
        %v1539 = vadd.f32 %v763, %v1538
        %v1540 = vpop.f32.mrb[0].mxu0
        %v1541 = vadd.f32 %v767, %v1540
        %1542 = vmatprep.mubr.bf16.mxu0 %v613
        %1543 = vmatmul.mubr.bf16.gmra.mrb[0].mxu0 %v612
        %v1544 = vpop.f32.mrb[0].mxu0
        %v1545 = vadd.f32 %v763, %v1544
        %v1546 = vpop.f32.mrb[0].mxu0
        %v1547 = vadd.f32 %v767, %v1546
        %v1548 = vpop.f32.mrb[0].mxu0
        %v1549 = vadd.f32 %v763, %v1548
        %v1550 = vpop.f32.mrb[0].mxu0
        %v1551 = vadd.f32 %v767, %v1550
        %1552 = vmatprep.mubr.bf16.mxu0 %v615
        %1553 = vmatmul.mubr.bf16.gmra.mrb[0].mxu0 %v614
        %v1554 = vpop.f32.mrb[0].mxu0
        %v1555 = vadd.f32 %v763, %v1554
        %v1556 = vpop.f32.mrb[0].mxu0
        %v1557 = vadd.f32 %v767, %v1556
        %v1558 = vpop.f32.mrb[0].mxu0
        %v1559 = vadd.f32 %v763, %v1558
        %v1560 = vpop.f32.mrb[0].mxu0
        %v1561 = vadd.f32 %v767, %v1560
        %1562 = vmatprep.mubr.bf16.mxu0 %v617
        %1563 = vmatmul.mubr.bf16.gmra.mrb[0].mxu0 %v616
        %v1564 = vpop.f32.mrb[0].mxu0
        %v1565 = vadd.f32 %v763, %v1564
        %v1566 = vpop.f32.mrb[0].mxu0
        %v1567 = vadd.f32 %v767, %v1566
        %v1568 = vpop.f32.mrb[0].mxu0
        %v1569 = vadd.f32 %v763, %v1568
        %v1570 = vpop.f32.mrb[0].mxu0
        %v1571 = vadd.f32 %v767, %v1570
        %1572 = vmatprep.mubr.bf16.mxu0 %v619
        %1573 = vmatmul.mubr.bf16.gmra.mrb[0].mxu0 %v618
        %v1574 = vpop.f32.mrb[0].mxu0
        %v1575 = vadd.f32 %v763, %v1574
        %v1576 = vpop.f32.mrb[0].mxu0
        %v1577 = vadd.f32 %v767, %v1576
        %v1578 = vpop.f32.mrb[0].mxu0
        %v1579 = vadd.f32 %v763, %v1578
        %v1580 = vpop.f32.mrb[0].mxu0
        %v1581 = vadd.f32 %v767, %v1580
        %1582 = vmatprep.mubr.bf16.mxu0 %v621
        %1583 = vmatmul.mubr.bf16.gmra.mrb[0].mxu0 %v620
        %v1584 = vpop.f32.mrb[0].mxu0
        %v1585 = vadd.f32 %v763, %v1584
        %v1586 = vpop.f32.mrb[0].mxu0
        %v1587 = vadd.f32 %v767, %v1586
        %v1588 = vpop.f32.mrb[0].mxu0
        %v1589 = vadd.f32 %v763, %v1588
        %v1590 = vpop.f32.mrb[0].mxu0
        %v1591 = vadd.f32 %v767, %v1590
        %1592 = vmatprep.mubr.bf16.mxu0 %v623
        %1593 = vmatmul.mubr.bf16.gmra.mrb[0].mxu0 %v622
        %v1594 = vpop.f32.mrb[0].mxu0
        %v1595 = vadd.f32 %v763, %v1594
        %v1596 = vpop.f32.mrb[0].mxu0
        %v1597 = vadd.f32 %v767, %v1596
        %v1598 = vpop.f32.mrb[0].mxu0
        %v1599 = vadd.f32 %v763, %v1598
        %v1600 = vpop.f32.mrb[0].mxu0
        %v1601 = vadd.f32 %v767, %v1600
        %1602 = vmatprep.mubr.bf16.mxu0 %v625
        %1603 = vmatmul.mubr.bf16.gmra.mrb[0].mxu0 %v624
        %v1604 = vpop.f32.mrb[0].mxu0
        %v1605 = vadd.f32 %v763, %v1604
        %v1606 = vpop.f32.mrb[0].mxu0
        %v1607 = vadd.f32 %v767, %v1606
        %v1608 = vpop.f32.mrb[0].mxu0
        %v1609 = vadd.f32 %v763, %v1608
        %v1610 = vpop.f32.mrb[0].mxu0
        %v1611 = vadd.f32 %v767, %v1610
        %1612 = vmatprep.mubr.bf16.mxu0 %v627
        %1613 = vmatmul.mubr.bf16.gmra.mrb[0].mxu0 %v626
        %v1614 = vpop.f32.mrb[0].mxu0
        %v1615 = vadd.f32 %v763, %v1614
        %v1616 = vpop.f32.mrb[0].mxu0
        %v1617 = vadd.f32 %v767, %v1616
        %v1618 = vpop.f32.mrb[0].mxu0
        %v1619 = vadd.f32 %v763, %v1618
        %v1620 = vpop.f32.mrb[0].mxu0
        %v1621 = vadd.f32 %v767, %v1620
        %1622 = vmatprep.mubr.bf16.mxu0 %v629
        %1623 = vmatmul.mubr.bf16.gmra.mrb[0].mxu0 %v628
        %v1624 = vpop.f32.mrb[0].mxu0
        %v1625 = vadd.f32 %v763, %v1624
        %v1626 = vpop.f32.mrb[0].mxu0
        %v1627 = vadd.f32 %v767, %v1626
        %v1628 = vpop.f32.mrb[0].mxu0
        %v1629 = vadd.f32 %v763, %v1628
        %v1630 = vpop.f32.mrb[0].mxu0
        %v1631 = vadd.f32 %v767, %v1630
        %1632 = vdwg.mxu0
        %1633 = vmatprep.subr.bf16.mxu0 %v1187
        %1634 = vmatpush1.bf16.msra.mxu0 %v1186
        %1635 = vmatprep.subr.bf16.mxu0 %v1195
        %1636 = vmatpush1.bf16.msra.mxu0 %v1194
        %1637 = vmatprep.subr.bf16.mxu0 %v1203
        %1638 = vmatpush1.bf16.msra.mxu0 %v1202
        %1639 = vmatprep.subr.bf16.mxu0 %v1211
        %1640 = vmatpush1.bf16.msra.mxu0 %v1210
        %1641 = vmatprep.subr.bf16.mxu0 %v1219
        %1642 = vmatpush1.bf16.msra.mxu0 %v1218
        %1643 = vmatprep.subr.bf16.mxu0 %v1227
        %1644 = vmatpush1.bf16.msra.mxu0 %v1226
        %1645 = vmatprep.subr.bf16.mxu0 %v1235
        %1646 = vmatpush1.bf16.msra.mxu0 %v1234
        %1647 = vmatprep.subr.bf16.mxu0 %v1243
        %1648 = vmatpush1.bf16.msra.mxu0 %v1242
        %1649 = vmatprep.subr.bf16.mxu0 %v1251
        %1650 = vmatpush1.bf16.msra.mxu0 %v1250
        %1651 = vmatprep.subr.bf16.mxu0 %v1259
        %1652 = vmatpush1.bf16.msra.mxu0 %v1258
        %1653 = vmatprep.subr.bf16.mxu0 %v1267
        %1654 = vmatpush1.bf16.msra.mxu0 %v1266
        %1655 = vmatprep.subr.bf16.mxu0 %v1275
        %1656 = vmatpush1.bf16.msra.mxu0 %v1274
        %1657 = vmatprep.subr.bf16.mxu0 %v1283
        %1658 = vmatpush1.bf16.msra.mxu0 %v1282
        %1659 = vmatprep.subr.bf16.mxu0 %v1291
        %1660 = vmatpush1.bf16.msra.mxu0 %v1290
        %1661 = vmatprep.subr.bf16.mxu0 %v1299
        %1662 = vmatpush1.bf16.msra.mxu0 %v1298
        %1663 = vmatprep.subr.bf16.mxu0 %v1307
        %1664 = vmatpush1.bf16.msra.mxu0 %v1306
        %1665 = vmatprep.mubr.bf16.mxu0 %v599
        %1666 = vmatmul.mubr.bf16.gmra.mrb[0].mxu0 %v598
        %v1667 = vpop.f32.mrb[0].mxu0
        %v1668 = vadd.f32 %v771, %v1667
        %v1669 = vpop.f32.mrb[0].mxu0
        %v1670 = vadd.f32 %v775, %v1669
        %v1671 = vpop.f32.mrb[0].mxu0
        %v1672 = vadd.f32 %v771, %v1671
        %v1673 = vpop.f32.mrb[0].mxu0
        %v1674 = vadd.f32 %v775, %v1673
        %1675 = vmatprep.mubr.bf16.mxu0 %v601
        %1676 = vmatmul.mubr.bf16.gmra.mrb[0].mxu0 %v600
        %v1677 = vpop.f32.mrb[0].mxu0
        %v1678 = vadd.f32 %v771, %v1677
        %v1679 = vpop.f32.mrb[0].mxu0
        %v1680 = vadd.f32 %v775, %v1679
        %v1681 = vpop.f32.mrb[0].mxu0
        %v1682 = vadd.f32 %v771, %v1681
        %v1683 = vpop.f32.mrb[0].mxu0
        %v1684 = vadd.f32 %v775, %v1683
        %1685 = vmatprep.mubr.bf16.mxu0 %v603
        %1686 = vmatmul.mubr.bf16.gmra.mrb[0].mxu0 %v602
        %v1687 = vpop.f32.mrb[0].mxu0
        %v1688 = vadd.f32 %v771, %v1687
        %v1689 = vpop.f32.mrb[0].mxu0
        %v1690 = vadd.f32 %v775, %v1689
        %v1691 = vpop.f32.mrb[0].mxu0
        %v1692 = vadd.f32 %v771, %v1691
        %v1693 = vpop.f32.mrb[0].mxu0
        %v1694 = vadd.f32 %v775, %v1693
        %1695 = vmatprep.mubr.bf16.mxu0 %v605
        %1696 = vmatmul.mubr.bf16.gmra.mrb[0].mxu0 %v604
        %v1697 = vpop.f32.mrb[0].mxu0
        %v1698 = vadd.f32 %v771, %v1697
        %v1699 = vpop.f32.mrb[0].mxu0
        %v1700 = vadd.f32 %v775, %v1699
        %v1701 = vpop.f32.mrb[0].mxu0
        %v1702 = vadd.f32 %v771, %v1701
        %v1703 = vpop.f32.mrb[0].mxu0
        %v1704 = vadd.f32 %v775, %v1703
        %1705 = vmatprep.mubr.bf16.mxu0 %v607
        %1706 = vmatmul.mubr.bf16.gmra.mrb[0].mxu0 %v606
        %v1707 = vpop.f32.mrb[0].mxu0
        %v1708 = vadd.f32 %v771, %v1707
        %v1709 = vpop.f32.mrb[0].mxu0
        %v1710 = vadd.f32 %v775, %v1709
        %v1711 = vpop.f32.mrb[0].mxu0
        %v1712 = vadd.f32 %v771, %v1711
        %v1713 = vpop.f32.mrb[0].mxu0
        %v1714 = vadd.f32 %v775, %v1713
        %1715 = vmatprep.mubr.bf16.mxu0 %v609
        %1716 = vmatmul.mubr.bf16.gmra.mrb[0].mxu0 %v608
        %v1717 = vpop.f32.mrb[0].mxu0
        %v1718 = vadd.f32 %v771, %v1717
        %v1719 = vpop.f32.mrb[0].mxu0
        %v1720 = vadd.f32 %v775, %v1719
        %v1721 = vpop.f32.mrb[0].mxu0
        %v1722 = vadd.f32 %v771, %v1721
        %v1723 = vpop.f32.mrb[0].mxu0
        %v1724 = vadd.f32 %v775, %v1723
        %1725 = vmatprep.mubr.bf16.mxu0 %v611
        %1726 = vmatmul.mubr.bf16.gmra.mrb[0].mxu0 %v610
        %v1727 = vpop.f32.mrb[0].mxu0
        %v1728 = vadd.f32 %v771, %v1727
        %v1729 = vpop.f32.mrb[0].mxu0
        %v1730 = vadd.f32 %v775, %v1729
        %v1731 = vpop.f32.mrb[0].mxu0
        %v1732 = vadd.f32 %v771, %v1731
        %v1733 = vpop.f32.mrb[0].mxu0
        %v1734 = vadd.f32 %v775, %v1733
        %1735 = vmatprep.mubr.bf16.mxu0 %v613
        %1736 = vmatmul.mubr.bf16.gmra.mrb[0].mxu0 %v612
        %v1737 = vpop.f32.mrb[0].mxu0
        %v1738 = vadd.f32 %v771, %v1737
        %v1739 = vpop.f32.mrb[0].mxu0
        %v1740 = vadd.f32 %v775, %v1739
        %v1741 = vpop.f32.mrb[0].mxu0
        %v1742 = vadd.f32 %v771, %v1741
        %v1743 = vpop.f32.mrb[0].mxu0
        %v1744 = vadd.f32 %v775, %v1743
        %1745 = vmatprep.mubr.bf16.mxu0 %v615
        %1746 = vmatmul.mubr.bf16.gmra.mrb[0].mxu0 %v614
        %v1747 = vpop.f32.mrb[0].mxu0
        %v1748 = vadd.f32 %v771, %v1747
        %v1749 = vpop.f32.mrb[0].mxu0
        %v1750 = vadd.f32 %v775, %v1749
        %v1751 = vpop.f32.mrb[0].mxu0
        %v1752 = vadd.f32 %v771, %v1751
        %v1753 = vpop.f32.mrb[0].mxu0
        %v1754 = vadd.f32 %v775, %v1753
        %1755 = vmatprep.mubr.bf16.mxu0 %v617
        %1756 = vmatmul.mubr.bf16.gmra.mrb[0].mxu0 %v616
        %v1757 = vpop.f32.mrb[0].mxu0
        %v1758 = vadd.f32 %v771, %v1757
        %v1759 = vpop.f32.mrb[0].mxu0
        %v1760 = vadd.f32 %v775, %v1759
        %v1761 = vpop.f32.mrb[0].mxu0
        %v1762 = vadd.f32 %v771, %v1761
        %v1763 = vpop.f32.mrb[0].mxu0
        %v1764 = vadd.f32 %v775, %v1763
        %1765 = vmatprep.mubr.bf16.mxu0 %v619
        %1766 = vmatmul.mubr.bf16.gmra.mrb[0].mxu0 %v618
        %v1767 = vpop.f32.mrb[0].mxu0
        %v1768 = vadd.f32 %v771, %v1767
        %v1769 = vpop.f32.mrb[0].mxu0
        %v1770 = vadd.f32 %v775, %v1769
        %v1771 = vpop.f32.mrb[0].mxu0
        %v1772 = vadd.f32 %v771, %v1771
        %v1773 = vpop.f32.mrb[0].mxu0
        %v1774 = vadd.f32 %v775, %v1773
        %1775 = vmatprep.mubr.bf16.mxu0 %v621
        %1776 = vmatmul.mubr.bf16.gmra.mrb[0].mxu0 %v620
        %v1777 = vpop.f32.mrb[0].mxu0
        %v1778 = vadd.f32 %v771, %v1777
        %v1779 = vpop.f32.mrb[0].mxu0
        %v1780 = vadd.f32 %v775, %v1779
        %v1781 = vpop.f32.mrb[0].mxu0
        %v1782 = vadd.f32 %v771, %v1781
        %v1783 = vpop.f32.mrb[0].mxu0
        %v1784 = vadd.f32 %v775, %v1783
        %1785 = vmatprep.mubr.bf16.mxu0 %v623
        %1786 = vmatmul.mubr.bf16.gmra.mrb[0].mxu0 %v622
        %v1787 = vpop.f32.mrb[0].mxu0
        %v1788 = vadd.f32 %v771, %v1787
        %v1789 = vpop.f32.mrb[0].mxu0
        %v1790 = vadd.f32 %v775, %v1789
        %v1791 = vpop.f32.mrb[0].mxu0
        %v1792 = vadd.f32 %v771, %v1791
        %v1793 = vpop.f32.mrb[0].mxu0
        %v1794 = vadd.f32 %v775, %v1793
        %1795 = vmatprep.mubr.bf16.mxu0 %v625
        %1796 = vmatmul.mubr.bf16.gmra.mrb[0].mxu0 %v624
        %v1797 = vpop.f32.mrb[0].mxu0
        %v1798 = vadd.f32 %v771, %v1797
        %v1799 = vpop.f32.mrb[0].mxu0
        %v1800 = vadd.f32 %v775, %v1799
        %v1801 = vpop.f32.mrb[0].mxu0
        %v1802 = vadd.f32 %v771, %v1801
        %v1803 = vpop.f32.mrb[0].mxu0
        %v1804 = vadd.f32 %v775, %v1803
        %1805 = vmatprep.mubr.bf16.mxu0 %v627
        %1806 = vmatmul.mubr.bf16.gmra.mrb[0].mxu0 %v626
        %v1807 = vpop.f32.mrb[0].mxu0
        %v1808 = vadd.f32 %v771, %v1807
        %v1809 = vpop.f32.mrb[0].mxu0
        %v1810 = vadd.f32 %v775, %v1809
        %v1811 = vpop.f32.mrb[0].mxu0
        %v1812 = vadd.f32 %v771, %v1811
        %v1813 = vpop.f32.mrb[0].mxu0
        %v1814 = vadd.f32 %v775, %v1813
        %1815 = vmatprep.mubr.bf16.mxu0 %v629
        %1816 = vmatmul.mubr.bf16.gmra.mrb[0].mxu0 %v628
        %v1817 = vpop.f32.mrb[0].mxu0
        %v1818 = vadd.f32 %v771, %v1817
        %v1819 = vpop.f32.mrb[0].mxu0
        %v1820 = vadd.f32 %v775, %v1819
        %v1821 = vpop.f32.mrb[0].mxu0
        %v1822 = vadd.f32 %v771, %v1821
        %v1823 = vpop.f32.mrb[0].mxu0
        %v1824 = vadd.f32 %v775, %v1823
        %1825 = vdwg.mxu0
        %1826 = vmatprep.subr.bf16.mxu0 %v1189
        %1827 = vmatpush1.bf16.msra.mxu0 %v1188
        %1828 = vmatprep.subr.bf16.mxu0 %v1197
        %1829 = vmatpush1.bf16.msra.mxu0 %v1196
        %1830 = vmatprep.subr.bf16.mxu0 %v1205
        %1831 = vmatpush1.bf16.msra.mxu0 %v1204
        %1832 = vmatprep.subr.bf16.mxu0 %v1213
        %1833 = vmatpush1.bf16.msra.mxu0 %v1212
        %1834 = vmatprep.subr.bf16.mxu0 %v1221
        %1835 = vmatpush1.bf16.msra.mxu0 %v1220
        %1836 = vmatprep.subr.bf16.mxu0 %v1229
        %1837 = vmatpush1.bf16.msra.mxu0 %v1228
        %1838 = vmatprep.subr.bf16.mxu0 %v1237
        %1839 = vmatpush1.bf16.msra.mxu0 %v1236
        %1840 = vmatprep.subr.bf16.mxu0 %v1245
        %1841 = vmatpush1.bf16.msra.mxu0 %v1244
        %1842 = vmatprep.subr.bf16.mxu0 %v1253
        %1843 = vmatpush1.bf16.msra.mxu0 %v1252
        %1844 = vmatprep.subr.bf16.mxu0 %v1261
        %1845 = vmatpush1.bf16.msra.mxu0 %v1260
        %1846 = vmatprep.subr.bf16.mxu0 %v1269
        %1847 = vmatpush1.bf16.msra.mxu0 %v1268
        %1848 = vmatprep.subr.bf16.mxu0 %v1277
        %1849 = vmatpush1.bf16.msra.mxu0 %v1276
        %1850 = vmatprep.subr.bf16.mxu0 %v1285
        %1851 = vmatpush1.bf16.msra.mxu0 %v1284
        %1852 = vmatprep.subr.bf16.mxu0 %v1293
        %1853 = vmatpush1.bf16.msra.mxu0 %v1292
        %1854 = vmatprep.subr.bf16.mxu0 %v1301
        %1855 = vmatpush1.bf16.msra.mxu0 %v1300
        %1856 = vmatprep.subr.bf16.mxu0 %v1309
        %1857 = vmatpush1.bf16.msra.mxu0 %v1308
        %1858 = vmatprep.mubr.bf16.mxu0 %v599
        %1859 = vmatmul.mubr.bf16.gmra.mrb[0].mxu0 %v598
        %v1860 = vpop.f32.mrb[0].mxu0
        %v1861 = vadd.f32 %v779, %v1860
        %v1862 = vpop.f32.mrb[0].mxu0
        %v1863 = vadd.f32 %v783, %v1862
        %v1864 = vpop.f32.mrb[0].mxu0
        %v1865 = vadd.f32 %v779, %v1864
        %v1866 = vpop.f32.mrb[0].mxu0
        %v1867 = vadd.f32 %v783, %v1866
        %1868 = vmatprep.mubr.bf16.mxu0 %v601
        %1869 = vmatmul.mubr.bf16.gmra.mrb[0].mxu0 %v600
        %v1870 = vpop.f32.mrb[0].mxu0
        %v1871 = vadd.f32 %v779, %v1870
        %v1872 = vpop.f32.mrb[0].mxu0
        %v1873 = vadd.f32 %v783, %v1872
        %v1874 = vpop.f32.mrb[0].mxu0
        %v1875 = vadd.f32 %v779, %v1874
        %v1876 = vpop.f32.mrb[0].mxu0
        %v1877 = vadd.f32 %v783, %v1876
        %1878 = vmatprep.mubr.bf16.mxu0 %v603
        %1879 = vmatmul.mubr.bf16.gmra.mrb[0].mxu0 %v602
        %v1880 = vpop.f32.mrb[0].mxu0
        %v1881 = vadd.f32 %v779, %v1880
        %v1882 = vpop.f32.mrb[0].mxu0
        %v1883 = vadd.f32 %v783, %v1882
        %v1884 = vpop.f32.mrb[0].mxu0
        %v1885 = vadd.f32 %v779, %v1884
        %v1886 = vpop.f32.mrb[0].mxu0
        %v1887 = vadd.f32 %v783, %v1886
        %1888 = vmatprep.mubr.bf16.mxu0 %v605
        %1889 = vmatmul.mubr.bf16.gmra.mrb[0].mxu0 %v604
        %v1890 = vpop.f32.mrb[0].mxu0
        %v1891 = vadd.f32 %v779, %v1890
        %v1892 = vpop.f32.mrb[0].mxu0
        %v1893 = vadd.f32 %v783, %v1892
        %v1894 = vpop.f32.mrb[0].mxu0
        %v1895 = vadd.f32 %v779, %v1894
        %v1896 = vpop.f32.mrb[0].mxu0
        %v1897 = vadd.f32 %v783, %v1896
        %1898 = vmatprep.mubr.bf16.mxu0 %v607
        %1899 = vmatmul.mubr.bf16.gmra.mrb[0].mxu0 %v606
        %v1900 = vpop.f32.mrb[0].mxu0
        %v1901 = vadd.f32 %v779, %v1900
        %v1902 = vpop.f32.mrb[0].mxu0
        %v1903 = vadd.f32 %v783, %v1902
        %v1904 = vpop.f32.mrb[0].mxu0
        %v1905 = vadd.f32 %v779, %v1904
        %v1906 = vpop.f32.mrb[0].mxu0
        %v1907 = vadd.f32 %v783, %v1906
        %1908 = vmatprep.mubr.bf16.mxu0 %v609
        %1909 = vmatmul.mubr.bf16.gmra.mrb[0].mxu0 %v608
        %v1910 = vpop.f32.mrb[0].mxu0
        %v1911 = vadd.f32 %v779, %v1910
        %v1912 = vpop.f32.mrb[0].mxu0
        %v1913 = vadd.f32 %v783, %v1912
        %v1914 = vpop.f32.mrb[0].mxu0
        %v1915 = vadd.f32 %v779, %v1914
        %v1916 = vpop.f32.mrb[0].mxu0
        %v1917 = vadd.f32 %v783, %v1916
        %1918 = vmatprep.mubr.bf16.mxu0 %v611
        %1919 = vmatmul.mubr.bf16.gmra.mrb[0].mxu0 %v610
        %v1920 = vpop.f32.mrb[0].mxu0
        %v1921 = vadd.f32 %v779, %v1920
        %v1922 = vpop.f32.mrb[0].mxu0
        %v1923 = vadd.f32 %v783, %v1922
        %v1924 = vpop.f32.mrb[0].mxu0
        %v1925 = vadd.f32 %v779, %v1924
        %v1926 = vpop.f32.mrb[0].mxu0
        %v1927 = vadd.f32 %v783, %v1926
        %1928 = vmatprep.mubr.bf16.mxu0 %v613
        %1929 = vmatmul.mubr.bf16.gmra.mrb[0].mxu0 %v612
        %v1930 = vpop.f32.mrb[0].mxu0
        %v1931 = vadd.f32 %v779, %v1930
        %v1932 = vpop.f32.mrb[0].mxu0
        %v1933 = vadd.f32 %v783, %v1932
        %v1934 = vpop.f32.mrb[0].mxu0
        %v1935 = vadd.f32 %v779, %v1934
        %v1936 = vpop.f32.mrb[0].mxu0
        %v1937 = vadd.f32 %v783, %v1936
        %1938 = vmatprep.mubr.bf16.mxu0 %v615
        %1939 = vmatmul.mubr.bf16.gmra.mrb[0].mxu0 %v614
        %v1940 = vpop.f32.mrb[0].mxu0
        %v1941 = vadd.f32 %v779, %v1940
        %v1942 = vpop.f32.mrb[0].mxu0
        %v1943 = vadd.f32 %v783, %v1942
        %v1944 = vpop.f32.mrb[0].mxu0
        %v1945 = vadd.f32 %v779, %v1944
        %v1946 = vpop.f32.mrb[0].mxu0
        %v1947 = vadd.f32 %v783, %v1946
        %1948 = vmatprep.mubr.bf16.mxu0 %v617
        %1949 = vmatmul.mubr.bf16.gmra.mrb[0].mxu0 %v616
        %v1950 = vpop.f32.mrb[0].mxu0
        %v1951 = vadd.f32 %v779, %v1950
        %v1952 = vpop.f32.mrb[0].mxu0
        %v1953 = vadd.f32 %v783, %v1952
        %v1954 = vpop.f32.mrb[0].mxu0
        %v1955 = vadd.f32 %v779, %v1954
        %v1956 = vpop.f32.mrb[0].mxu0
        %v1957 = vadd.f32 %v783, %v1956
        %1958 = vmatprep.mubr.bf16.mxu0 %v619
        %1959 = vmatmul.mubr.bf16.gmra.mrb[0].mxu0 %v618
        %v1960 = vpop.f32.mrb[0].mxu0
        %v1961 = vadd.f32 %v779, %v1960
        %v1962 = vpop.f32.mrb[0].mxu0
        %v1963 = vadd.f32 %v783, %v1962
        %v1964 = vpop.f32.mrb[0].mxu0
        %v1965 = vadd.f32 %v779, %v1964
        %v1966 = vpop.f32.mrb[0].mxu0
        %v1967 = vadd.f32 %v783, %v1966
        %1968 = vmatprep.mubr.bf16.mxu0 %v621
        %1969 = vmatmul.mubr.bf16.gmra.mrb[0].mxu0 %v620
        %v1970 = vpop.f32.mrb[0].mxu0
        %v1971 = vadd.f32 %v779, %v1970
        %v1972 = vpop.f32.mrb[0].mxu0
        %v1973 = vadd.f32 %v783, %v1972
        %v1974 = vpop.f32.mrb[0].mxu0
        %v1975 = vadd.f32 %v779, %v1974
        %v1976 = vpop.f32.mrb[0].mxu0
        %v1977 = vadd.f32 %v783, %v1976
        %1978 = vmatprep.mubr.bf16.mxu0 %v623
        %1979 = vmatmul.mubr.bf16.gmra.mrb[0].mxu0 %v622
        %v1980 = vpop.f32.mrb[0].mxu0
        %v1981 = vadd.f32 %v779, %v1980
        %v1982 = vpop.f32.mrb[0].mxu0
        %v1983 = vadd.f32 %v783, %v1982
        %v1984 = vpop.f32.mrb[0].mxu0
        %v1985 = vadd.f32 %v779, %v1984
        %v1986 = vpop.f32.mrb[0].mxu0
        %v1987 = vadd.f32 %v783, %v1986
        %1988 = vmatprep.mubr.bf16.mxu0 %v625
        %1989 = vmatmul.mubr.bf16.gmra.mrb[0].mxu0 %v624
        %v1990 = vpop.f32.mrb[0].mxu0
        %v1991 = vadd.f32 %v779, %v1990
        %v1992 = vpop.f32.mrb[0].mxu0
        %v1993 = vadd.f32 %v783, %v1992
        %v1994 = vpop.f32.mrb[0].mxu0
        %v1995 = vadd.f32 %v779, %v1994
        %v1996 = vpop.f32.mrb[0].mxu0
        %v1997 = vadd.f32 %v783, %v1996
        %1998 = vmatprep.mubr.bf16.mxu0 %v627
        %1999 = vmatmul.mubr.bf16.gmra.mrb[0].mxu0 %v626
        %v2000 = vpop.f32.mrb[0].mxu0
        %v2001 = vadd.f32 %v779, %v2000
        %v2002 = vpop.f32.mrb[0].mxu0
        %v2003 = vadd.f32 %v783, %v2002
        %v2004 = vpop.f32.mrb[0].mxu0
        %v2005 = vadd.f32 %v779, %v2004
        %v2006 = vpop.f32.mrb[0].mxu0
        %v2007 = vadd.f32 %v783, %v2006
        %2008 = vmatprep.mubr.bf16.mxu0 %v629
        %2009 = vmatmul.mubr.bf16.gmra.mrb[0].mxu0 %v628
        %v2010 = vpop.f32.mrb[0].mxu0
        %v2011 = vadd.f32 %v779, %v2010
        %v2012 = vpop.f32.mrb[0].mxu0
        %v2013 = vadd.f32 %v783, %v2012
        %v2014 = vpop.f32.mrb[0].mxu0
        %v2015 = vadd.f32 %v779, %v2014
        %v2016 = vpop.f32.mrb[0].mxu0
        %v2017 = vadd.f32 %v783, %v2016
        %2018 = vdwg.mxu0
        %2019 = vmatprep.subr.bf16.mxu0 %v1191
        %2020 = vmatpush1.bf16.msra.mxu0 %v1190
        %2021 = vmatprep.subr.bf16.mxu0 %v1199
        %2022 = vmatpush1.bf16.msra.mxu0 %v1198
        %2023 = vmatprep.subr.bf16.mxu0 %v1207
        %2024 = vmatpush1.bf16.msra.mxu0 %v1206
        %2025 = vmatprep.subr.bf16.mxu0 %v1215
        %2026 = vmatpush1.bf16.msra.mxu0 %v1214
        %2027 = vmatprep.subr.bf16.mxu0 %v1223
        %2028 = vmatpush1.bf16.msra.mxu0 %v1222
        %2029 = vmatprep.subr.bf16.mxu0 %v1231
        %2030 = vmatpush1.bf16.msra.mxu0 %v1230
        %2031 = vmatprep.subr.bf16.mxu0 %v1239
        %2032 = vmatpush1.bf16.msra.mxu0 %v1238
        %2033 = vmatprep.subr.bf16.mxu0 %v1247
        %2034 = vmatpush1.bf16.msra.mxu0 %v1246
        %2035 = vmatprep.subr.bf16.mxu0 %v1255
        %2036 = vmatpush1.bf16.msra.mxu0 %v1254
        %2037 = vmatprep.subr.bf16.mxu0 %v1263
        %2038 = vmatpush1.bf16.msra.mxu0 %v1262
        %2039 = vmatprep.subr.bf16.mxu0 %v1271
        %2040 = vmatpush1.bf16.msra.mxu0 %v1270
        %2041 = vmatprep.subr.bf16.mxu0 %v1279
        %2042 = vmatpush1.bf16.msra.mxu0 %v1278
        %2043 = vmatprep.subr.bf16.mxu0 %v1287
        %2044 = vmatpush1.bf16.msra.mxu0 %v1286
        %2045 = vmatprep.subr.bf16.mxu0 %v1295
        %2046 = vmatpush1.bf16.msra.mxu0 %v1294
        %2047 = vmatprep.subr.bf16.mxu0 %v1303
        %2048 = vmatpush1.bf16.msra.mxu0 %v1302
        %2049 = vmatprep.subr.bf16.mxu0 %v1311
        %2050 = vmatpush1.bf16.msra.mxu0 %v1310
        %2051 = vmatprep.mubr.bf16.mxu0 %v599
        %2052 = vmatmul.mubr.bf16.gmra.mrb[0].mxu0 %v598
        %v2053 = vpop.f32.mrb[0].mxu0
        %v2054 = vadd.f32 %v787, %v2053
        %v2055 = vpop.f32.mrb[0].mxu0
        %v2056 = vadd.f32 %v791, %v2055
        %v2057 = vpop.f32.mrb[0].mxu0
        %v2058 = vadd.f32 %v787, %v2057
        %v2059 = vpop.f32.mrb[0].mxu0
        %v2060 = vadd.f32 %v791, %v2059
        %2061 = vmatprep.mubr.bf16.mxu0 %v601
        %2062 = vmatmul.mubr.bf16.gmra.mrb[0].mxu0 %v600
        %v2063 = vpop.f32.mrb[0].mxu0
        %v2064 = vadd.f32 %v787, %v2063
        %v2065 = vpop.f32.mrb[0].mxu0
        %v2066 = vadd.f32 %v791, %v2065
        %v2067 = vpop.f32.mrb[0].mxu0
        %v2068 = vadd.f32 %v787, %v2067
        %v2069 = vpop.f32.mrb[0].mxu0
        %v2070 = vadd.f32 %v791, %v2069
        %2071 = vmatprep.mubr.bf16.mxu0 %v603
        %2072 = vmatmul.mubr.bf16.gmra.mrb[0].mxu0 %v602
        %v2073 = vpop.f32.mrb[0].mxu0
        %v2074 = vadd.f32 %v787, %v2073
        %v2075 = vpop.f32.mrb[0].mxu0
        %v2076 = vadd.f32 %v791, %v2075
        %v2077 = vpop.f32.mrb[0].mxu0
        %v2078 = vadd.f32 %v787, %v2077
        %v2079 = vpop.f32.mrb[0].mxu0
        %v2080 = vadd.f32 %v791, %v2079
        %2081 = vmatprep.mubr.bf16.mxu0 %v605
        %2082 = vmatmul.mubr.bf16.gmra.mrb[0].mxu0 %v604
        %v2083 = vpop.f32.mrb[0].mxu0
        %v2084 = vadd.f32 %v787, %v2083
        %v2085 = vpop.f32.mrb[0].mxu0
        %v2086 = vadd.f32 %v791, %v2085
        %v2087 = vpop.f32.mrb[0].mxu0
        %v2088 = vadd.f32 %v787, %v2087
        %v2089 = vpop.f32.mrb[0].mxu0
        %v2090 = vadd.f32 %v791, %v2089
        %2091 = vmatprep.mubr.bf16.mxu0 %v607
        %2092 = vmatmul.mubr.bf16.gmra.mrb[0].mxu0 %v606
        %v2093 = vpop.f32.mrb[0].mxu0
        %v2094 = vadd.f32 %v787, %v2093
        %v2095 = vpop.f32.mrb[0].mxu0
        %v2096 = vadd.f32 %v791, %v2095
        %v2097 = vpop.f32.mrb[0].mxu0
        %v2098 = vadd.f32 %v787, %v2097
        %v2099 = vpop.f32.mrb[0].mxu0
        %v2100 = vadd.f32 %v791, %v2099
        %2101 = vmatprep.mubr.bf16.mxu0 %v609
        %2102 = vmatmul.mubr.bf16.gmra.mrb[0].mxu0 %v608
        %v2103 = vpop.f32.mrb[0].mxu0
        %v2104 = vadd.f32 %v787, %v2103
        %v2105 = vpop.f32.mrb[0].mxu0
        %v2106 = vadd.f32 %v791, %v2105
        %v2107 = vpop.f32.mrb[0].mxu0
        %v2108 = vadd.f32 %v787, %v2107
        %v2109 = vpop.f32.mrb[0].mxu0
        %v2110 = vadd.f32 %v791, %v2109
        %2111 = vmatprep.mubr.bf16.mxu0 %v611
        %2112 = vmatmul.mubr.bf16.gmra.mrb[0].mxu0 %v610
        %v2113 = vpop.f32.mrb[0].mxu0
        %v2114 = vadd.f32 %v787, %v2113
        %v2115 = vpop.f32.mrb[0].mxu0
        %v2116 = vadd.f32 %v791, %v2115
        %v2117 = vpop.f32.mrb[0].mxu0
        %v2118 = vadd.f32 %v787, %v2117
        %v2119 = vpop.f32.mrb[0].mxu0
        %v2120 = vadd.f32 %v791, %v2119
        %2121 = vmatprep.mubr.bf16.mxu0 %v613
        %2122 = vmatmul.mubr.bf16.gmra.mrb[0].mxu0 %v612
        %v2123 = vpop.f32.mrb[0].mxu0
        %v2124 = vadd.f32 %v787, %v2123
        %v2125 = vpop.f32.mrb[0].mxu0
        %v2126 = vadd.f32 %v791, %v2125
        %v2127 = vpop.f32.mrb[0].mxu0
        %v2128 = vadd.f32 %v787, %v2127
        %v2129 = vpop.f32.mrb[0].mxu0
        %v2130 = vadd.f32 %v791, %v2129
        %2131 = vmatprep.mubr.bf16.mxu0 %v615
        %2132 = vmatmul.mubr.bf16.gmra.mrb[0].mxu0 %v614
        %v2133 = vpop.f32.mrb[0].mxu0
        %v2134 = vadd.f32 %v787, %v2133
        %v2135 = vpop.f32.mrb[0].mxu0
        %v2136 = vadd.f32 %v791, %v2135
        %v2137 = vpop.f32.mrb[0].mxu0
        %v2138 = vadd.f32 %v787, %v2137
        %v2139 = vpop.f32.mrb[0].mxu0
        %v2140 = vadd.f32 %v791, %v2139
        %2141 = vmatprep.mubr.bf16.mxu0 %v617
        %2142 = vmatmul.mubr.bf16.gmra.mrb[0].mxu0 %v616
        %v2143 = vpop.f32.mrb[0].mxu0
        %v2144 = vadd.f32 %v787, %v2143
        %v2145 = vpop.f32.mrb[0].mxu0
        %v2146 = vadd.f32 %v791, %v2145
        %v2147 = vpop.f32.mrb[0].mxu0
        %v2148 = vadd.f32 %v787, %v2147
        %v2149 = vpop.f32.mrb[0].mxu0
        %v2150 = vadd.f32 %v791, %v2149
        %2151 = vmatprep.mubr.bf16.mxu0 %v619
        %2152 = vmatmul.mubr.bf16.gmra.mrb[0].mxu0 %v618
        %v2153 = vpop.f32.mrb[0].mxu0
        %v2154 = vadd.f32 %v787, %v2153
        %v2155 = vpop.f32.mrb[0].mxu0
        %v2156 = vadd.f32 %v791, %v2155
        %v2157 = vpop.f32.mrb[0].mxu0
        %v2158 = vadd.f32 %v787, %v2157
        %v2159 = vpop.f32.mrb[0].mxu0
        %v2160 = vadd.f32 %v791, %v2159
        %2161 = vmatprep.mubr.bf16.mxu0 %v621
        %2162 = vmatmul.mubr.bf16.gmra.mrb[0].mxu0 %v620
        %v2163 = vpop.f32.mrb[0].mxu0
        %v2164 = vadd.f32 %v787, %v2163
        %v2165 = vpop.f32.mrb[0].mxu0
        %v2166 = vadd.f32 %v791, %v2165
        %v2167 = vpop.f32.mrb[0].mxu0
        %v2168 = vadd.f32 %v787, %v2167
        %v2169 = vpop.f32.mrb[0].mxu0
        %v2170 = vadd.f32 %v791, %v2169
        %2171 = vmatprep.mubr.bf16.mxu0 %v623
        %2172 = vmatmul.mubr.bf16.gmra.mrb[0].mxu0 %v622
        %v2173 = vpop.f32.mrb[0].mxu0
        %v2174 = vadd.f32 %v787, %v2173
        %v2175 = vpop.f32.mrb[0].mxu0
        %v2176 = vadd.f32 %v791, %v2175
        %v2177 = vpop.f32.mrb[0].mxu0
        %v2178 = vadd.f32 %v787, %v2177
        %v2179 = vpop.f32.mrb[0].mxu0
        %v2180 = vadd.f32 %v791, %v2179
        %2181 = vmatprep.mubr.bf16.mxu0 %v625
        %2182 = vmatmul.mubr.bf16.gmra.mrb[0].mxu0 %v624
        %v2183 = vpop.f32.mrb[0].mxu0
        %v2184 = vadd.f32 %v787, %v2183
        %v2185 = vpop.f32.mrb[0].mxu0
        %v2186 = vadd.f32 %v791, %v2185
        %v2187 = vpop.f32.mrb[0].mxu0
        %v2188 = vadd.f32 %v787, %v2187
        %v2189 = vpop.f32.mrb[0].mxu0
        %v2190 = vadd.f32 %v791, %v2189
        %2191 = vmatprep.mubr.bf16.mxu0 %v627
        %2192 = vmatmul.mubr.bf16.gmra.mrb[0].mxu0 %v626
        %v2193 = vpop.f32.mrb[0].mxu0
        %v2194 = vadd.f32 %v787, %v2193
        %v2195 = vpop.f32.mrb[0].mxu0
        %v2196 = vadd.f32 %v791, %v2195
        %v2197 = vpop.f32.mrb[0].mxu0
        %v2198 = vadd.f32 %v787, %v2197
        %v2199 = vpop.f32.mrb[0].mxu0
        %v2200 = vadd.f32 %v791, %v2199
        %2201 = vmatprep.mubr.bf16.mxu0 %v629
        %2202 = vmatmul.mubr.bf16.gmra.mrb[0].mxu0 %v628
        %v2203 = vpop.f32.mrb[0].mxu0
        %v2204 = vadd.f32 %v787, %v2203
        %v2205 = vpop.f32.mrb[0].mxu0
        %v2206 = vadd.f32 %v791, %v2205
        %v2207 = vpop.f32.mrb[0].mxu0
        %v2208 = vadd.f32 %v787, %v2207
        %v2209 = vpop.f32.mrb[0].mxu0
        %v2210 = vadd.f32 %v791, %v2209
        %2211 = vdwg.mxu0
        %v2212 = vmax.f32 %v1475, 0.0
        %v2213 = vmax.f32 %v1477, 0.0
        %v2214 = vmax.f32 %v1668, 0.0
        %v2215 = vmax.f32 %v1670, 0.0
        %v2216 = vmax.f32 %v1861, 0.0
        %v2217 = vmax.f32 %v1863, 0.0
        %v2218 = vmax.f32 %v2054, 0.0
        %v2219 = vmax.f32 %v2056, 0.0
        %v2220 = vmax.f32 %v1479, 0.0
        %v2221 = vmax.f32 %v1481, 0.0
        %v2222 = vmax.f32 %v1672, 0.0
        %v2223 = vmax.f32 %v1674, 0.0
        %v2224 = vmax.f32 %v1865, 0.0
        %v2225 = vmax.f32 %v1867, 0.0
        %v2226 = vmax.f32 %v2058, 0.0
        %v2227 = vmax.f32 %v2060, 0.0
        %v2228 = vmax.f32 %v1485, 0.0
        %v2229 = vmax.f32 %v1487, 0.0
        %v2230 = vmax.f32 %v1678, 0.0
        %v2231 = vmax.f32 %v1680, 0.0
        %v2232 = vmax.f32 %v1871, 0.0
        %v2233 = vmax.f32 %v1873, 0.0
        %v2234 = vmax.f32 %v2064, 0.0
        %v2235 = vmax.f32 %v2066, 0.0
        %v2236 = vmax.f32 %v1489, 0.0
        %v2237 = vmax.f32 %v1491, 0.0
        %v2238 = vmax.f32 %v1682, 0.0
        %v2239 = vmax.f32 %v1684, 0.0
        %v2240 = vmax.f32 %v1875, 0.0
        %v2241 = vmax.f32 %v1877, 0.0
        %v2242 = vmax.f32 %v2068, 0.0
        %v2243 = vmax.f32 %v2070, 0.0
        %v2244 = vmax.f32 %v1495, 0.0
        %v2245 = vmax.f32 %v1497, 0.0
        %v2246 = vmax.f32 %v1688, 0.0
        %v2247 = vmax.f32 %v1690, 0.0
        %v2248 = vmax.f32 %v1881, 0.0
        %v2249 = vmax.f32 %v1883, 0.0
        %v2250 = vmax.f32 %v2074, 0.0
        %v2251 = vmax.f32 %v2076, 0.0
        %v2252 = vmax.f32 %v1499, 0.0
        %v2253 = vmax.f32 %v1501, 0.0
        %v2254 = vmax.f32 %v1692, 0.0
        %v2255 = vmax.f32 %v1694, 0.0
        %v2256 = vmax.f32 %v1885, 0.0
        %v2257 = vmax.f32 %v1887, 0.0
        %v2258 = vmax.f32 %v2078, 0.0
        %v2259 = vmax.f32 %v2080, 0.0
        %v2260 = vmax.f32 %v1505, 0.0
        %v2261 = vmax.f32 %v1507, 0.0
        %v2262 = vmax.f32 %v1698, 0.0
        %v2263 = vmax.f32 %v1700, 0.0
        %v2264 = vmax.f32 %v1891, 0.0
        %v2265 = vmax.f32 %v1893, 0.0
        %v2266 = vmax.f32 %v2084, 0.0
        %v2267 = vmax.f32 %v2086, 0.0
        %v2268 = vmax.f32 %v1509, 0.0
        %v2269 = vmax.f32 %v1511, 0.0
        %v2270 = vmax.f32 %v1702, 0.0
        %v2271 = vmax.f32 %v1704, 0.0
        %v2272 = vmax.f32 %v1895, 0.0
        %v2273 = vmax.f32 %v1897, 0.0
        %v2274 = vmax.f32 %v2088, 0.0
        %v2275 = vmax.f32 %v2090, 0.0
        %v2276 = vmax.f32 %v1515, 0.0
        %v2277 = vmax.f32 %v1517, 0.0
        %v2278 = vmax.f32 %v1708, 0.0
        %v2279 = vmax.f32 %v1710, 0.0
        %v2280 = vmax.f32 %v1901, 0.0
        %v2281 = vmax.f32 %v1903, 0.0
        %v2282 = vmax.f32 %v2094, 0.0
        %v2283 = vmax.f32 %v2096, 0.0
        %v2284 = vmax.f32 %v1519, 0.0
        %v2285 = vmax.f32 %v1521, 0.0
        %v2286 = vmax.f32 %v1712, 0.0
        %v2287 = vmax.f32 %v1714, 0.0
        %v2288 = vmax.f32 %v1905, 0.0
        %v2289 = vmax.f32 %v1907, 0.0
        %v2290 = vmax.f32 %v2098, 0.0
        %v2291 = vmax.f32 %v2100, 0.0
        %v2292 = vmax.f32 %v1525, 0.0
        %v2293 = vmax.f32 %v1527, 0.0
        %v2294 = vmax.f32 %v1718, 0.0
        %v2295 = vmax.f32 %v1720, 0.0
        %v2296 = vmax.f32 %v1911, 0.0
        %v2297 = vmax.f32 %v1913, 0.0
        %v2298 = vmax.f32 %v2104, 0.0
        %v2299 = vmax.f32 %v2106, 0.0
        %v2300 = vmax.f32 %v1529, 0.0
        %v2301 = vmax.f32 %v1531, 0.0
        %v2302 = vmax.f32 %v1722, 0.0
        %v2303 = vmax.f32 %v1724, 0.0
        %v2304 = vmax.f32 %v1915, 0.0
        %v2305 = vmax.f32 %v1917, 0.0
        %v2306 = vmax.f32 %v2108, 0.0
        %v2307 = vmax.f32 %v2110, 0.0
        %v2308 = vmax.f32 %v1535, 0.0
        %v2309 = vmax.f32 %v1537, 0.0
        %v2310 = vmax.f32 %v1728, 0.0
        %v2311 = vmax.f32 %v1730, 0.0
        %v2312 = vmax.f32 %v1921, 0.0
        %v2313 = vmax.f32 %v1923, 0.0
        %v2314 = vmax.f32 %v2114, 0.0
        %v2315 = vmax.f32 %v2116, 0.0
        %v2316 = vmax.f32 %v1539, 0.0
        %v2317 = vmax.f32 %v1541, 0.0
        %v2318 = vmax.f32 %v1732, 0.0
        %v2319 = vmax.f32 %v1734, 0.0
        %v2320 = vmax.f32 %v1925, 0.0
        %v2321 = vmax.f32 %v1927, 0.0
        %v2322 = vmax.f32 %v2118, 0.0
        %v2323 = vmax.f32 %v2120, 0.0
        %v2324 = vmax.f32 %v1545, 0.0
        %v2325 = vmax.f32 %v1547, 0.0
        %v2326 = vmax.f32 %v1738, 0.0
        %v2327 = vmax.f32 %v1740, 0.0
        %v2328 = vmax.f32 %v1931, 0.0
        %v2329 = vmax.f32 %v1933, 0.0
        %v2330 = vmax.f32 %v2124, 0.0
        %v2331 = vmax.f32 %v2126, 0.0
        %v2332 = vmax.f32 %v1549, 0.0
        %v2333 = vmax.f32 %v1551, 0.0
        %v2334 = vmax.f32 %v1742, 0.0
        %v2335 = vmax.f32 %v1744, 0.0
        %v2336 = vmax.f32 %v1935, 0.0
        %v2337 = vmax.f32 %v1937, 0.0
        %v2338 = vmax.f32 %v2128, 0.0
        %v2339 = vmax.f32 %v2130, 0.0
        %v2340 = vmax.f32 %v1555, 0.0
        %v2341 = vmax.f32 %v1557, 0.0
        %v2342 = vmax.f32 %v1748, 0.0
        %v2343 = vmax.f32 %v1750, 0.0
        %v2344 = vmax.f32 %v1941, 0.0
        %v2345 = vmax.f32 %v1943, 0.0
        %v2346 = vmax.f32 %v2134, 0.0
        %v2347 = vmax.f32 %v2136, 0.0
        %v2348 = vmax.f32 %v1559, 0.0
        %v2349 = vmax.f32 %v1561, 0.0
        %v2350 = vmax.f32 %v1752, 0.0
        %v2351 = vmax.f32 %v1754, 0.0
        %v2352 = vmax.f32 %v1945, 0.0
        %v2353 = vmax.f32 %v1947, 0.0
        %v2354 = vmax.f32 %v2138, 0.0
        %v2355 = vmax.f32 %v2140, 0.0
        %v2356 = vmax.f32 %v1565, 0.0
        %v2357 = vmax.f32 %v1567, 0.0
        %v2358 = vmax.f32 %v1758, 0.0
        %v2359 = vmax.f32 %v1760, 0.0
        %v2360 = vmax.f32 %v1951, 0.0
        %v2361 = vmax.f32 %v1953, 0.0
        %v2362 = vmax.f32 %v2144, 0.0
        %v2363 = vmax.f32 %v2146, 0.0
        %v2364 = vmax.f32 %v1569, 0.0
        %v2365 = vmax.f32 %v1571, 0.0
        %v2366 = vmax.f32 %v1762, 0.0
        %v2367 = vmax.f32 %v1764, 0.0
        %v2368 = vmax.f32 %v1955, 0.0
        %v2369 = vmax.f32 %v1957, 0.0
        %v2370 = vmax.f32 %v2148, 0.0
        %v2371 = vmax.f32 %v2150, 0.0
        %v2372 = vmax.f32 %v1575, 0.0
        %v2373 = vmax.f32 %v1577, 0.0
        %v2374 = vmax.f32 %v1768, 0.0
        %v2375 = vmax.f32 %v1770, 0.0
        %v2376 = vmax.f32 %v1961, 0.0
        %v2377 = vmax.f32 %v1963, 0.0
        %v2378 = vmax.f32 %v2154, 0.0
        %v2379 = vmax.f32 %v2156, 0.0
        %v2380 = vmax.f32 %v1579, 0.0
        %v2381 = vmax.f32 %v1581, 0.0
        %v2382 = vmax.f32 %v1772, 0.0
        %v2383 = vmax.f32 %v1774, 0.0
        %v2384 = vmax.f32 %v1965, 0.0
        %v2385 = vmax.f32 %v1967, 0.0
        %v2386 = vmax.f32 %v2158, 0.0
        %v2387 = vmax.f32 %v2160, 0.0
        %v2388 = vmax.f32 %v1585, 0.0
        %v2389 = vmax.f32 %v1587, 0.0
        %v2390 = vmax.f32 %v1778, 0.0
        %v2391 = vmax.f32 %v1780, 0.0
        %v2392 = vmax.f32 %v1971, 0.0
        %v2393 = vmax.f32 %v1973, 0.0
        %v2394 = vmax.f32 %v2164, 0.0
        %v2395 = vmax.f32 %v2166, 0.0
        %v2396 = vmax.f32 %v1589, 0.0
        %v2397 = vmax.f32 %v1591, 0.0
        %v2398 = vmax.f32 %v1782, 0.0
        %v2399 = vmax.f32 %v1784, 0.0
        %v2400 = vmax.f32 %v1975, 0.0
        %v2401 = vmax.f32 %v1977, 0.0
        %v2402 = vmax.f32 %v2168, 0.0
        %v2403 = vmax.f32 %v2170, 0.0
        %v2404 = vmax.f32 %v1595, 0.0
        %v2405 = vmax.f32 %v1597, 0.0
        %v2406 = vmax.f32 %v1788, 0.0
        %v2407 = vmax.f32 %v1790, 0.0
        %v2408 = vmax.f32 %v1981, 0.0
        %v2409 = vmax.f32 %v1983, 0.0
        %v2410 = vmax.f32 %v2174, 0.0
        %v2411 = vmax.f32 %v2176, 0.0
        %v2412 = vmax.f32 %v1599, 0.0
        %v2413 = vmax.f32 %v1601, 0.0
        %v2414 = vmax.f32 %v1792, 0.0
        %v2415 = vmax.f32 %v1794, 0.0
        %v2416 = vmax.f32 %v1985, 0.0
        %v2417 = vmax.f32 %v1987, 0.0
        %v2418 = vmax.f32 %v2178, 0.0
        %v2419 = vmax.f32 %v2180, 0.0
        %v2420 = vmax.f32 %v1605, 0.0
        %v2421 = vmax.f32 %v1607, 0.0
        %v2422 = vmax.f32 %v1798, 0.0
        %v2423 = vmax.f32 %v1800, 0.0
        %v2424 = vmax.f32 %v1991, 0.0
        %v2425 = vmax.f32 %v1993, 0.0
        %v2426 = vmax.f32 %v2184, 0.0
        %v2427 = vmax.f32 %v2186, 0.0
        %v2428 = vmax.f32 %v1609, 0.0
        %v2429 = vmax.f32 %v1611, 0.0
        %v2430 = vmax.f32 %v1802, 0.0
        %v2431 = vmax.f32 %v1804, 0.0
        %v2432 = vmax.f32 %v1995, 0.0
        %v2433 = vmax.f32 %v1997, 0.0
        %v2434 = vmax.f32 %v2188, 0.0
        %v2435 = vmax.f32 %v2190, 0.0
        %v2436 = vmax.f32 %v1615, 0.0
        %v2437 = vmax.f32 %v1617, 0.0
        %v2438 = vmax.f32 %v1808, 0.0
        %v2439 = vmax.f32 %v1810, 0.0
        %v2440 = vmax.f32 %v2001, 0.0
        %v2441 = vmax.f32 %v2003, 0.0
        %v2442 = vmax.f32 %v2194, 0.0
        %v2443 = vmax.f32 %v2196, 0.0
        %v2444 = vmax.f32 %v1619, 0.0
        %v2445 = vmax.f32 %v1621, 0.0
        %v2446 = vmax.f32 %v1812, 0.0
        %v2447 = vmax.f32 %v1814, 0.0
        %v2448 = vmax.f32 %v2005, 0.0
        %v2449 = vmax.f32 %v2007, 0.0
        %v2450 = vmax.f32 %v2198, 0.0
        %v2451 = vmax.f32 %v2200, 0.0
        %v2452 = vmax.f32 %v1625, 0.0
        %v2453 = vmax.f32 %v1627, 0.0
        %v2454 = vmax.f32 %v1818, 0.0
        %v2455 = vmax.f32 %v1820, 0.0
        %v2456 = vmax.f32 %v2011, 0.0
        %v2457 = vmax.f32 %v2013, 0.0
        %v2458 = vmax.f32 %v2204, 0.0
        %v2459 = vmax.f32 %v2206, 0.0
        %v2460 = vmax.f32 %v1629, 0.0
        %v2461 = vmax.f32 %v1631, 0.0
        %v2462 = vmax.f32 %v1822, 0.0
        %v2463 = vmax.f32 %v1824, 0.0
        %v2464 = vmax.f32 %v2015, 0.0
        %v2465 = vmax.f32 %v2017, 0.0
        %v2466 = vmax.f32 %v2208, 0.0
        %v2467 = vmax.f32 %v2210, 0.0
        %v2468 = vpack.c.bf16 %v2220, %v2212
        %v2469 = vpack.c.bf16 %v2221, %v2213
        %v2470 = vpack.c.bf16 %v2222, %v2214
        %v2471 = vpack.c.bf16 %v2223, %v2215
        %v2472 = vpack.c.bf16 %v2224, %v2216
        %v2473 = vpack.c.bf16 %v2225, %v2217
        %v2474 = vpack.c.bf16 %v2226, %v2218
        %v2475 = vpack.c.bf16 %v2227, %v2219
        %v2476 = vpack.c.bf16 %v2236, %v2228
        %v2477 = vpack.c.bf16 %v2237, %v2229
        %v2478 = vpack.c.bf16 %v2238, %v2230
        %v2479 = vpack.c.bf16 %v2239, %v2231
        %v2480 = vpack.c.bf16 %v2240, %v2232
        %v2481 = vpack.c.bf16 %v2241, %v2233
        %v2482 = vpack.c.bf16 %v2242, %v2234
        %v2483 = vpack.c.bf16 %v2243, %v2235
        %v2484 = vpack.c.bf16 %v2252, %v2244
        %v2485 = vpack.c.bf16 %v2253, %v2245
        %v2486 = vpack.c.bf16 %v2254, %v2246
        %v2487 = vpack.c.bf16 %v2255, %v2247
        %v2488 = vpack.c.bf16 %v2256, %v2248
        %v2489 = vpack.c.bf16 %v2257, %v2249
        %v2490 = vpack.c.bf16 %v2258, %v2250
        %v2491 = vpack.c.bf16 %v2259, %v2251
        %v2492 = vpack.c.bf16 %v2268, %v2260
        %v2493 = vpack.c.bf16 %v2269, %v2261
        %v2494 = vpack.c.bf16 %v2270, %v2262
        %v2495 = vpack.c.bf16 %v2271, %v2263
        %v2496 = vpack.c.bf16 %v2272, %v2264
        %v2497 = vpack.c.bf16 %v2273, %v2265
        %v2498 = vpack.c.bf16 %v2274, %v2266
        %v2499 = vpack.c.bf16 %v2275, %v2267
        %v2500 = vpack.c.bf16 %v2284, %v2276
        %v2501 = vpack.c.bf16 %v2285, %v2277
        %v2502 = vpack.c.bf16 %v2286, %v2278
        %v2503 = vpack.c.bf16 %v2287, %v2279
        %v2504 = vpack.c.bf16 %v2288, %v2280
        %v2505 = vpack.c.bf16 %v2289, %v2281
        %v2506 = vpack.c.bf16 %v2290, %v2282
        %v2507 = vpack.c.bf16 %v2291, %v2283
        %v2508 = vpack.c.bf16 %v2300, %v2292
        %v2509 = vpack.c.bf16 %v2301, %v2293
        %v2510 = vpack.c.bf16 %v2302, %v2294
        %v2511 = vpack.c.bf16 %v2303, %v2295
        %v2512 = vpack.c.bf16 %v2304, %v2296
        %v2513 = vpack.c.bf16 %v2305, %v2297
        %v2514 = vpack.c.bf16 %v2306, %v2298
        %v2515 = vpack.c.bf16 %v2307, %v2299
        %v2516 = vpack.c.bf16 %v2316, %v2308
        %v2517 = vpack.c.bf16 %v2317, %v2309
        %v2518 = vpack.c.bf16 %v2318, %v2310
        %v2519 = vpack.c.bf16 %v2319, %v2311
        %v2520 = vpack.c.bf16 %v2320, %v2312
        %v2521 = vpack.c.bf16 %v2321, %v2313
        %v2522 = vpack.c.bf16 %v2322, %v2314
        %v2523 = vpack.c.bf16 %v2323, %v2315
        %v2524 = vpack.c.bf16 %v2332, %v2324
        %v2525 = vpack.c.bf16 %v2333, %v2325
        %v2526 = vpack.c.bf16 %v2334, %v2326
        %v2527 = vpack.c.bf16 %v2335, %v2327
        %v2528 = vpack.c.bf16 %v2336, %v2328
        %v2529 = vpack.c.bf16 %v2337, %v2329
        %v2530 = vpack.c.bf16 %v2338, %v2330
        %v2531 = vpack.c.bf16 %v2339, %v2331
        %v2532 = vpack.c.bf16 %v2348, %v2340
        %v2533 = vpack.c.bf16 %v2349, %v2341
        %v2534 = vpack.c.bf16 %v2350, %v2342
        %v2535 = vpack.c.bf16 %v2351, %v2343
        %v2536 = vpack.c.bf16 %v2352, %v2344
        %v2537 = vpack.c.bf16 %v2353, %v2345
        %v2538 = vpack.c.bf16 %v2354, %v2346
        %v2539 = vpack.c.bf16 %v2355, %v2347
        %v2540 = vpack.c.bf16 %v2364, %v2356
        %v2541 = vpack.c.bf16 %v2365, %v2357
        %v2542 = vpack.c.bf16 %v2366, %v2358
        %v2543 = vpack.c.bf16 %v2367, %v2359
        %v2544 = vpack.c.bf16 %v2368, %v2360
        %v2545 = vpack.c.bf16 %v2369, %v2361
        %v2546 = vpack.c.bf16 %v2370, %v2362
        %v2547 = vpack.c.bf16 %v2371, %v2363
        %v2548 = vpack.c.bf16 %v2380, %v2372
        %v2549 = vpack.c.bf16 %v2381, %v2373
        %v2550 = vpack.c.bf16 %v2382, %v2374
        %v2551 = vpack.c.bf16 %v2383, %v2375
        %v2552 = vpack.c.bf16 %v2384, %v2376
        %v2553 = vpack.c.bf16 %v2385, %v2377
        %v2554 = vpack.c.bf16 %v2386, %v2378
        %v2555 = vpack.c.bf16 %v2387, %v2379
        %v2556 = vpack.c.bf16 %v2396, %v2388
        %v2557 = vpack.c.bf16 %v2397, %v2389
        %v2558 = vpack.c.bf16 %v2398, %v2390
        %v2559 = vpack.c.bf16 %v2399, %v2391
        %v2560 = vpack.c.bf16 %v2400, %v2392
        %v2561 = vpack.c.bf16 %v2401, %v2393
        %v2562 = vpack.c.bf16 %v2402, %v2394
        %v2563 = vpack.c.bf16 %v2403, %v2395
        %v2564 = vpack.c.bf16 %v2412, %v2404
        %v2565 = vpack.c.bf16 %v2413, %v2405
        %v2566 = vpack.c.bf16 %v2414, %v2406
        %v2567 = vpack.c.bf16 %v2415, %v2407
        %v2568 = vpack.c.bf16 %v2416, %v2408
        %v2569 = vpack.c.bf16 %v2417, %v2409
        %v2570 = vpack.c.bf16 %v2418, %v2410
        %v2571 = vpack.c.bf16 %v2419, %v2411
        %v2572 = vpack.c.bf16 %v2428, %v2420
        %v2573 = vpack.c.bf16 %v2429, %v2421
        %v2574 = vpack.c.bf16 %v2430, %v2422
        %v2575 = vpack.c.bf16 %v2431, %v2423
        %v2576 = vpack.c.bf16 %v2432, %v2424
        %v2577 = vpack.c.bf16 %v2433, %v2425
        %v2578 = vpack.c.bf16 %v2434, %v2426
        %v2579 = vpack.c.bf16 %v2435, %v2427
        %v2580 = vpack.c.bf16 %v2444, %v2436
        %v2581 = vpack.c.bf16 %v2445, %v2437
        %v2582 = vpack.c.bf16 %v2446, %v2438
        %v2583 = vpack.c.bf16 %v2447, %v2439
        %v2584 = vpack.c.bf16 %v2448, %v2440
        %v2585 = vpack.c.bf16 %v2449, %v2441
        %v2586 = vpack.c.bf16 %v2450, %v2442
        %v2587 = vpack.c.bf16 %v2451, %v2443
        %v2588 = vpack.c.bf16 %v2460, %v2452
        %v2589 = vpack.c.bf16 %v2461, %v2453
        %v2590 = vpack.c.bf16 %v2462, %v2454
        %v2591 = vpack.c.bf16 %v2463, %v2455
        %v2592 = vpack.c.bf16 %v2464, %v2456
        %v2593 = vpack.c.bf16 %v2465, %v2457
        %v2594 = vpack.c.bf16 %v2466, %v2458
        %v2595 = vpack.c.bf16 %v2467, %v2459
        %v2596 = vld [vmem:[#allocation9] sm:$0xff]
        %v2597 = vld [vmem:[#allocation9 + $0x8] sm:$0xff]
        %v2598 = vld [vmem:[#allocation9 + $0x10] sm:$0xff]
        %v2599 = vld [vmem:[#allocation9 + $0x18] sm:$0xff]
        %v2600 = vld [vmem:[#allocation9 + $0x20] sm:$0xff]
        %v2601 = vld [vmem:[#allocation9 + $0x28] sm:$0xff]
        %v2602 = vld [vmem:[#allocation9 + $0x30] sm:$0xff]
        %v2603 = vld [vmem:[#allocation9 + $0x38] sm:$0xff]
        %v2604 = vld [vmem:[#allocation9 + $0x40] sm:$0xff]
        %v2605 = vld [vmem:[#allocation9 + $0x48] sm:$0xff]
        %v2606 = vld [vmem:[#allocation9 + $0x50] sm:$0xff]
        %v2607 = vld [vmem:[#allocation9 + $0x58] sm:$0xff]
        %v2608 = vld [vmem:[#allocation9 + $0x60] sm:$0xff]
        %v2609 = vld [vmem:[#allocation9 + $0x68] sm:$0xff]
        %v2610 = vld [vmem:[#allocation9 + $0x70] sm:$0xff]
        %v2611 = vld [vmem:[#allocation9 + $0x78] sm:$0xff]
        %v2612 = vld [vmem:[#allocation9 + $0x80] sm:$0xff]
        %v2613 = vld [vmem:[#allocation9 + $0x88] sm:$0xff]
        %v2614 = vld [vmem:[#allocation9 + $0x90] sm:$0xff]
        %v2615 = vld [vmem:[#allocation9 + $0x98] sm:$0xff]
        %v2616 = vld [vmem:[#allocation9 + $0xa0] sm:$0xff]
        %v2617 = vld [vmem:[#allocation9 + $0xa8] sm:$0xff]
        %v2618 = vld [vmem:[#allocation9 + $0xb0] sm:$0xff]
        %v2619 = vld [vmem:[#allocation9 + $0xb8] sm:$0xff]
        %v2620 = vld [vmem:[#allocation9 + $0xc0] sm:$0xff]
        %v2621 = vld [vmem:[#allocation9 + $0xc8] sm:$0xff]
        %v2622 = vld [vmem:[#allocation9 + $0xd0] sm:$0xff]
        %v2623 = vld [vmem:[#allocation9 + $0xd8] sm:$0xff]
        %v2624 = vld [vmem:[#allocation9 + $0xe0] sm:$0xff]
        %v2625 = vld [vmem:[#allocation9 + $0xe8] sm:$0xff]
        %v2626 = vld [vmem:[#allocation9 + $0xf0] sm:$0xff]
        %v2627 = vld [vmem:[#allocation9 + $0xf8] sm:$0xff]
        %v2628 = vld [vmem:[#allocation9 + $0x100] sm:$0xff]
        %v2629 = vld [vmem:[#allocation9 + $0x108] sm:$0xff]
        %v2630 = vld [vmem:[#allocation9 + $0x110] sm:$0xff]
        %v2631 = vld [vmem:[#allocation9 + $0x118] sm:$0xff]
        %v2632 = vld [vmem:[#allocation9 + $0x120] sm:$0xff]
        %v2633 = vld [vmem:[#allocation9 + $0x128] sm:$0xff]
        %v2634 = vld [vmem:[#allocation9 + $0x130] sm:$0xff]
        %v2635 = vld [vmem:[#allocation9 + $0x138] sm:$0xff]
        %v2636 = vld [vmem:[#allocation9 + $0x140] sm:$0xff]
        %v2637 = vld [vmem:[#allocation9 + $0x148] sm:$0xff]
        %v2638 = vld [vmem:[#allocation9 + $0x150] sm:$0xff]
        %v2639 = vld [vmem:[#allocation9 + $0x158] sm:$0xff]
        %v2640 = vld [vmem:[#allocation9 + $0x160] sm:$0xff]
        %v2641 = vld [vmem:[#allocation9 + $0x168] sm:$0xff]
        %v2642 = vld [vmem:[#allocation9 + $0x170] sm:$0xff]
        %v2643 = vld [vmem:[#allocation9 + $0x178] sm:$0xff]
        %v2644 = vld [vmem:[#allocation9 + $0x180] sm:$0xff]
        %v2645 = vld [vmem:[#allocation9 + $0x188] sm:$0xff]
        %v2646 = vld [vmem:[#allocation9 + $0x190] sm:$0xff]
        %v2647 = vld [vmem:[#allocation9 + $0x198] sm:$0xff]
        %v2648 = vld [vmem:[#allocation9 + $0x1a0] sm:$0xff]
        %v2649 = vld [vmem:[#allocation9 + $0x1a8] sm:$0xff]
        %v2650 = vld [vmem:[#allocation9 + $0x1b0] sm:$0xff]
        %v2651 = vld [vmem:[#allocation9 + $0x1b8] sm:$0xff]
        %v2652 = vld [vmem:[#allocation9 + $0x1c0] sm:$0xff]
        %v2653 = vld [vmem:[#allocation9 + $0x1c8] sm:$0xff]
        %v2654 = vld [vmem:[#allocation9 + $0x1d0] sm:$0xff]
        %v2655 = vld [vmem:[#allocation9 + $0x1d8] sm:$0xff]
        %v2656 = vld [vmem:[#allocation9 + $0x1e0] sm:$0xff]
        %v2657 = vld [vmem:[#allocation9 + $0x1e8] sm:$0xff]
        %v2658 = vld [vmem:[#allocation9 + $0x1f0] sm:$0xff]
        %v2659 = vld [vmem:[#allocation9 + $0x1f8] sm:$0xff]
        %v2660 = vld [vmem:[#allocation9 + $0x200] sm:$0xff]
        %v2661 = vld [vmem:[#allocation9 + $0x208] sm:$0xff]
        %v2662 = vld [vmem:[#allocation9 + $0x210] sm:$0xff]
        %v2663 = vld [vmem:[#allocation9 + $0x218] sm:$0xff]
        %v2664 = vld [vmem:[#allocation9 + $0x220] sm:$0xff]
        %v2665 = vld [vmem:[#allocation9 + $0x228] sm:$0xff]
        %v2666 = vld [vmem:[#allocation9 + $0x230] sm:$0xff]
        %v2667 = vld [vmem:[#allocation9 + $0x238] sm:$0xff]
        %v2668 = vld [vmem:[#allocation9 + $0x240] sm:$0xff]
        %v2669 = vld [vmem:[#allocation9 + $0x248] sm:$0xff]
        %v2670 = vld [vmem:[#allocation9 + $0x250] sm:$0xff]
        %v2671 = vld [vmem:[#allocation9 + $0x258] sm:$0xff]
        %v2672 = vld [vmem:[#allocation9 + $0x260] sm:$0xff]
        %v2673 = vld [vmem:[#allocation9 + $0x268] sm:$0xff]
        %v2674 = vld [vmem:[#allocation9 + $0x270] sm:$0xff]
        %v2675 = vld [vmem:[#allocation9 + $0x278] sm:$0xff]
        %v2676 = vld [vmem:[#allocation9 + $0x280] sm:$0xff]
        %v2677 = vld [vmem:[#allocation9 + $0x288] sm:$0xff]
        %v2678 = vld [vmem:[#allocation9 + $0x290] sm:$0xff]
        %v2679 = vld [vmem:[#allocation9 + $0x298] sm:$0xff]
        %v2680 = vld [vmem:[#allocation9 + $0x2a0] sm:$0xff]
        %v2681 = vld [vmem:[#allocation9 + $0x2a8] sm:$0xff]
        %v2682 = vld [vmem:[#allocation9 + $0x2b0] sm:$0xff]
        %v2683 = vld [vmem:[#allocation9 + $0x2b8] sm:$0xff]
        %v2684 = vld [vmem:[#allocation9 + $0x2c0] sm:$0xff]
        %v2685 = vld [vmem:[#allocation9 + $0x2c8] sm:$0xff]
        %v2686 = vld [vmem:[#allocation9 + $0x2d0] sm:$0xff]
        %v2687 = vld [vmem:[#allocation9 + $0x2d8] sm:$0xff]
        %v2688 = vld [vmem:[#allocation9 + $0x2e0] sm:$0xff]
        %v2689 = vld [vmem:[#allocation9 + $0x2e8] sm:$0xff]
        %v2690 = vld [vmem:[#allocation9 + $0x2f0] sm:$0xff]
        %v2691 = vld [vmem:[#allocation9 + $0x2f8] sm:$0xff]
        %v2692 = vld [vmem:[#allocation9 + $0x300] sm:$0xff]
        %v2693 = vld [vmem:[#allocation9 + $0x308] sm:$0xff]
        %v2694 = vld [vmem:[#allocation9 + $0x310] sm:$0xff]
        %v2695 = vld [vmem:[#allocation9 + $0x318] sm:$0xff]
        %v2696 = vld [vmem:[#allocation9 + $0x320] sm:$0xff]
        %v2697 = vld [vmem:[#allocation9 + $0x328] sm:$0xff]
        %v2698 = vld [vmem:[#allocation9 + $0x330] sm:$0xff]
        %v2699 = vld [vmem:[#allocation9 + $0x338] sm:$0xff]
        %v2700 = vld [vmem:[#allocation9 + $0x340] sm:$0xff]
        %v2701 = vld [vmem:[#allocation9 + $0x348] sm:$0xff]
        %v2702 = vld [vmem:[#allocation9 + $0x350] sm:$0xff]
        %v2703 = vld [vmem:[#allocation9 + $0x358] sm:$0xff]
        %v2704 = vld [vmem:[#allocation9 + $0x360] sm:$0xff]
        %v2705 = vld [vmem:[#allocation9 + $0x368] sm:$0xff]
        %v2706 = vld [vmem:[#allocation9 + $0x370] sm:$0xff]
        %v2707 = vld [vmem:[#allocation9 + $0x378] sm:$0xff]
        %v2708 = vld [vmem:[#allocation9 + $0x380] sm:$0xff]
        %v2709 = vld [vmem:[#allocation9 + $0x388] sm:$0xff]
        %v2710 = vld [vmem:[#allocation9 + $0x390] sm:$0xff]
        %v2711 = vld [vmem:[#allocation9 + $0x398] sm:$0xff]
        %v2712 = vld [vmem:[#allocation9 + $0x3a0] sm:$0xff]
        %v2713 = vld [vmem:[#allocation9 + $0x3a8] sm:$0xff]
        %v2714 = vld [vmem:[#allocation9 + $0x3b0] sm:$0xff]
        %v2715 = vld [vmem:[#allocation9 + $0x3b8] sm:$0xff]
        %v2716 = vld [vmem:[#allocation9 + $0x3c0] sm:$0xff]
        %v2717 = vld [vmem:[#allocation9 + $0x3c8] sm:$0xff]
        %v2718 = vld [vmem:[#allocation9 + $0x3d0] sm:$0xff]
        %v2719 = vld [vmem:[#allocation9 + $0x3d8] sm:$0xff]
        %v2720 = vld [vmem:[#allocation9 + $0x3e0] sm:$0xff]
        %v2721 = vld [vmem:[#allocation9 + $0x3e8] sm:$0xff]
        %v2722 = vld [vmem:[#allocation9 + $0x3f0] sm:$0xff]
        %v2723 = vld [vmem:[#allocation9 + $0x3f8] sm:$0xff]
        %v2724 = vld [vmem:[#allocation9 + $0x400] sm:$0xff]
        %v2725 = vld [vmem:[#allocation9 + $0x408] sm:$0xff]
        %v2726 = vld [vmem:[#allocation9 + $0x410] sm:$0xff]
        %v2727 = vld [vmem:[#allocation9 + $0x418] sm:$0xff]
        %v2728 = vld [vmem:[#allocation9 + $0x420] sm:$0xff]
        %v2729 = vld [vmem:[#allocation9 + $0x428] sm:$0xff]
        %v2730 = vld [vmem:[#allocation9 + $0x430] sm:$0xff]
        %v2731 = vld [vmem:[#allocation9 + $0x438] sm:$0xff]
        %v2732 = vld [vmem:[#allocation9 + $0x440] sm:$0xff]
        %v2733 = vld [vmem:[#allocation9 + $0x448] sm:$0xff]
        %v2734 = vld [vmem:[#allocation9 + $0x450] sm:$0xff]
        %v2735 = vld [vmem:[#allocation9 + $0x458] sm:$0xff]
        %v2736 = vld [vmem:[#allocation9 + $0x460] sm:$0xff]
        %v2737 = vld [vmem:[#allocation9 + $0x468] sm:$0xff]
        %v2738 = vld [vmem:[#allocation9 + $0x470] sm:$0xff]
        %v2739 = vld [vmem:[#allocation9 + $0x478] sm:$0xff]
        %v2740 = vld [vmem:[#allocation9 + $0x480] sm:$0xff]
        %v2741 = vld [vmem:[#allocation9 + $0x488] sm:$0xff]
        %v2742 = vld [vmem:[#allocation9 + $0x490] sm:$0xff]
        %v2743 = vld [vmem:[#allocation9 + $0x498] sm:$0xff]
        %v2744 = vld [vmem:[#allocation9 + $0x4a0] sm:$0xff]
        %v2745 = vld [vmem:[#allocation9 + $0x4a8] sm:$0xff]
        %v2746 = vld [vmem:[#allocation9 + $0x4b0] sm:$0xff]
        %v2747 = vld [vmem:[#allocation9 + $0x4b8] sm:$0xff]
        %v2748 = vld [vmem:[#allocation9 + $0x4c0] sm:$0xff]
        %v2749 = vld [vmem:[#allocation9 + $0x4c8] sm:$0xff]
        %v2750 = vld [vmem:[#allocation9 + $0x4d0] sm:$0xff]
        %v2751 = vld [vmem:[#allocation9 + $0x4d8] sm:$0xff]
        %v2752 = vld [vmem:[#allocation9 + $0x4e0] sm:$0xff]
        %v2753 = vld [vmem:[#allocation9 + $0x4e8] sm:$0xff]
        %v2754 = vld [vmem:[#allocation9 + $0x4f0] sm:$0xff]
        %v2755 = vld [vmem:[#allocation9 + $0x4f8] sm:$0xff]
        %v2756 = vld [vmem:[#allocation9 + $0x500] sm:$0xff]
        %v2757 = vld [vmem:[#allocation9 + $0x508] sm:$0xff]
        %v2758 = vld [vmem:[#allocation9 + $0x510] sm:$0xff]
        %v2759 = vld [vmem:[#allocation9 + $0x518] sm:$0xff]
        %v2760 = vld [vmem:[#allocation9 + $0x520] sm:$0xff]
        %v2761 = vld [vmem:[#allocation9 + $0x528] sm:$0xff]
        %v2762 = vld [vmem:[#allocation9 + $0x530] sm:$0xff]
        %v2763 = vld [vmem:[#allocation9 + $0x538] sm:$0xff]
        %v2764 = vld [vmem:[#allocation9 + $0x540] sm:$0xff]
        %v2765 = vld [vmem:[#allocation9 + $0x548] sm:$0xff]
        %v2766 = vld [vmem:[#allocation9 + $0x550] sm:$0xff]
        %v2767 = vld [vmem:[#allocation9 + $0x558] sm:$0xff]
        %v2768 = vld [vmem:[#allocation9 + $0x560] sm:$0xff]
        %v2769 = vld [vmem:[#allocation9 + $0x568] sm:$0xff]
        %v2770 = vld [vmem:[#allocation9 + $0x570] sm:$0xff]
        %v2771 = vld [vmem:[#allocation9 + $0x578] sm:$0xff]
        %v2772 = vld [vmem:[#allocation9 + $0x580] sm:$0xff]
        %v2773 = vld [vmem:[#allocation9 + $0x588] sm:$0xff]
        %v2774 = vld [vmem:[#allocation9 + $0x590] sm:$0xff]
        %v2775 = vld [vmem:[#allocation9 + $0x598] sm:$0xff]
        %v2776 = vld [vmem:[#allocation9 + $0x5a0] sm:$0xff]
        %v2777 = vld [vmem:[#allocation9 + $0x5a8] sm:$0xff]
        %v2778 = vld [vmem:[#allocation9 + $0x5b0] sm:$0xff]
        %v2779 = vld [vmem:[#allocation9 + $0x5b8] sm:$0xff]
        %v2780 = vld [vmem:[#allocation9 + $0x5c0] sm:$0xff]
        %v2781 = vld [vmem:[#allocation9 + $0x5c8] sm:$0xff]
        %v2782 = vld [vmem:[#allocation9 + $0x5d0] sm:$0xff]
        %v2783 = vld [vmem:[#allocation9 + $0x5d8] sm:$0xff]
        %v2784 = vld [vmem:[#allocation9 + $0x5e0] sm:$0xff]
        %v2785 = vld [vmem:[#allocation9 + $0x5e8] sm:$0xff]
        %v2786 = vld [vmem:[#allocation9 + $0x5f0] sm:$0xff]
        %v2787 = vld [vmem:[#allocation9 + $0x5f8] sm:$0xff]
        %v2788 = vld [vmem:[#allocation9 + $0x600] sm:$0xff]
        %v2789 = vld [vmem:[#allocation9 + $0x608] sm:$0xff]
        %v2790 = vld [vmem:[#allocation9 + $0x610] sm:$0xff]
        %v2791 = vld [vmem:[#allocation9 + $0x618] sm:$0xff]
        %v2792 = vld [vmem:[#allocation9 + $0x620] sm:$0xff]
        %v2793 = vld [vmem:[#allocation9 + $0x628] sm:$0xff]
        %v2794 = vld [vmem:[#allocation9 + $0x630] sm:$0xff]
        %v2795 = vld [vmem:[#allocation9 + $0x638] sm:$0xff]
        %v2796 = vld [vmem:[#allocation9 + $0x640] sm:$0xff]
        %v2797 = vld [vmem:[#allocation9 + $0x648] sm:$0xff]
        %v2798 = vld [vmem:[#allocation9 + $0x650] sm:$0xff]
        %v2799 = vld [vmem:[#allocation9 + $0x658] sm:$0xff]
        %v2800 = vld [vmem:[#allocation9 + $0x660] sm:$0xff]
        %v2801 = vld [vmem:[#allocation9 + $0x668] sm:$0xff]
        %v2802 = vld [vmem:[#allocation9 + $0x670] sm:$0xff]
        %v2803 = vld [vmem:[#allocation9 + $0x678] sm:$0xff]
        %v2804 = vld [vmem:[#allocation9 + $0x680] sm:$0xff]
        %v2805 = vld [vmem:[#allocation9 + $0x688] sm:$0xff]
        %v2806 = vld [vmem:[#allocation9 + $0x690] sm:$0xff]
        %v2807 = vld [vmem:[#allocation9 + $0x698] sm:$0xff]
        %v2808 = vld [vmem:[#allocation9 + $0x6a0] sm:$0xff]
        %v2809 = vld [vmem:[#allocation9 + $0x6a8] sm:$0xff]
        %v2810 = vld [vmem:[#allocation9 + $0x6b0] sm:$0xff]
        %v2811 = vld [vmem:[#allocation9 + $0x6b8] sm:$0xff]
        %v2812 = vld [vmem:[#allocation9 + $0x6c0] sm:$0xff]
        %v2813 = vld [vmem:[#allocation9 + $0x6c8] sm:$0xff]
        %v2814 = vld [vmem:[#allocation9 + $0x6d0] sm:$0xff]
        %v2815 = vld [vmem:[#allocation9 + $0x6d8] sm:$0xff]
        %v2816 = vld [vmem:[#allocation9 + $0x6e0] sm:$0xff]
        %v2817 = vld [vmem:[#allocation9 + $0x6e8] sm:$0xff]
        %v2818 = vld [vmem:[#allocation9 + $0x6f0] sm:$0xff]
        %v2819 = vld [vmem:[#allocation9 + $0x6f8] sm:$0xff]
        %v2820 = vld [vmem:[#allocation9 + $0x700] sm:$0xff]
        %v2821 = vld [vmem:[#allocation9 + $0x708] sm:$0xff]
        %v2822 = vld [vmem:[#allocation9 + $0x710] sm:$0xff]
        %v2823 = vld [vmem:[#allocation9 + $0x718] sm:$0xff]
        %v2824 = vld [vmem:[#allocation9 + $0x720] sm:$0xff]
        %v2825 = vld [vmem:[#allocation9 + $0x728] sm:$0xff]
        %v2826 = vld [vmem:[#allocation9 + $0x730] sm:$0xff]
        %v2827 = vld [vmem:[#allocation9 + $0x738] sm:$0xff]
        %v2828 = vld [vmem:[#allocation9 + $0x740] sm:$0xff]
        %v2829 = vld [vmem:[#allocation9 + $0x748] sm:$0xff]
        %v2830 = vld [vmem:[#allocation9 + $0x750] sm:$0xff]
        %v2831 = vld [vmem:[#allocation9 + $0x758] sm:$0xff]
        %v2832 = vld [vmem:[#allocation9 + $0x760] sm:$0xff]
        %v2833 = vld [vmem:[#allocation9 + $0x768] sm:$0xff]
        %v2834 = vld [vmem:[#allocation9 + $0x770] sm:$0xff]
        %v2835 = vld [vmem:[#allocation9 + $0x778] sm:$0xff]
        %v2836 = vld [vmem:[#allocation9 + $0x780] sm:$0xff]
        %v2837 = vld [vmem:[#allocation9 + $0x788] sm:$0xff]
        %v2838 = vld [vmem:[#allocation9 + $0x790] sm:$0xff]
        %v2839 = vld [vmem:[#allocation9 + $0x798] sm:$0xff]
        %v2840 = vld [vmem:[#allocation9 + $0x7a0] sm:$0xff]
        %v2841 = vld [vmem:[#allocation9 + $0x7a8] sm:$0xff]
        %v2842 = vld [vmem:[#allocation9 + $0x7b0] sm:$0xff]
        %v2843 = vld [vmem:[#allocation9 + $0x7b8] sm:$0xff]
        %v2844 = vld [vmem:[#allocation9 + $0x7c0] sm:$0xff]
        %v2845 = vld [vmem:[#allocation9 + $0x7c8] sm:$0xff]
        %v2846 = vld [vmem:[#allocation9 + $0x7d0] sm:$0xff]
        %v2847 = vld [vmem:[#allocation9 + $0x7d8] sm:$0xff]
        %v2848 = vld [vmem:[#allocation9 + $0x7e0] sm:$0xff]
        %v2849 = vld [vmem:[#allocation9 + $0x7e8] sm:$0xff]
        %v2850 = vld [vmem:[#allocation9 + $0x7f0] sm:$0xff]
        %v2851 = vld [vmem:[#allocation9 + $0x7f8] sm:$0xff]
        %v2852 = vld [vmem:[#allocation11] sm:$0xf]
        %v2854 = vlaneseq
        %v2855 = vshrl.u32 %v2854, 7
        %v2856 = vsub.s32 0, %v2855
        %v2857 = vrot.slane %v2852, %v2856
        %v2858 = vlaneseq
        %v2859 = vshrl.u32 %v2858, 7
        %v2860 = vsub.s32 1, %v2859
        %v2861 = vrot.slane %v2852, %v2860
        %v2862 = vlaneseq
        %v2863 = vshrl.u32 %v2862, 7
        %v2864 = vsub.s32 2, %v2863
        %v2865 = vrot.slane %v2852, %v2864
        %v2866 = vlaneseq
        %v2867 = vshrl.u32 %v2866, 7
        %v2868 = vsub.s32 3, %v2867
        %v2869 = vrot.slane %v2852, %v2868
        %v3130 = vunpack.c.l.b16 %v2596
        %v3131 = vunpack.c.h.b16 %v2596
        %v3132 = vunpack.c.l.b16 %v2597
        %v3133 = vunpack.c.h.b16 %v2597
        %v3134 = vunpack.c.l.b16 %v2598
        %v3135 = vunpack.c.h.b16 %v2598
        %v3136 = vunpack.c.l.b16 %v2599
        %v3137 = vunpack.c.h.b16 %v2599
        %v3138 = vunpack.c.l.b16 %v2600
        %v3139 = vunpack.c.h.b16 %v2600
        %v3140 = vunpack.c.l.b16 %v2601
        %v3141 = vunpack.c.h.b16 %v2601
        %v3142 = vunpack.c.l.b16 %v2602
        %v3143 = vunpack.c.h.b16 %v2602
        %v3144 = vunpack.c.l.b16 %v2603
        %v3145 = vunpack.c.h.b16 %v2603
        %v3146 = vunpack.c.l.b16 %v2604
        %v3147 = vunpack.c.h.b16 %v2604
        %v3148 = vunpack.c.l.b16 %v2605
        %v3149 = vunpack.c.h.b16 %v2605
        %v3150 = vunpack.c.l.b16 %v2606
        %v3151 = vunpack.c.h.b16 %v2606
        %v3152 = vunpack.c.l.b16 %v2607
        %v3153 = vunpack.c.h.b16 %v2607
        %v3154 = vunpack.c.l.b16 %v2608
        %v3155 = vunpack.c.h.b16 %v2608
        %v3156 = vunpack.c.l.b16 %v2609
        %v3157 = vunpack.c.h.b16 %v2609
        %v3158 = vunpack.c.l.b16 %v2610
        %v3159 = vunpack.c.h.b16 %v2610
        %v3160 = vunpack.c.l.b16 %v2611
        %v3161 = vunpack.c.h.b16 %v2611
        %v3162 = vunpack.c.l.b16 %v2612
        %v3163 = vunpack.c.h.b16 %v2612
        %v3164 = vunpack.c.l.b16 %v2613
        %v3165 = vunpack.c.h.b16 %v2613
        %v3166 = vunpack.c.l.b16 %v2614
        %v3167 = vunpack.c.h.b16 %v2614
        %v3168 = vunpack.c.l.b16 %v2615
        %v3169 = vunpack.c.h.b16 %v2615
        %v3170 = vunpack.c.l.b16 %v2616
        %v3171 = vunpack.c.h.b16 %v2616
        %v3172 = vunpack.c.l.b16 %v2617
        %v3173 = vunpack.c.h.b16 %v2617
        %v3174 = vunpack.c.l.b16 %v2618
        %v3175 = vunpack.c.h.b16 %v2618
        %v3176 = vunpack.c.l.b16 %v2619
        %v3177 = vunpack.c.h.b16 %v2619
        %v3178 = vunpack.c.l.b16 %v2620
        %v3179 = vunpack.c.h.b16 %v2620
        %v3180 = vunpack.c.l.b16 %v2621
        %v3181 = vunpack.c.h.b16 %v2621
        %v3182 = vunpack.c.l.b16 %v2622
        %v3183 = vunpack.c.h.b16 %v2622
        %v3184 = vunpack.c.l.b16 %v2623
        %v3185 = vunpack.c.h.b16 %v2623
        %v3186 = vunpack.c.l.b16 %v2624
        %v3187 = vunpack.c.h.b16 %v2624
        %v3188 = vunpack.c.l.b16 %v2625
        %v3189 = vunpack.c.h.b16 %v2625
        %v3190 = vunpack.c.l.b16 %v2626
        %v3191 = vunpack.c.h.b16 %v2626
        %v3192 = vunpack.c.l.b16 %v2627
        %v3193 = vunpack.c.h.b16 %v2627
        %v3194 = vunpack.c.l.b16 %v2628
        %v3195 = vunpack.c.h.b16 %v2628
        %v3196 = vunpack.c.l.b16 %v2629
        %v3197 = vunpack.c.h.b16 %v2629
        %v3198 = vunpack.c.l.b16 %v2630
        %v3199 = vunpack.c.h.b16 %v2630
        %v3200 = vunpack.c.l.b16 %v2631
        %v3201 = vunpack.c.h.b16 %v2631
        %v3202 = vunpack.c.l.b16 %v2632
        %v3203 = vunpack.c.h.b16 %v2632
        %v3204 = vunpack.c.l.b16 %v2633
        %v3205 = vunpack.c.h.b16 %v2633
        %v3206 = vunpack.c.l.b16 %v2634
        %v3207 = vunpack.c.h.b16 %v2634
        %v3208 = vunpack.c.l.b16 %v2635
        %v3209 = vunpack.c.h.b16 %v2635
        %v3210 = vunpack.c.l.b16 %v2636
        %v3211 = vunpack.c.h.b16 %v2636
        %v3212 = vunpack.c.l.b16 %v2637
        %v3213 = vunpack.c.h.b16 %v2637
        %v3214 = vunpack.c.l.b16 %v2638
        %v3215 = vunpack.c.h.b16 %v2638
        %v3216 = vunpack.c.l.b16 %v2639
        %v3217 = vunpack.c.h.b16 %v2639
        %v3218 = vunpack.c.l.b16 %v2640
        %v3219 = vunpack.c.h.b16 %v2640
        %v3220 = vunpack.c.l.b16 %v2641
        %v3221 = vunpack.c.h.b16 %v2641
        %v3222 = vunpack.c.l.b16 %v2642
        %v3223 = vunpack.c.h.b16 %v2642
        %v3224 = vunpack.c.l.b16 %v2643
        %v3225 = vunpack.c.h.b16 %v2643
        %v3226 = vunpack.c.l.b16 %v2644
        %v3227 = vunpack.c.h.b16 %v2644
        %v3228 = vunpack.c.l.b16 %v2645
        %v3229 = vunpack.c.h.b16 %v2645
        %v3230 = vunpack.c.l.b16 %v2646
        %v3231 = vunpack.c.h.b16 %v2646
        %v3232 = vunpack.c.l.b16 %v2647
        %v3233 = vunpack.c.h.b16 %v2647
        %v3234 = vunpack.c.l.b16 %v2648
        %v3235 = vunpack.c.h.b16 %v2648
        %v3236 = vunpack.c.l.b16 %v2649
        %v3237 = vunpack.c.h.b16 %v2649
        %v3238 = vunpack.c.l.b16 %v2650
        %v3239 = vunpack.c.h.b16 %v2650
        %v3240 = vunpack.c.l.b16 %v2651
        %v3241 = vunpack.c.h.b16 %v2651
        %v3242 = vunpack.c.l.b16 %v2652
        %v3243 = vunpack.c.h.b16 %v2652
        %v3244 = vunpack.c.l.b16 %v2653
        %v3245 = vunpack.c.h.b16 %v2653
        %v3246 = vunpack.c.l.b16 %v2654
        %v3247 = vunpack.c.h.b16 %v2654
        %v3248 = vunpack.c.l.b16 %v2655
        %v3249 = vunpack.c.h.b16 %v2655
        %v3250 = vunpack.c.l.b16 %v2656
        %v3251 = vunpack.c.h.b16 %v2656
        %v3252 = vunpack.c.l.b16 %v2657
        %v3253 = vunpack.c.h.b16 %v2657
        %v3254 = vunpack.c.l.b16 %v2658
        %v3255 = vunpack.c.h.b16 %v2658
        %v3256 = vunpack.c.l.b16 %v2659
        %v3257 = vunpack.c.h.b16 %v2659
        %v3258 = vunpack.c.l.b16 %v2660
        %v3259 = vunpack.c.h.b16 %v2660
        %v3260 = vunpack.c.l.b16 %v2661
        %v3261 = vunpack.c.h.b16 %v2661
        %v3262 = vunpack.c.l.b16 %v2662
        %v3263 = vunpack.c.h.b16 %v2662
        %v3264 = vunpack.c.l.b16 %v2663
        %v3265 = vunpack.c.h.b16 %v2663
        %v3266 = vunpack.c.l.b16 %v2664
        %v3267 = vunpack.c.h.b16 %v2664
        %v3268 = vunpack.c.l.b16 %v2665
        %v3269 = vunpack.c.h.b16 %v2665
        %v3270 = vunpack.c.l.b16 %v2666
        %v3271 = vunpack.c.h.b16 %v2666
        %v3272 = vunpack.c.l.b16 %v2667
        %v3273 = vunpack.c.h.b16 %v2667
        %v3274 = vunpack.c.l.b16 %v2668
        %v3275 = vunpack.c.h.b16 %v2668
        %v3276 = vunpack.c.l.b16 %v2669
        %v3277 = vunpack.c.h.b16 %v2669
        %v3278 = vunpack.c.l.b16 %v2670
        %v3279 = vunpack.c.h.b16 %v2670
        %v3280 = vunpack.c.l.b16 %v2671
        %v3281 = vunpack.c.h.b16 %v2671
        %v3282 = vunpack.c.l.b16 %v2672
        %v3283 = vunpack.c.h.b16 %v2672
        %v3284 = vunpack.c.l.b16 %v2673
        %v3285 = vunpack.c.h.b16 %v2673
        %v3286 = vunpack.c.l.b16 %v2674
        %v3287 = vunpack.c.h.b16 %v2674
        %v3288 = vunpack.c.l.b16 %v2675
        %v3289 = vunpack.c.h.b16 %v2675
        %v3290 = vunpack.c.l.b16 %v2676
        %v3291 = vunpack.c.h.b16 %v2676
        %v3292 = vunpack.c.l.b16 %v2677
        %v3293 = vunpack.c.h.b16 %v2677
        %v3294 = vunpack.c.l.b16 %v2678
        %v3295 = vunpack.c.h.b16 %v2678
        %v3296 = vunpack.c.l.b16 %v2679
        %v3297 = vunpack.c.h.b16 %v2679
        %v3298 = vunpack.c.l.b16 %v2680
        %v3299 = vunpack.c.h.b16 %v2680
        %v3300 = vunpack.c.l.b16 %v2681
        %v3301 = vunpack.c.h.b16 %v2681
        %v3302 = vunpack.c.l.b16 %v2682
        %v3303 = vunpack.c.h.b16 %v2682
        %v3304 = vunpack.c.l.b16 %v2683
        %v3305 = vunpack.c.h.b16 %v2683
        %v3306 = vunpack.c.l.b16 %v2684
        %v3307 = vunpack.c.h.b16 %v2684
        %v3308 = vunpack.c.l.b16 %v2685
        %v3309 = vunpack.c.h.b16 %v2685
        %v3310 = vunpack.c.l.b16 %v2686
        %v3311 = vunpack.c.h.b16 %v2686
        %v3312 = vunpack.c.l.b16 %v2687
        %v3313 = vunpack.c.h.b16 %v2687
        %v3314 = vunpack.c.l.b16 %v2688
        %v3315 = vunpack.c.h.b16 %v2688
        %v3316 = vunpack.c.l.b16 %v2689
        %v3317 = vunpack.c.h.b16 %v2689
        %v3318 = vunpack.c.l.b16 %v2690
        %v3319 = vunpack.c.h.b16 %v2690
        %v3320 = vunpack.c.l.b16 %v2691
        %v3321 = vunpack.c.h.b16 %v2691
        %v3322 = vunpack.c.l.b16 %v2692
        %v3323 = vunpack.c.h.b16 %v2692
        %v3324 = vunpack.c.l.b16 %v2693
        %v3325 = vunpack.c.h.b16 %v2693
        %v3326 = vunpack.c.l.b16 %v2694
        %v3327 = vunpack.c.h.b16 %v2694
        %v3328 = vunpack.c.l.b16 %v2695
        %v3329 = vunpack.c.h.b16 %v2695
        %v3330 = vunpack.c.l.b16 %v2696
        %v3331 = vunpack.c.h.b16 %v2696
        %v3332 = vunpack.c.l.b16 %v2697
        %v3333 = vunpack.c.h.b16 %v2697
        %v3334 = vunpack.c.l.b16 %v2698
        %v3335 = vunpack.c.h.b16 %v2698
        %v3336 = vunpack.c.l.b16 %v2699
        %v3337 = vunpack.c.h.b16 %v2699
        %v3338 = vunpack.c.l.b16 %v2700
        %v3339 = vunpack.c.h.b16 %v2700
        %v3340 = vunpack.c.l.b16 %v2701
        %v3341 = vunpack.c.h.b16 %v2701
        %v3342 = vunpack.c.l.b16 %v2702
        %v3343 = vunpack.c.h.b16 %v2702
        %v3344 = vunpack.c.l.b16 %v2703
        %v3345 = vunpack.c.h.b16 %v2703
        %v3346 = vunpack.c.l.b16 %v2704
        %v3347 = vunpack.c.h.b16 %v2704
        %v3348 = vunpack.c.l.b16 %v2705
        %v3349 = vunpack.c.h.b16 %v2705
        %v3350 = vunpack.c.l.b16 %v2706
        %v3351 = vunpack.c.h.b16 %v2706
        %v3352 = vunpack.c.l.b16 %v2707
        %v3353 = vunpack.c.h.b16 %v2707
        %v3354 = vunpack.c.l.b16 %v2708
        %v3355 = vunpack.c.h.b16 %v2708
        %v3356 = vunpack.c.l.b16 %v2709
        %v3357 = vunpack.c.h.b16 %v2709
        %v3358 = vunpack.c.l.b16 %v2710
        %v3359 = vunpack.c.h.b16 %v2710
        %v3360 = vunpack.c.l.b16 %v2711
        %v3361 = vunpack.c.h.b16 %v2711
        %v3362 = vunpack.c.l.b16 %v2712
        %v3363 = vunpack.c.h.b16 %v2712
        %v3364 = vunpack.c.l.b16 %v2713
        %v3365 = vunpack.c.h.b16 %v2713
        %v3366 = vunpack.c.l.b16 %v2714
        %v3367 = vunpack.c.h.b16 %v2714
        %v3368 = vunpack.c.l.b16 %v2715
        %v3369 = vunpack.c.h.b16 %v2715
        %v3370 = vunpack.c.l.b16 %v2716
        %v3371 = vunpack.c.h.b16 %v2716
        %v3372 = vunpack.c.l.b16 %v2717
        %v3373 = vunpack.c.h.b16 %v2717
        %v3374 = vunpack.c.l.b16 %v2718
        %v3375 = vunpack.c.h.b16 %v2718
        %v3376 = vunpack.c.l.b16 %v2719
        %v3377 = vunpack.c.h.b16 %v2719
        %v3378 = vunpack.c.l.b16 %v2720
        %v3379 = vunpack.c.h.b16 %v2720
        %v3380 = vunpack.c.l.b16 %v2721
        %v3381 = vunpack.c.h.b16 %v2721
        %v3382 = vunpack.c.l.b16 %v2722
        %v3383 = vunpack.c.h.b16 %v2722
        %v3384 = vunpack.c.l.b16 %v2723
        %v3385 = vunpack.c.h.b16 %v2723
        %v3386 = vunpack.c.l.b16 %v2724
        %v3387 = vunpack.c.h.b16 %v2724
        %v3388 = vunpack.c.l.b16 %v2725
        %v3389 = vunpack.c.h.b16 %v2725
        %v3390 = vunpack.c.l.b16 %v2726
        %v3391 = vunpack.c.h.b16 %v2726
        %v3392 = vunpack.c.l.b16 %v2727
        %v3393 = vunpack.c.h.b16 %v2727
        %v3394 = vunpack.c.l.b16 %v2728
        %v3395 = vunpack.c.h.b16 %v2728
        %v3396 = vunpack.c.l.b16 %v2729
        %v3397 = vunpack.c.h.b16 %v2729
        %v3398 = vunpack.c.l.b16 %v2730
        %v3399 = vunpack.c.h.b16 %v2730
        %v3400 = vunpack.c.l.b16 %v2731
        %v3401 = vunpack.c.h.b16 %v2731
        %v3402 = vunpack.c.l.b16 %v2732
        %v3403 = vunpack.c.h.b16 %v2732
        %v3404 = vunpack.c.l.b16 %v2733
        %v3405 = vunpack.c.h.b16 %v2733
        %v3406 = vunpack.c.l.b16 %v2734
        %v3407 = vunpack.c.h.b16 %v2734
        %v3408 = vunpack.c.l.b16 %v2735
        %v3409 = vunpack.c.h.b16 %v2735
        %v3410 = vunpack.c.l.b16 %v2736
        %v3411 = vunpack.c.h.b16 %v2736
        %v3412 = vunpack.c.l.b16 %v2737
        %v3413 = vunpack.c.h.b16 %v2737
        %v3414 = vunpack.c.l.b16 %v2738
        %v3415 = vunpack.c.h.b16 %v2738
        %v3416 = vunpack.c.l.b16 %v2739
        %v3417 = vunpack.c.h.b16 %v2739
        %v3418 = vunpack.c.l.b16 %v2740
        %v3419 = vunpack.c.h.b16 %v2740
        %v3420 = vunpack.c.l.b16 %v2741
        %v3421 = vunpack.c.h.b16 %v2741
        %v3422 = vunpack.c.l.b16 %v2742
        %v3423 = vunpack.c.h.b16 %v2742
        %v3424 = vunpack.c.l.b16 %v2743
        %v3425 = vunpack.c.h.b16 %v2743
        %v3426 = vunpack.c.l.b16 %v2744
        %v3427 = vunpack.c.h.b16 %v2744
        %v3428 = vunpack.c.l.b16 %v2745
        %v3429 = vunpack.c.h.b16 %v2745
        %v3430 = vunpack.c.l.b16 %v2746
        %v3431 = vunpack.c.h.b16 %v2746
        %v3432 = vunpack.c.l.b16 %v2747
        %v3433 = vunpack.c.h.b16 %v2747
        %v3434 = vunpack.c.l.b16 %v2748
        %v3435 = vunpack.c.h.b16 %v2748
        %v3436 = vunpack.c.l.b16 %v2749
        %v3437 = vunpack.c.h.b16 %v2749
        %v3438 = vunpack.c.l.b16 %v2750
        %v3439 = vunpack.c.h.b16 %v2750
        %v3440 = vunpack.c.l.b16 %v2751
        %v3441 = vunpack.c.h.b16 %v2751
        %v3442 = vunpack.c.l.b16 %v2752
        %v3443 = vunpack.c.h.b16 %v2752
        %v3444 = vunpack.c.l.b16 %v2753
        %v3445 = vunpack.c.h.b16 %v2753
        %v3446 = vunpack.c.l.b16 %v2754
        %v3447 = vunpack.c.h.b16 %v2754
        %v3448 = vunpack.c.l.b16 %v2755
        %v3449 = vunpack.c.h.b16 %v2755
        %v3450 = vunpack.c.l.b16 %v2756
        %v3451 = vunpack.c.h.b16 %v2756
        %v3452 = vunpack.c.l.b16 %v2757
        %v3453 = vunpack.c.h.b16 %v2757
        %v3454 = vunpack.c.l.b16 %v2758
        %v3455 = vunpack.c.h.b16 %v2758
        %v3456 = vunpack.c.l.b16 %v2759
        %v3457 = vunpack.c.h.b16 %v2759
        %v3458 = vunpack.c.l.b16 %v2760
        %v3459 = vunpack.c.h.b16 %v2760
        %v3460 = vunpack.c.l.b16 %v2761
        %v3461 = vunpack.c.h.b16 %v2761
        %v3462 = vunpack.c.l.b16 %v2762
        %v3463 = vunpack.c.h.b16 %v2762
        %v3464 = vunpack.c.l.b16 %v2763
        %v3465 = vunpack.c.h.b16 %v2763
        %v3466 = vunpack.c.l.b16 %v2764
        %v3467 = vunpack.c.h.b16 %v2764
        %v3468 = vunpack.c.l.b16 %v2765
        %v3469 = vunpack.c.h.b16 %v2765
        %v3470 = vunpack.c.l.b16 %v2766
        %v3471 = vunpack.c.h.b16 %v2766
        %v3472 = vunpack.c.l.b16 %v2767
        %v3473 = vunpack.c.h.b16 %v2767
        %v3474 = vunpack.c.l.b16 %v2768
        %v3475 = vunpack.c.h.b16 %v2768
        %v3476 = vunpack.c.l.b16 %v2769
        %v3477 = vunpack.c.h.b16 %v2769
        %v3478 = vunpack.c.l.b16 %v2770
        %v3479 = vunpack.c.h.b16 %v2770
        %v3480 = vunpack.c.l.b16 %v2771
        %v3481 = vunpack.c.h.b16 %v2771
        %v3482 = vunpack.c.l.b16 %v2772
        %v3483 = vunpack.c.h.b16 %v2772
        %v3484 = vunpack.c.l.b16 %v2773
        %v3485 = vunpack.c.h.b16 %v2773
        %v3486 = vunpack.c.l.b16 %v2774
        %v3487 = vunpack.c.h.b16 %v2774
        %v3488 = vunpack.c.l.b16 %v2775
        %v3489 = vunpack.c.h.b16 %v2775
        %v3490 = vunpack.c.l.b16 %v2776
        %v3491 = vunpack.c.h.b16 %v2776
        %v3492 = vunpack.c.l.b16 %v2777
        %v3493 = vunpack.c.h.b16 %v2777
        %v3494 = vunpack.c.l.b16 %v2778
        %v3495 = vunpack.c.h.b16 %v2778
        %v3496 = vunpack.c.l.b16 %v2779
        %v3497 = vunpack.c.h.b16 %v2779
        %v3498 = vunpack.c.l.b16 %v2780
        %v3499 = vunpack.c.h.b16 %v2780
        %v3500 = vunpack.c.l.b16 %v2781
        %v3501 = vunpack.c.h.b16 %v2781
        %v3502 = vunpack.c.l.b16 %v2782
        %v3503 = vunpack.c.h.b16 %v2782
        %v3504 = vunpack.c.l.b16 %v2783
        %v3505 = vunpack.c.h.b16 %v2783
        %v3506 = vunpack.c.l.b16 %v2784
        %v3507 = vunpack.c.h.b16 %v2784
        %v3508 = vunpack.c.l.b16 %v2785
        %v3509 = vunpack.c.h.b16 %v2785
        %v3510 = vunpack.c.l.b16 %v2786
        %v3511 = vunpack.c.h.b16 %v2786
        %v3512 = vunpack.c.l.b16 %v2787
        %v3513 = vunpack.c.h.b16 %v2787
        %v3514 = vunpack.c.l.b16 %v2788
        %v3515 = vunpack.c.h.b16 %v2788
        %v3516 = vunpack.c.l.b16 %v2789
        %v3517 = vunpack.c.h.b16 %v2789
        %v3518 = vunpack.c.l.b16 %v2790
        %v3519 = vunpack.c.h.b16 %v2790
        %v3520 = vunpack.c.l.b16 %v2791
        %v3521 = vunpack.c.h.b16 %v2791
        %v3522 = vunpack.c.l.b16 %v2792
        %v3523 = vunpack.c.h.b16 %v2792
        %v3524 = vunpack.c.l.b16 %v2793
        %v3525 = vunpack.c.h.b16 %v2793
        %v3526 = vunpack.c.l.b16 %v2794
        %v3527 = vunpack.c.h.b16 %v2794
        %v3528 = vunpack.c.l.b16 %v2795
        %v3529 = vunpack.c.h.b16 %v2795
        %v3530 = vunpack.c.l.b16 %v2796
        %v3531 = vunpack.c.h.b16 %v2796
        %v3532 = vunpack.c.l.b16 %v2797
        %v3533 = vunpack.c.h.b16 %v2797
        %v3534 = vunpack.c.l.b16 %v2798
        %v3535 = vunpack.c.h.b16 %v2798
        %v3536 = vunpack.c.l.b16 %v2799
        %v3537 = vunpack.c.h.b16 %v2799
        %v3538 = vunpack.c.l.b16 %v2800
        %v3539 = vunpack.c.h.b16 %v2800
        %v3540 = vunpack.c.l.b16 %v2801
        %v3541 = vunpack.c.h.b16 %v2801
        %v3542 = vunpack.c.l.b16 %v2802
        %v3543 = vunpack.c.h.b16 %v2802
        %v3544 = vunpack.c.l.b16 %v2803
        %v3545 = vunpack.c.h.b16 %v2803
        %v3546 = vunpack.c.l.b16 %v2804
        %v3547 = vunpack.c.h.b16 %v2804
        %v3548 = vunpack.c.l.b16 %v2805
        %v3549 = vunpack.c.h.b16 %v2805
        %v3550 = vunpack.c.l.b16 %v2806
        %v3551 = vunpack.c.h.b16 %v2806
        %v3552 = vunpack.c.l.b16 %v2807
        %v3553 = vunpack.c.h.b16 %v2807
        %v3554 = vunpack.c.l.b16 %v2808
        %v3555 = vunpack.c.h.b16 %v2808
        %v3556 = vunpack.c.l.b16 %v2809
        %v3557 = vunpack.c.h.b16 %v2809
        %v3558 = vunpack.c.l.b16 %v2810
        %v3559 = vunpack.c.h.b16 %v2810
        %v3560 = vunpack.c.l.b16 %v2811
        %v3561 = vunpack.c.h.b16 %v2811
        %v3562 = vunpack.c.l.b16 %v2812
        %v3563 = vunpack.c.h.b16 %v2812
        %v3564 = vunpack.c.l.b16 %v2813
        %v3565 = vunpack.c.h.b16 %v2813
        %v3566 = vunpack.c.l.b16 %v2814
        %v3567 = vunpack.c.h.b16 %v2814
        %v3568 = vunpack.c.l.b16 %v2815
        %v3569 = vunpack.c.h.b16 %v2815
        %v3570 = vunpack.c.l.b16 %v2816
        %v3571 = vunpack.c.h.b16 %v2816
        %v3572 = vunpack.c.l.b16 %v2817
        %v3573 = vunpack.c.h.b16 %v2817
        %v3574 = vunpack.c.l.b16 %v2818
        %v3575 = vunpack.c.h.b16 %v2818
        %v3576 = vunpack.c.l.b16 %v2819
        %v3577 = vunpack.c.h.b16 %v2819
        %v3578 = vunpack.c.l.b16 %v2820
        %v3579 = vunpack.c.h.b16 %v2820
        %v3580 = vunpack.c.l.b16 %v2821
        %v3581 = vunpack.c.h.b16 %v2821
        %v3582 = vunpack.c.l.b16 %v2822
        %v3583 = vunpack.c.h.b16 %v2822
        %v3584 = vunpack.c.l.b16 %v2823
        %v3585 = vunpack.c.h.b16 %v2823
        %v3586 = vunpack.c.l.b16 %v2824
        %v3587 = vunpack.c.h.b16 %v2824
        %v3588 = vunpack.c.l.b16 %v2825
        %v3589 = vunpack.c.h.b16 %v2825
        %v3590 = vunpack.c.l.b16 %v2826
        %v3591 = vunpack.c.h.b16 %v2826
        %v3592 = vunpack.c.l.b16 %v2827
        %v3593 = vunpack.c.h.b16 %v2827
        %v3594 = vunpack.c.l.b16 %v2828
        %v3595 = vunpack.c.h.b16 %v2828
        %v3596 = vunpack.c.l.b16 %v2829
        %v3597 = vunpack.c.h.b16 %v2829
        %v3598 = vunpack.c.l.b16 %v2830
        %v3599 = vunpack.c.h.b16 %v2830
        %v3600 = vunpack.c.l.b16 %v2831
        %v3601 = vunpack.c.h.b16 %v2831
        %v3602 = vunpack.c.l.b16 %v2832
        %v3603 = vunpack.c.h.b16 %v2832
        %v3604 = vunpack.c.l.b16 %v2833
        %v3605 = vunpack.c.h.b16 %v2833
        %v3606 = vunpack.c.l.b16 %v2834
        %v3607 = vunpack.c.h.b16 %v2834
        %v3608 = vunpack.c.l.b16 %v2835
        %v3609 = vunpack.c.h.b16 %v2835
        %v3610 = vunpack.c.l.b16 %v2836
        %v3611 = vunpack.c.h.b16 %v2836
        %v3612 = vunpack.c.l.b16 %v2837
        %v3613 = vunpack.c.h.b16 %v2837
        %v3614 = vunpack.c.l.b16 %v2838
        %v3615 = vunpack.c.h.b16 %v2838
        %v3616 = vunpack.c.l.b16 %v2839
        %v3617 = vunpack.c.h.b16 %v2839
        %v3618 = vunpack.c.l.b16 %v2840
        %v3619 = vunpack.c.h.b16 %v2840
        %v3620 = vunpack.c.l.b16 %v2841
        %v3621 = vunpack.c.h.b16 %v2841
        %v3622 = vunpack.c.l.b16 %v2842
        %v3623 = vunpack.c.h.b16 %v2842
        %v3624 = vunpack.c.l.b16 %v2843
        %v3625 = vunpack.c.h.b16 %v2843
        %v3626 = vunpack.c.l.b16 %v2844
        %v3627 = vunpack.c.h.b16 %v2844
        %v3628 = vunpack.c.l.b16 %v2845
        %v3629 = vunpack.c.h.b16 %v2845
        %v3630 = vunpack.c.l.b16 %v2846
        %v3631 = vunpack.c.h.b16 %v2846
        %v3632 = vunpack.c.l.b16 %v2847
        %v3633 = vunpack.c.h.b16 %v2847
        %v3634 = vunpack.c.l.b16 %v2848
        %v3635 = vunpack.c.h.b16 %v2848
        %v3636 = vunpack.c.l.b16 %v2849
        %v3637 = vunpack.c.h.b16 %v2849
        %v3638 = vunpack.c.l.b16 %v2850
        %v3639 = vunpack.c.h.b16 %v2850
        %v3640 = vunpack.c.l.b16 %v2851
        %v3641 = vunpack.c.h.b16 %v2851
        %v3642 = vpack.c.b16 %v3134, %v3130
        %v3643 = vpack.c.b16 %v3135, %v3131
        %v3644 = vpack.c.b16 %v3136, %v3132
        %v3645 = vpack.c.b16 %v3137, %v3133
        %v3646 = vpack.c.b16 %v3142, %v3138
        %v3647 = vpack.c.b16 %v3143, %v3139
        %v3648 = vpack.c.b16 %v3144, %v3140
        %v3649 = vpack.c.b16 %v3145, %v3141
        %v3650 = vpack.c.b16 %v3150, %v3146
        %v3651 = vpack.c.b16 %v3151, %v3147
        %v3652 = vpack.c.b16 %v3152, %v3148
        %v3653 = vpack.c.b16 %v3153, %v3149
        %v3654 = vpack.c.b16 %v3158, %v3154
        %v3655 = vpack.c.b16 %v3159, %v3155
        %v3656 = vpack.c.b16 %v3160, %v3156
        %v3657 = vpack.c.b16 %v3161, %v3157
        %v3658 = vpack.c.b16 %v3166, %v3162
        %v3659 = vpack.c.b16 %v3167, %v3163
        %v3660 = vpack.c.b16 %v3168, %v3164
        %v3661 = vpack.c.b16 %v3169, %v3165
        %v3662 = vpack.c.b16 %v3174, %v3170
        %v3663 = vpack.c.b16 %v3175, %v3171
        %v3664 = vpack.c.b16 %v3176, %v3172
        %v3665 = vpack.c.b16 %v3177, %v3173
        %v3666 = vpack.c.b16 %v3182, %v3178
        %v3667 = vpack.c.b16 %v3183, %v3179
        %v3668 = vpack.c.b16 %v3184, %v3180
        %v3669 = vpack.c.b16 %v3185, %v3181
        %v3670 = vpack.c.b16 %v3190, %v3186
        %v3671 = vpack.c.b16 %v3191, %v3187
        %v3672 = vpack.c.b16 %v3192, %v3188
        %v3673 = vpack.c.b16 %v3193, %v3189
        %v3674 = vpack.c.b16 %v3198, %v3194
        %v3675 = vpack.c.b16 %v3199, %v3195
        %v3676 = vpack.c.b16 %v3200, %v3196
        %v3677 = vpack.c.b16 %v3201, %v3197
        %v3678 = vpack.c.b16 %v3206, %v3202
        %v3679 = vpack.c.b16 %v3207, %v3203
        %v3680 = vpack.c.b16 %v3208, %v3204
        %v3681 = vpack.c.b16 %v3209, %v3205
        %v3682 = vpack.c.b16 %v3214, %v3210
        %v3683 = vpack.c.b16 %v3215, %v3211
        %v3684 = vpack.c.b16 %v3216, %v3212
        %v3685 = vpack.c.b16 %v3217, %v3213
        %v3686 = vpack.c.b16 %v3222, %v3218
        %v3687 = vpack.c.b16 %v3223, %v3219
        %v3688 = vpack.c.b16 %v3224, %v3220
        %v3689 = vpack.c.b16 %v3225, %v3221
        %v3690 = vpack.c.b16 %v3230, %v3226
        %v3691 = vpack.c.b16 %v3231, %v3227
        %v3692 = vpack.c.b16 %v3232, %v3228
        %v3693 = vpack.c.b16 %v3233, %v3229
        %v3694 = vpack.c.b16 %v3238, %v3234
        %v3695 = vpack.c.b16 %v3239, %v3235
        %v3696 = vpack.c.b16 %v3240, %v3236
        %v3697 = vpack.c.b16 %v3241, %v3237
        %v3698 = vpack.c.b16 %v3246, %v3242
        %v3699 = vpack.c.b16 %v3247, %v3243
        %v3700 = vpack.c.b16 %v3248, %v3244
        %v3701 = vpack.c.b16 %v3249, %v3245
        %v3702 = vpack.c.b16 %v3254, %v3250
        %v3703 = vpack.c.b16 %v3255, %v3251
        %v3704 = vpack.c.b16 %v3256, %v3252
        %v3705 = vpack.c.b16 %v3257, %v3253
        %v3706 = vpack.c.b16 %v3262, %v3258
        %v3707 = vpack.c.b16 %v3263, %v3259
        %v3708 = vpack.c.b16 %v3264, %v3260
        %v3709 = vpack.c.b16 %v3265, %v3261
        %v3710 = vpack.c.b16 %v3270, %v3266
        %v3711 = vpack.c.b16 %v3271, %v3267
        %v3712 = vpack.c.b16 %v3272, %v3268
        %v3713 = vpack.c.b16 %v3273, %v3269
        %v3714 = vpack.c.b16 %v3278, %v3274
        %v3715 = vpack.c.b16 %v3279, %v3275
        %v3716 = vpack.c.b16 %v3280, %v3276
        %v3717 = vpack.c.b16 %v3281, %v3277
        %v3718 = vpack.c.b16 %v3286, %v3282
        %v3719 = vpack.c.b16 %v3287, %v3283
        %v3720 = vpack.c.b16 %v3288, %v3284
        %v3721 = vpack.c.b16 %v3289, %v3285
        %v3722 = vpack.c.b16 %v3294, %v3290
        %v3723 = vpack.c.b16 %v3295, %v3291
        %v3724 = vpack.c.b16 %v3296, %v3292
        %v3725 = vpack.c.b16 %v3297, %v3293
        %v3726 = vpack.c.b16 %v3302, %v3298
        %v3727 = vpack.c.b16 %v3303, %v3299
        %v3728 = vpack.c.b16 %v3304, %v3300
        %v3729 = vpack.c.b16 %v3305, %v3301
        %v3730 = vpack.c.b16 %v3310, %v3306
        %v3731 = vpack.c.b16 %v3311, %v3307
        %v3732 = vpack.c.b16 %v3312, %v3308
        %v3733 = vpack.c.b16 %v3313, %v3309
        %v3734 = vpack.c.b16 %v3318, %v3314
        %v3735 = vpack.c.b16 %v3319, %v3315
        %v3736 = vpack.c.b16 %v3320, %v3316
        %v3737 = vpack.c.b16 %v3321, %v3317
        %v3738 = vpack.c.b16 %v3326, %v3322
        %v3739 = vpack.c.b16 %v3327, %v3323
        %v3740 = vpack.c.b16 %v3328, %v3324
        %v3741 = vpack.c.b16 %v3329, %v3325
        %v3742 = vpack.c.b16 %v3334, %v3330
        %v3743 = vpack.c.b16 %v3335, %v3331
        %v3744 = vpack.c.b16 %v3336, %v3332
        %v3745 = vpack.c.b16 %v3337, %v3333
        %v3746 = vpack.c.b16 %v3342, %v3338
        %v3747 = vpack.c.b16 %v3343, %v3339
        %v3748 = vpack.c.b16 %v3344, %v3340
        %v3749 = vpack.c.b16 %v3345, %v3341
        %v3750 = vpack.c.b16 %v3350, %v3346
        %v3751 = vpack.c.b16 %v3351, %v3347
        %v3752 = vpack.c.b16 %v3352, %v3348
        %v3753 = vpack.c.b16 %v3353, %v3349
        %v3754 = vpack.c.b16 %v3358, %v3354
        %v3755 = vpack.c.b16 %v3359, %v3355
        %v3756 = vpack.c.b16 %v3360, %v3356
        %v3757 = vpack.c.b16 %v3361, %v3357
        %v3758 = vpack.c.b16 %v3366, %v3362
        %v3759 = vpack.c.b16 %v3367, %v3363
        %v3760 = vpack.c.b16 %v3368, %v3364
        %v3761 = vpack.c.b16 %v3369, %v3365
        %v3762 = vpack.c.b16 %v3374, %v3370
        %v3763 = vpack.c.b16 %v3375, %v3371
        %v3764 = vpack.c.b16 %v3376, %v3372
        %v3765 = vpack.c.b16 %v3377, %v3373
        %v3766 = vpack.c.b16 %v3382, %v3378
        %v3767 = vpack.c.b16 %v3383, %v3379
        %v3768 = vpack.c.b16 %v3384, %v3380
        %v3769 = vpack.c.b16 %v3385, %v3381
        %v3770 = vpack.c.b16 %v3390, %v3386
        %v3771 = vpack.c.b16 %v3391, %v3387
        %v3772 = vpack.c.b16 %v3392, %v3388
        %v3773 = vpack.c.b16 %v3393, %v3389
        %v3774 = vpack.c.b16 %v3398, %v3394
        %v3775 = vpack.c.b16 %v3399, %v3395
        %v3776 = vpack.c.b16 %v3400, %v3396
        %v3777 = vpack.c.b16 %v3401, %v3397
        %v3778 = vpack.c.b16 %v3406, %v3402
        %v3779 = vpack.c.b16 %v3407, %v3403
        %v3780 = vpack.c.b16 %v3408, %v3404
        %v3781 = vpack.c.b16 %v3409, %v3405
        %v3782 = vpack.c.b16 %v3414, %v3410
        %v3783 = vpack.c.b16 %v3415, %v3411
        %v3784 = vpack.c.b16 %v3416, %v3412
        %v3785 = vpack.c.b16 %v3417, %v3413
        %v3786 = vpack.c.b16 %v3422, %v3418
        %v3787 = vpack.c.b16 %v3423, %v3419
        %v3788 = vpack.c.b16 %v3424, %v3420
        %v3789 = vpack.c.b16 %v3425, %v3421
        %v3790 = vpack.c.b16 %v3430, %v3426
        %v3791 = vpack.c.b16 %v3431, %v3427
        %v3792 = vpack.c.b16 %v3432, %v3428
        %v3793 = vpack.c.b16 %v3433, %v3429
        %v3794 = vpack.c.b16 %v3438, %v3434
        %v3795 = vpack.c.b16 %v3439, %v3435
        %v3796 = vpack.c.b16 %v3440, %v3436
        %v3797 = vpack.c.b16 %v3441, %v3437
        %v3798 = vpack.c.b16 %v3446, %v3442
        %v3799 = vpack.c.b16 %v3447, %v3443
        %v3800 = vpack.c.b16 %v3448, %v3444
        %v3801 = vpack.c.b16 %v3449, %v3445
        %v3802 = vpack.c.b16 %v3454, %v3450
        %v3803 = vpack.c.b16 %v3455, %v3451
        %v3804 = vpack.c.b16 %v3456, %v3452
        %v3805 = vpack.c.b16 %v3457, %v3453
        %v3806 = vpack.c.b16 %v3462, %v3458
        %v3807 = vpack.c.b16 %v3463, %v3459
        %v3808 = vpack.c.b16 %v3464, %v3460
        %v3809 = vpack.c.b16 %v3465, %v3461
        %v3810 = vpack.c.b16 %v3470, %v3466
        %v3811 = vpack.c.b16 %v3471, %v3467
        %v3812 = vpack.c.b16 %v3472, %v3468
        %v3813 = vpack.c.b16 %v3473, %v3469
        %v3814 = vpack.c.b16 %v3478, %v3474
        %v3815 = vpack.c.b16 %v3479, %v3475
        %v3816 = vpack.c.b16 %v3480, %v3476
        %v3817 = vpack.c.b16 %v3481, %v3477
        %v3818 = vpack.c.b16 %v3486, %v3482
        %v3819 = vpack.c.b16 %v3487, %v3483
        %v3820 = vpack.c.b16 %v3488, %v3484
        %v3821 = vpack.c.b16 %v3489, %v3485
        %v3822 = vpack.c.b16 %v3494, %v3490
        %v3823 = vpack.c.b16 %v3495, %v3491
        %v3824 = vpack.c.b16 %v3496, %v3492
        %v3825 = vpack.c.b16 %v3497, %v3493
        %v3826 = vpack.c.b16 %v3502, %v3498
        %v3827 = vpack.c.b16 %v3503, %v3499
        %v3828 = vpack.c.b16 %v3504, %v3500
        %v3829 = vpack.c.b16 %v3505, %v3501
        %v3830 = vpack.c.b16 %v3510, %v3506
        %v3831 = vpack.c.b16 %v3511, %v3507
        %v3832 = vpack.c.b16 %v3512, %v3508
        %v3833 = vpack.c.b16 %v3513, %v3509
        %v3834 = vpack.c.b16 %v3518, %v3514
        %v3835 = vpack.c.b16 %v3519, %v3515
        %v3836 = vpack.c.b16 %v3520, %v3516
        %v3837 = vpack.c.b16 %v3521, %v3517
        %v3838 = vpack.c.b16 %v3526, %v3522
        %v3839 = vpack.c.b16 %v3527, %v3523
        %v3840 = vpack.c.b16 %v3528, %v3524
        %v3841 = vpack.c.b16 %v3529, %v3525
        %v3842 = vpack.c.b16 %v3534, %v3530
        %v3843 = vpack.c.b16 %v3535, %v3531
        %v3844 = vpack.c.b16 %v3536, %v3532
        %v3845 = vpack.c.b16 %v3537, %v3533
        %v3846 = vpack.c.b16 %v3542, %v3538
        %v3847 = vpack.c.b16 %v3543, %v3539
        %v3848 = vpack.c.b16 %v3544, %v3540
        %v3849 = vpack.c.b16 %v3545, %v3541
        %v3850 = vpack.c.b16 %v3550, %v3546
        %v3851 = vpack.c.b16 %v3551, %v3547
        %v3852 = vpack.c.b16 %v3552, %v3548
        %v3853 = vpack.c.b16 %v3553, %v3549
        %v3854 = vpack.c.b16 %v3558, %v3554
        %v3855 = vpack.c.b16 %v3559, %v3555
        %v3856 = vpack.c.b16 %v3560, %v3556
        %v3857 = vpack.c.b16 %v3561, %v3557
        %v3858 = vpack.c.b16 %v3566, %v3562
        %v3859 = vpack.c.b16 %v3567, %v3563
        %v3860 = vpack.c.b16 %v3568, %v3564
        %v3861 = vpack.c.b16 %v3569, %v3565
        %v3862 = vpack.c.b16 %v3574, %v3570
        %v3863 = vpack.c.b16 %v3575, %v3571
        %v3864 = vpack.c.b16 %v3576, %v3572
        %v3865 = vpack.c.b16 %v3577, %v3573
        %v3866 = vpack.c.b16 %v3582, %v3578
        %v3867 = vpack.c.b16 %v3583, %v3579
        %v3868 = vpack.c.b16 %v3584, %v3580
        %v3869 = vpack.c.b16 %v3585, %v3581
        %v3870 = vpack.c.b16 %v3590, %v3586
        %v3871 = vpack.c.b16 %v3591, %v3587
        %v3872 = vpack.c.b16 %v3592, %v3588
        %v3873 = vpack.c.b16 %v3593, %v3589
        %v3874 = vpack.c.b16 %v3598, %v3594
        %v3875 = vpack.c.b16 %v3599, %v3595
        %v3876 = vpack.c.b16 %v3600, %v3596
        %v3877 = vpack.c.b16 %v3601, %v3597
        %v3878 = vpack.c.b16 %v3606, %v3602
        %v3879 = vpack.c.b16 %v3607, %v3603
        %v3880 = vpack.c.b16 %v3608, %v3604
        %v3881 = vpack.c.b16 %v3609, %v3605
        %v3882 = vpack.c.b16 %v3614, %v3610
        %v3883 = vpack.c.b16 %v3615, %v3611
        %v3884 = vpack.c.b16 %v3616, %v3612
        %v3885 = vpack.c.b16 %v3617, %v3613
        %v3886 = vpack.c.b16 %v3622, %v3618
        %v3887 = vpack.c.b16 %v3623, %v3619
        %v3888 = vpack.c.b16 %v3624, %v3620
        %v3889 = vpack.c.b16 %v3625, %v3621
        %v3890 = vpack.c.b16 %v3630, %v3626
        %v3891 = vpack.c.b16 %v3631, %v3627
        %v3892 = vpack.c.b16 %v3632, %v3628
        %v3893 = vpack.c.b16 %v3633, %v3629
        %v3894 = vpack.c.b16 %v3638, %v3634
        %v3895 = vpack.c.b16 %v3639, %v3635
        %v3896 = vpack.c.b16 %v3640, %v3636
        %v3897 = vpack.c.b16 %v3641, %v3637
        %4154 = vmatprep.subr.bf16.mxu0 %v3643
        %4155 = vmatpush1.bf16.msra.mxu0 %v3642
        %4156 = vmatprep.subr.bf16.mxu0 %v3647
        %4157 = vmatpush1.bf16.msra.mxu0 %v3646
        %4158 = vmatprep.subr.bf16.mxu0 %v3651
        %4159 = vmatpush1.bf16.msra.mxu0 %v3650
        %4160 = vmatprep.subr.bf16.mxu0 %v3655
        %4161 = vmatpush1.bf16.msra.mxu0 %v3654
        %4162 = vmatprep.subr.bf16.mxu0 %v3659
        %4163 = vmatpush1.bf16.msra.mxu0 %v3658
        %4164 = vmatprep.subr.bf16.mxu0 %v3663
        %4165 = vmatpush1.bf16.msra.mxu0 %v3662
        %4166 = vmatprep.subr.bf16.mxu0 %v3667
        %4167 = vmatpush1.bf16.msra.mxu0 %v3666
        %4168 = vmatprep.subr.bf16.mxu0 %v3671
        %4169 = vmatpush1.bf16.msra.mxu0 %v3670
        %4170 = vmatprep.subr.bf16.mxu0 %v3675
        %4171 = vmatpush1.bf16.msra.mxu0 %v3674
        %4172 = vmatprep.subr.bf16.mxu0 %v3679
        %4173 = vmatpush1.bf16.msra.mxu0 %v3678
        %4174 = vmatprep.subr.bf16.mxu0 %v3683
        %4175 = vmatpush1.bf16.msra.mxu0 %v3682
        %4176 = vmatprep.subr.bf16.mxu0 %v3687
        %4177 = vmatpush1.bf16.msra.mxu0 %v3686
        %4178 = vmatprep.subr.bf16.mxu0 %v3691
        %4179 = vmatpush1.bf16.msra.mxu0 %v3690
        %4180 = vmatprep.subr.bf16.mxu0 %v3695
        %4181 = vmatpush1.bf16.msra.mxu0 %v3694
        %4182 = vmatprep.subr.bf16.mxu0 %v3699
        %4183 = vmatpush1.bf16.msra.mxu0 %v3698
        %4184 = vmatprep.subr.bf16.mxu0 %v3703
        %4185 = vmatpush1.bf16.msra.mxu0 %v3702
        %4186 = vmatprep.mubr.bf16.mxu0 %v2469
        %4187 = vmatmul.mubr.bf16.gmra.mrb[0].mxu0 %v2468
        %v4188 = vpop.f32.mrb[0].mxu0
        %v4189 = vadd.f32 %v2857, %v4188
        %v4190 = vpop.f32.mrb[0].mxu0
        %v4191 = vadd.f32 %v2861, %v4190
        %v4192 = vpop.f32.mrb[0].mxu0
        %v4193 = vadd.f32 %v2857, %v4192
        %v4194 = vpop.f32.mrb[0].mxu0
        %v4195 = vadd.f32 %v2861, %v4194
        %4196 = vmatprep.mubr.bf16.mxu0 %v2477
        %4197 = vmatmul.mubr.bf16.gmra.mrb[0].mxu0 %v2476
        %v4198 = vpop.f32.mrb[0].mxu0
        %v4199 = vadd.f32 %v2857, %v4198
        %v4200 = vpop.f32.mrb[0].mxu0
        %v4201 = vadd.f32 %v2861, %v4200
        %v4202 = vpop.f32.mrb[0].mxu0
        %v4203 = vadd.f32 %v2857, %v4202
        %v4204 = vpop.f32.mrb[0].mxu0
        %v4205 = vadd.f32 %v2861, %v4204
        %4206 = vmatprep.mubr.bf16.mxu0 %v2485
        %4207 = vmatmul.mubr.bf16.gmra.mrb[0].mxu0 %v2484
        %v4208 = vpop.f32.mrb[0].mxu0
        %v4209 = vadd.f32 %v2857, %v4208
        %v4210 = vpop.f32.mrb[0].mxu0
        %v4211 = vadd.f32 %v2861, %v4210
        %v4212 = vpop.f32.mrb[0].mxu0
        %v4213 = vadd.f32 %v2857, %v4212
        %v4214 = vpop.f32.mrb[0].mxu0
        %v4215 = vadd.f32 %v2861, %v4214
        %4216 = vmatprep.mubr.bf16.mxu0 %v2493
        %4217 = vmatmul.mubr.bf16.gmra.mrb[0].mxu0 %v2492
        %v4218 = vpop.f32.mrb[0].mxu0
        %v4219 = vadd.f32 %v2857, %v4218
        %v4220 = vpop.f32.mrb[0].mxu0
        %v4221 = vadd.f32 %v2861, %v4220
        %v4222 = vpop.f32.mrb[0].mxu0
        %v4223 = vadd.f32 %v2857, %v4222
        %v4224 = vpop.f32.mrb[0].mxu0
        %v4225 = vadd.f32 %v2861, %v4224
        %4226 = vmatprep.mubr.bf16.mxu0 %v2501
        %4227 = vmatmul.mubr.bf16.gmra.mrb[0].mxu0 %v2500
        %v4228 = vpop.f32.mrb[0].mxu0
        %v4229 = vadd.f32 %v2857, %v4228
        %v4230 = vpop.f32.mrb[0].mxu0
        %v4231 = vadd.f32 %v2861, %v4230
        %v4232 = vpop.f32.mrb[0].mxu0
        %v4233 = vadd.f32 %v2857, %v4232
        %v4234 = vpop.f32.mrb[0].mxu0
        %v4235 = vadd.f32 %v2861, %v4234
        %4236 = vmatprep.mubr.bf16.mxu0 %v2509
        %4237 = vmatmul.mubr.bf16.gmra.mrb[0].mxu0 %v2508
        %v4238 = vpop.f32.mrb[0].mxu0
        %v4239 = vadd.f32 %v2857, %v4238
        %v4240 = vpop.f32.mrb[0].mxu0
        %v4241 = vadd.f32 %v2861, %v4240
        %v4242 = vpop.f32.mrb[0].mxu0
        %v4243 = vadd.f32 %v2857, %v4242
        %v4244 = vpop.f32.mrb[0].mxu0
        %v4245 = vadd.f32 %v2861, %v4244
        %4246 = vmatprep.mubr.bf16.mxu0 %v2517
        %4247 = vmatmul.mubr.bf16.gmra.mrb[0].mxu0 %v2516
        %v4248 = vpop.f32.mrb[0].mxu0
        %v4249 = vadd.f32 %v2857, %v4248
        %v4250 = vpop.f32.mrb[0].mxu0
        %v4251 = vadd.f32 %v2861, %v4250
        %v4252 = vpop.f32.mrb[0].mxu0
        %v4253 = vadd.f32 %v2857, %v4252
        %v4254 = vpop.f32.mrb[0].mxu0
        %v4255 = vadd.f32 %v2861, %v4254
        %4256 = vmatprep.mubr.bf16.mxu0 %v2525
        %4257 = vmatmul.mubr.bf16.gmra.mrb[0].mxu0 %v2524
        %v4258 = vpop.f32.mrb[0].mxu0
        %v4259 = vadd.f32 %v2857, %v4258
        %v4260 = vpop.f32.mrb[0].mxu0
        %v4261 = vadd.f32 %v2861, %v4260
        %v4262 = vpop.f32.mrb[0].mxu0
        %v4263 = vadd.f32 %v2857, %v4262
        %v4264 = vpop.f32.mrb[0].mxu0
        %v4265 = vadd.f32 %v2861, %v4264
        %4266 = vmatprep.mubr.bf16.mxu0 %v2533
        %4267 = vmatmul.mubr.bf16.gmra.mrb[0].mxu0 %v2532
        %v4268 = vpop.f32.mrb[0].mxu0
        %v4269 = vadd.f32 %v2857, %v4268
        %v4270 = vpop.f32.mrb[0].mxu0
        %v4271 = vadd.f32 %v2861, %v4270
        %v4272 = vpop.f32.mrb[0].mxu0
        %v4273 = vadd.f32 %v2857, %v4272
        %v4274 = vpop.f32.mrb[0].mxu0
        %v4275 = vadd.f32 %v2861, %v4274
        %4276 = vmatprep.mubr.bf16.mxu0 %v2541
        %4277 = vmatmul.mubr.bf16.gmra.mrb[0].mxu0 %v2540
        %v4278 = vpop.f32.mrb[0].mxu0
        %v4279 = vadd.f32 %v2857, %v4278
        %v4280 = vpop.f32.mrb[0].mxu0
        %v4281 = vadd.f32 %v2861, %v4280
        %v4282 = vpop.f32.mrb[0].mxu0
        %v4283 = vadd.f32 %v2857, %v4282
        %v4284 = vpop.f32.mrb[0].mxu0
        %v4285 = vadd.f32 %v2861, %v4284
        %4286 = vmatprep.mubr.bf16.mxu0 %v2549
        %4287 = vmatmul.mubr.bf16.gmra.mrb[0].mxu0 %v2548
        %v4288 = vpop.f32.mrb[0].mxu0
        %v4289 = vadd.f32 %v2857, %v4288
        %v4290 = vpop.f32.mrb[0].mxu0
        %v4291 = vadd.f32 %v2861, %v4290
        %v4292 = vpop.f32.mrb[0].mxu0
        %v4293 = vadd.f32 %v2857, %v4292
        %v4294 = vpop.f32.mrb[0].mxu0
        %v4295 = vadd.f32 %v2861, %v4294
        %4296 = vmatprep.mubr.bf16.mxu0 %v2557
        %4297 = vmatmul.mubr.bf16.gmra.mrb[0].mxu0 %v2556
        %v4298 = vpop.f32.mrb[0].mxu0
        %v4299 = vadd.f32 %v2857, %v4298
        %v4300 = vpop.f32.mrb[0].mxu0
        %v4301 = vadd.f32 %v2861, %v4300
        %v4302 = vpop.f32.mrb[0].mxu0
        %v4303 = vadd.f32 %v2857, %v4302
        %v4304 = vpop.f32.mrb[0].mxu0
        %v4305 = vadd.f32 %v2861, %v4304
        %4306 = vmatprep.mubr.bf16.mxu0 %v2565
        %4307 = vmatmul.mubr.bf16.gmra.mrb[0].mxu0 %v2564
        %v4308 = vpop.f32.mrb[0].mxu0
        %v4309 = vadd.f32 %v2857, %v4308
        %v4310 = vpop.f32.mrb[0].mxu0
        %v4311 = vadd.f32 %v2861, %v4310
        %v4312 = vpop.f32.mrb[0].mxu0
        %v4313 = vadd.f32 %v2857, %v4312
        %v4314 = vpop.f32.mrb[0].mxu0
        %v4315 = vadd.f32 %v2861, %v4314
        %4316 = vmatprep.mubr.bf16.mxu0 %v2573
        %4317 = vmatmul.mubr.bf16.gmra.mrb[0].mxu0 %v2572
        %v4318 = vpop.f32.mrb[0].mxu0
        %v4319 = vadd.f32 %v2857, %v4318
        %v4320 = vpop.f32.mrb[0].mxu0
        %v4321 = vadd.f32 %v2861, %v4320
        %v4322 = vpop.f32.mrb[0].mxu0
        %v4323 = vadd.f32 %v2857, %v4322
        %v4324 = vpop.f32.mrb[0].mxu0
        %v4325 = vadd.f32 %v2861, %v4324
        %4326 = vmatprep.mubr.bf16.mxu0 %v2581
        %4327 = vmatmul.mubr.bf16.gmra.mrb[0].mxu0 %v2580
        %v4328 = vpop.f32.mrb[0].mxu0
        %v4329 = vadd.f32 %v2857, %v4328
        %v4330 = vpop.f32.mrb[0].mxu0
        %v4331 = vadd.f32 %v2861, %v4330
        %v4332 = vpop.f32.mrb[0].mxu0
        %v4333 = vadd.f32 %v2857, %v4332
        %v4334 = vpop.f32.mrb[0].mxu0
        %v4335 = vadd.f32 %v2861, %v4334
        %4336 = vmatprep.mubr.bf16.mxu0 %v2589
        %4337 = vmatmul.mubr.bf16.gmra.mrb[0].mxu0 %v2588
        %v4338 = vpop.f32.mrb[0].mxu0
        %v4339 = vadd.f32 %v2857, %v4338
        %v4340 = vpop.f32.mrb[0].mxu0
        %v4341 = vadd.f32 %v2861, %v4340
        %v4342 = vpop.f32.mrb[0].mxu0
        %v4343 = vadd.f32 %v2857, %v4342
        %v4344 = vpop.f32.mrb[0].mxu0
        %v4345 = vadd.f32 %v2861, %v4344
        %4346 = vdwg.mxu0
        %4347 = vmatprep.subr.bf16.mxu0 %v3707
        %4348 = vmatpush1.bf16.msra.mxu0 %v3706
        %4349 = vmatprep.subr.bf16.mxu0 %v3711
        %4350 = vmatpush1.bf16.msra.mxu0 %v3710
        %4351 = vmatprep.subr.bf16.mxu0 %v3715
        %4352 = vmatpush1.bf16.msra.mxu0 %v3714
        %4353 = vmatprep.subr.bf16.mxu0 %v3719
        %4354 = vmatpush1.bf16.msra.mxu0 %v3718
        %4355 = vmatprep.subr.bf16.mxu0 %v3723
        %4356 = vmatpush1.bf16.msra.mxu0 %v3722
        %4357 = vmatprep.subr.bf16.mxu0 %v3727
        %4358 = vmatpush1.bf16.msra.mxu0 %v3726
        %4359 = vmatprep.subr.bf16.mxu0 %v3731
        %4360 = vmatpush1.bf16.msra.mxu0 %v3730
        %4361 = vmatprep.subr.bf16.mxu0 %v3735
        %4362 = vmatpush1.bf16.msra.mxu0 %v3734
        %4363 = vmatprep.subr.bf16.mxu0 %v3739
        %4364 = vmatpush1.bf16.msra.mxu0 %v3738
        %4365 = vmatprep.subr.bf16.mxu0 %v3743
        %4366 = vmatpush1.bf16.msra.mxu0 %v3742
        %4367 = vmatprep.subr.bf16.mxu0 %v3747
        %4368 = vmatpush1.bf16.msra.mxu0 %v3746
        %4369 = vmatprep.subr.bf16.mxu0 %v3751
        %4370 = vmatpush1.bf16.msra.mxu0 %v3750
        %4371 = vmatprep.subr.bf16.mxu0 %v3755
        %4372 = vmatpush1.bf16.msra.mxu0 %v3754
        %4373 = vmatprep.subr.bf16.mxu0 %v3759
        %4374 = vmatpush1.bf16.msra.mxu0 %v3758
        %4375 = vmatprep.subr.bf16.mxu0 %v3763
        %4376 = vmatpush1.bf16.msra.mxu0 %v3762
        %4377 = vmatprep.subr.bf16.mxu0 %v3767
        %4378 = vmatpush1.bf16.msra.mxu0 %v3766
        %4379 = vmatprep.mubr.bf16.mxu0 %v2471
        %4380 = vmatmul.mubr.bf16.gmra.mrb[0].mxu0 %v2470
        %v4381 = vpop.f32.mrb[0].mxu0
        %v4382 = vadd.f32 %v4189, %v4381
        %v4383 = vpop.f32.mrb[0].mxu0
        %v4384 = vadd.f32 %v4191, %v4383
        %v4385 = vpop.f32.mrb[0].mxu0
        %v4386 = vadd.f32 %v4193, %v4385
        %v4387 = vpop.f32.mrb[0].mxu0
        %v4388 = vadd.f32 %v4195, %v4387
        %4389 = vmatprep.mubr.bf16.mxu0 %v2479
        %4390 = vmatmul.mubr.bf16.gmra.mrb[0].mxu0 %v2478
        %v4391 = vpop.f32.mrb[0].mxu0
        %v4392 = vadd.f32 %v4199, %v4391
        %v4393 = vpop.f32.mrb[0].mxu0
        %v4394 = vadd.f32 %v4201, %v4393
        %v4395 = vpop.f32.mrb[0].mxu0
        %v4396 = vadd.f32 %v4203, %v4395
        %v4397 = vpop.f32.mrb[0].mxu0
        %v4398 = vadd.f32 %v4205, %v4397
        %4399 = vmatprep.mubr.bf16.mxu0 %v2487
        %4400 = vmatmul.mubr.bf16.gmra.mrb[0].mxu0 %v2486
        %v4401 = vpop.f32.mrb[0].mxu0
        %v4402 = vadd.f32 %v4209, %v4401
        %v4403 = vpop.f32.mrb[0].mxu0
        %v4404 = vadd.f32 %v4211, %v4403
        %v4405 = vpop.f32.mrb[0].mxu0
        %v4406 = vadd.f32 %v4213, %v4405
        %v4407 = vpop.f32.mrb[0].mxu0
        %v4408 = vadd.f32 %v4215, %v4407
        %4409 = vmatprep.mubr.bf16.mxu0 %v2495
        %4410 = vmatmul.mubr.bf16.gmra.mrb[0].mxu0 %v2494
        %v4411 = vpop.f32.mrb[0].mxu0
        %v4412 = vadd.f32 %v4219, %v4411
        %v4413 = vpop.f32.mrb[0].mxu0
        %v4414 = vadd.f32 %v4221, %v4413
        %v4415 = vpop.f32.mrb[0].mxu0
        %v4416 = vadd.f32 %v4223, %v4415
        %v4417 = vpop.f32.mrb[0].mxu0
        %v4418 = vadd.f32 %v4225, %v4417
        %4419 = vmatprep.mubr.bf16.mxu0 %v2503
        %4420 = vmatmul.mubr.bf16.gmra.mrb[0].mxu0 %v2502
        %v4421 = vpop.f32.mrb[0].mxu0
        %v4422 = vadd.f32 %v4229, %v4421
        %v4423 = vpop.f32.mrb[0].mxu0
        %v4424 = vadd.f32 %v4231, %v4423
        %v4425 = vpop.f32.mrb[0].mxu0
        %v4426 = vadd.f32 %v4233, %v4425
        %v4427 = vpop.f32.mrb[0].mxu0
        %v4428 = vadd.f32 %v4235, %v4427
        %4429 = vmatprep.mubr.bf16.mxu0 %v2511
        %4430 = vmatmul.mubr.bf16.gmra.mrb[0].mxu0 %v2510
        %v4431 = vpop.f32.mrb[0].mxu0
        %v4432 = vadd.f32 %v4239, %v4431
        %v4433 = vpop.f32.mrb[0].mxu0
        %v4434 = vadd.f32 %v4241, %v4433
        %v4435 = vpop.f32.mrb[0].mxu0
        %v4436 = vadd.f32 %v4243, %v4435
        %v4437 = vpop.f32.mrb[0].mxu0
        %v4438 = vadd.f32 %v4245, %v4437
        %4439 = vmatprep.mubr.bf16.mxu0 %v2519
        %4440 = vmatmul.mubr.bf16.gmra.mrb[0].mxu0 %v2518
        %v4441 = vpop.f32.mrb[0].mxu0
        %v4442 = vadd.f32 %v4249, %v4441
        %v4443 = vpop.f32.mrb[0].mxu0
        %v4444 = vadd.f32 %v4251, %v4443
        %v4445 = vpop.f32.mrb[0].mxu0
        %v4446 = vadd.f32 %v4253, %v4445
        %v4447 = vpop.f32.mrb[0].mxu0
        %v4448 = vadd.f32 %v4255, %v4447
        %4449 = vmatprep.mubr.bf16.mxu0 %v2527
        %4450 = vmatmul.mubr.bf16.gmra.mrb[0].mxu0 %v2526
        %v4451 = vpop.f32.mrb[0].mxu0
        %v4452 = vadd.f32 %v4259, %v4451
        %v4453 = vpop.f32.mrb[0].mxu0
        %v4454 = vadd.f32 %v4261, %v4453
        %v4455 = vpop.f32.mrb[0].mxu0
        %v4456 = vadd.f32 %v4263, %v4455
        %v4457 = vpop.f32.mrb[0].mxu0
        %v4458 = vadd.f32 %v4265, %v4457
        %4459 = vmatprep.mubr.bf16.mxu0 %v2535
        %4460 = vmatmul.mubr.bf16.gmra.mrb[0].mxu0 %v2534
        %v4461 = vpop.f32.mrb[0].mxu0
        %v4462 = vadd.f32 %v4269, %v4461
        %v4463 = vpop.f32.mrb[0].mxu0
        %v4464 = vadd.f32 %v4271, %v4463
        %v4465 = vpop.f32.mrb[0].mxu0
        %v4466 = vadd.f32 %v4273, %v4465
        %v4467 = vpop.f32.mrb[0].mxu0
        %v4468 = vadd.f32 %v4275, %v4467
        %4469 = vmatprep.mubr.bf16.mxu0 %v2543
        %4470 = vmatmul.mubr.bf16.gmra.mrb[0].mxu0 %v2542
        %v4471 = vpop.f32.mrb[0].mxu0
        %v4472 = vadd.f32 %v4279, %v4471
        %v4473 = vpop.f32.mrb[0].mxu0
        %v4474 = vadd.f32 %v4281, %v4473
        %v4475 = vpop.f32.mrb[0].mxu0
        %v4476 = vadd.f32 %v4283, %v4475
        %v4477 = vpop.f32.mrb[0].mxu0
        %v4478 = vadd.f32 %v4285, %v4477
        %4479 = vmatprep.mubr.bf16.mxu0 %v2551
        %4480 = vmatmul.mubr.bf16.gmra.mrb[0].mxu0 %v2550
        %v4481 = vpop.f32.mrb[0].mxu0
        %v4482 = vadd.f32 %v4289, %v4481
        %v4483 = vpop.f32.mrb[0].mxu0
        %v4484 = vadd.f32 %v4291, %v4483
        %v4485 = vpop.f32.mrb[0].mxu0
        %v4486 = vadd.f32 %v4293, %v4485
        %v4487 = vpop.f32.mrb[0].mxu0
        %v4488 = vadd.f32 %v4295, %v4487
        %4489 = vmatprep.mubr.bf16.mxu0 %v2559
        %4490 = vmatmul.mubr.bf16.gmra.mrb[0].mxu0 %v2558
        %v4491 = vpop.f32.mrb[0].mxu0
        %v4492 = vadd.f32 %v4299, %v4491
        %v4493 = vpop.f32.mrb[0].mxu0
        %v4494 = vadd.f32 %v4301, %v4493
        %v4495 = vpop.f32.mrb[0].mxu0
        %v4496 = vadd.f32 %v4303, %v4495
        %v4497 = vpop.f32.mrb[0].mxu0
        %v4498 = vadd.f32 %v4305, %v4497
        %4499 = vmatprep.mubr.bf16.mxu0 %v2567
        %4500 = vmatmul.mubr.bf16.gmra.mrb[0].mxu0 %v2566
        %v4501 = vpop.f32.mrb[0].mxu0
        %v4502 = vadd.f32 %v4309, %v4501
        %v4503 = vpop.f32.mrb[0].mxu0
        %v4504 = vadd.f32 %v4311, %v4503
        %v4505 = vpop.f32.mrb[0].mxu0
        %v4506 = vadd.f32 %v4313, %v4505
        %v4507 = vpop.f32.mrb[0].mxu0
        %v4508 = vadd.f32 %v4315, %v4507
        %4509 = vmatprep.mubr.bf16.mxu0 %v2575
        %4510 = vmatmul.mubr.bf16.gmra.mrb[0].mxu0 %v2574
        %v4511 = vpop.f32.mrb[0].mxu0
        %v4512 = vadd.f32 %v4319, %v4511
        %v4513 = vpop.f32.mrb[0].mxu0
        %v4514 = vadd.f32 %v4321, %v4513
        %v4515 = vpop.f32.mrb[0].mxu0
        %v4516 = vadd.f32 %v4323, %v4515
        %v4517 = vpop.f32.mrb[0].mxu0
        %v4518 = vadd.f32 %v4325, %v4517
        %4519 = vmatprep.mubr.bf16.mxu0 %v2583
        %4520 = vmatmul.mubr.bf16.gmra.mrb[0].mxu0 %v2582
        %v4521 = vpop.f32.mrb[0].mxu0
        %v4522 = vadd.f32 %v4329, %v4521
        %v4523 = vpop.f32.mrb[0].mxu0
        %v4524 = vadd.f32 %v4331, %v4523
        %v4525 = vpop.f32.mrb[0].mxu0
        %v4526 = vadd.f32 %v4333, %v4525
        %v4527 = vpop.f32.mrb[0].mxu0
        %v4528 = vadd.f32 %v4335, %v4527
        %4529 = vmatprep.mubr.bf16.mxu0 %v2591
        %4530 = vmatmul.mubr.bf16.gmra.mrb[0].mxu0 %v2590
        %v4531 = vpop.f32.mrb[0].mxu0
        %v4532 = vadd.f32 %v4339, %v4531
        %v4533 = vpop.f32.mrb[0].mxu0
        %v4534 = vadd.f32 %v4341, %v4533
        %v4535 = vpop.f32.mrb[0].mxu0
        %v4536 = vadd.f32 %v4343, %v4535
        %v4537 = vpop.f32.mrb[0].mxu0
        %v4538 = vadd.f32 %v4345, %v4537
        %4539 = vdwg.mxu0
        %4540 = vmatprep.subr.bf16.mxu0 %v3771
        %4541 = vmatpush1.bf16.msra.mxu0 %v3770
        %4542 = vmatprep.subr.bf16.mxu0 %v3775
        %4543 = vmatpush1.bf16.msra.mxu0 %v3774
        %4544 = vmatprep.subr.bf16.mxu0 %v3779
        %4545 = vmatpush1.bf16.msra.mxu0 %v3778
        %4546 = vmatprep.subr.bf16.mxu0 %v3783
        %4547 = vmatpush1.bf16.msra.mxu0 %v3782
        %4548 = vmatprep.subr.bf16.mxu0 %v3787
        %4549 = vmatpush1.bf16.msra.mxu0 %v3786
        %4550 = vmatprep.subr.bf16.mxu0 %v3791
        %4551 = vmatpush1.bf16.msra.mxu0 %v3790
        %4552 = vmatprep.subr.bf16.mxu0 %v3795
        %4553 = vmatpush1.bf16.msra.mxu0 %v3794
        %4554 = vmatprep.subr.bf16.mxu0 %v3799
        %4555 = vmatpush1.bf16.msra.mxu0 %v3798
        %4556 = vmatprep.subr.bf16.mxu0 %v3803
        %4557 = vmatpush1.bf16.msra.mxu0 %v3802
        %4558 = vmatprep.subr.bf16.mxu0 %v3807
        %4559 = vmatpush1.bf16.msra.mxu0 %v3806
        %4560 = vmatprep.subr.bf16.mxu0 %v3811
        %4561 = vmatpush1.bf16.msra.mxu0 %v3810
        %4562 = vmatprep.subr.bf16.mxu0 %v3815
        %4563 = vmatpush1.bf16.msra.mxu0 %v3814
        %4564 = vmatprep.subr.bf16.mxu0 %v3819
        %4565 = vmatpush1.bf16.msra.mxu0 %v3818
        %4566 = vmatprep.subr.bf16.mxu0 %v3823
        %4567 = vmatpush1.bf16.msra.mxu0 %v3822
        %4568 = vmatprep.subr.bf16.mxu0 %v3827
        %4569 = vmatpush1.bf16.msra.mxu0 %v3826
        %4570 = vmatprep.subr.bf16.mxu0 %v3831
        %4571 = vmatpush1.bf16.msra.mxu0 %v3830
        %4572 = vmatprep.mubr.bf16.mxu0 %v2473
        %4573 = vmatmul.mubr.bf16.gmra.mrb[0].mxu0 %v2472
        %v4574 = vpop.f32.mrb[0].mxu0
        %v4575 = vadd.f32 %v4382, %v4574
        %v4576 = vpop.f32.mrb[0].mxu0
        %v4577 = vadd.f32 %v4384, %v4576
        %v4578 = vpop.f32.mrb[0].mxu0
        %v4579 = vadd.f32 %v4386, %v4578
        %v4580 = vpop.f32.mrb[0].mxu0
        %v4581 = vadd.f32 %v4388, %v4580
        %4582 = vmatprep.mubr.bf16.mxu0 %v2481
        %4583 = vmatmul.mubr.bf16.gmra.mrb[0].mxu0 %v2480
        %v4584 = vpop.f32.mrb[0].mxu0
        %v4585 = vadd.f32 %v4392, %v4584
        %v4586 = vpop.f32.mrb[0].mxu0
        %v4587 = vadd.f32 %v4394, %v4586
        %v4588 = vpop.f32.mrb[0].mxu0
        %v4589 = vadd.f32 %v4396, %v4588
        %v4590 = vpop.f32.mrb[0].mxu0
        %v4591 = vadd.f32 %v4398, %v4590
        %4592 = vmatprep.mubr.bf16.mxu0 %v2489
        %4593 = vmatmul.mubr.bf16.gmra.mrb[0].mxu0 %v2488
        %v4594 = vpop.f32.mrb[0].mxu0
        %v4595 = vadd.f32 %v4402, %v4594
        %v4596 = vpop.f32.mrb[0].mxu0
        %v4597 = vadd.f32 %v4404, %v4596
        %v4598 = vpop.f32.mrb[0].mxu0
        %v4599 = vadd.f32 %v4406, %v4598
        %v4600 = vpop.f32.mrb[0].mxu0
        %v4601 = vadd.f32 %v4408, %v4600
        %4602 = vmatprep.mubr.bf16.mxu0 %v2497
        %4603 = vmatmul.mubr.bf16.gmra.mrb[0].mxu0 %v2496
        %v4604 = vpop.f32.mrb[0].mxu0
        %v4605 = vadd.f32 %v4412, %v4604
        %v4606 = vpop.f32.mrb[0].mxu0
        %v4607 = vadd.f32 %v4414, %v4606
        %v4608 = vpop.f32.mrb[0].mxu0
        %v4609 = vadd.f32 %v4416, %v4608
        %v4610 = vpop.f32.mrb[0].mxu0
        %v4611 = vadd.f32 %v4418, %v4610
        %4612 = vmatprep.mubr.bf16.mxu0 %v2505
        %4613 = vmatmul.mubr.bf16.gmra.mrb[0].mxu0 %v2504
        %v4614 = vpop.f32.mrb[0].mxu0
        %v4615 = vadd.f32 %v4422, %v4614
        %v4616 = vpop.f32.mrb[0].mxu0
        %v4617 = vadd.f32 %v4424, %v4616
        %v4618 = vpop.f32.mrb[0].mxu0
        %v4619 = vadd.f32 %v4426, %v4618
        %v4620 = vpop.f32.mrb[0].mxu0
        %v4621 = vadd.f32 %v4428, %v4620
        %4622 = vmatprep.mubr.bf16.mxu0 %v2513
        %4623 = vmatmul.mubr.bf16.gmra.mrb[0].mxu0 %v2512
        %v4624 = vpop.f32.mrb[0].mxu0
        %v4625 = vadd.f32 %v4432, %v4624
        %v4626 = vpop.f32.mrb[0].mxu0
        %v4627 = vadd.f32 %v4434, %v4626
        %v4628 = vpop.f32.mrb[0].mxu0
        %v4629 = vadd.f32 %v4436, %v4628
        %v4630 = vpop.f32.mrb[0].mxu0
        %v4631 = vadd.f32 %v4438, %v4630
        %4632 = vmatprep.mubr.bf16.mxu0 %v2521
        %4633 = vmatmul.mubr.bf16.gmra.mrb[0].mxu0 %v2520
        %v4634 = vpop.f32.mrb[0].mxu0
        %v4635 = vadd.f32 %v4442, %v4634
        %v4636 = vpop.f32.mrb[0].mxu0
        %v4637 = vadd.f32 %v4444, %v4636
        %v4638 = vpop.f32.mrb[0].mxu0
        %v4639 = vadd.f32 %v4446, %v4638
        %v4640 = vpop.f32.mrb[0].mxu0
        %v4641 = vadd.f32 %v4448, %v4640
        %4642 = vmatprep.mubr.bf16.mxu0 %v2529
        %4643 = vmatmul.mubr.bf16.gmra.mrb[0].mxu0 %v2528
        %v4644 = vpop.f32.mrb[0].mxu0
        %v4645 = vadd.f32 %v4452, %v4644
        %v4646 = vpop.f32.mrb[0].mxu0
        %v4647 = vadd.f32 %v4454, %v4646
        %v4648 = vpop.f32.mrb[0].mxu0
        %v4649 = vadd.f32 %v4456, %v4648
        %v4650 = vpop.f32.mrb[0].mxu0
        %v4651 = vadd.f32 %v4458, %v4650
        %4652 = vmatprep.mubr.bf16.mxu0 %v2537
        %4653 = vmatmul.mubr.bf16.gmra.mrb[0].mxu0 %v2536
        %v4654 = vpop.f32.mrb[0].mxu0
        %v4655 = vadd.f32 %v4462, %v4654
        %v4656 = vpop.f32.mrb[0].mxu0
        %v4657 = vadd.f32 %v4464, %v4656
        %v4658 = vpop.f32.mrb[0].mxu0
        %v4659 = vadd.f32 %v4466, %v4658
        %v4660 = vpop.f32.mrb[0].mxu0
        %v4661 = vadd.f32 %v4468, %v4660
        %4662 = vmatprep.mubr.bf16.mxu0 %v2545
        %4663 = vmatmul.mubr.bf16.gmra.mrb[0].mxu0 %v2544
        %v4664 = vpop.f32.mrb[0].mxu0
        %v4665 = vadd.f32 %v4472, %v4664
        %v4666 = vpop.f32.mrb[0].mxu0
        %v4667 = vadd.f32 %v4474, %v4666
        %v4668 = vpop.f32.mrb[0].mxu0
        %v4669 = vadd.f32 %v4476, %v4668
        %v4670 = vpop.f32.mrb[0].mxu0
        %v4671 = vadd.f32 %v4478, %v4670
        %4672 = vmatprep.mubr.bf16.mxu0 %v2553
        %4673 = vmatmul.mubr.bf16.gmra.mrb[0].mxu0 %v2552
        %v4674 = vpop.f32.mrb[0].mxu0
        %v4675 = vadd.f32 %v4482, %v4674
        %v4676 = vpop.f32.mrb[0].mxu0
        %v4677 = vadd.f32 %v4484, %v4676
        %v4678 = vpop.f32.mrb[0].mxu0
        %v4679 = vadd.f32 %v4486, %v4678
        %v4680 = vpop.f32.mrb[0].mxu0
        %v4681 = vadd.f32 %v4488, %v4680
        %4682 = vmatprep.mubr.bf16.mxu0 %v2561
        %4683 = vmatmul.mubr.bf16.gmra.mrb[0].mxu0 %v2560
        %v4684 = vpop.f32.mrb[0].mxu0
        %v4685 = vadd.f32 %v4492, %v4684
        %v4686 = vpop.f32.mrb[0].mxu0
        %v4687 = vadd.f32 %v4494, %v4686
        %v4688 = vpop.f32.mrb[0].mxu0
        %v4689 = vadd.f32 %v4496, %v4688
        %v4690 = vpop.f32.mrb[0].mxu0
        %v4691 = vadd.f32 %v4498, %v4690
        %4692 = vmatprep.mubr.bf16.mxu0 %v2569
        %4693 = vmatmul.mubr.bf16.gmra.mrb[0].mxu0 %v2568
        %v4694 = vpop.f32.mrb[0].mxu0
        %v4695 = vadd.f32 %v4502, %v4694
        %v4696 = vpop.f32.mrb[0].mxu0
        %v4697 = vadd.f32 %v4504, %v4696
        %v4698 = vpop.f32.mrb[0].mxu0
        %v4699 = vadd.f32 %v4506, %v4698
        %v4700 = vpop.f32.mrb[0].mxu0
        %v4701 = vadd.f32 %v4508, %v4700
        %4702 = vmatprep.mubr.bf16.mxu0 %v2577
        %4703 = vmatmul.mubr.bf16.gmra.mrb[0].mxu0 %v2576
        %v4704 = vpop.f32.mrb[0].mxu0
        %v4705 = vadd.f32 %v4512, %v4704
        %v4706 = vpop.f32.mrb[0].mxu0
        %v4707 = vadd.f32 %v4514, %v4706
        %v4708 = vpop.f32.mrb[0].mxu0
        %v4709 = vadd.f32 %v4516, %v4708
        %v4710 = vpop.f32.mrb[0].mxu0
        %v4711 = vadd.f32 %v4518, %v4710
        %4712 = vmatprep.mubr.bf16.mxu0 %v2585
        %4713 = vmatmul.mubr.bf16.gmra.mrb[0].mxu0 %v2584
        %v4714 = vpop.f32.mrb[0].mxu0
        %v4715 = vadd.f32 %v4522, %v4714
        %v4716 = vpop.f32.mrb[0].mxu0
        %v4717 = vadd.f32 %v4524, %v4716
        %v4718 = vpop.f32.mrb[0].mxu0
        %v4719 = vadd.f32 %v4526, %v4718
        %v4720 = vpop.f32.mrb[0].mxu0
        %v4721 = vadd.f32 %v4528, %v4720
        %4722 = vmatprep.mubr.bf16.mxu0 %v2593
        %4723 = vmatmul.mubr.bf16.gmra.mrb[0].mxu0 %v2592
        %v4724 = vpop.f32.mrb[0].mxu0
        %v4725 = vadd.f32 %v4532, %v4724
        %v4726 = vpop.f32.mrb[0].mxu0
        %v4727 = vadd.f32 %v4534, %v4726
        %v4728 = vpop.f32.mrb[0].mxu0
        %v4729 = vadd.f32 %v4536, %v4728
        %v4730 = vpop.f32.mrb[0].mxu0
        %v4731 = vadd.f32 %v4538, %v4730
        %4732 = vdwg.mxu0
        %4733 = vmatprep.subr.bf16.mxu0 %v3835
        %4734 = vmatpush1.bf16.msra.mxu0 %v3834
        %4735 = vmatprep.subr.bf16.mxu0 %v3839
        %4736 = vmatpush1.bf16.msra.mxu0 %v3838
        %4737 = vmatprep.subr.bf16.mxu0 %v3843
        %4738 = vmatpush1.bf16.msra.mxu0 %v3842
        %4739 = vmatprep.subr.bf16.mxu0 %v3847
        %4740 = vmatpush1.bf16.msra.mxu0 %v3846
        %4741 = vmatprep.subr.bf16.mxu0 %v3851
        %4742 = vmatpush1.bf16.msra.mxu0 %v3850
        %4743 = vmatprep.subr.bf16.mxu0 %v3855
        %4744 = vmatpush1.bf16.msra.mxu0 %v3854
        %4745 = vmatprep.subr.bf16.mxu0 %v3859
        %4746 = vmatpush1.bf16.msra.mxu0 %v3858
        %4747 = vmatprep.subr.bf16.mxu0 %v3863
        %4748 = vmatpush1.bf16.msra.mxu0 %v3862
        %4749 = vmatprep.subr.bf16.mxu0 %v3867
        %4750 = vmatpush1.bf16.msra.mxu0 %v3866
        %4751 = vmatprep.subr.bf16.mxu0 %v3871
        %4752 = vmatpush1.bf16.msra.mxu0 %v3870
        %4753 = vmatprep.subr.bf16.mxu0 %v3875
        %4754 = vmatpush1.bf16.msra.mxu0 %v3874
        %4755 = vmatprep.subr.bf16.mxu0 %v3879
        %4756 = vmatpush1.bf16.msra.mxu0 %v3878
        %4757 = vmatprep.subr.bf16.mxu0 %v3883
        %4758 = vmatpush1.bf16.msra.mxu0 %v3882
        %4759 = vmatprep.subr.bf16.mxu0 %v3887
        %4760 = vmatpush1.bf16.msra.mxu0 %v3886
        %4761 = vmatprep.subr.bf16.mxu0 %v3891
        %4762 = vmatpush1.bf16.msra.mxu0 %v3890
        %4763 = vmatprep.subr.bf16.mxu0 %v3895
        %4764 = vmatpush1.bf16.msra.mxu0 %v3894
        %4765 = vmatprep.mubr.bf16.mxu0 %v2475
        %4766 = vmatmul.mubr.bf16.gmra.mrb[0].mxu0 %v2474
        %v4767 = vpop.f32.mrb[0].mxu0
        %v4768 = vadd.f32 %v4575, %v4767
        %v4769 = vpop.f32.mrb[0].mxu0
        %v4770 = vadd.f32 %v4577, %v4769
        %v4771 = vpop.f32.mrb[0].mxu0
        %v4772 = vadd.f32 %v4579, %v4771
        %v4773 = vpop.f32.mrb[0].mxu0
        %v4774 = vadd.f32 %v4581, %v4773
        %4775 = vmatprep.mubr.bf16.mxu0 %v2483
        %4776 = vmatmul.mubr.bf16.gmra.mrb[0].mxu0 %v2482
        %v4777 = vpop.f32.mrb[0].mxu0
        %v4778 = vadd.f32 %v4585, %v4777
        %v4779 = vpop.f32.mrb[0].mxu0
        %v4780 = vadd.f32 %v4587, %v4779
        %v4781 = vpop.f32.mrb[0].mxu0
        %v4782 = vadd.f32 %v4589, %v4781
        %v4783 = vpop.f32.mrb[0].mxu0
        %v4784 = vadd.f32 %v4591, %v4783
        %4785 = vmatprep.mubr.bf16.mxu0 %v2491
        %4786 = vmatmul.mubr.bf16.gmra.mrb[0].mxu0 %v2490
        %v4787 = vpop.f32.mrb[0].mxu0
        %v4788 = vadd.f32 %v4595, %v4787
        %v4789 = vpop.f32.mrb[0].mxu0
        %v4790 = vadd.f32 %v4597, %v4789
        %v4791 = vpop.f32.mrb[0].mxu0
        %v4792 = vadd.f32 %v4599, %v4791
        %v4793 = vpop.f32.mrb[0].mxu0
        %v4794 = vadd.f32 %v4601, %v4793
        %4795 = vmatprep.mubr.bf16.mxu0 %v2499
        %4796 = vmatmul.mubr.bf16.gmra.mrb[0].mxu0 %v2498
        %v4797 = vpop.f32.mrb[0].mxu0
        %v4798 = vadd.f32 %v4605, %v4797
        %v4799 = vpop.f32.mrb[0].mxu0
        %v4800 = vadd.f32 %v4607, %v4799
        %v4801 = vpop.f32.mrb[0].mxu0
        %v4802 = vadd.f32 %v4609, %v4801
        %v4803 = vpop.f32.mrb[0].mxu0
        %v4804 = vadd.f32 %v4611, %v4803
        %4805 = vmatprep.mubr.bf16.mxu0 %v2507
        %4806 = vmatmul.mubr.bf16.gmra.mrb[0].mxu0 %v2506
        %v4807 = vpop.f32.mrb[0].mxu0
        %v4808 = vadd.f32 %v4615, %v4807
        %v4809 = vpop.f32.mrb[0].mxu0
        %v4810 = vadd.f32 %v4617, %v4809
        %v4811 = vpop.f32.mrb[0].mxu0
        %v4812 = vadd.f32 %v4619, %v4811
        %v4813 = vpop.f32.mrb[0].mxu0
        %v4814 = vadd.f32 %v4621, %v4813
        %4815 = vmatprep.mubr.bf16.mxu0 %v2515
        %4816 = vmatmul.mubr.bf16.gmra.mrb[0].mxu0 %v2514
        %v4817 = vpop.f32.mrb[0].mxu0
        %v4818 = vadd.f32 %v4625, %v4817
        %v4819 = vpop.f32.mrb[0].mxu0
        %v4820 = vadd.f32 %v4627, %v4819
        %v4821 = vpop.f32.mrb[0].mxu0
        %v4822 = vadd.f32 %v4629, %v4821
        %v4823 = vpop.f32.mrb[0].mxu0
        %v4824 = vadd.f32 %v4631, %v4823
        %4825 = vmatprep.mubr.bf16.mxu0 %v2523
        %4826 = vmatmul.mubr.bf16.gmra.mrb[0].mxu0 %v2522
        %v4827 = vpop.f32.mrb[0].mxu0
        %v4828 = vadd.f32 %v4635, %v4827
        %v4829 = vpop.f32.mrb[0].mxu0
        %v4830 = vadd.f32 %v4637, %v4829
        %v4831 = vpop.f32.mrb[0].mxu0
        %v4832 = vadd.f32 %v4639, %v4831
        %v4833 = vpop.f32.mrb[0].mxu0
        %v4834 = vadd.f32 %v4641, %v4833
        %4835 = vmatprep.mubr.bf16.mxu0 %v2531
        %4836 = vmatmul.mubr.bf16.gmra.mrb[0].mxu0 %v2530
        %v4837 = vpop.f32.mrb[0].mxu0
        %v4838 = vadd.f32 %v4645, %v4837
        %v4839 = vpop.f32.mrb[0].mxu0
        %v4840 = vadd.f32 %v4647, %v4839
        %v4841 = vpop.f32.mrb[0].mxu0
        %v4842 = vadd.f32 %v4649, %v4841
        %v4843 = vpop.f32.mrb[0].mxu0
        %v4844 = vadd.f32 %v4651, %v4843
        %4845 = vmatprep.mubr.bf16.mxu0 %v2539
        %4846 = vmatmul.mubr.bf16.gmra.mrb[0].mxu0 %v2538
        %v4847 = vpop.f32.mrb[0].mxu0
        %v4848 = vadd.f32 %v4655, %v4847
        %v4849 = vpop.f32.mrb[0].mxu0
        %v4850 = vadd.f32 %v4657, %v4849
        %v4851 = vpop.f32.mrb[0].mxu0
        %v4852 = vadd.f32 %v4659, %v4851
        %v4853 = vpop.f32.mrb[0].mxu0
        %v4854 = vadd.f32 %v4661, %v4853
        %4855 = vmatprep.mubr.bf16.mxu0 %v2547
        %4856 = vmatmul.mubr.bf16.gmra.mrb[0].mxu0 %v2546
        %v4857 = vpop.f32.mrb[0].mxu0
        %v4858 = vadd.f32 %v4665, %v4857
        %v4859 = vpop.f32.mrb[0].mxu0
        %v4860 = vadd.f32 %v4667, %v4859
        %v4861 = vpop.f32.mrb[0].mxu0
        %v4862 = vadd.f32 %v4669, %v4861
        %v4863 = vpop.f32.mrb[0].mxu0
        %v4864 = vadd.f32 %v4671, %v4863
        %4865 = vmatprep.mubr.bf16.mxu0 %v2555
        %4866 = vmatmul.mubr.bf16.gmra.mrb[0].mxu0 %v2554
        %v4867 = vpop.f32.mrb[0].mxu0
        %v4868 = vadd.f32 %v4675, %v4867
        %v4869 = vpop.f32.mrb[0].mxu0
        %v4870 = vadd.f32 %v4677, %v4869
        %v4871 = vpop.f32.mrb[0].mxu0
        %v4872 = vadd.f32 %v4679, %v4871
        %v4873 = vpop.f32.mrb[0].mxu0
        %v4874 = vadd.f32 %v4681, %v4873
        %4875 = vmatprep.mubr.bf16.mxu0 %v2563
        %4876 = vmatmul.mubr.bf16.gmra.mrb[0].mxu0 %v2562
        %v4877 = vpop.f32.mrb[0].mxu0
        %v4878 = vadd.f32 %v4685, %v4877
        %v4879 = vpop.f32.mrb[0].mxu0
        %v4880 = vadd.f32 %v4687, %v4879
        %v4881 = vpop.f32.mrb[0].mxu0
        %v4882 = vadd.f32 %v4689, %v4881
        %v4883 = vpop.f32.mrb[0].mxu0
        %v4884 = vadd.f32 %v4691, %v4883
        %4885 = vmatprep.mubr.bf16.mxu0 %v2571
        %4886 = vmatmul.mubr.bf16.gmra.mrb[0].mxu0 %v2570
        %v4887 = vpop.f32.mrb[0].mxu0
        %v4888 = vadd.f32 %v4695, %v4887
        %v4889 = vpop.f32.mrb[0].mxu0
        %v4890 = vadd.f32 %v4697, %v4889
        %v4891 = vpop.f32.mrb[0].mxu0
        %v4892 = vadd.f32 %v4699, %v4891
        %v4893 = vpop.f32.mrb[0].mxu0
        %v4894 = vadd.f32 %v4701, %v4893
        %4895 = vmatprep.mubr.bf16.mxu0 %v2579
        %4896 = vmatmul.mubr.bf16.gmra.mrb[0].mxu0 %v2578
        %v4897 = vpop.f32.mrb[0].mxu0
        %v4898 = vadd.f32 %v4705, %v4897
        %v4899 = vpop.f32.mrb[0].mxu0
        %v4900 = vadd.f32 %v4707, %v4899
        %v4901 = vpop.f32.mrb[0].mxu0
        %v4902 = vadd.f32 %v4709, %v4901
        %v4903 = vpop.f32.mrb[0].mxu0
        %v4904 = vadd.f32 %v4711, %v4903
        %4905 = vmatprep.mubr.bf16.mxu0 %v2587
        %4906 = vmatmul.mubr.bf16.gmra.mrb[0].mxu0 %v2586
        %v4907 = vpop.f32.mrb[0].mxu0
        %v4908 = vadd.f32 %v4715, %v4907
        %v4909 = vpop.f32.mrb[0].mxu0
        %v4910 = vadd.f32 %v4717, %v4909
        %v4911 = vpop.f32.mrb[0].mxu0
        %v4912 = vadd.f32 %v4719, %v4911
        %v4913 = vpop.f32.mrb[0].mxu0
        %v4914 = vadd.f32 %v4721, %v4913
        %4915 = vmatprep.mubr.bf16.mxu0 %v2595
        %4916 = vmatmul.mubr.bf16.gmra.mrb[0].mxu0 %v2594
        %v4917 = vpop.f32.mrb[0].mxu0
        %v4918 = vadd.f32 %v4725, %v4917
        %v4919 = vpop.f32.mrb[0].mxu0
        %v4920 = vadd.f32 %v4727, %v4919
        %v4921 = vpop.f32.mrb[0].mxu0
        %v4922 = vadd.f32 %v4729, %v4921
        %v4923 = vpop.f32.mrb[0].mxu0
        %v4924 = vadd.f32 %v4731, %v4923
        %4925 = vdwg.mxu0
        %4926 = vmatprep.subr.bf16.mxu0 %v3645
        %4927 = vmatpush1.bf16.msra.mxu0 %v3644
        %4928 = vmatprep.subr.bf16.mxu0 %v3649
        %4929 = vmatpush1.bf16.msra.mxu0 %v3648
        %4930 = vmatprep.subr.bf16.mxu0 %v3653
        %4931 = vmatpush1.bf16.msra.mxu0 %v3652
        %4932 = vmatprep.subr.bf16.mxu0 %v3657
        %4933 = vmatpush1.bf16.msra.mxu0 %v3656
        %4934 = vmatprep.subr.bf16.mxu0 %v3661
        %4935 = vmatpush1.bf16.msra.mxu0 %v3660
        %4936 = vmatprep.subr.bf16.mxu0 %v3665
        %4937 = vmatpush1.bf16.msra.mxu0 %v3664
        %4938 = vmatprep.subr.bf16.mxu0 %v3669
        %4939 = vmatpush1.bf16.msra.mxu0 %v3668
        %4940 = vmatprep.subr.bf16.mxu0 %v3673
        %4941 = vmatpush1.bf16.msra.mxu0 %v3672
        %4942 = vmatprep.subr.bf16.mxu0 %v3677
        %4943 = vmatpush1.bf16.msra.mxu0 %v3676
        %4944 = vmatprep.subr.bf16.mxu0 %v3681
        %4945 = vmatpush1.bf16.msra.mxu0 %v3680
        %4946 = vmatprep.subr.bf16.mxu0 %v3685
        %4947 = vmatpush1.bf16.msra.mxu0 %v3684
        %4948 = vmatprep.subr.bf16.mxu0 %v3689
        %4949 = vmatpush1.bf16.msra.mxu0 %v3688
        %4950 = vmatprep.subr.bf16.mxu0 %v3693
        %4951 = vmatpush1.bf16.msra.mxu0 %v3692
        %4952 = vmatprep.subr.bf16.mxu0 %v3697
        %4953 = vmatpush1.bf16.msra.mxu0 %v3696
        %4954 = vmatprep.subr.bf16.mxu0 %v3701
        %4955 = vmatpush1.bf16.msra.mxu0 %v3700
        %4956 = vmatprep.subr.bf16.mxu0 %v3705
        %4957 = vmatpush1.bf16.msra.mxu0 %v3704
        %4958 = vmatprep.mubr.bf16.mxu0 %v2469
        %4959 = vmatmul.mubr.bf16.gmra.mrb[0].mxu0 %v2468
        %v4960 = vpop.f32.mrb[0].mxu0
        %v4961 = vadd.f32 %v2865, %v4960
        %v4962 = vpop.f32.mrb[0].mxu0
        %v4963 = vadd.f32 %v2869, %v4962
        %v4964 = vpop.f32.mrb[0].mxu0
        %v4965 = vadd.f32 %v2865, %v4964
        %v4966 = vpop.f32.mrb[0].mxu0
        %v4967 = vadd.f32 %v2869, %v4966
        %4968 = vmatprep.mubr.bf16.mxu0 %v2477
        %4969 = vmatmul.mubr.bf16.gmra.mrb[0].mxu0 %v2476
        %v4970 = vpop.f32.mrb[0].mxu0
        %v4971 = vadd.f32 %v2865, %v4970
        %v4972 = vpop.f32.mrb[0].mxu0
        %v4973 = vadd.f32 %v2869, %v4972
        %v4974 = vpop.f32.mrb[0].mxu0
        %v4975 = vadd.f32 %v2865, %v4974
        %v4976 = vpop.f32.mrb[0].mxu0
        %v4977 = vadd.f32 %v2869, %v4976
        %4978 = vmatprep.mubr.bf16.mxu0 %v2485
        %4979 = vmatmul.mubr.bf16.gmra.mrb[0].mxu0 %v2484
        %v4980 = vpop.f32.mrb[0].mxu0
        %v4981 = vadd.f32 %v2865, %v4980
        %v4982 = vpop.f32.mrb[0].mxu0
        %v4983 = vadd.f32 %v2869, %v4982
        %v4984 = vpop.f32.mrb[0].mxu0
        %v4985 = vadd.f32 %v2865, %v4984
        %v4986 = vpop.f32.mrb[0].mxu0
        %v4987 = vadd.f32 %v2869, %v4986
        %4988 = vmatprep.mubr.bf16.mxu0 %v2493
        %4989 = vmatmul.mubr.bf16.gmra.mrb[0].mxu0 %v2492
        %v4990 = vpop.f32.mrb[0].mxu0
        %v4991 = vadd.f32 %v2865, %v4990
        %v4992 = vpop.f32.mrb[0].mxu0
        %v4993 = vadd.f32 %v2869, %v4992
        %v4994 = vpop.f32.mrb[0].mxu0
        %v4995 = vadd.f32 %v2865, %v4994
        %v4996 = vpop.f32.mrb[0].mxu0
        %v4997 = vadd.f32 %v2869, %v4996
        %4998 = vmatprep.mubr.bf16.mxu0 %v2501
        %4999 = vmatmul.mubr.bf16.gmra.mrb[0].mxu0 %v2500
        %v5000 = vpop.f32.mrb[0].mxu0
        %v5001 = vadd.f32 %v2865, %v5000
        %v5002 = vpop.f32.mrb[0].mxu0
        %v5003 = vadd.f32 %v2869, %v5002
        %v5004 = vpop.f32.mrb[0].mxu0
        %v5005 = vadd.f32 %v2865, %v5004
        %v5006 = vpop.f32.mrb[0].mxu0
        %v5007 = vadd.f32 %v2869, %v5006
        %5008 = vmatprep.mubr.bf16.mxu0 %v2509
        %5009 = vmatmul.mubr.bf16.gmra.mrb[0].mxu0 %v2508
        %v5010 = vpop.f32.mrb[0].mxu0
        %v5011 = vadd.f32 %v2865, %v5010
        %v5012 = vpop.f32.mrb[0].mxu0
        %v5013 = vadd.f32 %v2869, %v5012
        %v5014 = vpop.f32.mrb[0].mxu0
        %v5015 = vadd.f32 %v2865, %v5014
        %v5016 = vpop.f32.mrb[0].mxu0
        %v5017 = vadd.f32 %v2869, %v5016
        %5018 = vmatprep.mubr.bf16.mxu0 %v2517
        %5019 = vmatmul.mubr.bf16.gmra.mrb[0].mxu0 %v2516
        %v5020 = vpop.f32.mrb[0].mxu0
        %v5021 = vadd.f32 %v2865, %v5020
        %v5022 = vpop.f32.mrb[0].mxu0
        %v5023 = vadd.f32 %v2869, %v5022
        %v5024 = vpop.f32.mrb[0].mxu0
        %v5025 = vadd.f32 %v2865, %v5024
        %v5026 = vpop.f32.mrb[0].mxu0
        %v5027 = vadd.f32 %v2869, %v5026
        %5028 = vmatprep.mubr.bf16.mxu0 %v2525
        %5029 = vmatmul.mubr.bf16.gmra.mrb[0].mxu0 %v2524
        %v5030 = vpop.f32.mrb[0].mxu0
        %v5031 = vadd.f32 %v2865, %v5030
        %v5032 = vpop.f32.mrb[0].mxu0
        %v5033 = vadd.f32 %v2869, %v5032
        %v5034 = vpop.f32.mrb[0].mxu0
        %v5035 = vadd.f32 %v2865, %v5034
        %v5036 = vpop.f32.mrb[0].mxu0
        %v5037 = vadd.f32 %v2869, %v5036
        %5038 = vmatprep.mubr.bf16.mxu0 %v2533
        %5039 = vmatmul.mubr.bf16.gmra.mrb[0].mxu0 %v2532
        %v5040 = vpop.f32.mrb[0].mxu0
        %v5041 = vadd.f32 %v2865, %v5040
        %v5042 = vpop.f32.mrb[0].mxu0
        %v5043 = vadd.f32 %v2869, %v5042
        %v5044 = vpop.f32.mrb[0].mxu0
        %v5045 = vadd.f32 %v2865, %v5044
        %v5046 = vpop.f32.mrb[0].mxu0
        %v5047 = vadd.f32 %v2869, %v5046
        %5048 = vmatprep.mubr.bf16.mxu0 %v2541
        %5049 = vmatmul.mubr.bf16.gmra.mrb[0].mxu0 %v2540
        %v5050 = vpop.f32.mrb[0].mxu0
        %v5051 = vadd.f32 %v2865, %v5050
        %v5052 = vpop.f32.mrb[0].mxu0
        %v5053 = vadd.f32 %v2869, %v5052
        %v5054 = vpop.f32.mrb[0].mxu0
        %v5055 = vadd.f32 %v2865, %v5054
        %v5056 = vpop.f32.mrb[0].mxu0
        %v5057 = vadd.f32 %v2869, %v5056
        %5058 = vmatprep.mubr.bf16.mxu0 %v2549
        %5059 = vmatmul.mubr.bf16.gmra.mrb[0].mxu0 %v2548
        %v5060 = vpop.f32.mrb[0].mxu0
        %v5061 = vadd.f32 %v2865, %v5060
        %v5062 = vpop.f32.mrb[0].mxu0
        %v5063 = vadd.f32 %v2869, %v5062
        %v5064 = vpop.f32.mrb[0].mxu0
        %v5065 = vadd.f32 %v2865, %v5064
        %v5066 = vpop.f32.mrb[0].mxu0
        %v5067 = vadd.f32 %v2869, %v5066
        %5068 = vmatprep.mubr.bf16.mxu0 %v2557
        %5069 = vmatmul.mubr.bf16.gmra.mrb[0].mxu0 %v2556
        %v5070 = vpop.f32.mrb[0].mxu0
        %v5071 = vadd.f32 %v2865, %v5070
        %v5072 = vpop.f32.mrb[0].mxu0
        %v5073 = vadd.f32 %v2869, %v5072
        %v5074 = vpop.f32.mrb[0].mxu0
        %v5075 = vadd.f32 %v2865, %v5074
        %v5076 = vpop.f32.mrb[0].mxu0
        %v5077 = vadd.f32 %v2869, %v5076
        %5078 = vmatprep.mubr.bf16.mxu0 %v2565
        %5079 = vmatmul.mubr.bf16.gmra.mrb[0].mxu0 %v2564
        %v5080 = vpop.f32.mrb[0].mxu0
        %v5081 = vadd.f32 %v2865, %v5080
        %v5082 = vpop.f32.mrb[0].mxu0
        %v5083 = vadd.f32 %v2869, %v5082
        %v5084 = vpop.f32.mrb[0].mxu0
        %v5085 = vadd.f32 %v2865, %v5084
        %v5086 = vpop.f32.mrb[0].mxu0
        %v5087 = vadd.f32 %v2869, %v5086
        %5088 = vmatprep.mubr.bf16.mxu0 %v2573
        %5089 = vmatmul.mubr.bf16.gmra.mrb[0].mxu0 %v2572
        %v5090 = vpop.f32.mrb[0].mxu0
        %v5091 = vadd.f32 %v2865, %v5090
        %v5092 = vpop.f32.mrb[0].mxu0
        %v5093 = vadd.f32 %v2869, %v5092
        %v5094 = vpop.f32.mrb[0].mxu0
        %v5095 = vadd.f32 %v2865, %v5094
        %v5096 = vpop.f32.mrb[0].mxu0
        %v5097 = vadd.f32 %v2869, %v5096
        %5098 = vmatprep.mubr.bf16.mxu0 %v2581
        %5099 = vmatmul.mubr.bf16.gmra.mrb[0].mxu0 %v2580
        %v5100 = vpop.f32.mrb[0].mxu0
        %v5101 = vadd.f32 %v2865, %v5100
        %v5102 = vpop.f32.mrb[0].mxu0
        %v5103 = vadd.f32 %v2869, %v5102
        %v5104 = vpop.f32.mrb[0].mxu0
        %v5105 = vadd.f32 %v2865, %v5104
        %v5106 = vpop.f32.mrb[0].mxu0
        %v5107 = vadd.f32 %v2869, %v5106
        %5108 = vmatprep.mubr.bf16.mxu0 %v2589
        %5109 = vmatmul.mubr.bf16.gmra.mrb[0].mxu0 %v2588
        %v5110 = vpop.f32.mrb[0].mxu0
        %v5111 = vadd.f32 %v2865, %v5110
        %v5112 = vpop.f32.mrb[0].mxu0
        %v5113 = vadd.f32 %v2869, %v5112
        %v5114 = vpop.f32.mrb[0].mxu0
        %v5115 = vadd.f32 %v2865, %v5114
        %v5116 = vpop.f32.mrb[0].mxu0
        %v5117 = vadd.f32 %v2869, %v5116
        %5118 = vdwg.mxu0
        %5119 = vmatprep.subr.bf16.mxu0 %v3709
        %5120 = vmatpush1.bf16.msra.mxu0 %v3708
        %5121 = vmatprep.subr.bf16.mxu0 %v3713
        %5122 = vmatpush1.bf16.msra.mxu0 %v3712
        %5123 = vmatprep.subr.bf16.mxu0 %v3717
        %5124 = vmatpush1.bf16.msra.mxu0 %v3716
        %5125 = vmatprep.subr.bf16.mxu0 %v3721
        %5126 = vmatpush1.bf16.msra.mxu0 %v3720
        %5127 = vmatprep.subr.bf16.mxu0 %v3725
        %5128 = vmatpush1.bf16.msra.mxu0 %v3724
        %5129 = vmatprep.subr.bf16.mxu0 %v3729
        %5130 = vmatpush1.bf16.msra.mxu0 %v3728
        %5131 = vmatprep.subr.bf16.mxu0 %v3733
        %5132 = vmatpush1.bf16.msra.mxu0 %v3732
        %5133 = vmatprep.subr.bf16.mxu0 %v3737
        %5134 = vmatpush1.bf16.msra.mxu0 %v3736
        %5135 = vmatprep.subr.bf16.mxu0 %v3741
        %5136 = vmatpush1.bf16.msra.mxu0 %v3740
        %5137 = vmatprep.subr.bf16.mxu0 %v3745
        %5138 = vmatpush1.bf16.msra.mxu0 %v3744
        %5139 = vmatprep.subr.bf16.mxu0 %v3749
        %5140 = vmatpush1.bf16.msra.mxu0 %v3748
        %5141 = vmatprep.subr.bf16.mxu0 %v3753
        %5142 = vmatpush1.bf16.msra.mxu0 %v3752
        %5143 = vmatprep.subr.bf16.mxu0 %v3757
        %5144 = vmatpush1.bf16.msra.mxu0 %v3756
        %5145 = vmatprep.subr.bf16.mxu0 %v3761
        %5146 = vmatpush1.bf16.msra.mxu0 %v3760
        %5147 = vmatprep.subr.bf16.mxu0 %v3765
        %5148 = vmatpush1.bf16.msra.mxu0 %v3764
        %5149 = vmatprep.subr.bf16.mxu0 %v3769
        %5150 = vmatpush1.bf16.msra.mxu0 %v3768
        %5151 = vmatprep.mubr.bf16.mxu0 %v2471
        %5152 = vmatmul.mubr.bf16.gmra.mrb[0].mxu0 %v2470
        %v5153 = vpop.f32.mrb[0].mxu0
        %v5154 = vadd.f32 %v4961, %v5153
        %v5155 = vpop.f32.mrb[0].mxu0
        %v5156 = vadd.f32 %v4963, %v5155
        %v5157 = vpop.f32.mrb[0].mxu0
        %v5158 = vadd.f32 %v4965, %v5157
        %v5159 = vpop.f32.mrb[0].mxu0
        %v5160 = vadd.f32 %v4967, %v5159
        %5161 = vmatprep.mubr.bf16.mxu0 %v2479
        %5162 = vmatmul.mubr.bf16.gmra.mrb[0].mxu0 %v2478
        %v5163 = vpop.f32.mrb[0].mxu0
        %v5164 = vadd.f32 %v4971, %v5163
        %v5165 = vpop.f32.mrb[0].mxu0
        %v5166 = vadd.f32 %v4973, %v5165
        %v5167 = vpop.f32.mrb[0].mxu0
        %v5168 = vadd.f32 %v4975, %v5167
        %v5169 = vpop.f32.mrb[0].mxu0
        %v5170 = vadd.f32 %v4977, %v5169
        %5171 = vmatprep.mubr.bf16.mxu0 %v2487
        %5172 = vmatmul.mubr.bf16.gmra.mrb[0].mxu0 %v2486
        %v5173 = vpop.f32.mrb[0].mxu0
        %v5174 = vadd.f32 %v4981, %v5173
        %v5175 = vpop.f32.mrb[0].mxu0
        %v5176 = vadd.f32 %v4983, %v5175
        %v5177 = vpop.f32.mrb[0].mxu0
        %v5178 = vadd.f32 %v4985, %v5177
        %v5179 = vpop.f32.mrb[0].mxu0
        %v5180 = vadd.f32 %v4987, %v5179
        %5181 = vmatprep.mubr.bf16.mxu0 %v2495
        %5182 = vmatmul.mubr.bf16.gmra.mrb[0].mxu0 %v2494
        %v5183 = vpop.f32.mrb[0].mxu0
        %v5184 = vadd.f32 %v4991, %v5183
        %v5185 = vpop.f32.mrb[0].mxu0
        %v5186 = vadd.f32 %v4993, %v5185
        %v5187 = vpop.f32.mrb[0].mxu0
        %v5188 = vadd.f32 %v4995, %v5187
        %v5189 = vpop.f32.mrb[0].mxu0
        %v5190 = vadd.f32 %v4997, %v5189
        %5191 = vmatprep.mubr.bf16.mxu0 %v2503
        %5192 = vmatmul.mubr.bf16.gmra.mrb[0].mxu0 %v2502
        %v5193 = vpop.f32.mrb[0].mxu0
        %v5194 = vadd.f32 %v5001, %v5193
        %v5195 = vpop.f32.mrb[0].mxu0
        %v5196 = vadd.f32 %v5003, %v5195
        %v5197 = vpop.f32.mrb[0].mxu0
        %v5198 = vadd.f32 %v5005, %v5197
        %v5199 = vpop.f32.mrb[0].mxu0
        %v5200 = vadd.f32 %v5007, %v5199
        %5201 = vmatprep.mubr.bf16.mxu0 %v2511
        %5202 = vmatmul.mubr.bf16.gmra.mrb[0].mxu0 %v2510
        %v5203 = vpop.f32.mrb[0].mxu0
        %v5204 = vadd.f32 %v5011, %v5203
        %v5205 = vpop.f32.mrb[0].mxu0
        %v5206 = vadd.f32 %v5013, %v5205
        %v5207 = vpop.f32.mrb[0].mxu0
        %v5208 = vadd.f32 %v5015, %v5207
        %v5209 = vpop.f32.mrb[0].mxu0
        %v5210 = vadd.f32 %v5017, %v5209
        %5211 = vmatprep.mubr.bf16.mxu0 %v2519
        %5212 = vmatmul.mubr.bf16.gmra.mrb[0].mxu0 %v2518
        %v5213 = vpop.f32.mrb[0].mxu0
        %v5214 = vadd.f32 %v5021, %v5213
        %v5215 = vpop.f32.mrb[0].mxu0
        %v5216 = vadd.f32 %v5023, %v5215
        %v5217 = vpop.f32.mrb[0].mxu0
        %v5218 = vadd.f32 %v5025, %v5217
        %v5219 = vpop.f32.mrb[0].mxu0
        %v5220 = vadd.f32 %v5027, %v5219
        %5221 = vmatprep.mubr.bf16.mxu0 %v2527
        %5222 = vmatmul.mubr.bf16.gmra.mrb[0].mxu0 %v2526
        %v5223 = vpop.f32.mrb[0].mxu0
        %v5224 = vadd.f32 %v5031, %v5223
        %v5225 = vpop.f32.mrb[0].mxu0
        %v5226 = vadd.f32 %v5033, %v5225
        %v5227 = vpop.f32.mrb[0].mxu0
        %v5228 = vadd.f32 %v5035, %v5227
        %v5229 = vpop.f32.mrb[0].mxu0
        %v5230 = vadd.f32 %v5037, %v5229
        %5231 = vmatprep.mubr.bf16.mxu0 %v2535
        %5232 = vmatmul.mubr.bf16.gmra.mrb[0].mxu0 %v2534
        %v5233 = vpop.f32.mrb[0].mxu0
        %v5234 = vadd.f32 %v5041, %v5233
        %v5235 = vpop.f32.mrb[0].mxu0
        %v5236 = vadd.f32 %v5043, %v5235
        %v5237 = vpop.f32.mrb[0].mxu0
        %v5238 = vadd.f32 %v5045, %v5237
        %v5239 = vpop.f32.mrb[0].mxu0
        %v5240 = vadd.f32 %v5047, %v5239
        %5241 = vmatprep.mubr.bf16.mxu0 %v2543
        %5242 = vmatmul.mubr.bf16.gmra.mrb[0].mxu0 %v2542
        %v5243 = vpop.f32.mrb[0].mxu0
        %v5244 = vadd.f32 %v5051, %v5243
        %v5245 = vpop.f32.mrb[0].mxu0
        %v5246 = vadd.f32 %v5053, %v5245
        %v5247 = vpop.f32.mrb[0].mxu0
        %v5248 = vadd.f32 %v5055, %v5247
        %v5249 = vpop.f32.mrb[0].mxu0
        %v5250 = vadd.f32 %v5057, %v5249
        %5251 = vmatprep.mubr.bf16.mxu0 %v2551
        %5252 = vmatmul.mubr.bf16.gmra.mrb[0].mxu0 %v2550
        %v5253 = vpop.f32.mrb[0].mxu0
        %v5254 = vadd.f32 %v5061, %v5253
        %v5255 = vpop.f32.mrb[0].mxu0
        %v5256 = vadd.f32 %v5063, %v5255
        %v5257 = vpop.f32.mrb[0].mxu0
        %v5258 = vadd.f32 %v5065, %v5257
        %v5259 = vpop.f32.mrb[0].mxu0
        %v5260 = vadd.f32 %v5067, %v5259
        %5261 = vmatprep.mubr.bf16.mxu0 %v2559
        %5262 = vmatmul.mubr.bf16.gmra.mrb[0].mxu0 %v2558
        %v5263 = vpop.f32.mrb[0].mxu0
        %v5264 = vadd.f32 %v5071, %v5263
        %v5265 = vpop.f32.mrb[0].mxu0
        %v5266 = vadd.f32 %v5073, %v5265
        %v5267 = vpop.f32.mrb[0].mxu0
        %v5268 = vadd.f32 %v5075, %v5267
        %v5269 = vpop.f32.mrb[0].mxu0
        %v5270 = vadd.f32 %v5077, %v5269
        %5271 = vmatprep.mubr.bf16.mxu0 %v2567
        %5272 = vmatmul.mubr.bf16.gmra.mrb[0].mxu0 %v2566
        %v5273 = vpop.f32.mrb[0].mxu0
        %v5274 = vadd.f32 %v5081, %v5273
        %v5275 = vpop.f32.mrb[0].mxu0
        %v5276 = vadd.f32 %v5083, %v5275
        %v5277 = vpop.f32.mrb[0].mxu0
        %v5278 = vadd.f32 %v5085, %v5277
        %v5279 = vpop.f32.mrb[0].mxu0
        %v5280 = vadd.f32 %v5087, %v5279
        %5281 = vmatprep.mubr.bf16.mxu0 %v2575
        %5282 = vmatmul.mubr.bf16.gmra.mrb[0].mxu0 %v2574
        %v5283 = vpop.f32.mrb[0].mxu0
        %v5284 = vadd.f32 %v5091, %v5283
        %v5285 = vpop.f32.mrb[0].mxu0
        %v5286 = vadd.f32 %v5093, %v5285
        %v5287 = vpop.f32.mrb[0].mxu0
        %v5288 = vadd.f32 %v5095, %v5287
        %v5289 = vpop.f32.mrb[0].mxu0
        %v5290 = vadd.f32 %v5097, %v5289
        %5291 = vmatprep.mubr.bf16.mxu0 %v2583
        %5292 = vmatmul.mubr.bf16.gmra.mrb[0].mxu0 %v2582
        %v5293 = vpop.f32.mrb[0].mxu0
        %v5294 = vadd.f32 %v5101, %v5293
        %v5295 = vpop.f32.mrb[0].mxu0
        %v5296 = vadd.f32 %v5103, %v5295
        %v5297 = vpop.f32.mrb[0].mxu0
        %v5298 = vadd.f32 %v5105, %v5297
        %v5299 = vpop.f32.mrb[0].mxu0
        %v5300 = vadd.f32 %v5107, %v5299
        %5301 = vmatprep.mubr.bf16.mxu0 %v2591
        %5302 = vmatmul.mubr.bf16.gmra.mrb[0].mxu0 %v2590
        %v5303 = vpop.f32.mrb[0].mxu0
        %v5304 = vadd.f32 %v5111, %v5303
        %v5305 = vpop.f32.mrb[0].mxu0
        %v5306 = vadd.f32 %v5113, %v5305
        %v5307 = vpop.f32.mrb[0].mxu0
        %v5308 = vadd.f32 %v5115, %v5307
        %v5309 = vpop.f32.mrb[0].mxu0
        %v5310 = vadd.f32 %v5117, %v5309
        %5311 = vdwg.mxu0
        %5312 = vmatprep.subr.bf16.mxu0 %v3773
        %5313 = vmatpush1.bf16.msra.mxu0 %v3772
        %5314 = vmatprep.subr.bf16.mxu0 %v3777
        %5315 = vmatpush1.bf16.msra.mxu0 %v3776
        %5316 = vmatprep.subr.bf16.mxu0 %v3781
        %5317 = vmatpush1.bf16.msra.mxu0 %v3780
        %5318 = vmatprep.subr.bf16.mxu0 %v3785
        %5319 = vmatpush1.bf16.msra.mxu0 %v3784
        %5320 = vmatprep.subr.bf16.mxu0 %v3789
        %5321 = vmatpush1.bf16.msra.mxu0 %v3788
        %5322 = vmatprep.subr.bf16.mxu0 %v3793
        %5323 = vmatpush1.bf16.msra.mxu0 %v3792
        %5324 = vmatprep.subr.bf16.mxu0 %v3797
        %5325 = vmatpush1.bf16.msra.mxu0 %v3796
        %5326 = vmatprep.subr.bf16.mxu0 %v3801
        %5327 = vmatpush1.bf16.msra.mxu0 %v3800
        %5328 = vmatprep.subr.bf16.mxu0 %v3805
        %5329 = vmatpush1.bf16.msra.mxu0 %v3804
        %5330 = vmatprep.subr.bf16.mxu0 %v3809
        %5331 = vmatpush1.bf16.msra.mxu0 %v3808
        %5332 = vmatprep.subr.bf16.mxu0 %v3813
        %5333 = vmatpush1.bf16.msra.mxu0 %v3812
        %5334 = vmatprep.subr.bf16.mxu0 %v3817
        %5335 = vmatpush1.bf16.msra.mxu0 %v3816
        %5336 = vmatprep.subr.bf16.mxu0 %v3821
        %5337 = vmatpush1.bf16.msra.mxu0 %v3820
        %5338 = vmatprep.subr.bf16.mxu0 %v3825
        %5339 = vmatpush1.bf16.msra.mxu0 %v3824
        %5340 = vmatprep.subr.bf16.mxu0 %v3829
        %5341 = vmatpush1.bf16.msra.mxu0 %v3828
        %5342 = vmatprep.subr.bf16.mxu0 %v3833
        %5343 = vmatpush1.bf16.msra.mxu0 %v3832
        %5344 = vmatprep.mubr.bf16.mxu0 %v2473
        %5345 = vmatmul.mubr.bf16.gmra.mrb[0].mxu0 %v2472
        %v5346 = vpop.f32.mrb[0].mxu0
        %v5347 = vadd.f32 %v5154, %v5346
        %v5348 = vpop.f32.mrb[0].mxu0
        %v5349 = vadd.f32 %v5156, %v5348
        %v5350 = vpop.f32.mrb[0].mxu0
        %v5351 = vadd.f32 %v5158, %v5350
        %v5352 = vpop.f32.mrb[0].mxu0
        %v5353 = vadd.f32 %v5160, %v5352
        %5354 = vmatprep.mubr.bf16.mxu0 %v2481
        %5355 = vmatmul.mubr.bf16.gmra.mrb[0].mxu0 %v2480
        %v5356 = vpop.f32.mrb[0].mxu0
        %v5357 = vadd.f32 %v5164, %v5356
        %v5358 = vpop.f32.mrb[0].mxu0
        %v5359 = vadd.f32 %v5166, %v5358
        %v5360 = vpop.f32.mrb[0].mxu0
        %v5361 = vadd.f32 %v5168, %v5360
        %v5362 = vpop.f32.mrb[0].mxu0
        %v5363 = vadd.f32 %v5170, %v5362
        %5364 = vmatprep.mubr.bf16.mxu0 %v2489
        %5365 = vmatmul.mubr.bf16.gmra.mrb[0].mxu0 %v2488
        %v5366 = vpop.f32.mrb[0].mxu0
        %v5367 = vadd.f32 %v5174, %v5366
        %v5368 = vpop.f32.mrb[0].mxu0
        %v5369 = vadd.f32 %v5176, %v5368
        %v5370 = vpop.f32.mrb[0].mxu0
        %v5371 = vadd.f32 %v5178, %v5370
        %v5372 = vpop.f32.mrb[0].mxu0
        %v5373 = vadd.f32 %v5180, %v5372
        %5374 = vmatprep.mubr.bf16.mxu0 %v2497
        %5375 = vmatmul.mubr.bf16.gmra.mrb[0].mxu0 %v2496
        %v5376 = vpop.f32.mrb[0].mxu0
        %v5377 = vadd.f32 %v5184, %v5376
        %v5378 = vpop.f32.mrb[0].mxu0
        %v5379 = vadd.f32 %v5186, %v5378
        %v5380 = vpop.f32.mrb[0].mxu0
        %v5381 = vadd.f32 %v5188, %v5380
        %v5382 = vpop.f32.mrb[0].mxu0
        %v5383 = vadd.f32 %v5190, %v5382
        %5384 = vmatprep.mubr.bf16.mxu0 %v2505
        %5385 = vmatmul.mubr.bf16.gmra.mrb[0].mxu0 %v2504
        %v5386 = vpop.f32.mrb[0].mxu0
        %v5387 = vadd.f32 %v5194, %v5386
        %v5388 = vpop.f32.mrb[0].mxu0
        %v5389 = vadd.f32 %v5196, %v5388
        %v5390 = vpop.f32.mrb[0].mxu0
        %v5391 = vadd.f32 %v5198, %v5390
        %v5392 = vpop.f32.mrb[0].mxu0
        %v5393 = vadd.f32 %v5200, %v5392
        %5394 = vmatprep.mubr.bf16.mxu0 %v2513
        %5395 = vmatmul.mubr.bf16.gmra.mrb[0].mxu0 %v2512
        %v5396 = vpop.f32.mrb[0].mxu0
        %v5397 = vadd.f32 %v5204, %v5396
        %v5398 = vpop.f32.mrb[0].mxu0
        %v5399 = vadd.f32 %v5206, %v5398
        %v5400 = vpop.f32.mrb[0].mxu0
        %v5401 = vadd.f32 %v5208, %v5400
        %v5402 = vpop.f32.mrb[0].mxu0
        %v5403 = vadd.f32 %v5210, %v5402
        %5404 = vmatprep.mubr.bf16.mxu0 %v2521
        %5405 = vmatmul.mubr.bf16.gmra.mrb[0].mxu0 %v2520
        %v5406 = vpop.f32.mrb[0].mxu0
        %v5407 = vadd.f32 %v5214, %v5406
        %v5408 = vpop.f32.mrb[0].mxu0
        %v5409 = vadd.f32 %v5216, %v5408
        %v5410 = vpop.f32.mrb[0].mxu0
        %v5411 = vadd.f32 %v5218, %v5410
        %v5412 = vpop.f32.mrb[0].mxu0
        %v5413 = vadd.f32 %v5220, %v5412
        %5414 = vmatprep.mubr.bf16.mxu0 %v2529
        %5415 = vmatmul.mubr.bf16.gmra.mrb[0].mxu0 %v2528
        %v5416 = vpop.f32.mrb[0].mxu0
        %v5417 = vadd.f32 %v5224, %v5416
        %v5418 = vpop.f32.mrb[0].mxu0
        %v5419 = vadd.f32 %v5226, %v5418
        %v5420 = vpop.f32.mrb[0].mxu0
        %v5421 = vadd.f32 %v5228, %v5420
        %v5422 = vpop.f32.mrb[0].mxu0
        %v5423 = vadd.f32 %v5230, %v5422
        %5424 = vmatprep.mubr.bf16.mxu0 %v2537
        %5425 = vmatmul.mubr.bf16.gmra.mrb[0].mxu0 %v2536
        %v5426 = vpop.f32.mrb[0].mxu0
        %v5427 = vadd.f32 %v5234, %v5426
        %v5428 = vpop.f32.mrb[0].mxu0
        %v5429 = vadd.f32 %v5236, %v5428
        %v5430 = vpop.f32.mrb[0].mxu0
        %v5431 = vadd.f32 %v5238, %v5430
        %v5432 = vpop.f32.mrb[0].mxu0
        %v5433 = vadd.f32 %v5240, %v5432
        %5434 = vmatprep.mubr.bf16.mxu0 %v2545
        %5435 = vmatmul.mubr.bf16.gmra.mrb[0].mxu0 %v2544
        %v5436 = vpop.f32.mrb[0].mxu0
        %v5437 = vadd.f32 %v5244, %v5436
        %v5438 = vpop.f32.mrb[0].mxu0
        %v5439 = vadd.f32 %v5246, %v5438
        %v5440 = vpop.f32.mrb[0].mxu0
        %v5441 = vadd.f32 %v5248, %v5440
        %v5442 = vpop.f32.mrb[0].mxu0
        %v5443 = vadd.f32 %v5250, %v5442
        %5444 = vmatprep.mubr.bf16.mxu0 %v2553
        %5445 = vmatmul.mubr.bf16.gmra.mrb[0].mxu0 %v2552
        %v5446 = vpop.f32.mrb[0].mxu0
        %v5447 = vadd.f32 %v5254, %v5446
        %v5448 = vpop.f32.mrb[0].mxu0
        %v5449 = vadd.f32 %v5256, %v5448
        %v5450 = vpop.f32.mrb[0].mxu0
        %v5451 = vadd.f32 %v5258, %v5450
        %v5452 = vpop.f32.mrb[0].mxu0
        %v5453 = vadd.f32 %v5260, %v5452
        %5454 = vmatprep.mubr.bf16.mxu0 %v2561
        %5455 = vmatmul.mubr.bf16.gmra.mrb[0].mxu0 %v2560
        %v5456 = vpop.f32.mrb[0].mxu0
        %v5457 = vadd.f32 %v5264, %v5456
        %v5458 = vpop.f32.mrb[0].mxu0
        %v5459 = vadd.f32 %v5266, %v5458
        %v5460 = vpop.f32.mrb[0].mxu0
        %v5461 = vadd.f32 %v5268, %v5460
        %v5462 = vpop.f32.mrb[0].mxu0
        %v5463 = vadd.f32 %v5270, %v5462
        %5464 = vmatprep.mubr.bf16.mxu0 %v2569
        %5465 = vmatmul.mubr.bf16.gmra.mrb[0].mxu0 %v2568
        %v5466 = vpop.f32.mrb[0].mxu0
        %v5467 = vadd.f32 %v5274, %v5466
        %v5468 = vpop.f32.mrb[0].mxu0
        %v5469 = vadd.f32 %v5276, %v5468
        %v5470 = vpop.f32.mrb[0].mxu0
        %v5471 = vadd.f32 %v5278, %v5470
        %v5472 = vpop.f32.mrb[0].mxu0
        %v5473 = vadd.f32 %v5280, %v5472
        %5474 = vmatprep.mubr.bf16.mxu0 %v2577
        %5475 = vmatmul.mubr.bf16.gmra.mrb[0].mxu0 %v2576
        %v5476 = vpop.f32.mrb[0].mxu0
        %v5477 = vadd.f32 %v5284, %v5476
        %v5478 = vpop.f32.mrb[0].mxu0
        %v5479 = vadd.f32 %v5286, %v5478
        %v5480 = vpop.f32.mrb[0].mxu0
        %v5481 = vadd.f32 %v5288, %v5480
        %v5482 = vpop.f32.mrb[0].mxu0
        %v5483 = vadd.f32 %v5290, %v5482
        %5484 = vmatprep.mubr.bf16.mxu0 %v2585
        %5485 = vmatmul.mubr.bf16.gmra.mrb[0].mxu0 %v2584
        %v5486 = vpop.f32.mrb[0].mxu0
        %v5487 = vadd.f32 %v5294, %v5486
        %v5488 = vpop.f32.mrb[0].mxu0
        %v5489 = vadd.f32 %v5296, %v5488
        %v5490 = vpop.f32.mrb[0].mxu0
        %v5491 = vadd.f32 %v5298, %v5490
        %v5492 = vpop.f32.mrb[0].mxu0
        %v5493 = vadd.f32 %v5300, %v5492
        %5494 = vmatprep.mubr.bf16.mxu0 %v2593
        %5495 = vmatmul.mubr.bf16.gmra.mrb[0].mxu0 %v2592
        %v5496 = vpop.f32.mrb[0].mxu0
        %v5497 = vadd.f32 %v5304, %v5496
        %v5498 = vpop.f32.mrb[0].mxu0
        %v5499 = vadd.f32 %v5306, %v5498
        %v5500 = vpop.f32.mrb[0].mxu0
        %v5501 = vadd.f32 %v5308, %v5500
        %v5502 = vpop.f32.mrb[0].mxu0
        %v5503 = vadd.f32 %v5310, %v5502
        %5504 = vdwg.mxu0
        %5505 = vmatprep.subr.bf16.mxu0 %v3837
        %5506 = vmatpush1.bf16.msra.mxu0 %v3836
        %5507 = vmatprep.subr.bf16.mxu0 %v3841
        %5508 = vmatpush1.bf16.msra.mxu0 %v3840
        %5509 = vmatprep.subr.bf16.mxu0 %v3845
        %5510 = vmatpush1.bf16.msra.mxu0 %v3844
        %5511 = vmatprep.subr.bf16.mxu0 %v3849
        %5512 = vmatpush1.bf16.msra.mxu0 %v3848
        %5513 = vmatprep.subr.bf16.mxu0 %v3853
        %5514 = vmatpush1.bf16.msra.mxu0 %v3852
        %5515 = vmatprep.subr.bf16.mxu0 %v3857
        %5516 = vmatpush1.bf16.msra.mxu0 %v3856
        %5517 = vmatprep.subr.bf16.mxu0 %v3861
        %5518 = vmatpush1.bf16.msra.mxu0 %v3860
        %5519 = vmatprep.subr.bf16.mxu0 %v3865
        %5520 = vmatpush1.bf16.msra.mxu0 %v3864
        %5521 = vmatprep.subr.bf16.mxu0 %v3869
        %5522 = vmatpush1.bf16.msra.mxu0 %v3868
        %5523 = vmatprep.subr.bf16.mxu0 %v3873
        %5524 = vmatpush1.bf16.msra.mxu0 %v3872
        %5525 = vmatprep.subr.bf16.mxu0 %v3877
        %5526 = vmatpush1.bf16.msra.mxu0 %v3876
        %5527 = vmatprep.subr.bf16.mxu0 %v3881
        %5528 = vmatpush1.bf16.msra.mxu0 %v3880
        %5529 = vmatprep.subr.bf16.mxu0 %v3885
        %5530 = vmatpush1.bf16.msra.mxu0 %v3884
        %5531 = vmatprep.subr.bf16.mxu0 %v3889
        %5532 = vmatpush1.bf16.msra.mxu0 %v3888
        %5533 = vmatprep.subr.bf16.mxu0 %v3893
        %5534 = vmatpush1.bf16.msra.mxu0 %v3892
        %5535 = vmatprep.subr.bf16.mxu0 %v3897
        %5536 = vmatpush1.bf16.msra.mxu0 %v3896
        %5537 = vmatprep.mubr.bf16.mxu0 %v2475
        %5538 = vmatmul.mubr.bf16.gmra.mrb[0].mxu0 %v2474
        %v5539 = vpop.f32.mrb[0].mxu0
        %v5540 = vadd.f32 %v5347, %v5539
        %v5541 = vpop.f32.mrb[0].mxu0
        %v5542 = vadd.f32 %v5349, %v5541
        %v5543 = vpop.f32.mrb[0].mxu0
        %v5544 = vadd.f32 %v5351, %v5543
        %v5545 = vpop.f32.mrb[0].mxu0
        %v5546 = vadd.f32 %v5353, %v5545
        %5547 = vmatprep.mubr.bf16.mxu0 %v2483
        %5548 = vmatmul.mubr.bf16.gmra.mrb[0].mxu0 %v2482
        %v5549 = vpop.f32.mrb[0].mxu0
        %v5550 = vadd.f32 %v5357, %v5549
        %v5551 = vpop.f32.mrb[0].mxu0
        %v5552 = vadd.f32 %v5359, %v5551
        %v5553 = vpop.f32.mrb[0].mxu0
        %v5554 = vadd.f32 %v5361, %v5553
        %v5555 = vpop.f32.mrb[0].mxu0
        %v5556 = vadd.f32 %v5363, %v5555
        %5557 = vmatprep.mubr.bf16.mxu0 %v2491
        %5558 = vmatmul.mubr.bf16.gmra.mrb[0].mxu0 %v2490
        %v5559 = vpop.f32.mrb[0].mxu0
        %v5560 = vadd.f32 %v5367, %v5559
        %v5561 = vpop.f32.mrb[0].mxu0
        %v5562 = vadd.f32 %v5369, %v5561
        %v5563 = vpop.f32.mrb[0].mxu0
        %v5564 = vadd.f32 %v5371, %v5563
        %v5565 = vpop.f32.mrb[0].mxu0
        %v5566 = vadd.f32 %v5373, %v5565
        %5567 = vmatprep.mubr.bf16.mxu0 %v2499
        %5568 = vmatmul.mubr.bf16.gmra.mrb[0].mxu0 %v2498
        %v5569 = vpop.f32.mrb[0].mxu0
        %v5570 = vadd.f32 %v5377, %v5569
        %v5571 = vpop.f32.mrb[0].mxu0
        %v5572 = vadd.f32 %v5379, %v5571
        %v5573 = vpop.f32.mrb[0].mxu0
        %v5574 = vadd.f32 %v5381, %v5573
        %v5575 = vpop.f32.mrb[0].mxu0
        %v5576 = vadd.f32 %v5383, %v5575
        %5577 = vmatprep.mubr.bf16.mxu0 %v2507
        %5578 = vmatmul.mubr.bf16.gmra.mrb[0].mxu0 %v2506
        %v5579 = vpop.f32.mrb[0].mxu0
        %v5580 = vadd.f32 %v5387, %v5579
        %v5581 = vpop.f32.mrb[0].mxu0
        %v5582 = vadd.f32 %v5389, %v5581
        %v5583 = vpop.f32.mrb[0].mxu0
        %v5584 = vadd.f32 %v5391, %v5583
        %v5585 = vpop.f32.mrb[0].mxu0
        %v5586 = vadd.f32 %v5393, %v5585
        %5587 = vmatprep.mubr.bf16.mxu0 %v2515
        %5588 = vmatmul.mubr.bf16.gmra.mrb[0].mxu0 %v2514
        %v5589 = vpop.f32.mrb[0].mxu0
        %v5590 = vadd.f32 %v5397, %v5589
        %v5591 = vpop.f32.mrb[0].mxu0
        %v5592 = vadd.f32 %v5399, %v5591
        %v5593 = vpop.f32.mrb[0].mxu0
        %v5594 = vadd.f32 %v5401, %v5593
        %v5595 = vpop.f32.mrb[0].mxu0
        %v5596 = vadd.f32 %v5403, %v5595
        %5597 = vmatprep.mubr.bf16.mxu0 %v2523
        %5598 = vmatmul.mubr.bf16.gmra.mrb[0].mxu0 %v2522
        %v5599 = vpop.f32.mrb[0].mxu0
        %v5600 = vadd.f32 %v5407, %v5599
        %v5601 = vpop.f32.mrb[0].mxu0
        %v5602 = vadd.f32 %v5409, %v5601
        %v5603 = vpop.f32.mrb[0].mxu0
        %v5604 = vadd.f32 %v5411, %v5603
        %v5605 = vpop.f32.mrb[0].mxu0
        %v5606 = vadd.f32 %v5413, %v5605
        %5607 = vmatprep.mubr.bf16.mxu0 %v2531
        %5608 = vmatmul.mubr.bf16.gmra.mrb[0].mxu0 %v2530
        %v5609 = vpop.f32.mrb[0].mxu0
        %v5610 = vadd.f32 %v5417, %v5609
        %v5611 = vpop.f32.mrb[0].mxu0
        %v5612 = vadd.f32 %v5419, %v5611
        %v5613 = vpop.f32.mrb[0].mxu0
        %v5614 = vadd.f32 %v5421, %v5613
        %v5615 = vpop.f32.mrb[0].mxu0
        %v5616 = vadd.f32 %v5423, %v5615
        %5617 = vmatprep.mubr.bf16.mxu0 %v2539
        %5618 = vmatmul.mubr.bf16.gmra.mrb[0].mxu0 %v2538
        %v5619 = vpop.f32.mrb[0].mxu0
        %v5620 = vadd.f32 %v5427, %v5619
        %v5621 = vpop.f32.mrb[0].mxu0
        %v5622 = vadd.f32 %v5429, %v5621
        %v5623 = vpop.f32.mrb[0].mxu0
        %v5624 = vadd.f32 %v5431, %v5623
        %v5625 = vpop.f32.mrb[0].mxu0
        %v5626 = vadd.f32 %v5433, %v5625
        %5627 = vmatprep.mubr.bf16.mxu0 %v2547
        %5628 = vmatmul.mubr.bf16.gmra.mrb[0].mxu0 %v2546
        %v5629 = vpop.f32.mrb[0].mxu0
        %v5630 = vadd.f32 %v5437, %v5629
        %v5631 = vpop.f32.mrb[0].mxu0
        %v5632 = vadd.f32 %v5439, %v5631
        %v5633 = vpop.f32.mrb[0].mxu0
        %v5634 = vadd.f32 %v5441, %v5633
        %v5635 = vpop.f32.mrb[0].mxu0
        %v5636 = vadd.f32 %v5443, %v5635
        %5637 = vmatprep.mubr.bf16.mxu0 %v2555
        %5638 = vmatmul.mubr.bf16.gmra.mrb[0].mxu0 %v2554
        %v5639 = vpop.f32.mrb[0].mxu0
        %v5640 = vadd.f32 %v5447, %v5639
        %v5641 = vpop.f32.mrb[0].mxu0
        %v5642 = vadd.f32 %v5449, %v5641
        %v5643 = vpop.f32.mrb[0].mxu0
        %v5644 = vadd.f32 %v5451, %v5643
        %v5645 = vpop.f32.mrb[0].mxu0
        %v5646 = vadd.f32 %v5453, %v5645
        %5647 = vmatprep.mubr.bf16.mxu0 %v2563
        %5648 = vmatmul.mubr.bf16.gmra.mrb[0].mxu0 %v2562
        %v5649 = vpop.f32.mrb[0].mxu0
        %v5650 = vadd.f32 %v5457, %v5649
        %v5651 = vpop.f32.mrb[0].mxu0
        %v5652 = vadd.f32 %v5459, %v5651
        %v5653 = vpop.f32.mrb[0].mxu0
        %v5654 = vadd.f32 %v5461, %v5653
        %v5655 = vpop.f32.mrb[0].mxu0
        %v5656 = vadd.f32 %v5463, %v5655
        %5657 = vmatprep.mubr.bf16.mxu0 %v2571
        %5658 = vmatmul.mubr.bf16.gmra.mrb[0].mxu0 %v2570
        %v5659 = vpop.f32.mrb[0].mxu0
        %v5660 = vadd.f32 %v5467, %v5659
        %v5661 = vpop.f32.mrb[0].mxu0
        %v5662 = vadd.f32 %v5469, %v5661
        %v5663 = vpop.f32.mrb[0].mxu0
        %v5664 = vadd.f32 %v5471, %v5663
        %v5665 = vpop.f32.mrb[0].mxu0
        %v5666 = vadd.f32 %v5473, %v5665
        %5667 = vmatprep.mubr.bf16.mxu0 %v2579
        %5668 = vmatmul.mubr.bf16.gmra.mrb[0].mxu0 %v2578
        %v5669 = vpop.f32.mrb[0].mxu0
        %v5670 = vadd.f32 %v5477, %v5669
        %v5671 = vpop.f32.mrb[0].mxu0
        %v5672 = vadd.f32 %v5479, %v5671
        %v5673 = vpop.f32.mrb[0].mxu0
        %v5674 = vadd.f32 %v5481, %v5673
        %v5675 = vpop.f32.mrb[0].mxu0
        %v5676 = vadd.f32 %v5483, %v5675
        %5677 = vmatprep.mubr.bf16.mxu0 %v2587
        %5678 = vmatmul.mubr.bf16.gmra.mrb[0].mxu0 %v2586
        %v5679 = vpop.f32.mrb[0].mxu0
        %v5680 = vadd.f32 %v5487, %v5679
        %v5681 = vpop.f32.mrb[0].mxu0
        %v5682 = vadd.f32 %v5489, %v5681
        %v5683 = vpop.f32.mrb[0].mxu0
        %v5684 = vadd.f32 %v5491, %v5683
        %v5685 = vpop.f32.mrb[0].mxu0
        %v5686 = vadd.f32 %v5493, %v5685
        %5687 = vmatprep.mubr.bf16.mxu0 %v2595
        %5688 = vmatmul.mubr.bf16.gmra.mrb[0].mxu0 %v2594
        %v5689 = vpop.f32.mrb[0].mxu0
        %v5690 = vadd.f32 %v5497, %v5689
        %v5691 = vpop.f32.mrb[0].mxu0
        %v5692 = vadd.f32 %v5499, %v5691
        %v5693 = vpop.f32.mrb[0].mxu0
        %v5694 = vadd.f32 %v5501, %v5693
        %v5695 = vpop.f32.mrb[0].mxu0
        %v5696 = vadd.f32 %v5503, %v5695
        %5697 = vdwg.mxu0
        %v5698 = vmax.f32 %v4768, 0.0
        %v5699 = vmax.f32 %v4770, 0.0
        %v5700 = vmax.f32 %v5540, 0.0
        %v5701 = vmax.f32 %v5542, 0.0
        %v5702 = vmax.f32 %v4772, 0.0
        %v5703 = vmax.f32 %v4774, 0.0
        %v5704 = vmax.f32 %v5544, 0.0
        %v5705 = vmax.f32 %v5546, 0.0
        %v5706 = vmax.f32 %v4778, 0.0
        %v5707 = vmax.f32 %v4780, 0.0
        %v5708 = vmax.f32 %v5550, 0.0
        %v5709 = vmax.f32 %v5552, 0.0
        %v5710 = vmax.f32 %v4782, 0.0
        %v5711 = vmax.f32 %v4784, 0.0
        %v5712 = vmax.f32 %v5554, 0.0
        %v5713 = vmax.f32 %v5556, 0.0
        %v5714 = vmax.f32 %v4788, 0.0
        %v5715 = vmax.f32 %v4790, 0.0
        %v5716 = vmax.f32 %v5560, 0.0
        %v5717 = vmax.f32 %v5562, 0.0
        %v5718 = vmax.f32 %v4792, 0.0
        %v5719 = vmax.f32 %v4794, 0.0
        %v5720 = vmax.f32 %v5564, 0.0
        %v5721 = vmax.f32 %v5566, 0.0
        %v5722 = vmax.f32 %v4798, 0.0
        %v5723 = vmax.f32 %v4800, 0.0
        %v5724 = vmax.f32 %v5570, 0.0
        %v5725 = vmax.f32 %v5572, 0.0
        %v5726 = vmax.f32 %v4802, 0.0
        %v5727 = vmax.f32 %v4804, 0.0
        %v5728 = vmax.f32 %v5574, 0.0
        %v5729 = vmax.f32 %v5576, 0.0
        %v5730 = vmax.f32 %v4808, 0.0
        %v5731 = vmax.f32 %v4810, 0.0
        %v5732 = vmax.f32 %v5580, 0.0
        %v5733 = vmax.f32 %v5582, 0.0
        %v5734 = vmax.f32 %v4812, 0.0
        %v5735 = vmax.f32 %v4814, 0.0
        %v5736 = vmax.f32 %v5584, 0.0
        %v5737 = vmax.f32 %v5586, 0.0
        %v5738 = vmax.f32 %v4818, 0.0
        %v5739 = vmax.f32 %v4820, 0.0
        %v5740 = vmax.f32 %v5590, 0.0
        %v5741 = vmax.f32 %v5592, 0.0
        %v5742 = vmax.f32 %v4822, 0.0
        %v5743 = vmax.f32 %v4824, 0.0
        %v5744 = vmax.f32 %v5594, 0.0
        %v5745 = vmax.f32 %v5596, 0.0
        %v5746 = vmax.f32 %v4828, 0.0
        %v5747 = vmax.f32 %v4830, 0.0
        %v5748 = vmax.f32 %v5600, 0.0
        %v5749 = vmax.f32 %v5602, 0.0
        %v5750 = vmax.f32 %v4832, 0.0
        %v5751 = vmax.f32 %v4834, 0.0
        %v5752 = vmax.f32 %v5604, 0.0
        %v5753 = vmax.f32 %v5606, 0.0
        %v5754 = vmax.f32 %v4838, 0.0
        %v5755 = vmax.f32 %v4840, 0.0
        %v5756 = vmax.f32 %v5610, 0.0
        %v5757 = vmax.f32 %v5612, 0.0
        %v5758 = vmax.f32 %v4842, 0.0
        %v5759 = vmax.f32 %v4844, 0.0
        %v5760 = vmax.f32 %v5614, 0.0
        %v5761 = vmax.f32 %v5616, 0.0
        %v5762 = vmax.f32 %v4848, 0.0
        %v5763 = vmax.f32 %v4850, 0.0
        %v5764 = vmax.f32 %v5620, 0.0
        %v5765 = vmax.f32 %v5622, 0.0
        %v5766 = vmax.f32 %v4852, 0.0
        %v5767 = vmax.f32 %v4854, 0.0
        %v5768 = vmax.f32 %v5624, 0.0
        %v5769 = vmax.f32 %v5626, 0.0
        %v5770 = vmax.f32 %v4858, 0.0
        %v5771 = vmax.f32 %v4860, 0.0
        %v5772 = vmax.f32 %v5630, 0.0
        %v5773 = vmax.f32 %v5632, 0.0
        %v5774 = vmax.f32 %v4862, 0.0
        %v5775 = vmax.f32 %v4864, 0.0
        %v5776 = vmax.f32 %v5634, 0.0
        %v5777 = vmax.f32 %v5636, 0.0
        %v5778 = vmax.f32 %v4868, 0.0
        %v5779 = vmax.f32 %v4870, 0.0
        %v5780 = vmax.f32 %v5640, 0.0
        %v5781 = vmax.f32 %v5642, 0.0
        %v5782 = vmax.f32 %v4872, 0.0
        %v5783 = vmax.f32 %v4874, 0.0
        %v5784 = vmax.f32 %v5644, 0.0
        %v5785 = vmax.f32 %v5646, 0.0
        %v5786 = vmax.f32 %v4878, 0.0
        %v5787 = vmax.f32 %v4880, 0.0
        %v5788 = vmax.f32 %v5650, 0.0
        %v5789 = vmax.f32 %v5652, 0.0
        %v5790 = vmax.f32 %v4882, 0.0
        %v5791 = vmax.f32 %v4884, 0.0
        %v5792 = vmax.f32 %v5654, 0.0
        %v5793 = vmax.f32 %v5656, 0.0
        %v5794 = vmax.f32 %v4888, 0.0
        %v5795 = vmax.f32 %v4890, 0.0
        %v5796 = vmax.f32 %v5660, 0.0
        %v5797 = vmax.f32 %v5662, 0.0
        %v5798 = vmax.f32 %v4892, 0.0
        %v5799 = vmax.f32 %v4894, 0.0
        %v5800 = vmax.f32 %v5664, 0.0
        %v5801 = vmax.f32 %v5666, 0.0
        %v5802 = vmax.f32 %v4898, 0.0
        %v5803 = vmax.f32 %v4900, 0.0
        %v5804 = vmax.f32 %v5670, 0.0
        %v5805 = vmax.f32 %v5672, 0.0
        %v5806 = vmax.f32 %v4902, 0.0
        %v5807 = vmax.f32 %v4904, 0.0
        %v5808 = vmax.f32 %v5674, 0.0
        %v5809 = vmax.f32 %v5676, 0.0
        %v5810 = vmax.f32 %v4908, 0.0
        %v5811 = vmax.f32 %v4910, 0.0
        %v5812 = vmax.f32 %v5680, 0.0
        %v5813 = vmax.f32 %v5682, 0.0
        %v5814 = vmax.f32 %v4912, 0.0
        %v5815 = vmax.f32 %v4914, 0.0
        %v5816 = vmax.f32 %v5684, 0.0
        %v5817 = vmax.f32 %v5686, 0.0
        %v5818 = vmax.f32 %v4918, 0.0
        %v5819 = vmax.f32 %v4920, 0.0
        %v5820 = vmax.f32 %v5690, 0.0
        %v5821 = vmax.f32 %v5692, 0.0
        %v5822 = vmax.f32 %v4922, 0.0
        %v5823 = vmax.f32 %v4924, 0.0
        %v5824 = vmax.f32 %v5694, 0.0
        %v5825 = vmax.f32 %v5696, 0.0
        %v5826 = vpack.c.bf16 %v5702, %v5698
        %v5827 = vpack.c.bf16 %v5703, %v5699
        %v5828 = vpack.c.bf16 %v5704, %v5700
        %v5829 = vpack.c.bf16 %v5705, %v5701
        %v5830 = vpack.c.bf16 %v5710, %v5706
        %v5831 = vpack.c.bf16 %v5711, %v5707
        %v5832 = vpack.c.bf16 %v5712, %v5708
        %v5833 = vpack.c.bf16 %v5713, %v5709
        %v5834 = vpack.c.bf16 %v5718, %v5714
        %v5835 = vpack.c.bf16 %v5719, %v5715
        %v5836 = vpack.c.bf16 %v5720, %v5716
        %v5837 = vpack.c.bf16 %v5721, %v5717
        %v5838 = vpack.c.bf16 %v5726, %v5722
        %v5839 = vpack.c.bf16 %v5727, %v5723
        %v5840 = vpack.c.bf16 %v5728, %v5724
        %v5841 = vpack.c.bf16 %v5729, %v5725
        %v5842 = vpack.c.bf16 %v5734, %v5730
        %v5843 = vpack.c.bf16 %v5735, %v5731
        %v5844 = vpack.c.bf16 %v5736, %v5732
        %v5845 = vpack.c.bf16 %v5737, %v5733
        %v5846 = vpack.c.bf16 %v5742, %v5738
        %v5847 = vpack.c.bf16 %v5743, %v5739
        %v5848 = vpack.c.bf16 %v5744, %v5740
        %v5849 = vpack.c.bf16 %v5745, %v5741
        %v5850 = vpack.c.bf16 %v5750, %v5746
        %v5851 = vpack.c.bf16 %v5751, %v5747
        %v5852 = vpack.c.bf16 %v5752, %v5748
        %v5853 = vpack.c.bf16 %v5753, %v5749
        %v5854 = vpack.c.bf16 %v5758, %v5754
        %v5855 = vpack.c.bf16 %v5759, %v5755
        %v5856 = vpack.c.bf16 %v5760, %v5756
        %v5857 = vpack.c.bf16 %v5761, %v5757
        %v5858 = vpack.c.bf16 %v5766, %v5762
        %v5859 = vpack.c.bf16 %v5767, %v5763
        %v5860 = vpack.c.bf16 %v5768, %v5764
        %v5861 = vpack.c.bf16 %v5769, %v5765
        %v5862 = vpack.c.bf16 %v5774, %v5770
        %v5863 = vpack.c.bf16 %v5775, %v5771
        %v5864 = vpack.c.bf16 %v5776, %v5772
        %v5865 = vpack.c.bf16 %v5777, %v5773
        %v5866 = vpack.c.bf16 %v5782, %v5778
        %v5867 = vpack.c.bf16 %v5783, %v5779
        %v5868 = vpack.c.bf16 %v5784, %v5780
        %v5869 = vpack.c.bf16 %v5785, %v5781
        %v5870 = vpack.c.bf16 %v5790, %v5786
        %v5871 = vpack.c.bf16 %v5791, %v5787
        %v5872 = vpack.c.bf16 %v5792, %v5788
        %v5873 = vpack.c.bf16 %v5793, %v5789
        %v5874 = vpack.c.bf16 %v5798, %v5794
        %v5875 = vpack.c.bf16 %v5799, %v5795
        %v5876 = vpack.c.bf16 %v5800, %v5796
        %v5877 = vpack.c.bf16 %v5801, %v5797
        %v5878 = vpack.c.bf16 %v5806, %v5802
        %v5879 = vpack.c.bf16 %v5807, %v5803
        %v5880 = vpack.c.bf16 %v5808, %v5804
        %v5881 = vpack.c.bf16 %v5809, %v5805
        %v5882 = vpack.c.bf16 %v5814, %v5810
        %v5883 = vpack.c.bf16 %v5815, %v5811
        %v5884 = vpack.c.bf16 %v5816, %v5812
        %v5885 = vpack.c.bf16 %v5817, %v5813
        %v5886 = vpack.c.bf16 %v5822, %v5818
        %v5887 = vpack.c.bf16 %v5823, %v5819
        %v5888 = vpack.c.bf16 %v5824, %v5820
        %v5889 = vpack.c.bf16 %v5825, %v5821
        %v5890 = vld [vmem:[#allocation12] sm:$0xff]
        %v5891 = vld [vmem:[#allocation12 + $0x8] sm:$0xff]
        %v5892 = vld [vmem:[#allocation12 + $0x10] sm:$0xff]
        %v5893 = vld [vmem:[#allocation12 + $0x18] sm:$0xff]
        %v5894 = vld [vmem:[#allocation12 + $0x20] sm:$0xff]
        %v5895 = vld [vmem:[#allocation12 + $0x28] sm:$0xff]
        %v5896 = vld [vmem:[#allocation12 + $0x30] sm:$0xff]
        %v5897 = vld [vmem:[#allocation12 + $0x38] sm:$0xff]
        %v5898 = vld [vmem:[#allocation12 + $0x40] sm:$0xff]
        %v5899 = vld [vmem:[#allocation12 + $0x48] sm:$0xff]
        %v5900 = vld [vmem:[#allocation12 + $0x50] sm:$0xff]
        %v5901 = vld [vmem:[#allocation12 + $0x58] sm:$0xff]
        %v5902 = vld [vmem:[#allocation12 + $0x60] sm:$0xff]
        %v5903 = vld [vmem:[#allocation12 + $0x68] sm:$0xff]
        %v5904 = vld [vmem:[#allocation12 + $0x70] sm:$0xff]
        %v5905 = vld [vmem:[#allocation12 + $0x78] sm:$0xff]
        %v5906 = vld [vmem:[#allocation12 + $0x80] sm:$0xff]
        %v5907 = vld [vmem:[#allocation12 + $0x88] sm:$0xff]
        %v5908 = vld [vmem:[#allocation12 + $0x90] sm:$0xff]
        %v5909 = vld [vmem:[#allocation12 + $0x98] sm:$0xff]
        %v5910 = vld [vmem:[#allocation12 + $0xa0] sm:$0xff]
        %v5911 = vld [vmem:[#allocation12 + $0xa8] sm:$0xff]
        %v5912 = vld [vmem:[#allocation12 + $0xb0] sm:$0xff]
        %v5913 = vld [vmem:[#allocation12 + $0xb8] sm:$0xff]
        %v5914 = vld [vmem:[#allocation12 + $0xc0] sm:$0xff]
        %v5915 = vld [vmem:[#allocation12 + $0xc8] sm:$0xff]
        %v5916 = vld [vmem:[#allocation12 + $0xd0] sm:$0xff]
        %v5917 = vld [vmem:[#allocation12 + $0xd8] sm:$0xff]
        %v5918 = vld [vmem:[#allocation12 + $0xe0] sm:$0xff]
        %v5919 = vld [vmem:[#allocation12 + $0xe8] sm:$0xff]
        %v5920 = vld [vmem:[#allocation12 + $0xf0] sm:$0xff]
        %v5921 = vld [vmem:[#allocation12 + $0xf8] sm:$0xff]
        %v5922 = vld [vmem:[#allocation12 + $0x100] sm:$0xff]
        %v5923 = vld [vmem:[#allocation12 + $0x108] sm:$0xff]
        %v5924 = vld [vmem:[#allocation12 + $0x110] sm:$0xff]
        %v5925 = vld [vmem:[#allocation12 + $0x118] sm:$0xff]
        %v5926 = vld [vmem:[#allocation12 + $0x120] sm:$0xff]
        %v5927 = vld [vmem:[#allocation12 + $0x128] sm:$0xff]
        %v5928 = vld [vmem:[#allocation12 + $0x130] sm:$0xff]
        %v5929 = vld [vmem:[#allocation12 + $0x138] sm:$0xff]
        %v5930 = vld [vmem:[#allocation12 + $0x140] sm:$0xff]
        %v5931 = vld [vmem:[#allocation12 + $0x148] sm:$0xff]
        %v5932 = vld [vmem:[#allocation12 + $0x150] sm:$0xff]
        %v5933 = vld [vmem:[#allocation12 + $0x158] sm:$0xff]
        %v5934 = vld [vmem:[#allocation12 + $0x160] sm:$0xff]
        %v5935 = vld [vmem:[#allocation12 + $0x168] sm:$0xff]
        %v5936 = vld [vmem:[#allocation12 + $0x170] sm:$0xff]
        %v5937 = vld [vmem:[#allocation12 + $0x178] sm:$0xff]
        %v5938 = vld [vmem:[#allocation12 + $0x180] sm:$0xff]
        %v5939 = vld [vmem:[#allocation12 + $0x188] sm:$0xff]
        %v5940 = vld [vmem:[#allocation12 + $0x190] sm:$0xff]
        %v5941 = vld [vmem:[#allocation12 + $0x198] sm:$0xff]
        %v5942 = vld [vmem:[#allocation12 + $0x1a0] sm:$0xff]
        %v5943 = vld [vmem:[#allocation12 + $0x1a8] sm:$0xff]
        %v5944 = vld [vmem:[#allocation12 + $0x1b0] sm:$0xff]
        %v5945 = vld [vmem:[#allocation12 + $0x1b8] sm:$0xff]
        %v5946 = vld [vmem:[#allocation12 + $0x1c0] sm:$0xff]
        %v5947 = vld [vmem:[#allocation12 + $0x1c8] sm:$0xff]
        %v5948 = vld [vmem:[#allocation12 + $0x1d0] sm:$0xff]
        %v5949 = vld [vmem:[#allocation12 + $0x1d8] sm:$0xff]
        %v5950 = vld [vmem:[#allocation12 + $0x1e0] sm:$0xff]
        %v5951 = vld [vmem:[#allocation12 + $0x1e8] sm:$0xff]
        %v5952 = vld [vmem:[#allocation12 + $0x1f0] sm:$0xff]
        %v5953 = vld [vmem:[#allocation12 + $0x1f8] sm:$0xff]
        %v5954 = vld [vmem:[#allocation14] sm:$0x3]
        %v5956 = vlaneseq
        %v5957 = vshrl.u32 %v5956, 7
        %v5958 = vsub.s32 0, %v5957
        %v5959 = vrot.slane %v5954, %v5958
        %v5960 = vlaneseq
        %v5961 = vshrl.u32 %v5960, 7
        %v5962 = vsub.s32 1, %v5961
        %v5963 = vrot.slane %v5954, %v5962
        %v6030 = vunpack.c.l.b16 %v5890
        %v6031 = vunpack.c.h.b16 %v5890
        %v6032 = vunpack.c.l.b16 %v5891
        %v6033 = vunpack.c.h.b16 %v5891
        %v6034 = vunpack.c.l.b16 %v5892
        %v6035 = vunpack.c.h.b16 %v5892
        %v6036 = vunpack.c.l.b16 %v5893
        %v6037 = vunpack.c.h.b16 %v5893
        %v6038 = vunpack.c.l.b16 %v5894
        %v6039 = vunpack.c.h.b16 %v5894
        %v6040 = vunpack.c.l.b16 %v5895
        %v6041 = vunpack.c.h.b16 %v5895
        %v6042 = vunpack.c.l.b16 %v5896
        %v6043 = vunpack.c.h.b16 %v5896
        %v6044 = vunpack.c.l.b16 %v5897
        %v6045 = vunpack.c.h.b16 %v5897
        %v6046 = vunpack.c.l.b16 %v5898
        %v6047 = vunpack.c.h.b16 %v5898
        %v6048 = vunpack.c.l.b16 %v5899
        %v6049 = vunpack.c.h.b16 %v5899
        %v6050 = vunpack.c.l.b16 %v5900
        %v6051 = vunpack.c.h.b16 %v5900
        %v6052 = vunpack.c.l.b16 %v5901
        %v6053 = vunpack.c.h.b16 %v5901
        %v6054 = vunpack.c.l.b16 %v5902
        %v6055 = vunpack.c.h.b16 %v5902
        %v6056 = vunpack.c.l.b16 %v5903
        %v6057 = vunpack.c.h.b16 %v5903
        %v6058 = vunpack.c.l.b16 %v5904
        %v6059 = vunpack.c.h.b16 %v5904
        %v6060 = vunpack.c.l.b16 %v5905
        %v6061 = vunpack.c.h.b16 %v5905
        %v6062 = vunpack.c.l.b16 %v5906
        %v6063 = vunpack.c.h.b16 %v5906
        %v6064 = vunpack.c.l.b16 %v5907
        %v6065 = vunpack.c.h.b16 %v5907
        %v6066 = vunpack.c.l.b16 %v5908
        %v6067 = vunpack.c.h.b16 %v5908
        %v6068 = vunpack.c.l.b16 %v5909
        %v6069 = vunpack.c.h.b16 %v5909
        %v6070 = vunpack.c.l.b16 %v5910
        %v6071 = vunpack.c.h.b16 %v5910
        %v6072 = vunpack.c.l.b16 %v5911
        %v6073 = vunpack.c.h.b16 %v5911
        %v6074 = vunpack.c.l.b16 %v5912
        %v6075 = vunpack.c.h.b16 %v5912
        %v6076 = vunpack.c.l.b16 %v5913
        %v6077 = vunpack.c.h.b16 %v5913
        %v6078 = vunpack.c.l.b16 %v5914
        %v6079 = vunpack.c.h.b16 %v5914
        %v6080 = vunpack.c.l.b16 %v5915
        %v6081 = vunpack.c.h.b16 %v5915
        %v6082 = vunpack.c.l.b16 %v5916
        %v6083 = vunpack.c.h.b16 %v5916
        %v6084 = vunpack.c.l.b16 %v5917
        %v6085 = vunpack.c.h.b16 %v5917
        %v6086 = vunpack.c.l.b16 %v5918
        %v6087 = vunpack.c.h.b16 %v5918
        %v6088 = vunpack.c.l.b16 %v5919
        %v6089 = vunpack.c.h.b16 %v5919
        %v6090 = vunpack.c.l.b16 %v5920
        %v6091 = vunpack.c.h.b16 %v5920
        %v6092 = vunpack.c.l.b16 %v5921
        %v6093 = vunpack.c.h.b16 %v5921
        %v6094 = vunpack.c.l.b16 %v5922
        %v6095 = vunpack.c.h.b16 %v5922
        %v6096 = vunpack.c.l.b16 %v5923
        %v6097 = vunpack.c.h.b16 %v5923
        %v6098 = vunpack.c.l.b16 %v5924
        %v6099 = vunpack.c.h.b16 %v5924
        %v6100 = vunpack.c.l.b16 %v5925
        %v6101 = vunpack.c.h.b16 %v5925
        %v6102 = vunpack.c.l.b16 %v5926
        %v6103 = vunpack.c.h.b16 %v5926
        %v6104 = vunpack.c.l.b16 %v5927
        %v6105 = vunpack.c.h.b16 %v5927
        %v6106 = vunpack.c.l.b16 %v5928
        %v6107 = vunpack.c.h.b16 %v5928
        %v6108 = vunpack.c.l.b16 %v5929
        %v6109 = vunpack.c.h.b16 %v5929
        %v6110 = vunpack.c.l.b16 %v5930
        %v6111 = vunpack.c.h.b16 %v5930
        %v6112 = vunpack.c.l.b16 %v5931
        %v6113 = vunpack.c.h.b16 %v5931
        %v6114 = vunpack.c.l.b16 %v5932
        %v6115 = vunpack.c.h.b16 %v5932
        %v6116 = vunpack.c.l.b16 %v5933
        %v6117 = vunpack.c.h.b16 %v5933
        %v6118 = vunpack.c.l.b16 %v5934
        %v6119 = vunpack.c.h.b16 %v5934
        %v6120 = vunpack.c.l.b16 %v5935
        %v6121 = vunpack.c.h.b16 %v5935
        %v6122 = vunpack.c.l.b16 %v5936
        %v6123 = vunpack.c.h.b16 %v5936
        %v6124 = vunpack.c.l.b16 %v5937
        %v6125 = vunpack.c.h.b16 %v5937
        %v6126 = vunpack.c.l.b16 %v5938
        %v6127 = vunpack.c.h.b16 %v5938
        %v6128 = vunpack.c.l.b16 %v5939
        %v6129 = vunpack.c.h.b16 %v5939
        %v6130 = vunpack.c.l.b16 %v5940
        %v6131 = vunpack.c.h.b16 %v5940
        %v6132 = vunpack.c.l.b16 %v5941
        %v6133 = vunpack.c.h.b16 %v5941
        %v6134 = vunpack.c.l.b16 %v5942
        %v6135 = vunpack.c.h.b16 %v5942
        %v6136 = vunpack.c.l.b16 %v5943
        %v6137 = vunpack.c.h.b16 %v5943
        %v6138 = vunpack.c.l.b16 %v5944
        %v6139 = vunpack.c.h.b16 %v5944
        %v6140 = vunpack.c.l.b16 %v5945
        %v6141 = vunpack.c.h.b16 %v5945
        %v6142 = vunpack.c.l.b16 %v5946
        %v6143 = vunpack.c.h.b16 %v5946
        %v6144 = vunpack.c.l.b16 %v5947
        %v6145 = vunpack.c.h.b16 %v5947
        %v6146 = vunpack.c.l.b16 %v5948
        %v6147 = vunpack.c.h.b16 %v5948
        %v6148 = vunpack.c.l.b16 %v5949
        %v6149 = vunpack.c.h.b16 %v5949
        %v6150 = vunpack.c.l.b16 %v5950
        %v6151 = vunpack.c.h.b16 %v5950
        %v6152 = vunpack.c.l.b16 %v5951
        %v6153 = vunpack.c.h.b16 %v5951
        %v6154 = vunpack.c.l.b16 %v5952
        %v6155 = vunpack.c.h.b16 %v5952
        %v6156 = vunpack.c.l.b16 %v5953
        %v6157 = vunpack.c.h.b16 %v5953
        %v6158 = vpack.c.b16 %v6032, %v6030
        %v6159 = vpack.c.b16 %v6033, %v6031
        %v6160 = vpack.c.b16 %v6036, %v6034
        %v6161 = vpack.c.b16 %v6037, %v6035
        %v6162 = vpack.c.b16 %v6040, %v6038
        %v6163 = vpack.c.b16 %v6041, %v6039
        %v6164 = vpack.c.b16 %v6044, %v6042
        %v6165 = vpack.c.b16 %v6045, %v6043
        %v6166 = vpack.c.b16 %v6048, %v6046
        %v6167 = vpack.c.b16 %v6049, %v6047
        %v6168 = vpack.c.b16 %v6052, %v6050
        %v6169 = vpack.c.b16 %v6053, %v6051
        %v6170 = vpack.c.b16 %v6056, %v6054
        %v6171 = vpack.c.b16 %v6057, %v6055
        %v6172 = vpack.c.b16 %v6060, %v6058
        %v6173 = vpack.c.b16 %v6061, %v6059
        %v6174 = vpack.c.b16 %v6064, %v6062
        %v6175 = vpack.c.b16 %v6065, %v6063
        %v6176 = vpack.c.b16 %v6068, %v6066
        %v6177 = vpack.c.b16 %v6069, %v6067
        %v6178 = vpack.c.b16 %v6072, %v6070
        %v6179 = vpack.c.b16 %v6073, %v6071
        %v6180 = vpack.c.b16 %v6076, %v6074
        %v6181 = vpack.c.b16 %v6077, %v6075
        %v6182 = vpack.c.b16 %v6080, %v6078
        %v6183 = vpack.c.b16 %v6081, %v6079
        %v6184 = vpack.c.b16 %v6084, %v6082
        %v6185 = vpack.c.b16 %v6085, %v6083
        %v6186 = vpack.c.b16 %v6088, %v6086
        %v6187 = vpack.c.b16 %v6089, %v6087
        %v6188 = vpack.c.b16 %v6092, %v6090
        %v6189 = vpack.c.b16 %v6093, %v6091
        %v6190 = vpack.c.b16 %v6096, %v6094
        %v6191 = vpack.c.b16 %v6097, %v6095
        %v6192 = vpack.c.b16 %v6100, %v6098
        %v6193 = vpack.c.b16 %v6101, %v6099
        %v6194 = vpack.c.b16 %v6104, %v6102
        %v6195 = vpack.c.b16 %v6105, %v6103
        %v6196 = vpack.c.b16 %v6108, %v6106
        %v6197 = vpack.c.b16 %v6109, %v6107
        %v6198 = vpack.c.b16 %v6112, %v6110
        %v6199 = vpack.c.b16 %v6113, %v6111
        %v6200 = vpack.c.b16 %v6116, %v6114
        %v6201 = vpack.c.b16 %v6117, %v6115
        %v6202 = vpack.c.b16 %v6120, %v6118
        %v6203 = vpack.c.b16 %v6121, %v6119
        %v6204 = vpack.c.b16 %v6124, %v6122
        %v6205 = vpack.c.b16 %v6125, %v6123
        %v6206 = vpack.c.b16 %v6128, %v6126
        %v6207 = vpack.c.b16 %v6129, %v6127
        %v6208 = vpack.c.b16 %v6132, %v6130
        %v6209 = vpack.c.b16 %v6133, %v6131
        %v6210 = vpack.c.b16 %v6136, %v6134
        %v6211 = vpack.c.b16 %v6137, %v6135
        %v6212 = vpack.c.b16 %v6140, %v6138
        %v6213 = vpack.c.b16 %v6141, %v6139
        %v6214 = vpack.c.b16 %v6144, %v6142
        %v6215 = vpack.c.b16 %v6145, %v6143
        %v6216 = vpack.c.b16 %v6148, %v6146
        %v6217 = vpack.c.b16 %v6149, %v6147
        %v6218 = vpack.c.b16 %v6152, %v6150
        %v6219 = vpack.c.b16 %v6153, %v6151
        %v6220 = vpack.c.b16 %v6156, %v6154
        %v6221 = vpack.c.b16 %v6157, %v6155
        %6286 = vmatprep.subr.bf16.mxu0 %v6159
        %6287 = vmatpush1.bf16.msra.mxu0 %v6158
        %6288 = vmatprep.subr.bf16.mxu0 %v6161
        %6289 = vmatpush1.bf16.msra.mxu0 %v6160
        %6290 = vmatprep.subr.bf16.mxu0 %v6163
        %6291 = vmatpush1.bf16.msra.mxu0 %v6162
        %6292 = vmatprep.subr.bf16.mxu0 %v6165
        %6293 = vmatpush1.bf16.msra.mxu0 %v6164
        %6294 = vmatprep.subr.bf16.mxu0 %v6167
        %6295 = vmatpush1.bf16.msra.mxu0 %v6166
        %6296 = vmatprep.subr.bf16.mxu0 %v6169
        %6297 = vmatpush1.bf16.msra.mxu0 %v6168
        %6298 = vmatprep.subr.bf16.mxu0 %v6171
        %6299 = vmatpush1.bf16.msra.mxu0 %v6170
        %6300 = vmatprep.subr.bf16.mxu0 %v6173
        %6301 = vmatpush1.bf16.msra.mxu0 %v6172
        %6302 = vmatprep.subr.bf16.mxu0 %v6175
        %6303 = vmatpush1.bf16.msra.mxu0 %v6174
        %6304 = vmatprep.subr.bf16.mxu0 %v6177
        %6305 = vmatpush1.bf16.msra.mxu0 %v6176
        %6306 = vmatprep.subr.bf16.mxu0 %v6179
        %6307 = vmatpush1.bf16.msra.mxu0 %v6178
        %6308 = vmatprep.subr.bf16.mxu0 %v6181
        %6309 = vmatpush1.bf16.msra.mxu0 %v6180
        %6310 = vmatprep.subr.bf16.mxu0 %v6183
        %6311 = vmatpush1.bf16.msra.mxu0 %v6182
        %6312 = vmatprep.subr.bf16.mxu0 %v6185
        %6313 = vmatpush1.bf16.msra.mxu0 %v6184
        %6314 = vmatprep.subr.bf16.mxu0 %v6187
        %6315 = vmatpush1.bf16.msra.mxu0 %v6186
        %6316 = vmatprep.subr.bf16.mxu0 %v6189
        %6317 = vmatpush1.bf16.msra.mxu0 %v6188
        %6318 = vmatprep.mubr.bf16.mxu0 %v5827
        %6319 = vmatmul.mubr.bf16.gmra.mrb[0].mxu0 %v5826
        %v6320 = vpop.f32.mrb[0].mxu0
        %v6321 = vadd.f32 %v5959, %v6320
        %v6322 = vpop.f32.mrb[0].mxu0
        %v6323 = vadd.f32 %v5963, %v6322
        %v6324 = vpop.f32.mrb[0].mxu0
        %v6325 = vadd.f32 %v5959, %v6324
        %v6326 = vpop.f32.mrb[0].mxu0
        %v6327 = vadd.f32 %v5963, %v6326
        %6328 = vmatprep.mubr.bf16.mxu0 %v5831
        %6329 = vmatmul.mubr.bf16.gmra.mrb[0].mxu0 %v5830
        %v6330 = vpop.f32.mrb[0].mxu0
        %v6331 = vadd.f32 %v5959, %v6330
        %v6332 = vpop.f32.mrb[0].mxu0
        %v6333 = vadd.f32 %v5963, %v6332
        %v6334 = vpop.f32.mrb[0].mxu0
        %v6335 = vadd.f32 %v5959, %v6334
        %v6336 = vpop.f32.mrb[0].mxu0
        %v6337 = vadd.f32 %v5963, %v6336
        %6338 = vmatprep.mubr.bf16.mxu0 %v5835
        %6339 = vmatmul.mubr.bf16.gmra.mrb[0].mxu0 %v5834
        %v6340 = vpop.f32.mrb[0].mxu0
        %v6341 = vadd.f32 %v5959, %v6340
        %v6342 = vpop.f32.mrb[0].mxu0
        %v6343 = vadd.f32 %v5963, %v6342
        %v6344 = vpop.f32.mrb[0].mxu0
        %v6345 = vadd.f32 %v5959, %v6344
        %v6346 = vpop.f32.mrb[0].mxu0
        %v6347 = vadd.f32 %v5963, %v6346
        %6348 = vmatprep.mubr.bf16.mxu0 %v5839
        %6349 = vmatmul.mubr.bf16.gmra.mrb[0].mxu0 %v5838
        %v6350 = vpop.f32.mrb[0].mxu0
        %v6351 = vadd.f32 %v5959, %v6350
        %v6352 = vpop.f32.mrb[0].mxu0
        %v6353 = vadd.f32 %v5963, %v6352
        %v6354 = vpop.f32.mrb[0].mxu0
        %v6355 = vadd.f32 %v5959, %v6354
        %v6356 = vpop.f32.mrb[0].mxu0
        %v6357 = vadd.f32 %v5963, %v6356
        %6358 = vmatprep.mubr.bf16.mxu0 %v5843
        %6359 = vmatmul.mubr.bf16.gmra.mrb[0].mxu0 %v5842
        %v6360 = vpop.f32.mrb[0].mxu0
        %v6361 = vadd.f32 %v5959, %v6360
        %v6362 = vpop.f32.mrb[0].mxu0
        %v6363 = vadd.f32 %v5963, %v6362
        %v6364 = vpop.f32.mrb[0].mxu0
        %v6365 = vadd.f32 %v5959, %v6364
        %v6366 = vpop.f32.mrb[0].mxu0
        %v6367 = vadd.f32 %v5963, %v6366
        %6368 = vmatprep.mubr.bf16.mxu0 %v5847
        %6369 = vmatmul.mubr.bf16.gmra.mrb[0].mxu0 %v5846
        %v6370 = vpop.f32.mrb[0].mxu0
        %v6371 = vadd.f32 %v5959, %v6370
        %v6372 = vpop.f32.mrb[0].mxu0
        %v6373 = vadd.f32 %v5963, %v6372
        %v6374 = vpop.f32.mrb[0].mxu0
        %v6375 = vadd.f32 %v5959, %v6374
        %v6376 = vpop.f32.mrb[0].mxu0
        %v6377 = vadd.f32 %v5963, %v6376
        %6378 = vmatprep.mubr.bf16.mxu0 %v5851
        %6379 = vmatmul.mubr.bf16.gmra.mrb[0].mxu0 %v5850
        %v6380 = vpop.f32.mrb[0].mxu0
        %v6381 = vadd.f32 %v5959, %v6380
        %v6382 = vpop.f32.mrb[0].mxu0
        %v6383 = vadd.f32 %v5963, %v6382
        %v6384 = vpop.f32.mrb[0].mxu0
        %v6385 = vadd.f32 %v5959, %v6384
        %v6386 = vpop.f32.mrb[0].mxu0
        %v6387 = vadd.f32 %v5963, %v6386
        %6388 = vmatprep.mubr.bf16.mxu0 %v5855
        %6389 = vmatmul.mubr.bf16.gmra.mrb[0].mxu0 %v5854
        %v6390 = vpop.f32.mrb[0].mxu0
        %v6391 = vadd.f32 %v5959, %v6390
        %v6392 = vpop.f32.mrb[0].mxu0
        %v6393 = vadd.f32 %v5963, %v6392
        %v6394 = vpop.f32.mrb[0].mxu0
        %v6395 = vadd.f32 %v5959, %v6394
        %v6396 = vpop.f32.mrb[0].mxu0
        %v6397 = vadd.f32 %v5963, %v6396
        %6398 = vmatprep.mubr.bf16.mxu0 %v5859
        %6399 = vmatmul.mubr.bf16.gmra.mrb[0].mxu0 %v5858
        %v6400 = vpop.f32.mrb[0].mxu0
        %v6401 = vadd.f32 %v5959, %v6400
        %v6402 = vpop.f32.mrb[0].mxu0
        %v6403 = vadd.f32 %v5963, %v6402
        %v6404 = vpop.f32.mrb[0].mxu0
        %v6405 = vadd.f32 %v5959, %v6404
        %v6406 = vpop.f32.mrb[0].mxu0
        %v6407 = vadd.f32 %v5963, %v6406
        %6408 = vmatprep.mubr.bf16.mxu0 %v5863
        %6409 = vmatmul.mubr.bf16.gmra.mrb[0].mxu0 %v5862
        %v6410 = vpop.f32.mrb[0].mxu0
        %v6411 = vadd.f32 %v5959, %v6410
        %v6412 = vpop.f32.mrb[0].mxu0
        %v6413 = vadd.f32 %v5963, %v6412
        %v6414 = vpop.f32.mrb[0].mxu0
        %v6415 = vadd.f32 %v5959, %v6414
        %v6416 = vpop.f32.mrb[0].mxu0
        %v6417 = vadd.f32 %v5963, %v6416
        %6418 = vmatprep.mubr.bf16.mxu0 %v5867
        %6419 = vmatmul.mubr.bf16.gmra.mrb[0].mxu0 %v5866
        %v6420 = vpop.f32.mrb[0].mxu0
        %v6421 = vadd.f32 %v5959, %v6420
        %v6422 = vpop.f32.mrb[0].mxu0
        %v6423 = vadd.f32 %v5963, %v6422
        %v6424 = vpop.f32.mrb[0].mxu0
        %v6425 = vadd.f32 %v5959, %v6424
        %v6426 = vpop.f32.mrb[0].mxu0
        %v6427 = vadd.f32 %v5963, %v6426
        %6428 = vmatprep.mubr.bf16.mxu0 %v5871
        %6429 = vmatmul.mubr.bf16.gmra.mrb[0].mxu0 %v5870
        %v6430 = vpop.f32.mrb[0].mxu0
        %v6431 = vadd.f32 %v5959, %v6430
        %v6432 = vpop.f32.mrb[0].mxu0
        %v6433 = vadd.f32 %v5963, %v6432
        %v6434 = vpop.f32.mrb[0].mxu0
        %v6435 = vadd.f32 %v5959, %v6434
        %v6436 = vpop.f32.mrb[0].mxu0
        %v6437 = vadd.f32 %v5963, %v6436
        %6438 = vmatprep.mubr.bf16.mxu0 %v5875
        %6439 = vmatmul.mubr.bf16.gmra.mrb[0].mxu0 %v5874
        %v6440 = vpop.f32.mrb[0].mxu0
        %v6441 = vadd.f32 %v5959, %v6440
        %v6442 = vpop.f32.mrb[0].mxu0
        %v6443 = vadd.f32 %v5963, %v6442
        %v6444 = vpop.f32.mrb[0].mxu0
        %v6445 = vadd.f32 %v5959, %v6444
        %v6446 = vpop.f32.mrb[0].mxu0
        %v6447 = vadd.f32 %v5963, %v6446
        %6448 = vmatprep.mubr.bf16.mxu0 %v5879
        %6449 = vmatmul.mubr.bf16.gmra.mrb[0].mxu0 %v5878
        %v6450 = vpop.f32.mrb[0].mxu0
        %v6451 = vadd.f32 %v5959, %v6450
        %v6452 = vpop.f32.mrb[0].mxu0
        %v6453 = vadd.f32 %v5963, %v6452
        %v6454 = vpop.f32.mrb[0].mxu0
        %v6455 = vadd.f32 %v5959, %v6454
        %v6456 = vpop.f32.mrb[0].mxu0
        %v6457 = vadd.f32 %v5963, %v6456
        %6458 = vmatprep.mubr.bf16.mxu0 %v5883
        %6459 = vmatmul.mubr.bf16.gmra.mrb[0].mxu0 %v5882
        %v6460 = vpop.f32.mrb[0].mxu0
        %v6461 = vadd.f32 %v5959, %v6460
        %v6462 = vpop.f32.mrb[0].mxu0
        %v6463 = vadd.f32 %v5963, %v6462
        %v6464 = vpop.f32.mrb[0].mxu0
        %v6465 = vadd.f32 %v5959, %v6464
        %v6466 = vpop.f32.mrb[0].mxu0
        %v6467 = vadd.f32 %v5963, %v6466
        %6468 = vmatprep.mubr.bf16.mxu0 %v5887
        %6469 = vmatmul.mubr.bf16.gmra.mrb[0].mxu0 %v5886
        %v6470 = vpop.f32.mrb[0].mxu0
        %v6471 = vadd.f32 %v5959, %v6470
        %v6472 = vpop.f32.mrb[0].mxu0
        %v6473 = vadd.f32 %v5963, %v6472
        %v6474 = vpop.f32.mrb[0].mxu0
        %v6475 = vadd.f32 %v5959, %v6474
        %v6476 = vpop.f32.mrb[0].mxu0
        %v6477 = vadd.f32 %v5963, %v6476
        %6478 = vdwg.mxu0
        %6479 = vmatprep.subr.bf16.mxu0 %v6191
        %6480 = vmatpush1.bf16.msra.mxu0 %v6190
        %6481 = vmatprep.subr.bf16.mxu0 %v6193
        %6482 = vmatpush1.bf16.msra.mxu0 %v6192
        %6483 = vmatprep.subr.bf16.mxu0 %v6195
        %6484 = vmatpush1.bf16.msra.mxu0 %v6194
        %6485 = vmatprep.subr.bf16.mxu0 %v6197
        %6486 = vmatpush1.bf16.msra.mxu0 %v6196
        %6487 = vmatprep.subr.bf16.mxu0 %v6199
        %6488 = vmatpush1.bf16.msra.mxu0 %v6198
        %6489 = vmatprep.subr.bf16.mxu0 %v6201
        %6490 = vmatpush1.bf16.msra.mxu0 %v6200
        %6491 = vmatprep.subr.bf16.mxu0 %v6203
        %6492 = vmatpush1.bf16.msra.mxu0 %v6202
        %6493 = vmatprep.subr.bf16.mxu0 %v6205
        %6494 = vmatpush1.bf16.msra.mxu0 %v6204
        %6495 = vmatprep.subr.bf16.mxu0 %v6207
        %6496 = vmatpush1.bf16.msra.mxu0 %v6206
        %6497 = vmatprep.subr.bf16.mxu0 %v6209
        %6498 = vmatpush1.bf16.msra.mxu0 %v6208
        %6499 = vmatprep.subr.bf16.mxu0 %v6211
        %6500 = vmatpush1.bf16.msra.mxu0 %v6210
        %6501 = vmatprep.subr.bf16.mxu0 %v6213
        %6502 = vmatpush1.bf16.msra.mxu0 %v6212
        %6503 = vmatprep.subr.bf16.mxu0 %v6215
        %6504 = vmatpush1.bf16.msra.mxu0 %v6214
        %6505 = vmatprep.subr.bf16.mxu0 %v6217
        %6506 = vmatpush1.bf16.msra.mxu0 %v6216
        %6507 = vmatprep.subr.bf16.mxu0 %v6219
        %6508 = vmatpush1.bf16.msra.mxu0 %v6218
        %6509 = vmatprep.subr.bf16.mxu0 %v6221
        %6510 = vmatpush1.bf16.msra.mxu0 %v6220
        %6511 = vmatprep.mubr.bf16.mxu0 %v5829
        %6512 = vmatmul.mubr.bf16.gmra.mrb[0].mxu0 %v5828
        %v6513 = vpop.f32.mrb[0].mxu0
        %v6514 = vadd.f32 %v6321, %v6513
        %v6515 = vpop.f32.mrb[0].mxu0
        %v6516 = vadd.f32 %v6323, %v6515
        %v6517 = vpop.f32.mrb[0].mxu0
        %v6518 = vadd.f32 %v6325, %v6517
        %v6519 = vpop.f32.mrb[0].mxu0
        %v6520 = vadd.f32 %v6327, %v6519
        %6521 = vmatprep.mubr.bf16.mxu0 %v5833
        %6522 = vmatmul.mubr.bf16.gmra.mrb[0].mxu0 %v5832
        %v6523 = vpop.f32.mrb[0].mxu0
        %v6524 = vadd.f32 %v6331, %v6523
        %v6525 = vpop.f32.mrb[0].mxu0
        %v6526 = vadd.f32 %v6333, %v6525
        %v6527 = vpop.f32.mrb[0].mxu0
        %v6528 = vadd.f32 %v6335, %v6527
        %v6529 = vpop.f32.mrb[0].mxu0
        %v6530 = vadd.f32 %v6337, %v6529
        %6531 = vmatprep.mubr.bf16.mxu0 %v5837
        %6532 = vmatmul.mubr.bf16.gmra.mrb[0].mxu0 %v5836
        %v6533 = vpop.f32.mrb[0].mxu0
        %v6534 = vadd.f32 %v6341, %v6533
        %v6535 = vpop.f32.mrb[0].mxu0
        %v6536 = vadd.f32 %v6343, %v6535
        %v6537 = vpop.f32.mrb[0].mxu0
        %v6538 = vadd.f32 %v6345, %v6537
        %v6539 = vpop.f32.mrb[0].mxu0
        %v6540 = vadd.f32 %v6347, %v6539
        %6541 = vmatprep.mubr.bf16.mxu0 %v5841
        %6542 = vmatmul.mubr.bf16.gmra.mrb[0].mxu0 %v5840
        %v6543 = vpop.f32.mrb[0].mxu0
        %v6544 = vadd.f32 %v6351, %v6543
        %v6545 = vpop.f32.mrb[0].mxu0
        %v6546 = vadd.f32 %v6353, %v6545
        %v6547 = vpop.f32.mrb[0].mxu0
        %v6548 = vadd.f32 %v6355, %v6547
        %v6549 = vpop.f32.mrb[0].mxu0
        %v6550 = vadd.f32 %v6357, %v6549
        %6551 = vmatprep.mubr.bf16.mxu0 %v5845
        %6552 = vmatmul.mubr.bf16.gmra.mrb[0].mxu0 %v5844
        %v6553 = vpop.f32.mrb[0].mxu0
        %v6554 = vadd.f32 %v6361, %v6553
        %v6555 = vpop.f32.mrb[0].mxu0
        %v6556 = vadd.f32 %v6363, %v6555
        %v6557 = vpop.f32.mrb[0].mxu0
        %v6558 = vadd.f32 %v6365, %v6557
        %v6559 = vpop.f32.mrb[0].mxu0
        %v6560 = vadd.f32 %v6367, %v6559
        %6561 = vmatprep.mubr.bf16.mxu0 %v5849
        %6562 = vmatmul.mubr.bf16.gmra.mrb[0].mxu0 %v5848
        %v6563 = vpop.f32.mrb[0].mxu0
        %v6564 = vadd.f32 %v6371, %v6563
        %v6565 = vpop.f32.mrb[0].mxu0
        %v6566 = vadd.f32 %v6373, %v6565
        %v6567 = vpop.f32.mrb[0].mxu0
        %v6568 = vadd.f32 %v6375, %v6567
        %v6569 = vpop.f32.mrb[0].mxu0
        %v6570 = vadd.f32 %v6377, %v6569
        %6571 = vmatprep.mubr.bf16.mxu0 %v5853
        %6572 = vmatmul.mubr.bf16.gmra.mrb[0].mxu0 %v5852
        %v6573 = vpop.f32.mrb[0].mxu0
        %v6574 = vadd.f32 %v6381, %v6573
        %v6575 = vpop.f32.mrb[0].mxu0
        %v6576 = vadd.f32 %v6383, %v6575
        %v6577 = vpop.f32.mrb[0].mxu0
        %v6578 = vadd.f32 %v6385, %v6577
        %v6579 = vpop.f32.mrb[0].mxu0
        %v6580 = vadd.f32 %v6387, %v6579
        %6581 = vmatprep.mubr.bf16.mxu0 %v5857
        %6582 = vmatmul.mubr.bf16.gmra.mrb[0].mxu0 %v5856
        %v6583 = vpop.f32.mrb[0].mxu0
        %v6584 = vadd.f32 %v6391, %v6583
        %v6585 = vpop.f32.mrb[0].mxu0
        %v6586 = vadd.f32 %v6393, %v6585
        %v6587 = vpop.f32.mrb[0].mxu0
        %v6588 = vadd.f32 %v6395, %v6587
        %v6589 = vpop.f32.mrb[0].mxu0
        %v6590 = vadd.f32 %v6397, %v6589
        %6591 = vmatprep.mubr.bf16.mxu0 %v5861
        %6592 = vmatmul.mubr.bf16.gmra.mrb[0].mxu0 %v5860
        %v6593 = vpop.f32.mrb[0].mxu0
        %v6594 = vadd.f32 %v6401, %v6593
        %v6595 = vpop.f32.mrb[0].mxu0
        %v6596 = vadd.f32 %v6403, %v6595
        %v6597 = vpop.f32.mrb[0].mxu0
        %v6598 = vadd.f32 %v6405, %v6597
        %v6599 = vpop.f32.mrb[0].mxu0
        %v6600 = vadd.f32 %v6407, %v6599
        %6601 = vmatprep.mubr.bf16.mxu0 %v5865
        %6602 = vmatmul.mubr.bf16.gmra.mrb[0].mxu0 %v5864
        %v6603 = vpop.f32.mrb[0].mxu0
        %v6604 = vadd.f32 %v6411, %v6603
        %v6605 = vpop.f32.mrb[0].mxu0
        %v6606 = vadd.f32 %v6413, %v6605
        %v6607 = vpop.f32.mrb[0].mxu0
        %v6608 = vadd.f32 %v6415, %v6607
        %v6609 = vpop.f32.mrb[0].mxu0
        %v6610 = vadd.f32 %v6417, %v6609
        %6611 = vmatprep.mubr.bf16.mxu0 %v5869
        %6612 = vmatmul.mubr.bf16.gmra.mrb[0].mxu0 %v5868
        %v6613 = vpop.f32.mrb[0].mxu0
        %v6614 = vadd.f32 %v6421, %v6613
        %v6615 = vpop.f32.mrb[0].mxu0
        %v6616 = vadd.f32 %v6423, %v6615
        %v6617 = vpop.f32.mrb[0].mxu0
        %v6618 = vadd.f32 %v6425, %v6617
        %v6619 = vpop.f32.mrb[0].mxu0
        %v6620 = vadd.f32 %v6427, %v6619
        %6621 = vmatprep.mubr.bf16.mxu0 %v5873
        %6622 = vmatmul.mubr.bf16.gmra.mrb[0].mxu0 %v5872
        %v6623 = vpop.f32.mrb[0].mxu0
        %v6624 = vadd.f32 %v6431, %v6623
        %v6625 = vpop.f32.mrb[0].mxu0
        %v6626 = vadd.f32 %v6433, %v6625
        %v6627 = vpop.f32.mrb[0].mxu0
        %v6628 = vadd.f32 %v6435, %v6627
        %v6629 = vpop.f32.mrb[0].mxu0
        %v6630 = vadd.f32 %v6437, %v6629
        %6631 = vmatprep.mubr.bf16.mxu0 %v5877
        %6632 = vmatmul.mubr.bf16.gmra.mrb[0].mxu0 %v5876
        %v6633 = vpop.f32.mrb[0].mxu0
        %v6634 = vadd.f32 %v6441, %v6633
        %v6635 = vpop.f32.mrb[0].mxu0
        %v6636 = vadd.f32 %v6443, %v6635
        %v6637 = vpop.f32.mrb[0].mxu0
        %v6638 = vadd.f32 %v6445, %v6637
        %v6639 = vpop.f32.mrb[0].mxu0
        %v6640 = vadd.f32 %v6447, %v6639
        %6641 = vmatprep.mubr.bf16.mxu0 %v5881
        %6642 = vmatmul.mubr.bf16.gmra.mrb[0].mxu0 %v5880
        %v6643 = vpop.f32.mrb[0].mxu0
        %v6644 = vadd.f32 %v6451, %v6643
        %v6645 = vpop.f32.mrb[0].mxu0
        %v6646 = vadd.f32 %v6453, %v6645
        %v6647 = vpop.f32.mrb[0].mxu0
        %v6648 = vadd.f32 %v6455, %v6647
        %v6649 = vpop.f32.mrb[0].mxu0
        %v6650 = vadd.f32 %v6457, %v6649
        %6651 = vmatprep.mubr.bf16.mxu0 %v5885
        %6652 = vmatmul.mubr.bf16.gmra.mrb[0].mxu0 %v5884
        %v6653 = vpop.f32.mrb[0].mxu0
        %v6654 = vadd.f32 %v6461, %v6653
        %v6655 = vpop.f32.mrb[0].mxu0
        %v6656 = vadd.f32 %v6463, %v6655
        %v6657 = vpop.f32.mrb[0].mxu0
        %v6658 = vadd.f32 %v6465, %v6657
        %v6659 = vpop.f32.mrb[0].mxu0
        %v6660 = vadd.f32 %v6467, %v6659
        %6661 = vmatprep.mubr.bf16.mxu0 %v5889
        %6662 = vmatmul.mubr.bf16.gmra.mrb[0].mxu0 %v5888
        %v6663 = vpop.f32.mrb[0].mxu0
        %v6664 = vadd.f32 %v6471, %v6663
        %v6665 = vpop.f32.mrb[0].mxu0
        %v6666 = vadd.f32 %v6473, %v6665
        %v6667 = vpop.f32.mrb[0].mxu0
        %v6668 = vadd.f32 %v6475, %v6667
        %v6669 = vpop.f32.mrb[0].mxu0
        %v6670 = vadd.f32 %v6477, %v6669
        %6671 = vdwg.mxu0
        %v6672 = vmax.f32 %v6514, 0.0
        %v6673 = vmax.f32 %v6516, 0.0
        %v6674 = vmax.f32 %v6518, 0.0
        %v6675 = vmax.f32 %v6520, 0.0
        %v6676 = vmax.f32 %v6524, 0.0
        %v6677 = vmax.f32 %v6526, 0.0
        %v6678 = vmax.f32 %v6528, 0.0
        %v6679 = vmax.f32 %v6530, 0.0
        %v6680 = vmax.f32 %v6534, 0.0
        %v6681 = vmax.f32 %v6536, 0.0
        %v6682 = vmax.f32 %v6538, 0.0
        %v6683 = vmax.f32 %v6540, 0.0
        %v6684 = vmax.f32 %v6544, 0.0
        %v6685 = vmax.f32 %v6546, 0.0
        %v6686 = vmax.f32 %v6548, 0.0
        %v6687 = vmax.f32 %v6550, 0.0
        %v6688 = vmax.f32 %v6554, 0.0
        %v6689 = vmax.f32 %v6556, 0.0
        %v6690 = vmax.f32 %v6558, 0.0
        %v6691 = vmax.f32 %v6560, 0.0
        %v6692 = vmax.f32 %v6564, 0.0
        %v6693 = vmax.f32 %v6566, 0.0
        %v6694 = vmax.f32 %v6568, 0.0
        %v6695 = vmax.f32 %v6570, 0.0
        %v6696 = vmax.f32 %v6574, 0.0
        %v6697 = vmax.f32 %v6576, 0.0
        %v6698 = vmax.f32 %v6578, 0.0
        %v6699 = vmax.f32 %v6580, 0.0
        %v6700 = vmax.f32 %v6584, 0.0
        %v6701 = vmax.f32 %v6586, 0.0
        %v6702 = vmax.f32 %v6588, 0.0
        %v6703 = vmax.f32 %v6590, 0.0
        %v6704 = vmax.f32 %v6594, 0.0
        %v6705 = vmax.f32 %v6596, 0.0
        %v6706 = vmax.f32 %v6598, 0.0
        %v6707 = vmax.f32 %v6600, 0.0
        %v6708 = vmax.f32 %v6604, 0.0
        %v6709 = vmax.f32 %v6606, 0.0
        %v6710 = vmax.f32 %v6608, 0.0
        %v6711 = vmax.f32 %v6610, 0.0
        %v6712 = vmax.f32 %v6614, 0.0
        %v6713 = vmax.f32 %v6616, 0.0
        %v6714 = vmax.f32 %v6618, 0.0
        %v6715 = vmax.f32 %v6620, 0.0
        %v6716 = vmax.f32 %v6624, 0.0
        %v6717 = vmax.f32 %v6626, 0.0
        %v6718 = vmax.f32 %v6628, 0.0
        %v6719 = vmax.f32 %v6630, 0.0
        %v6720 = vmax.f32 %v6634, 0.0
        %v6721 = vmax.f32 %v6636, 0.0
        %v6722 = vmax.f32 %v6638, 0.0
        %v6723 = vmax.f32 %v6640, 0.0
        %v6724 = vmax.f32 %v6644, 0.0
        %v6725 = vmax.f32 %v6646, 0.0
        %v6726 = vmax.f32 %v6648, 0.0
        %v6727 = vmax.f32 %v6650, 0.0
        %v6728 = vmax.f32 %v6654, 0.0
        %v6729 = vmax.f32 %v6656, 0.0
        %v6730 = vmax.f32 %v6658, 0.0
        %v6731 = vmax.f32 %v6660, 0.0
        %v6732 = vmax.f32 %v6664, 0.0
        %v6733 = vmax.f32 %v6666, 0.0
        %v6734 = vmax.f32 %v6668, 0.0
        %v6735 = vmax.f32 %v6670, 0.0
        %v6736 = vpack.c.bf16 %v6674, %v6672
        %v6737 = vpack.c.bf16 %v6675, %v6673
        %v6738 = vpack.c.bf16 %v6678, %v6676
        %v6739 = vpack.c.bf16 %v6679, %v6677
        %v6740 = vpack.c.bf16 %v6682, %v6680
        %v6741 = vpack.c.bf16 %v6683, %v6681
        %v6742 = vpack.c.bf16 %v6686, %v6684
        %v6743 = vpack.c.bf16 %v6687, %v6685
        %v6744 = vpack.c.bf16 %v6690, %v6688
        %v6745 = vpack.c.bf16 %v6691, %v6689
        %v6746 = vpack.c.bf16 %v6694, %v6692
        %v6747 = vpack.c.bf16 %v6695, %v6693
        %v6748 = vpack.c.bf16 %v6698, %v6696
        %v6749 = vpack.c.bf16 %v6699, %v6697
        %v6750 = vpack.c.bf16 %v6702, %v6700
        %v6751 = vpack.c.bf16 %v6703, %v6701
        %v6752 = vpack.c.bf16 %v6706, %v6704
        %v6753 = vpack.c.bf16 %v6707, %v6705
        %v6754 = vpack.c.bf16 %v6710, %v6708
        %v6755 = vpack.c.bf16 %v6711, %v6709
        %v6756 = vpack.c.bf16 %v6714, %v6712
        %v6757 = vpack.c.bf16 %v6715, %v6713
        %v6758 = vpack.c.bf16 %v6718, %v6716
        %v6759 = vpack.c.bf16 %v6719, %v6717
        %v6760 = vpack.c.bf16 %v6722, %v6720
        %v6761 = vpack.c.bf16 %v6723, %v6721
        %v6762 = vpack.c.bf16 %v6726, %v6724
        %v6763 = vpack.c.bf16 %v6727, %v6725
        %v6764 = vpack.c.bf16 %v6730, %v6728
        %v6765 = vpack.c.bf16 %v6731, %v6729
        %v6766 = vpack.c.bf16 %v6734, %v6732
        %v6767 = vpack.c.bf16 %v6735, %v6733
        %v6768 = vld [vmem:[#allocation15] sm:$0xf]
        %v6769 = vld [vmem:[#allocation15 + $0x4] sm:$0xf]
        %v6770 = vld [vmem:[#allocation15 + $0x8] sm:$0xf]
        %v6771 = vld [vmem:[#allocation15 + $0xc] sm:$0xf]
        %v6772 = vld [vmem:[#allocation15 + $0x10] sm:$0xf]
        %v6773 = vld [vmem:[#allocation15 + $0x14] sm:$0xf]
        %v6774 = vld [vmem:[#allocation15 + $0x18] sm:$0xf]
        %v6775 = vld [vmem:[#allocation15 + $0x1c] sm:$0xf]
        %v6776 = vld [vmem:[#allocation15 + $0x20] sm:$0xf]
        %v6777 = vld [vmem:[#allocation15 + $0x24] sm:$0xf]
        %v6778 = vld [vmem:[#allocation15 + $0x28] sm:$0xf]
        %v6779 = vld [vmem:[#allocation15 + $0x2c] sm:$0xf]
        %v6780 = vld [vmem:[#allocation15 + $0x30] sm:$0xf]
        %v6781 = vld [vmem:[#allocation15 + $0x34] sm:$0xf]
        %v6782 = vld [vmem:[#allocation15 + $0x38] sm:$0xf]
        %v6783 = vld [vmem:[#allocation15 + $0x3c] sm:$0xf]
        %v6784 = vld [vmem:[#allocation15 + $0x40] sm:$0xf]
        %v6785 = vld [vmem:[#allocation15 + $0x44] sm:$0xf]
        %v6786 = vld [vmem:[#allocation15 + $0x48] sm:$0xf]
        %v6787 = vld [vmem:[#allocation15 + $0x4c] sm:$0xf]
        %v6788 = vld [vmem:[#allocation15 + $0x50] sm:$0xf]
        %v6789 = vld [vmem:[#allocation15 + $0x54] sm:$0xf]
        %v6790 = vld [vmem:[#allocation15 + $0x58] sm:$0xf]
        %v6791 = vld [vmem:[#allocation15 + $0x5c] sm:$0xf]
        %v6792 = vld [vmem:[#allocation15 + $0x60] sm:$0xf]
        %v6793 = vld [vmem:[#allocation15 + $0x64] sm:$0xf]
        %v6794 = vld [vmem:[#allocation15 + $0x68] sm:$0xf]
        %v6795 = vld [vmem:[#allocation15 + $0x6c] sm:$0xf]
        %v6796 = vld [vmem:[#allocation15 + $0x70] sm:$0xf]
        %v6797 = vld [vmem:[#allocation15 + $0x74] sm:$0xf]
        %v6798 = vld [vmem:[#allocation15 + $0x78] sm:$0xf]
        %v6799 = vld [vmem:[#allocation15 + $0x7c] sm:$0xf]
        %v6800 = vld [vmem:[#allocation17] sm:$0x1]
        %v6802 = vlaneseq
        %v6803 = vshrl.u32 %v6802, 7
        %v6804 = vsub.s32 0, %v6803
        %v6805 = vrot.slane %v6800, %v6804
        %v6839 = vunpack.c.l.b16 %v6768
        %v6840 = vunpack.c.l.b16 %v6769
        %v6841 = vunpack.c.l.b16 %v6770
        %v6842 = vunpack.c.l.b16 %v6771
        %v6843 = vunpack.c.l.b16 %v6772
        %v6844 = vunpack.c.l.b16 %v6773
        %v6845 = vunpack.c.l.b16 %v6774
        %v6846 = vunpack.c.l.b16 %v6775
        %v6847 = vunpack.c.l.b16 %v6776
        %v6848 = vunpack.c.l.b16 %v6777
        %v6849 = vunpack.c.l.b16 %v6778
        %v6850 = vunpack.c.l.b16 %v6779
        %v6851 = vunpack.c.l.b16 %v6780
        %v6852 = vunpack.c.l.b16 %v6781
        %v6853 = vunpack.c.l.b16 %v6782
        %v6854 = vunpack.c.l.b16 %v6783
        %v6855 = vunpack.c.l.b16 %v6784
        %v6856 = vunpack.c.l.b16 %v6785
        %v6857 = vunpack.c.l.b16 %v6786
        %v6858 = vunpack.c.l.b16 %v6787
        %v6859 = vunpack.c.l.b16 %v6788
        %v6860 = vunpack.c.l.b16 %v6789
        %v6861 = vunpack.c.l.b16 %v6790
        %v6862 = vunpack.c.l.b16 %v6791
        %v6863 = vunpack.c.l.b16 %v6792
        %v6864 = vunpack.c.l.b16 %v6793
        %v6865 = vunpack.c.l.b16 %v6794
        %v6866 = vunpack.c.l.b16 %v6795
        %v6867 = vunpack.c.l.b16 %v6796
        %v6868 = vunpack.c.l.b16 %v6797
        %v6869 = vunpack.c.l.b16 %v6798
        %v6870 = vunpack.c.l.b16 %v6799
        %v6871 = vpack.c.b16 %v6840, %v6839
        %v6872 = vpack.c.b16 %v6842, %v6841
        %v6873 = vpack.c.b16 %v6844, %v6843
        %v6874 = vpack.c.b16 %v6846, %v6845
        %v6875 = vpack.c.b16 %v6848, %v6847
        %v6876 = vpack.c.b16 %v6850, %v6849
        %v6877 = vpack.c.b16 %v6852, %v6851
        %v6878 = vpack.c.b16 %v6854, %v6853
        %v6879 = vpack.c.b16 %v6856, %v6855
        %v6880 = vpack.c.b16 %v6858, %v6857
        %v6881 = vpack.c.b16 %v6860, %v6859
        %v6882 = vpack.c.b16 %v6862, %v6861
        %v6883 = vpack.c.b16 %v6864, %v6863
        %v6884 = vpack.c.b16 %v6866, %v6865
        %v6885 = vpack.c.b16 %v6868, %v6867
        %v6886 = vpack.c.b16 %v6870, %v6869
        %6903 = vmatprep.subr.bf16.mxu0 0
        %6904 = vmatpush1.bf16.msra.mxu0 %v6871
        %6905 = vmatprep.subr.bf16.mxu0 0
        %6906 = vmatpush1.bf16.msra.mxu0 %v6872
        %6907 = vmatprep.subr.bf16.mxu0 0
        %6908 = vmatpush1.bf16.msra.mxu0 %v6873
        %6909 = vmatprep.subr.bf16.mxu0 0
        %6910 = vmatpush1.bf16.msra.mxu0 %v6874
        %6911 = vmatprep.subr.bf16.mxu0 0
        %6912 = vmatpush1.bf16.msra.mxu0 %v6875
        %6913 = vmatprep.subr.bf16.mxu0 0
        %6914 = vmatpush1.bf16.msra.mxu0 %v6876
        %6915 = vmatprep.subr.bf16.mxu0 0
        %6916 = vmatpush1.bf16.msra.mxu0 %v6877
        %6917 = vmatprep.subr.bf16.mxu0 0
        %6918 = vmatpush1.bf16.msra.mxu0 %v6878
        %6919 = vmatprep.subr.bf16.mxu0 0
        %6920 = vmatpush1.bf16.msra.mxu0 %v6879
        %6921 = vmatprep.subr.bf16.mxu0 0
        %6922 = vmatpush1.bf16.msra.mxu0 %v6880
        %6923 = vmatprep.subr.bf16.mxu0 0
        %6924 = vmatpush1.bf16.msra.mxu0 %v6881
        %6925 = vmatprep.subr.bf16.mxu0 0
        %6926 = vmatpush1.bf16.msra.mxu0 %v6882
        %6927 = vmatprep.subr.bf16.mxu0 0
        %6928 = vmatpush1.bf16.msra.mxu0 %v6883
        %6929 = vmatprep.subr.bf16.mxu0 0
        %6930 = vmatpush1.bf16.msra.mxu0 %v6884
        %6931 = vmatprep.subr.bf16.mxu0 0
        %6932 = vmatpush1.bf16.msra.mxu0 %v6885
        %6933 = vmatprep.subr.bf16.mxu0 0
        %6934 = vmatpush1.bf16.msra.mxu0 %v6886
        %6935 = vmatprep.mubr.bf16.mxu0 %v6737
        %6936 = vmatmul.mubr.bf16.gmra.mrb[0].mxu0 %v6736
        %v6937 = vpop.f32.mrb[0].mxu0
        %v6938 = vadd.f32 %v6805, %v6937
        %v6939 = vpop.f32.mrb[0].mxu0
        %v6940 = vpop.f32.mrb[0].mxu0
        %v6941 = vadd.f32 %v6805, %v6940
        %v6942 = vpop.f32.mrb[0].mxu0
        %6943 = vmatprep.mubr.bf16.mxu0 %v6739
        %6944 = vmatmul.mubr.bf16.gmra.mrb[0].mxu0 %v6738
        %v6945 = vpop.f32.mrb[0].mxu0
        %v6946 = vadd.f32 %v6805, %v6945
        %v6947 = vpop.f32.mrb[0].mxu0
        %v6948 = vpop.f32.mrb[0].mxu0
        %v6949 = vadd.f32 %v6805, %v6948
        %v6950 = vpop.f32.mrb[0].mxu0
        %6951 = vmatprep.mubr.bf16.mxu0 %v6741
        %6952 = vmatmul.mubr.bf16.gmra.mrb[0].mxu0 %v6740
        %v6953 = vpop.f32.mrb[0].mxu0
        %v6954 = vadd.f32 %v6805, %v6953
        %v6955 = vpop.f32.mrb[0].mxu0
        %v6956 = vpop.f32.mrb[0].mxu0
        %v6957 = vadd.f32 %v6805, %v6956
        %v6958 = vpop.f32.mrb[0].mxu0
        %6959 = vmatprep.mubr.bf16.mxu0 %v6743
        %6960 = vmatmul.mubr.bf16.gmra.mrb[0].mxu0 %v6742
        %v6961 = vpop.f32.mrb[0].mxu0
        %v6962 = vadd.f32 %v6805, %v6961
        %v6963 = vpop.f32.mrb[0].mxu0
        %v6964 = vpop.f32.mrb[0].mxu0
        %v6965 = vadd.f32 %v6805, %v6964
        %v6966 = vpop.f32.mrb[0].mxu0
        %6967 = vmatprep.mubr.bf16.mxu0 %v6745
        %6968 = vmatmul.mubr.bf16.gmra.mrb[0].mxu0 %v6744
        %v6969 = vpop.f32.mrb[0].mxu0
        %v6970 = vadd.f32 %v6805, %v6969
        %v6971 = vpop.f32.mrb[0].mxu0
        %v6972 = vpop.f32.mrb[0].mxu0
        %v6973 = vadd.f32 %v6805, %v6972
        %v6974 = vpop.f32.mrb[0].mxu0
        %6975 = vmatprep.mubr.bf16.mxu0 %v6747
        %6976 = vmatmul.mubr.bf16.gmra.mrb[0].mxu0 %v6746
        %v6977 = vpop.f32.mrb[0].mxu0
        %v6978 = vadd.f32 %v6805, %v6977
        %v6979 = vpop.f32.mrb[0].mxu0
        %v6980 = vpop.f32.mrb[0].mxu0
        %v6981 = vadd.f32 %v6805, %v6980
        %v6982 = vpop.f32.mrb[0].mxu0
        %6983 = vmatprep.mubr.bf16.mxu0 %v6749
        %6984 = vmatmul.mubr.bf16.gmra.mrb[0].mxu0 %v6748
        %v6985 = vpop.f32.mrb[0].mxu0
        %v6986 = vadd.f32 %v6805, %v6985
        %v6987 = vpop.f32.mrb[0].mxu0
        %v6988 = vpop.f32.mrb[0].mxu0
        %v6989 = vadd.f32 %v6805, %v6988
        %v6990 = vpop.f32.mrb[0].mxu0
        %6991 = vmatprep.mubr.bf16.mxu0 %v6751
        %6992 = vmatmul.mubr.bf16.gmra.mrb[0].mxu0 %v6750
        %v6993 = vpop.f32.mrb[0].mxu0
        %v6994 = vadd.f32 %v6805, %v6993
        %v6995 = vpop.f32.mrb[0].mxu0
        %v6996 = vpop.f32.mrb[0].mxu0
        %v6997 = vadd.f32 %v6805, %v6996
        %v6998 = vpop.f32.mrb[0].mxu0
        %6999 = vmatprep.mubr.bf16.mxu0 %v6753
        %7000 = vmatmul.mubr.bf16.gmra.mrb[0].mxu0 %v6752
        %v7001 = vpop.f32.mrb[0].mxu0
        %v7002 = vadd.f32 %v6805, %v7001
        %v7003 = vpop.f32.mrb[0].mxu0
        %v7004 = vpop.f32.mrb[0].mxu0
        %v7005 = vadd.f32 %v6805, %v7004
        %v7006 = vpop.f32.mrb[0].mxu0
        %7007 = vmatprep.mubr.bf16.mxu0 %v6755
        %7008 = vmatmul.mubr.bf16.gmra.mrb[0].mxu0 %v6754
        %v7009 = vpop.f32.mrb[0].mxu0
        %v7010 = vadd.f32 %v6805, %v7009
        %v7011 = vpop.f32.mrb[0].mxu0
        %v7012 = vpop.f32.mrb[0].mxu0
        %v7013 = vadd.f32 %v6805, %v7012
        %v7014 = vpop.f32.mrb[0].mxu0
        %7015 = vmatprep.mubr.bf16.mxu0 %v6757
        %7016 = vmatmul.mubr.bf16.gmra.mrb[0].mxu0 %v6756
        %v7017 = vpop.f32.mrb[0].mxu0
        %v7018 = vadd.f32 %v6805, %v7017
        %v7019 = vpop.f32.mrb[0].mxu0
        %v7020 = vpop.f32.mrb[0].mxu0
        %v7021 = vadd.f32 %v6805, %v7020
        %v7022 = vpop.f32.mrb[0].mxu0
        %7023 = vmatprep.mubr.bf16.mxu0 %v6759
        %7024 = vmatmul.mubr.bf16.gmra.mrb[0].mxu0 %v6758
        %v7025 = vpop.f32.mrb[0].mxu0
        %v7026 = vadd.f32 %v6805, %v7025
        %v7027 = vpop.f32.mrb[0].mxu0
        %v7028 = vpop.f32.mrb[0].mxu0
        %v7029 = vadd.f32 %v6805, %v7028
        %v7030 = vpop.f32.mrb[0].mxu0
        %7031 = vmatprep.mubr.bf16.mxu0 %v6761
        %7032 = vmatmul.mubr.bf16.gmra.mrb[0].mxu0 %v6760
        %v7033 = vpop.f32.mrb[0].mxu0
        %v7034 = vadd.f32 %v6805, %v7033
        %v7035 = vpop.f32.mrb[0].mxu0
        %v7036 = vpop.f32.mrb[0].mxu0
        %v7037 = vadd.f32 %v6805, %v7036
        %v7038 = vpop.f32.mrb[0].mxu0
        %7039 = vmatprep.mubr.bf16.mxu0 %v6763
        %7040 = vmatmul.mubr.bf16.gmra.mrb[0].mxu0 %v6762
        %v7041 = vpop.f32.mrb[0].mxu0
        %v7042 = vadd.f32 %v6805, %v7041
        %v7043 = vpop.f32.mrb[0].mxu0
        %v7044 = vpop.f32.mrb[0].mxu0
        %v7045 = vadd.f32 %v6805, %v7044
        %v7046 = vpop.f32.mrb[0].mxu0
        %7047 = vmatprep.mubr.bf16.mxu0 %v6765
        %7048 = vmatmul.mubr.bf16.gmra.mrb[0].mxu0 %v6764
        %v7049 = vpop.f32.mrb[0].mxu0
        %v7050 = vadd.f32 %v6805, %v7049
        %v7051 = vpop.f32.mrb[0].mxu0
        %v7052 = vpop.f32.mrb[0].mxu0
        %v7053 = vadd.f32 %v6805, %v7052
        %v7054 = vpop.f32.mrb[0].mxu0
        %7055 = vmatprep.mubr.bf16.mxu0 %v6767
        %7056 = vmatmul.mubr.bf16.gmra.mrb[0].mxu0 %v6766
        %v7057 = vpop.f32.mrb[0].mxu0
        %v7058 = vadd.f32 %v6805, %v7057
        %v7059 = vpop.f32.mrb[0].mxu0
        %v7060 = vpop.f32.mrb[0].mxu0
        %v7061 = vadd.f32 %v6805, %v7060
        %v7062 = vpop.f32.mrb[0].mxu0
        %7063 = vdwg.mxu0
        %v7064 = vmax.f32 %v6938, 0.0
        %v7065 = vmax.f32 %v6941, 0.0
        %v7066 = vmax.f32 %v6946, 0.0
        %v7067 = vmax.f32 %v6949, 0.0
        %v7068 = vmax.f32 %v6954, 0.0
        %v7069 = vmax.f32 %v6957, 0.0
        %v7070 = vmax.f32 %v6962, 0.0
        %v7071 = vmax.f32 %v6965, 0.0
        %v7072 = vmax.f32 %v6970, 0.0
        %v7073 = vmax.f32 %v6973, 0.0
        %v7074 = vmax.f32 %v6978, 0.0
        %v7075 = vmax.f32 %v6981, 0.0
        %v7076 = vmax.f32 %v6986, 0.0
        %v7077 = vmax.f32 %v6989, 0.0
        %v7078 = vmax.f32 %v6994, 0.0
        %v7079 = vmax.f32 %v6997, 0.0
        %v7080 = vmax.f32 %v7002, 0.0
        %v7081 = vmax.f32 %v7005, 0.0
        %v7082 = vmax.f32 %v7010, 0.0
        %v7083 = vmax.f32 %v7013, 0.0
        %v7084 = vmax.f32 %v7018, 0.0
        %v7085 = vmax.f32 %v7021, 0.0
        %v7086 = vmax.f32 %v7026, 0.0
        %v7087 = vmax.f32 %v7029, 0.0
        %v7088 = vmax.f32 %v7034, 0.0
        %v7089 = vmax.f32 %v7037, 0.0
        %v7090 = vmax.f32 %v7042, 0.0
        %v7091 = vmax.f32 %v7045, 0.0
        %v7092 = vmax.f32 %v7050, 0.0
        %v7093 = vmax.f32 %v7053, 0.0
        %v7094 = vmax.f32 %v7058, 0.0
        %v7095 = vmax.f32 %v7061, 0.0
        %7096 = vxpose.xlu0.b32.start [1/16] %v7064, 128
        %7097 = vxpose.xlu0.b32.cont [2/16] %v7065, 128
        %7098 = vxpose.xlu0.b32.cont [3/16] %v7066, 128
        %7099 = vxpose.xlu0.b32.cont [4/16] %v7067, 128
        %7100 = vxpose.xlu0.b32.cont [5/16] %v7068, 128
        %7101 = vxpose.xlu0.b32.cont [6/16] %v7069, 128
        %7102 = vxpose.xlu0.b32.cont [7/16] %v7070, 128
        %7103 = vxpose.xlu0.b32.cont [8/16] %v7071, 128
        %7104 = vxpose.xlu0.b32.cont [9/16] %v7072, 128
        %7105 = vxpose.xlu0.b32.cont [10/16] %v7073, 128
        %7106 = vxpose.xlu0.b32.cont [11/16] %v7074, 128
        %7107 = vxpose.xlu0.b32.cont [12/16] %v7075, 128
        %7108 = vxpose.xlu0.b32.cont [13/16] %v7076, 128
        %7109 = vxpose.xlu0.b32.cont [14/16] %v7077, 128
        %7110 = vxpose.xlu0.b32.cont [15/16] %v7078, 128
        %7111 = vxpose.xlu0.b32.end [16/16] %v7079, 128
        %v7112 = vpop.trf.xlu0
        %v7113 = vpop.trf.xlu0
        %v7114 = vpop.trf.xlu0
        %v7115 = vpop.trf.xlu0
        %v7116 = vpop.trf.xlu0
        %v7117 = vpop.trf.xlu0
        %v7118 = vpop.trf.xlu0
        %v7119 = vpop.trf.xlu0
        %v7120 = vpop.trf.xlu0
        %v7121 = vpop.trf.xlu0
        %v7122 = vpop.trf.xlu0
        %v7123 = vpop.trf.xlu0
        %v7124 = vpop.trf.xlu0
        %v7125 = vpop.trf.xlu0
        %v7126 = vpop.trf.xlu0
        %v7127 = vpop.trf.xlu0
        %7128 = vxpose.xlu0.b32.start [1/16] %v7080, 128
        %7129 = vxpose.xlu0.b32.cont [2/16] %v7081, 128
        %7130 = vxpose.xlu0.b32.cont [3/16] %v7082, 128
        %7131 = vxpose.xlu0.b32.cont [4/16] %v7083, 128
        %7132 = vxpose.xlu0.b32.cont [5/16] %v7084, 128
        %7133 = vxpose.xlu0.b32.cont [6/16] %v7085, 128
        %7134 = vxpose.xlu0.b32.cont [7/16] %v7086, 128
        %7135 = vxpose.xlu0.b32.cont [8/16] %v7087, 128
        %7136 = vxpose.xlu0.b32.cont [9/16] %v7088, 128
        %7137 = vxpose.xlu0.b32.cont [10/16] %v7089, 128
        %7138 = vxpose.xlu0.b32.cont [11/16] %v7090, 128
        %7139 = vxpose.xlu0.b32.cont [12/16] %v7091, 128
        %7140 = vxpose.xlu0.b32.cont [13/16] %v7092, 128
        %7141 = vxpose.xlu0.b32.cont [14/16] %v7093, 128
        %7142 = vxpose.xlu0.b32.cont [15/16] %v7094, 128
        %7143 = vxpose.xlu0.b32.end [16/16] %v7095, 128
        %v7144 = vpop.trf.xlu0
        %v7145 = vpop.trf.xlu0
        %v7146 = vpop.trf.xlu0
        %v7147 = vpop.trf.xlu0
        %v7148 = vpop.trf.xlu0
        %v7149 = vpop.trf.xlu0
        %v7150 = vpop.trf.xlu0
        %v7151 = vpop.trf.xlu0
        %v7152 = vpop.trf.xlu0
        %v7153 = vpop.trf.xlu0
        %v7154 = vpop.trf.xlu0
        %v7155 = vpop.trf.xlu0
        %v7156 = vpop.trf.xlu0
        %v7157 = vpop.trf.xlu0
        %v7158 = vpop.trf.xlu0
        %v7159 = vpop.trf.xlu0
        %v7160 = vld [vmem:[#allocation18] sm:$0xff]
        %v7161 = vld [vmem:[#allocation18 + $0x8] sm:$0xff]
        %v7162 = vld [vmem:[#allocation18 + $0x10] sm:$0xff]
        %v7163 = vld [vmem:[#allocation18 + $0x18] sm:$0xff]
        %v7164 = vld [vmem:[#allocation18 + $0x20] sm:$0xff]
        %v7165 = vld [vmem:[#allocation18 + $0x28] sm:$0xff]
        %v7166 = vld [vmem:[#allocation18 + $0x30] sm:$0xff]
        %v7167 = vld [vmem:[#allocation18 + $0x38] sm:$0xff]
        %v7168 = vld [vmem:[#allocation18 + $0x40] sm:$0xff]
        %v7169 = vld [vmem:[#allocation18 + $0x48] sm:$0xff]
        %v7170 = vld [vmem:[#allocation18 + $0x50] sm:$0xff]
        %v7171 = vld [vmem:[#allocation18 + $0x58] sm:$0xff]
        %v7172 = vld [vmem:[#allocation18 + $0x60] sm:$0xff]
        %v7173 = vld [vmem:[#allocation18 + $0x68] sm:$0xff]
        %v7174 = vld [vmem:[#allocation18 + $0x70] sm:$0xff]
        %v7175 = vld [vmem:[#allocation18 + $0x78] sm:$0xff]
        %7177 = vset.pattern.permute.xlu0 0
        %7178 = vperm.xlu0 %7177, %v7160
        %v7179 = vpop.permute.xlu0 %7178
        %7182 = vset.pattern.permute.xlu0 0
        %7183 = vperm.xlu0 %7182, %v7161
        %v7184 = vpop.permute.xlu0 %7183
        %7187 = vset.pattern.permute.xlu0 0
        %7188 = vperm.xlu0 %7187, %v7162
        %v7189 = vpop.permute.xlu0 %7188
        %7192 = vset.pattern.permute.xlu0 0
        %7193 = vperm.xlu0 %7192, %v7163
        %v7194 = vpop.permute.xlu0 %7193
        %7197 = vset.pattern.permute.xlu0 0
        %7198 = vperm.xlu0 %7197, %v7164
        %v7199 = vpop.permute.xlu0 %7198
        %7202 = vset.pattern.permute.xlu0 0
        %7203 = vperm.xlu0 %7202, %v7165
        %v7204 = vpop.permute.xlu0 %7203
        %7207 = vset.pattern.permute.xlu0 0
        %7208 = vperm.xlu0 %7207, %v7166
        %v7209 = vpop.permute.xlu0 %7208
        %7212 = vset.pattern.permute.xlu0 0
        %7213 = vperm.xlu0 %7212, %v7167
        %v7214 = vpop.permute.xlu0 %7213
        %7217 = vset.pattern.permute.xlu0 0
        %7218 = vperm.xlu0 %7217, %v7168
        %v7219 = vpop.permute.xlu0 %7218
        %7222 = vset.pattern.permute.xlu0 0
        %7223 = vperm.xlu0 %7222, %v7169
        %v7224 = vpop.permute.xlu0 %7223
        %7227 = vset.pattern.permute.xlu0 0
        %7228 = vperm.xlu0 %7227, %v7170
        %v7229 = vpop.permute.xlu0 %7228
        %7232 = vset.pattern.permute.xlu0 0
        %7233 = vperm.xlu0 %7232, %v7171
        %v7234 = vpop.permute.xlu0 %7233
        %7237 = vset.pattern.permute.xlu0 0
        %7238 = vperm.xlu0 %7237, %v7172
        %v7239 = vpop.permute.xlu0 %7238
        %7242 = vset.pattern.permute.xlu0 0
        %7243 = vperm.xlu0 %7242, %v7173
        %v7244 = vpop.permute.xlu0 %7243
        %7247 = vset.pattern.permute.xlu0 0
        %7248 = vperm.xlu0 %7247, %v7174
        %v7249 = vpop.permute.xlu0 %7248
        %7252 = vset.pattern.permute.xlu0 0
        %7253 = vperm.xlu0 %7252, %v7175
        %v7254 = vpop.permute.xlu0 %7253
        %v7256 = vmul.f32 %v7112, %v7179
        %v7257 = vmul.f32 %v7144, %v7179
        %v7258 = vmul.f32 %v7113, %v7184
        %v7259 = vmul.f32 %v7145, %v7184
        %v7260 = vmul.f32 %v7114, %v7189
        %v7261 = vmul.f32 %v7146, %v7189
        %v7262 = vmul.f32 %v7115, %v7194
        %v7263 = vmul.f32 %v7147, %v7194
        %v7264 = vmul.f32 %v7116, %v7199
        %v7265 = vmul.f32 %v7148, %v7199
        %v7266 = vmul.f32 %v7117, %v7204
        %v7267 = vmul.f32 %v7149, %v7204
        %v7268 = vmul.f32 %v7118, %v7209
        %v7269 = vmul.f32 %v7150, %v7209
        %v7270 = vmul.f32 %v7119, %v7214
        %v7271 = vmul.f32 %v7151, %v7214
        %v7272 = vmul.f32 %v7120, %v7219
        %v7273 = vmul.f32 %v7152, %v7219
        %v7274 = vmul.f32 %v7121, %v7224
        %v7275 = vmul.f32 %v7153, %v7224
        %v7276 = vmul.f32 %v7122, %v7229
        %v7277 = vmul.f32 %v7154, %v7229
        %v7278 = vmul.f32 %v7123, %v7234
        %v7279 = vmul.f32 %v7155, %v7234
        %v7280 = vmul.f32 %v7124, %v7239
        %v7281 = vmul.f32 %v7156, %v7239
        %v7282 = vmul.f32 %v7125, %v7244
        %v7283 = vmul.f32 %v7157, %v7244
        %v7284 = vmul.f32 %v7126, %v7249
        %v7285 = vmul.f32 %v7158, %v7249
        %v7286 = vmul.f32 %v7127, %v7254
        %v7287 = vmul.f32 %v7159, %v7254
        %v7288 = vadd.f32 %v7256, %v7258
        %v7289 = vadd.f32 %v7288, %v7260
        %v7290 = vadd.f32 %v7289, %v7262
        %v7291 = vadd.f32 %v7290, %v7264
        %v7292 = vadd.f32 %v7291, %v7266
        %v7293 = vadd.f32 %v7292, %v7268
        %v7294 = vadd.f32 %v7293, %v7270
        %v7295 = vadd.f32 %v7294, %v7272
        %v7296 = vadd.f32 %v7295, %v7274
        %v7297 = vadd.f32 %v7296, %v7276
        %v7298 = vadd.f32 %v7297, %v7278
        %v7299 = vadd.f32 %v7298, %v7280
        %v7300 = vadd.f32 %v7299, %v7282
        %v7301 = vadd.f32 %v7300, %v7284
        %v7302 = vadd.f32 %v7301, %v7286
        %v7303 = vrot.slane %v7302, 4
        %v7304 = vadd.f32 %v7302, %v7303
        %v7305 = vrot.slane %v7304, 2
        %v7306 = vadd.f32 %v7304, %v7305
        %v7307 = vrot.slane %v7306, 1
        %v7308 = vadd.f32 %v7306, %v7307
        %v7309 = vadd.f32 %v7257, %v7259
        %v7310 = vadd.f32 %v7309, %v7261
        %v7311 = vadd.f32 %v7310, %v7263
        %v7312 = vadd.f32 %v7311, %v7265
        %v7313 = vadd.f32 %v7312, %v7267
        %v7314 = vadd.f32 %v7313, %v7269
        %v7315 = vadd.f32 %v7314, %v7271
        %v7316 = vadd.f32 %v7315, %v7273
        %v7317 = vadd.f32 %v7316, %v7275
        %v7318 = vadd.f32 %v7317, %v7277
        %v7319 = vadd.f32 %v7318, %v7279
        %v7320 = vadd.f32 %v7319, %v7281
        %v7321 = vadd.f32 %v7320, %v7283
        %v7322 = vadd.f32 %v7321, %v7285
        %v7323 = vadd.f32 %v7322, %v7287
        %v7324 = vrot.slane %v7323, 4
        %v7325 = vadd.f32 %v7323, %v7324
        %v7326 = vrot.slane %v7325, 2
        %v7327 = vadd.f32 %v7325, %v7326
        %v7328 = vrot.slane %v7327, 1
        %v7329 = vadd.f32 %v7327, %v7328
        %v7330 = vld [vmem:[#allocation2] sm:$0x1]
        %7332 = vset.pattern.permute.xlu0 0
        %7333 = vperm.xlu0 %7332, %v7330
        %v7334 = vpop.permute.xlu0 %7333
        %v7336 = vlaneseq
        %v7337 = vshrl.u32 %v7336, 7
        %v7338 = vsub.s32 0, %v7337
        %v7339 = vrot.slane %v7334, %v7338
        %v7340 = vadd.f32 %v7308, %v7339
        %v7341 = vadd.f32 %v7329, %v7339
        %v7342 = vxor.u32 %v7340, 2147483648
        %v7343 = vxor.u32 %v7341, 2147483648
        %v7344 = vmul.f32 %v7342, 1.442695
        %v7345 = vpow.pop %v7344
        %v7346 = vmul.f32 %v7343, 1.442695
        %v7347 = vpow.pop %v7346
        %v7348 = vadd.f32 %v7345, 1.0
        %v7349 = vadd.f32 %v7347, 1.0
        %v7350 = vrcp.pop %v7348
        %v7351 = vmul.f32 1.0, %v7350
        %v7352 = vrcp.pop %v7349
        %v7353 = vmul.f32 1.0, %v7352
        %v7356 = vcombine.low %v7351, %v7353
        %v7358 = vunpack.c.l.s4 1966171168
        %v7359 = vunpack.c.0.s8 %v7358
        %v7360 = vlaneseq
        %v7361 = vshrl.u32 %v7360, 7
        %v7362 = vsub.s32 %v7359, %v7361
        %v7363 = vrot.slane %v7356, %v7362
        %v7365 = vunpack.c.l.s4 1966171168
        %v7366 = vunpack.c.0.s8 %v7365
        %v7367 = vlaneseq
        %v7368 = vshrl.u32 %v7367, 7
        %v7369 = vsub.s32 %v7366, %v7368
        %v7370 = vrot.slane %v7363, %v7369
        %v7372 = vlaneseq
        %vm7373 = vcmp.ge.s32.totalorder %v7372, 0
        %vm7374 = vcmp.lt.s32.totalorder %v7372, 256
        %vm7375 = vmand %vm7373, %vm7374
        %7376 = vst.msk [vmem:[%s530] sm:$0x3] %vm7375, %v7370
        %s7377 = sand.u32 %s279, 1
        %s7378 = scalar_lea.sflag [#allocation5], %s7377
        %s7379 = sand.u32 %s279, 1
        %s7380 = smul.addr %s7379, 2
        %s7381 = scalar_lea.vmem [#allocation20], %s7380
        // Predicated region
        $region105: #{ember_mlp_forward.1} parent=63 // pred_check
          %p7382 = pneg %p289
        $region106: #{ember_mlp_forward.1} parent=63 // pred_check_branch
          %7384 = sbr.rel (%p7382) target = $region108
        $region107: #{ember_mlp_forward.1} parent=63 // pred_region
          %s7385 = smul.u32 2, %s35
          %s7387 = ssub.s32 32, 32
          %7388 = vsyncadd %s7378, %s7387
          %s7389 = smul.addr %s7385, 16
          %s7390 = scalar_lea.hbm %s11, %s7389
          %s7392 = sshll.u32 %s7381, 4
          %s7393 = int_to_ptr.vmem [resolvable:$true] %s7392
          %7395 = dma.vmem_to_hbm [thread:$0]  %s7393, 32, %s7390, %s7378
        $region108: #{ember_mlp_forward.1} parent=63 // pred_fallthru
          _
      $region64: #{ember_mlp_forward.1} parent=5 // pred_fallthru
        _
      %p7396 = scmp.le.s32.totalorder 2, %s30
      // Predicated region
      $region109: #{ember_mlp_forward.1} parent=5 // pred_check
        %p7397 = pneg %p7396
      $region110: #{ember_mlp_forward.1} parent=5 // pred_check_branch
        %7399 = sbr.rel (%p7397) target = $region112
      $region111: #{ember_mlp_forward.1} parent=5 // pred_region
        %s7400 = ssub.s32 %s30, 2
        // Predicated region
        $region113: #{ember_mlp_forward.1} parent=111 // pred_check
          %p7401 = pneg %p295
        $region114: #{ember_mlp_forward.1} parent=111 // pred_check_branch
          %7403 = sbr.rel (%p7401) target = $region116
        $region115: #{ember_mlp_forward.1} parent=111 // pred_region
          %s7404 = sand.u32 %s280, 1
          %s7405 = scalar_lea.sflag [#allocation5], %s7404
          %s7406 = sand.u32 %s280, 1
          %s7407 = smul.addr %s7406, 2
          %s7408 = scalar_lea.vmem [#allocation20], %s7407
          %7409 = dma.done %s7405, 32
        $region116: #{ember_mlp_forward.1} parent=111 // pred_fallthru
          _
      $region112: #{ember_mlp_forward.1} parent=5 // pred_fallthru
        _
    $region6: #{ember_mlp_forward.1} parent=1 // loop_footer
      %s34 = sadd.s32 1, %s30
    $region7: #{ember_mlp_forward.1} parent=1 // loop_footer_branch
      %29 = sbr.rel target = $region3
    $region8: #{ember_mlp_forward.1} parent=1 // loop_exit
      _
    %7410 = vsyncpa [#allocation4], 1
    %s7411 = scalar_lea.sflag [#allocation4], 1
    %7412 = vsyncpa %s7411, 1
    %7413 = vsyncpa [#allocation7], 1
    %7414 = vsyncpa [#allocation10], 1
    %7415 = vsyncpa [#allocation13], 1
    %7416 = vsyncpa [#allocation16], 1
    %7417 = vsyncpa [#allocation19], 1
    %7418 = vsyncpa [#allocation5], 1
    %s7419 = scalar_lea.sflag [#allocation5], 1
    %7420 = vsyncpa %s7419, 1

</llo_original>
